<compile_context>
chip_gen: v7x
topology: tpu7x:2x2x1
jax: 0.10.0
libtpu: 0.0.40
codegen_flags: <defaults>
</compile_context>

<pallas_src>
import functools

import jax
import jax.numpy as jnp
import numpy as np
from jax.experimental import pallas as pl
from jax.experimental.pallas import tpu as pltpu

H = 100          # model hidden size (from the module)
HP = 128         # lane-padded hidden size
OUT_SIZE = 1


def _round_up(a, b):
    return -(-a // b) * b


# ----------------------------------------------------------------------------
# Kernel 1: fused bidirectional GRU (input projection + recurrence).
#   Gate column layout (width 6*HP): [r_f | r_b | z_f | z_b | n_f | n_b].
#   Forward walks time chunks left->right, backward walks them right->left via
#   a reversed chunk index_map.  Hidden state h_cat = [hf|hb] lives in VMEM.
# ----------------------------------------------------------------------------
def _bigru_kernel(xf_ref, xb_ref, wxf_ref, wxb_ref, bx_ref, wh_ref, bhn_ref,
                  outf_ref, outb_ref, h_ref, *, ct, t_valid, t_pad):
    c = pl.program_id(0)
    nc = pl.num_programs(0)
    needs_mask = t_pad > t_valid          # static

    @pl.when(c == 0)
    def _():
        h_ref[...] = jnp.zeros_like(h_ref)

    def step(i, h_cat):
        j = ct - 1 - i
        # Input projection for this time step (K = F, tiny); weights read
        # inside the step so their live range stays bounded (no spills).
        gi = (jnp.dot(xf_ref[i], wxf_ref[...],
                      preferred_element_type=jnp.float32)
              + jnp.dot(xb_ref[j], wxb_ref[...],
                        preferred_element_type=jnp.float32)
              + bx_ref[...])
        # Single merged recurrent matmul, K = 2*HP = 256 (fills the MXU).
        gh = (jnp.dot(h_cat, wh_ref[...],
                      preferred_element_type=jnp.float32)
              + bhn_ref[...])
        # Joint gate math for both directions.
        rz = jax.nn.sigmoid(gi[:, :4 * HP] + gh[:, :4 * HP])
        r = rz[:, :2 * HP]                 # [r_f | r_b]
        z = rz[:, 2 * HP:]                 # [z_f | z_b]
        n = jnp.tanh(gi[:, 4 * HP:] + r * gh[:, 4 * HP:])   # [n_f | n_b]
        h_new = (1.0 - z) * n + z * h_cat
        hf = h_new[:, :HP]
        hb = h_new[:, HP:]
        if needs_mask:
            t_f = c * ct + i
            t_b = (nc - 1 - c) * ct + j
            hf = jnp.where(t_f < t_valid, hf, h_cat[:, :HP])
            hb = jnp.where(t_b < t_valid, hb, h_cat[:, HP:])
        outf_ref[i] = hf
        outb_ref[j] = hb
        return jnp.concatenate([hf, hb], axis=-1)

    h_ref[...] = jax.lax.fori_loop(0, ct, step, h_ref[...], unroll=True)


def _bigru(xp, wx_f, wx_b, bx, wh, bhn, *, ct, t_valid):
    t_pad, b, f = xp.shape
    nc = t_pad // ct
    kern = functools.partial(_bigru_kernel, ct=ct, t_valid=t_valid,
                             t_pad=t_pad)
    return pl.pallas_call(
        kern,
        out_shape=(jax.ShapeDtypeStruct((t_pad, b, HP), jnp.float32),
                   jax.ShapeDtypeStruct((t_pad, b, HP), jnp.float32)),
        grid_spec=pltpu.PrefetchScalarGridSpec(
            num_scalar_prefetch=0,
            grid=(nc,),
            in_specs=[
                pl.BlockSpec((ct, b, f), lambda c: (c, 0, 0)),           # x fwd
                pl.BlockSpec((ct, b, f), lambda c: (nc - 1 - c, 0, 0)),  # x bwd
                pl.BlockSpec((f, 6 * HP), lambda c: (0, 0)),
                pl.BlockSpec((f, 6 * HP), lambda c: (0, 0)),
                pl.BlockSpec((1, 6 * HP), lambda c: (0, 0)),
                pl.BlockSpec((2 * HP, 6 * HP), lambda c: (0, 0)),
                pl.BlockSpec((1, 6 * HP), lambda c: (0, 0)),
            ],
            out_specs=[
                pl.BlockSpec((ct, b, HP), lambda c: (c, 0, 0)),
                pl.BlockSpec((ct, b, HP), lambda c: (nc - 1 - c, 0, 0)),
            ],
            scratch_shapes=[pltpu.VMEM((b, 2 * HP), jnp.float32)]),
        compiler_params=pltpu.CompilerParams(
            dimension_semantics=("arbitrary",)),      # sequential recurrence
    )(xp, xp, wx_f, wx_b, bx, wh, bhn)


# ----------------------------------------------------------------------------
# Kernel 2: MLP head
#   Linear(2H->H) -> [Dropout=id] -> PReLU -> Linear(H->H) -> PReLU -> Linear(H->1)
#   Layer 1 is one K=256 matmul; final layer produces a lane-dense (1, rt) row.
# ----------------------------------------------------------------------------
def _mlp_kernel(xf_ref, xb_ref, w1_ref, b1_ref, w2_ref, b2_ref, w3_ref,
                s_ref, o_ref):
    a1 = s_ref[0]
    a2 = s_ref[1]
    b3 = s_ref[2]
    x_cat = jnp.concatenate([xf_ref[...], xb_ref[...]], axis=-1)   # (rt, 2*HP)
    h = jnp.dot(x_cat, w1_ref[...],
                preferred_element_type=jnp.float32) + b1_ref[...]
    h = jnp.maximum(h, 0.0) + a1 * jnp.minimum(h, 0.0)             # PReLU
    h = jnp.dot(h, w2_ref[...],
                preferred_element_type=jnp.float32) + b2_ref[...]
    h = jnp.maximum(h, 0.0) + a2 * jnp.minimum(h, 0.0)             # PReLU
    # Final Linear(H->1): (1,HP) x (rt,HP)^T -> lane-dense (1, rt) row.
    o_ref[...] = jax.lax.dot_general(
        w3_ref[...], h, (((1,), (1,)), ((), ())),
        preferred_element_type=jnp.float32) + b3


def _mlp(xf, xb, w1, b1, w2, b2, w3row, scalars):
    n = xf.shape[0]
    if n >= 512 and n % 512 == 0:
        rt = 512
    elif n >= 256 and n % 256 == 0:
        rt = 256
    elif n >= 128 and n % 128 == 0:
        rt = 128
    elif n <= 1024:
        rt = _round_up(n, 8)
    else:
        rt = 512
    n_pad = _round_up(n, rt)
    if n_pad > n:
        pad = jnp.zeros((n_pad - n, HP), jnp.float32)
        xf = jnp.concatenate([xf, pad], axis=0)
        xb = jnp.concatenate([xb, pad], axis=0)
    out = pl.pallas_call(
        _mlp_kernel,
        out_shape=jax.ShapeDtypeStruct((1, n_pad), jnp.float32),
        grid_spec=pltpu.PrefetchScalarGridSpec(
            num_scalar_prefetch=0,
            grid=(n_pad // rt,),
            in_specs=[
                pl.BlockSpec((rt, HP), lambda i: (i, 0)),
                pl.BlockSpec((rt, HP), lambda i: (i, 0)),
                pl.BlockSpec((2 * HP, HP), lambda i: (0, 0)),
                pl.BlockSpec((1, HP), lambda i: (0, 0)),
                pl.BlockSpec((HP, HP), lambda i: (0, 0)),
                pl.BlockSpec((1, HP), lambda i: (0, 0)),
                pl.BlockSpec((1, HP), lambda i: (0, 0)),
                pl.BlockSpec(memory_space=pltpu.MemorySpace.SMEM),
            ],
            out_specs=pl.BlockSpec((1, rt), lambda i: (0, i))),
        compiler_params=pltpu.CompilerParams(
            dimension_semantics=("parallel",)),
    )(xf, xb, w1, b1, w2, b2, w3row, scalars)
    return out[0]                                    # (n_pad,)


# ----------------------------------------------------------------------------
# Parameter packing: PyTorch [r|z|n] GRU weights -> lane-padded, gate columns
# interleaved [r_f|r_b|z_f|z_b|n_f|n_b], feature gather folded into zero rows,
# r/z thirds of b_hh folded into the input bias.
# ----------------------------------------------------------------------------
def _pack_params(params, idx, f):
    wx_f = jnp.zeros((f, 6 * HP), jnp.float32)       # only fwd columns nonzero
    wx_b = jnp.zeros((f, 6 * HP), jnp.float32)       # only bwd columns nonzero
    bx = jnp.zeros((1, 6 * HP), jnp.float32)         # b_ih (+ b_hh for r,z)
    wh = jnp.zeros((2 * HP, 6 * HP), jnp.float32)    # block-diagonal recurrent
    bhn = jnp.zeros((1, 6 * HP), jnp.float32)        # b_hh, n-gate only

    def scatter_rows(w_gate):                        # (H, I) -> (f, H)
        return jnp.zeros((f, H), jnp.float32).at[idx].add(w_gate.T)

    for d, suffix in enumerate(("f", "b")):
        w_ih = params["w_ih_" + suffix]
        w_hh = params["w_hh_" + suffix]
        b_ih = params["b_ih_" + suffix]
        b_hh = params["b_hh_" + suffix]
        row0 = d * HP
        for g, slot in enumerate((0 + d, 2 + d, 4 + d)):     # r, z, n slots
            col0 = slot * HP
            wi_g = w_ih[g * H:(g + 1) * H]           # (H, I)
            wh_g = w_hh[g * H:(g + 1) * H]           # (H, H)
            if d == 0:
                wx_f = wx_f.at[:, col0:col0 + H].set(scatter_rows(wi_g))
            else:
                wx_b = wx_b.at[:, col0:col0 + H].set(scatter_rows(wi_g))
            wh = wh.at[row0:row0 + H, col0:col0 + H].set(wh_g.T)
            bi_g = b_ih[g * H:(g + 1) * H]
            bh_g = b_hh[g * H:(g + 1) * H]
            if g < 2:                                # r, z: fold b_hh into bx
                bx = bx.at[0, col0:col0 + H].set(bi_g + bh_g)
            else:                                    # n: b_hh stays with gh
                bx = bx.at[0, col0:col0 + H].set(bi_g)
                bhn = bhn.at[0, col0:col0 + H].set(bh_g)
    return wx_f, wx_b, bx, wh, bhn


# ----------------------------------------------------------------------------
# Full forward
# ----------------------------------------------------------------------------
@functools.partial(jax.jit, static_argnames=("active_feature_index",))
def arrival_rate_estimator_forward(x, params, active_feature_index):
    T, B, F = x.shape
    idx = jnp.asarray(active_feature_index, dtype=jnp.int32)

    # ---- pack weights (tiny, fused into the jitted graph) -------------------
    wx_f, wx_b, bx, wh, bhn = _pack_params(params, idx, F)

    # ---- time chunking (pad only the tiny x tensor) --------------------------
    ct = T if T <= 32 else 16
    t_pad = _round_up(T, ct)
    xp = x.astype(jnp.float32)
    if t_pad > T:
        xp = jnp.concatenate(
            [xp, jnp.zeros((t_pad - T, B, F), jnp.float32)], axis=0)

    # ---- fused bidirectional recurrence --------------------------------------
    out_f, out_b = _bigru(xp, wx_f, wx_b, bx, wh, bhn, ct=ct, t_valid=T)

    # ---- MLP head parameters --------------------------------------------------
    w1 = params["w1"]                                # (H, 2H)
    w1cat = jnp.zeros((2 * HP, HP), jnp.float32)
    w1cat = w1cat.at[:H, :H].set(w1[:, :H].T)        # fwd half
    w1cat = w1cat.at[HP:HP + H, :H].set(w1[:, H:].T) # bwd half
    b1 = jnp.zeros((1, HP), jnp.float32).at[0, :H].set(params["b1"])
    w2 = jnp.zeros((HP, HP), jnp.float32).at[:H, :H].set(params["w2"].T)
    b2 = jnp.zeros((1, HP), jnp.float32).at[0, :H].set(params["b2"])
    w3row = jnp.zeros((1, HP), jnp.float32).at[0, :H].set(params["w3"][0])
    scalars = jnp.stack(
        [params["a1"], params["a2"], params["b3"][0]]).astype(jnp.float32)

    mlp_flat = _mlp(out_f.reshape(t_pad * B, HP), out_b.reshape(t_pad * B, HP),
                    w1cat, b1, w2, b2, w3row, scalars)
    my_outs = mlp_flat[:T * B].reshape(T, B, OUT_SIZE)

    h_state = jnp.stack([out_f[T - 1, :, :H], out_b[0, :, :H]], axis=0)
    return my_outs, h_state


# ----------------------------------------------------------------------------
# Pure-JAX reference (for correctness check)
# ----------------------------------------------------------------------------
def gru_ref(x, w_ih, w_hh, b_ih, b_hh):
    B = x.shape[1]

    def step(h, x_t):
        gi = x_t @ w_ih.T + b_ih
        gh = h @ w_hh.T + b_hh
        r = jax.nn.sigmoid(gi[:, :H] + gh[:, :H])
        z = jax.nn.sigmoid(gi[:, H:2 * H] + gh[:, H:2 * H])
        n = jnp.tanh(gi[:, 2 * H:] + r * gh[:, 2 * H:])
        h_new = (1.0 - z) * n + z * h
        return h_new, h_new

    _, outs = jax.lax.scan(step, jnp.zeros((B, H), jnp.float32), x)
    return outs


def ref_forward(x, p, active_feature_index):
    idx = jnp.asarray(active_feature_index, dtype=jnp.int32)
    xs = jnp.take(x, idx, axis=2)
    out_f = gru_ref(xs, p["w_ih_f"], p["w_hh_f"], p["b_ih_f"], p["b_hh_f"])
    out_b = jnp.flip(gru_ref(jnp.flip(xs, 0), p["w_ih_b"], p["w_hh_b"],
                             p["b_ih_b"], p["b_hh_b"]), 0)
    r_out = jnp.concatenate([out_f, out_b], axis=-1)
    h_state = jnp.stack([out_f[-1], out_b[0]], axis=0)

    h = r_out @ p["w1"].T + p["b1"]
    h = jnp.maximum(h, 0.0) + p["a1"] * jnp.minimum(h, 0.0)
    h = h @ p["w2"].T + p["b2"]
    h = jnp.maximum(h, 0.0) + p["a2"] * jnp.minimum(h, 0.0)
    out = h @ p["w3"].T + p["b3"]
    return out, h_state


# ----------------------------------------------------------------------------
# Deterministic parameter init (shapes match the PyTorch module)
# ----------------------------------------------------------------------------
def init_params(key, input_size):
    ks = jax.random.split(key, 14)
    s = 0.1
    f32 = jnp.float32
    return {
        "w_ih_f": jax.random.normal(ks[0], (3 * H, input_size), f32) * s,
        "w_hh_f": jax.random.normal(ks[1], (3 * H, H), f32) * s,
        "b_ih_f": jax.random.normal(ks[2], (3 * H,), f32) * s,
        "b_hh_f": jax.random.normal(ks[3], (3 * H,), f32) * s,
        "w_ih_b": jax.random.normal(ks[4], (3 * H, input_size), f32) * s,
        "w_hh_b": jax.random.normal(ks[5], (3 * H, H), f32) * s,
        "b_ih_b": jax.random.normal(ks[6], (3 * H,), f32) * s,
        "b_hh_b": jax.random.normal(ks[7], (3 * H,), f32) * s,
        "w1": jax.random.normal(ks[8], (H, 2 * H), f32) * s,
        "b1": jax.random.normal(ks[9], (H,), f32) * s,
        "a1": jnp.array(0.25, f32),                      # PReLU default init
        "w2": jax.random.normal(ks[10], (H, H), f32) * s,
        "b2": jax.random.normal(ks[11], (H,), f32) * s,
        "a2": jnp.array(0.25, f32),
        "w3": jax.random.normal(ks[12], (OUT_SIZE, H), f32) * s,
        "b3": jax.random.normal(ks[13], (OUT_SIZE,), f32) * s,
    }


if __name__ == "__main__":
    T, B, F = 8, 4, 10
    active_feature_index = (0, 2, 3, 5, 7, 9)      # input_size = 6
    input_size = len(active_feature_index)

    key = jax.random.PRNGKey(0)
    kx, kp = jax.random.split(key)
    x = jax.random.normal(kx, (T, B, F), jnp.float32)
    params = init_params(kp, input_size)

    my_outs, h_state = arrival_rate_estimator_forward(
        x, params, active_feature_index=active_feature_index)
    my_outs = jax.block_until_ready(my_outs)
    h_state = jax.block_until_ready(h_state)

    ref_outs, ref_h = ref_forward(x, params, active_feature_index)

    assert my_outs.shape == (T, B, OUT_SIZE), my_outs.shape
    assert h_state.shape == (2, B, H), h_state.shape
    assert np.allclose(np.asarray(my_outs), np.asarray(ref_outs), rtol=1e-2, atol=1e-2)
    assert np.allclose(np.asarray(h_state), np.asarray(ref_h), rtol=1e-2, atol=1e-2)

    print("KERNEL_OK")
</pallas_src>

<mosaic_0001>
module attributes {stable_mosaic.version = 11 : i64} {
  func.func @_bigru_kernel(%arg0: i32, %arg1: memref<8x4x10xf32, #tpu.memory_space<vmem>>, %arg2: memref<8x4x10xf32, #tpu.memory_space<vmem>>, %arg3: memref<10x768xf32, #tpu.memory_space<vmem>>, %arg4: memref<10x768xf32, #tpu.memory_space<vmem>>, %arg5: memref<1x768xf32, #tpu.memory_space<vmem>>, %arg6: memref<256x768xf32, #tpu.memory_space<vmem>>, %arg7: memref<1x768xf32, #tpu.memory_space<vmem>>, %arg8: memref<8x4x128xf32, #tpu.memory_space<vmem>>, %arg9: memref<8x4x128xf32, #tpu.memory_space<vmem>>, %arg10: memref<4x256xf32, #tpu.memory_space<vmem>>) attributes {dimension_semantics = [#tpu.dimension_semantics<arbitrary>], iteration_bounds = array<i64: 1>, scalar_prefetch = 0 : i64, scratch_operands = 1 : i64, tpu.core_type = #tpu.core_type<tc>, window_params = [{transform_indices = @transform_0, window_bounds = array<i64: 8, 4, 10>}, {transform_indices = @transform_1, window_bounds = array<i64: 8, 4, 10>}, {pipeline_mode = #tpu.pipeline_mode<synchronous>, transform_indices = @transform_2, window_bounds = array<i64: 10, 768>}, {pipeline_mode = #tpu.pipeline_mode<synchronous>, transform_indices = @transform_3, window_bounds = array<i64: 10, 768>}, {pipeline_mode = #tpu.pipeline_mode<synchronous>, transform_indices = @transform_4, window_bounds = array<i64: 1, 768>}, {pipeline_mode = #tpu.pipeline_mode<synchronous>, transform_indices = @transform_5, window_bounds = array<i64: 256, 768>}, {pipeline_mode = #tpu.pipeline_mode<synchronous>, transform_indices = @transform_6, window_bounds = array<i64: 1, 768>}, {transform_indices = @transform_7, window_bounds = array<i64: 8, 4, 128>}, {transform_indices = @transform_8, window_bounds = array<i64: 8, 4, 128>}]} {
    %c0_i32 = arith.constant 0 : i32
    %0 = arith.cmpi eq, %arg0, %c0_i32 : i32
    %1 = arith.extui %0 : i1 to i32
    %c0_i32_0 = arith.constant 0 : i32
    %2 = arith.cmpi ne, %1, %c0_i32_0 : i32
    scf.if %2 {
      %cst_196 = arith.constant 0.000000e+00 : f32
      %413 = vector.broadcast %cst_196 : f32 to vector<4x256xf32>
      %c0_197 = arith.constant 0 : index
      %c0_198 = arith.constant 0 : index
      %414 = vector.load %arg10[%c0_197, %c0_198] : memref<4x256xf32, #tpu.memory_space<vmem>>, vector<4x256xf32>
      tpu.vector_store %arg10[%c0_197, %c0_198], %413 {strides = array<i32>} : memref<4x256xf32, #tpu.memory_space<vmem>>, vector<4x256xf32>,
    } else {
    }
    %c0 = arith.constant 0 : index
    %c0_1 = arith.constant 0 : index
    %3 = vector.load %arg10[%c0, %c0_1] : memref<4x256xf32, #tpu.memory_space<vmem>>, vector<4x256xf32>
    %c0_i32_2 = arith.constant 0 : i32
    %c7_i32 = arith.constant 7 : i32
    %4 = arith.subi %c7_i32, %c0_i32_2 : i32
    %5 = arith.index_cast %c0_i32_2 : i32 to index
    %c0_3 = arith.constant 0 : index
    %c0_4 = arith.constant 0 : index
    %6 = vector.load %arg1[%5, %c0_3, %c0_4] : memref<8x4x10xf32, #tpu.memory_space<vmem>>, vector<1x4x10xf32>
    %7 = vector.shape_cast %6 : vector<1x4x10xf32> to vector<4x10xf32>
    %c0_5 = arith.constant 0 : index
    %c0_6 = arith.constant 0 : index
    %8 = vector.load %arg3[%c0_5, %c0_6] : memref<10x768xf32, #tpu.memory_space<vmem>>, vector<10x768xf32>
    %cst = arith.constant dense<0.000000e+00> : vector<4x768xf32>
    %9 = tpu.matmul %7, %8, %cst {dimension_numbers = #tpu.dot_dimension_numbers<[1], [0], [0], [1], [0, 0, 1, 1], [], []>} : vector<4x10xf32>, vector<10x768xf32>, vector<4x768xf32> -> vector<4x768xf32>
    %10 = arith.index_cast %4 : i32 to index
    %c0_7 = arith.constant 0 : index
    %c0_8 = arith.constant 0 : index
    %11 = vector.load %arg2[%10, %c0_7, %c0_8] : memref<8x4x10xf32, #tpu.memory_space<vmem>>, vector<1x4x10xf32>
    %12 = vector.shape_cast %11 : vector<1x4x10xf32> to vector<4x10xf32>
    %c0_9 = arith.constant 0 : index
    %c0_10 = arith.constant 0 : index
    %13 = vector.load %arg4[%c0_9, %c0_10] : memref<10x768xf32, #tpu.memory_space<vmem>>, vector<10x768xf32>
    %cst_11 = arith.constant dense<0.000000e+00> : vector<4x768xf32>
    %14 = tpu.matmul %12, %13, %cst_11 {dimension_numbers = #tpu.dot_dimension_numbers<[1], [0], [0], [1], [0, 0, 1, 1], [], []>} : vector<4x10xf32>, vector<10x768xf32>, vector<4x768xf32> -> vector<4x768xf32>
    %15 = arith.addf %9, %14 : vector<4x768xf32>
    %c0_12 = arith.constant 0 : index
    %c0_13 = arith.constant 0 : index
    %16 = vector.load %arg5[%c0_12, %c0_13] : memref<1x768xf32, #tpu.memory_space<vmem>>, vector<1x768xf32>
    %17 = vector.broadcast %16 : vector<1x768xf32> to vector<4x768xf32>
    %18 = arith.addf %15, %17 : vector<4x768xf32>
    %c0_14 = arith.constant 0 : index
    %c0_15 = arith.constant 0 : index
    %19 = vector.load %arg6[%c0_14, %c0_15] : memref<256x768xf32, #tpu.memory_space<vmem>>, vector<256x768xf32>
    %cst_16 = arith.constant dense<0.000000e+00> : vector<4x768xf32>
    %20 = tpu.matmul %3, %19, %cst_16 {dimension_numbers = #tpu.dot_dimension_numbers<[1], [0], [0], [1], [0, 0, 1, 1], [], []>} : vector<4x256xf32>, vector<256x768xf32>, vector<4x768xf32> -> vector<4x768xf32>
    %c0_17 = arith.constant 0 : index
    %c0_18 = arith.constant 0 : index
    %21 = vector.load %arg7[%c0_17, %c0_18] : memref<1x768xf32, #tpu.memory_space<vmem>>, vector<1x768xf32>
    %22 = vector.broadcast %21 : vector<1x768xf32> to vector<4x768xf32>
    %23 = arith.addf %20, %22 : vector<4x768xf32>
    %24 = vector.extract_strided_slice %18 {offsets = [0, 0], sizes = [4, 512], strides = [1, 1]} : vector<4x768xf32> to vector<4x512xf32>
    %25 = vector.extract_strided_slice %23 {offsets = [0, 0], sizes = [4, 512], strides = [1, 1]} : vector<4x768xf32> to vector<4x512xf32>
    %26 = arith.addf %24, %25 : vector<4x512xf32>
    %27 = arith.negf %26 : vector<4x512xf32>
    %28 = math.exp %27 : vector<4x512xf32>
    %cst_19 = arith.constant 1.000000e+00 : f32
    %29 = vector.broadcast %cst_19 : f32 to vector<4x512xf32>
    %30 = arith.addf %29, %28 : vector<4x512xf32>
    %31 = arith.divf %29, %30 : vector<4x512xf32>
    %32 = vector.extract_strided_slice %31 {offsets = [0, 0], sizes = [4, 256], strides = [1, 1]} : vector<4x512xf32> to vector<4x256xf32>
    %33 = vector.extract_strided_slice %31 {offsets = [0, 256], sizes = [4, 256], strides = [1, 1]} : vector<4x512xf32> to vector<4x256xf32>
    %34 = vector.extract_strided_slice %18 {offsets = [0, 512], sizes = [4, 256], strides = [1, 1]} : vector<4x768xf32> to vector<4x256xf32>
    %35 = vector.extract_strided_slice %23 {offsets = [0, 512], sizes = [4, 256], strides = [1, 1]} : vector<4x768xf32> to vector<4x256xf32>
    %36 = arith.mulf %32, %35 : vector<4x256xf32>
    %37 = arith.addf %34, %36 : vector<4x256xf32>
    %38 = math.tanh %37 : vector<4x256xf32>
    %cst_20 = arith.constant 1.000000e+00 : f32
    %39 = vector.broadcast %cst_20 : f32 to vector<4x256xf32>
    %40 = arith.subf %39, %33 : vector<4x256xf32>
    %41 = arith.mulf %40, %38 : vector<4x256xf32>
    %42 = arith.mulf %33, %3 : vector<4x256xf32>
    %43 = arith.addf %41, %42 : vector<4x256xf32>
    %44 = vector.extract_strided_slice %43 {offsets = [0, 0], sizes = [4, 128], strides = [1, 1]} : vector<4x256xf32> to vector<4x128xf32>
    %45 = vector.extract_strided_slice %43 {offsets = [0, 128], sizes = [4, 128], strides = [1, 1]} : vector<4x256xf32> to vector<4x128xf32>
    %46 = arith.index_cast %c0_i32_2 : i32 to index
    %c0_21 = arith.constant 0 : index
    %c0_22 = arith.constant 0 : index
    %47 = vector.load %arg8[%46, %c0_21, %c0_22] : memref<8x4x128xf32, #tpu.memory_space<vmem>>, vector<1x4x128xf32>
    %48 = vector.shape_cast %47 : vector<1x4x128xf32> to vector<4x128xf32>
    %49 = vector.shape_cast %44 : vector<4x128xf32> to vector<1x4x128xf32>
    tpu.vector_store %arg8[%46, %c0_21, %c0_22], %49 {strides = array<i32>} : memref<8x4x128xf32, #tpu.memory_space<vmem>>, vector<1x4x128xf32>,
    %50 = arith.index_cast %4 : i32 to index
    %c0_23 = arith.constant 0 : index
    %c0_24 = arith.constant 0 : index
    %51 = vector.load %arg9[%50, %c0_23, %c0_24] : memref<8x4x128xf32, #tpu.memory_space<vmem>>, vector<1x4x128xf32>
    %52 = vector.shape_cast %51 : vector<1x4x128xf32> to vector<4x128xf32>
    %53 = vector.shape_cast %45 : vector<4x128xf32> to vector<1x4x128xf32>
    tpu.vector_store %arg9[%50, %c0_23, %c0_24], %53 {strides = array<i32>} : memref<8x4x128xf32, #tpu.memory_space<vmem>>, vector<1x4x128xf32>,
    %54 = tpu.concatenate %44, %45 in 1 : vector<4x128xf32>, vector<4x128xf32> -> vector<4x256xf32>
    %c1_i32 = arith.constant 1 : i32
    %c7_i32_25 = arith.constant 7 : i32
    %55 = arith.subi %c7_i32_25, %c1_i32 : i32
    %56 = arith.index_cast %c1_i32 : i32 to index
    %c0_26 = arith.constant 0 : index
    %c0_27 = arith.constant 0 : index
    %57 = vector.load %arg1[%56, %c0_26, %c0_27] : memref<8x4x10xf32, #tpu.memory_space<vmem>>, vector<1x4x10xf32>
    %58 = vector.shape_cast %57 : vector<1x4x10xf32> to vector<4x10xf32>
    %c0_28 = arith.constant 0 : index
    %c0_29 = arith.constant 0 : index
    %59 = vector.load %arg3[%c0_28, %c0_29] : memref<10x768xf32, #tpu.memory_space<vmem>>, vector<10x768xf32>
    %cst_30 = arith.constant dense<0.000000e+00> : vector<4x768xf32>
    %60 = tpu.matmul %58, %59, %cst_30 {dimension_numbers = #tpu.dot_dimension_numbers<[1], [0], [0], [1], [0, 0, 1, 1], [], []>} : vector<4x10xf32>, vector<10x768xf32>, vector<4x768xf32> -> vector<4x768xf32>
    %61 = arith.index_cast %55 : i32 to index
    %c0_31 = arith.constant 0 : index
    %c0_32 = arith.constant 0 : index
    %62 = vector.load %arg2[%61, %c0_31, %c0_32] : memref<8x4x10xf32, #tpu.memory_space<vmem>>, vector<1x4x10xf32>
    %63 = vector.shape_cast %62 : vector<1x4x10xf32> to vector<4x10xf32>
    %c0_33 = arith.constant 0 : index
    %c0_34 = arith.constant 0 : index
    %64 = vector.load %arg4[%c0_33, %c0_34] : memref<10x768xf32, #tpu.memory_space<vmem>>, vector<10x768xf32>
    %cst_35 = arith.constant dense<0.000000e+00> : vector<4x768xf32>
    %65 = tpu.matmul %63, %64, %cst_35 {dimension_numbers = #tpu.dot_dimension_numbers<[1], [0], [0], [1], [0, 0, 1, 1], [], []>} : vector<4x10xf32>, vector<10x768xf32>, vector<4x768xf32> -> vector<4x768xf32>
    %66 = arith.addf %60, %65 : vector<4x768xf32>
    %c0_36 = arith.constant 0 : index
    %c0_37 = arith.constant 0 : index
    %67 = vector.load %arg5[%c0_36, %c0_37] : memref<1x768xf32, #tpu.memory_space<vmem>>, vector<1x768xf32>
    %68 = vector.broadcast %67 : vector<1x768xf32> to vector<4x768xf32>
    %69 = arith.addf %66, %68 : vector<4x768xf32>
    %c0_38 = arith.constant 0 : index
    %c0_39 = arith.constant 0 : index
    %70 = vector.load %arg6[%c0_38, %c0_39] : memref<256x768xf32, #tpu.memory_space<vmem>>, vector<256x768xf32>
    %cst_40 = arith.constant dense<0.000000e+00> : vector<4x768xf32>
    %71 = tpu.matmul %54, %70, %cst_40 {dimension_numbers = #tpu.dot_dimension_numbers<[1], [0], [0], [1], [0, 0, 1, 1], [], []>} : vector<4x256xf32>, vector<256x768xf32>, vector<4x768xf32> -> vector<4x768xf32>
    %c0_41 = arith.constant 0 : index
    %c0_42 = arith.constant 0 : index
    %72 = vector.load %arg7[%c0_41, %c0_42] : memref<1x768xf32, #tpu.memory_space<vmem>>, vector<1x768xf32>
    %73 = vector.broadcast %72 : vector<1x768xf32> to vector<4x768xf32>
    %74 = arith.addf %71, %73 : vector<4x768xf32>
    %75 = vector.extract_strided_slice %69 {offsets = [0, 0], sizes = [4, 512], strides = [1, 1]} : vector<4x768xf32> to vector<4x512xf32>
    %76 = vector.extract_strided_slice %74 {offsets = [0, 0], sizes = [4, 512], strides = [1, 1]} : vector<4x768xf32> to vector<4x512xf32>
    %77 = arith.addf %75, %76 : vector<4x512xf32>
    %78 = arith.negf %77 : vector<4x512xf32>
    %79 = math.exp %78 : vector<4x512xf32>
    %cst_43 = arith.constant 1.000000e+00 : f32
    %80 = vector.broadcast %cst_43 : f32 to vector<4x512xf32>
    %81 = arith.addf %80, %79 : vector<4x512xf32>
    %82 = arith.divf %80, %81 : vector<4x512xf32>
    %83 = vector.extract_strided_slice %82 {offsets = [0, 0], sizes = [4, 256], strides = [1, 1]} : vector<4x512xf32> to vector<4x256xf32>
    %84 = vector.extract_strided_slice %82 {offsets = [0, 256], sizes = [4, 256], strides = [1, 1]} : vector<4x512xf32> to vector<4x256xf32>
    %85 = vector.extract_strided_slice %69 {offsets = [0, 512], sizes = [4, 256], strides = [1, 1]} : vector<4x768xf32> to vector<4x256xf32>
    %86 = vector.extract_strided_slice %74 {offsets = [0, 512], sizes = [4, 256], strides = [1, 1]} : vector<4x768xf32> to vector<4x256xf32>
    %87 = arith.mulf %83, %86 : vector<4x256xf32>
    %88 = arith.addf %85, %87 : vector<4x256xf32>
    %89 = math.tanh %88 : vector<4x256xf32>
    %cst_44 = arith.constant 1.000000e+00 : f32
    %90 = vector.broadcast %cst_44 : f32 to vector<4x256xf32>
    %91 = arith.subf %90, %84 : vector<4x256xf32>
    %92 = arith.mulf %91, %89 : vector<4x256xf32>
    %93 = arith.mulf %84, %54 : vector<4x256xf32>
    %94 = arith.addf %92, %93 : vector<4x256xf32>
    %95 = vector.extract_strided_slice %94 {offsets = [0, 0], sizes = [4, 128], strides = [1, 1]} : vector<4x256xf32> to vector<4x128xf32>
    %96 = vector.extract_strided_slice %94 {offsets = [0, 128], sizes = [4, 128], strides = [1, 1]} : vector<4x256xf32> to vector<4x128xf32>
    %97 = arith.index_cast %c1_i32 : i32 to index
    %c0_45 = arith.constant 0 : index
    %c0_46 = arith.constant 0 : index
    %98 = vector.load %arg8[%97, %c0_45, %c0_46] : memref<8x4x128xf32, #tpu.memory_space<vmem>>, vector<1x4x128xf32>
    %99 = vector.shape_cast %98 : vector<1x4x128xf32> to vector<4x128xf32>
    %100 = vector.shape_cast %95 : vector<4x128xf32> to vector<1x4x128xf32>
    tpu.vector_store %arg8[%97, %c0_45, %c0_46], %100 {strides = array<i32>} : memref<8x4x128xf32, #tpu.memory_space<vmem>>, vector<1x4x128xf32>,
    %101 = arith.index_cast %55 : i32 to index
    %c0_47 = arith.constant 0 : index
    %c0_48 = arith.constant 0 : index
    %102 = vector.load %arg9[%101, %c0_47, %c0_48] : memref<8x4x128xf32, #tpu.memory_space<vmem>>, vector<1x4x128xf32>
    %103 = vector.shape_cast %102 : vector<1x4x128xf32> to vector<4x128xf32>
    %104 = vector.shape_cast %96 : vector<4x128xf32> to vector<1x4x128xf32>
    tpu.vector_store %arg9[%101, %c0_47, %c0_48], %104 {strides = array<i32>} : memref<8x4x128xf32, #tpu.memory_space<vmem>>, vector<1x4x128xf32>,
    %105 = tpu.concatenate %95, %96 in 1 : vector<4x128xf32>, vector<4x128xf32> -> vector<4x256xf32>
    %c2_i32 = arith.constant 2 : i32
    %c7_i32_49 = arith.constant 7 : i32
    %106 = arith.subi %c7_i32_49, %c2_i32 : i32
    %107 = arith.index_cast %c2_i32 : i32 to index
    %c0_50 = arith.constant 0 : index
    %c0_51 = arith.constant 0 : index
    %108 = vector.load %arg1[%107, %c0_50, %c0_51] : memref<8x4x10xf32, #tpu.memory_space<vmem>>, vector<1x4x10xf32>
    %109 = vector.shape_cast %108 : vector<1x4x10xf32> to vector<4x10xf32>
    %c0_52 = arith.constant 0 : index
    %c0_53 = arith.constant 0 : index
    %110 = vector.load %arg3[%c0_52, %c0_53] : memref<10x768xf32, #tpu.memory_space<vmem>>, vector<10x768xf32>
    %cst_54 = arith.constant dense<0.000000e+00> : vector<4x768xf32>
    %111 = tpu.matmul %109, %110, %cst_54 {dimension_numbers = #tpu.dot_dimension_numbers<[1], [0], [0], [1], [0, 0, 1, 1], [], []>} : vector<4x10xf32>, vector<10x768xf32>, vector<4x768xf32> -> vector<4x768xf32>
    %112 = arith.index_cast %106 : i32 to index
    %c0_55 = arith.constant 0 : index
    %c0_56 = arith.constant 0 : index
    %113 = vector.load %arg2[%112, %c0_55, %c0_56] : memref<8x4x10xf32, #tpu.memory_space<vmem>>, vector<1x4x10xf32>
    %114 = vector.shape_cast %113 : vector<1x4x10xf32> to vector<4x10xf32>
    %c0_57 = arith.constant 0 : index
    %c0_58 = arith.constant 0 : index
    %115 = vector.load %arg4[%c0_57, %c0_58] : memref<10x768xf32, #tpu.memory_space<vmem>>, vector<10x768xf32>
    %cst_59 = arith.constant dense<0.000000e+00> : vector<4x768xf32>
    %116 = tpu.matmul %114, %115, %cst_59 {dimension_numbers = #tpu.dot_dimension_numbers<[1], [0], [0], [1], [0, 0, 1, 1], [], []>} : vector<4x10xf32>, vector<10x768xf32>, vector<4x768xf32> -> vector<4x768xf32>
    %117 = arith.addf %111, %116 : vector<4x768xf32>
    %c0_60 = arith.constant 0 : index
    %c0_61 = arith.constant 0 : index
    %118 = vector.load %arg5[%c0_60, %c0_61] : memref<1x768xf32, #tpu.memory_space<vmem>>, vector<1x768xf32>
    %119 = vector.broadcast %118 : vector<1x768xf32> to vector<4x768xf32>
    %120 = arith.addf %117, %119 : vector<4x768xf32>
    %c0_62 = arith.constant 0 : index
    %c0_63 = arith.constant 0 : index
    %121 = vector.load %arg6[%c0_62, %c0_63] : memref<256x768xf32, #tpu.memory_space<vmem>>, vector<256x768xf32>
    %cst_64 = arith.constant dense<0.000000e+00> : vector<4x768xf32>
    %122 = tpu.matmul %105, %121, %cst_64 {dimension_numbers = #tpu.dot_dimension_numbers<[1], [0], [0], [1], [0, 0, 1, 1], [], []>} : vector<4x256xf32>, vector<256x768xf32>, vector<4x768xf32> -> vector<4x768xf32>
    %c0_65 = arith.constant 0 : index
    %c0_66 = arith.constant 0 : index
    %123 = vector.load %arg7[%c0_65, %c0_66] : memref<1x768xf32, #tpu.memory_space<vmem>>, vector<1x768xf32>
    %124 = vector.broadcast %123 : vector<1x768xf32> to vector<4x768xf32>
    %125 = arith.addf %122, %124 : vector<4x768xf32>
    %126 = vector.extract_strided_slice %120 {offsets = [0, 0], sizes = [4, 512], strides = [1, 1]} : vector<4x768xf32> to vector<4x512xf32>
    %127 = vector.extract_strided_slice %125 {offsets = [0, 0], sizes = [4, 512], strides = [1, 1]} : vector<4x768xf32> to vector<4x512xf32>
    %128 = arith.addf %126, %127 : vector<4x512xf32>
    %129 = arith.negf %128 : vector<4x512xf32>
    %130 = math.exp %129 : vector<4x512xf32>
    %cst_67 = arith.constant 1.000000e+00 : f32
    %131 = vector.broadcast %cst_67 : f32 to vector<4x512xf32>
    %132 = arith.addf %131, %130 : vector<4x512xf32>
    %133 = arith.divf %131, %132 : vector<4x512xf32>
    %134 = vector.extract_strided_slice %133 {offsets = [0, 0], sizes = [4, 256], strides = [1, 1]} : vector<4x512xf32> to vector<4x256xf32>
    %135 = vector.extract_strided_slice %133 {offsets = [0, 256], sizes = [4, 256], strides = [1, 1]} : vector<4x512xf32> to vector<4x256xf32>
    %136 = vector.extract_strided_slice %120 {offsets = [0, 512], sizes = [4, 256], strides = [1, 1]} : vector<4x768xf32> to vector<4x256xf32>
    %137 = vector.extract_strided_slice %125 {offsets = [0, 512], sizes = [4, 256], strides = [1, 1]} : vector<4x768xf32> to vector<4x256xf32>
    %138 = arith.mulf %134, %137 : vector<4x256xf32>
    %139 = arith.addf %136, %138 : vector<4x256xf32>
    %140 = math.tanh %139 : vector<4x256xf32>
    %cst_68 = arith.constant 1.000000e+00 : f32
    %141 = vector.broadcast %cst_68 : f32 to vector<4x256xf32>
    %142 = arith.subf %141, %135 : vector<4x256xf32>
    %143 = arith.mulf %142, %140 : vector<4x256xf32>
    %144 = arith.mulf %135, %105 : vector<4x256xf32>
    %145 = arith.addf %143, %144 : vector<4x256xf32>
    %146 = vector.extract_strided_slice %145 {offsets = [0, 0], sizes = [4, 128], strides = [1, 1]} : vector<4x256xf32> to vector<4x128xf32>
    %147 = vector.extract_strided_slice %145 {offsets = [0, 128], sizes = [4, 128], strides = [1, 1]} : vector<4x256xf32> to vector<4x128xf32>
    %148 = arith.index_cast %c2_i32 : i32 to index
    %c0_69 = arith.constant 0 : index
    %c0_70 = arith.constant 0 : index
    %149 = vector.load %arg8[%148, %c0_69, %c0_70] : memref<8x4x128xf32, #tpu.memory_space<vmem>>, vector<1x4x128xf32>
    %150 = vector.shape_cast %149 : vector<1x4x128xf32> to vector<4x128xf32>
    %151 = vector.shape_cast %146 : vector<4x128xf32> to vector<1x4x128xf32>
    tpu.vector_store %arg8[%148, %c0_69, %c0_70], %151 {strides = array<i32>} : memref<8x4x128xf32, #tpu.memory_space<vmem>>, vector<1x4x128xf32>,
    %152 = arith.index_cast %106 : i32 to index
    %c0_71 = arith.constant 0 : index
    %c0_72 = arith.constant 0 : index
    %153 = vector.load %arg9[%152, %c0_71, %c0_72] : memref<8x4x128xf32, #tpu.memory_space<vmem>>, vector<1x4x128xf32>
    %154 = vector.shape_cast %153 : vector<1x4x128xf32> to vector<4x128xf32>
    %155 = vector.shape_cast %147 : vector<4x128xf32> to vector<1x4x128xf32>
    tpu.vector_store %arg9[%152, %c0_71, %c0_72], %155 {strides = array<i32>} : memref<8x4x128xf32, #tpu.memory_space<vmem>>, vector<1x4x128xf32>,
    %156 = tpu.concatenate %146, %147 in 1 : vector<4x128xf32>, vector<4x128xf32> -> vector<4x256xf32>
    %c3_i32 = arith.constant 3 : i32
    %c7_i32_73 = arith.constant 7 : i32
    %157 = arith.subi %c7_i32_73, %c3_i32 : i32
    %158 = arith.index_cast %c3_i32 : i32 to index
    %c0_74 = arith.constant 0 : index
    %c0_75 = arith.constant 0 : index
    %159 = vector.load %arg1[%158, %c0_74, %c0_75] : memref<8x4x10xf32, #tpu.memory_space<vmem>>, vector<1x4x10xf32>
    %160 = vector.shape_cast %159 : vector<1x4x10xf32> to vector<4x10xf32>
    %c0_76 = arith.constant 0 : index
    %c0_77 = arith.constant 0 : index
    %161 = vector.load %arg3[%c0_76, %c0_77] : memref<10x768xf32, #tpu.memory_space<vmem>>, vector<10x768xf32>
    %cst_78 = arith.constant dense<0.000000e+00> : vector<4x768xf32>
    %162 = tpu.matmul %160, %161, %cst_78 {dimension_numbers = #tpu.dot_dimension_numbers<[1], [0], [0], [1], [0, 0, 1, 1], [], []>} : vector<4x10xf32>, vector<10x768xf32>, vector<4x768xf32> -> vector<4x768xf32>
    %163 = arith.index_cast %157 : i32 to index
    %c0_79 = arith.constant 0 : index
    %c0_80 = arith.constant 0 : index
    %164 = vector.load %arg2[%163, %c0_79, %c0_80] : memref<8x4x10xf32, #tpu.memory_space<vmem>>, vector<1x4x10xf32>
    %165 = vector.shape_cast %164 : vector<1x4x10xf32> to vector<4x10xf32>
    %c0_81 = arith.constant 0 : index
    %c0_82 = arith.constant 0 : index
    %166 = vector.load %arg4[%c0_81, %c0_82] : memref<10x768xf32, #tpu.memory_space<vmem>>, vector<10x768xf32>
    %cst_83 = arith.constant dense<0.000000e+00> : vector<4x768xf32>
    %167 = tpu.matmul %165, %166, %cst_83 {dimension_numbers = #tpu.dot_dimension_numbers<[1], [0], [0], [1], [0, 0, 1, 1], [], []>} : vector<4x10xf32>, vector<10x768xf32>, vector<4x768xf32> -> vector<4x768xf32>
    %168 = arith.addf %162, %167 : vector<4x768xf32>
    %c0_84 = arith.constant 0 : index
    %c0_85 = arith.constant 0 : index
    %169 = vector.load %arg5[%c0_84, %c0_85] : memref<1x768xf32, #tpu.memory_space<vmem>>, vector<1x768xf32>
    %170 = vector.broadcast %169 : vector<1x768xf32> to vector<4x768xf32>
    %171 = arith.addf %168, %170 : vector<4x768xf32>
    %c0_86 = arith.constant 0 : index
    %c0_87 = arith.constant 0 : index
    %172 = vector.load %arg6[%c0_86, %c0_87] : memref<256x768xf32, #tpu.memory_space<vmem>>, vector<256x768xf32>
    %cst_88 = arith.constant dense<0.000000e+00> : vector<4x768xf32>
    %173 = tpu.matmul %156, %172, %cst_88 {dimension_numbers = #tpu.dot_dimension_numbers<[1], [0], [0], [1], [0, 0, 1, 1], [], []>} : vector<4x256xf32>, vector<256x768xf32>, vector<4x768xf32> -> vector<4x768xf32>
    %c0_89 = arith.constant 0 : index
    %c0_90 = arith.constant 0 : index
    %174 = vector.load %arg7[%c0_89, %c0_90] : memref<1x768xf32, #tpu.memory_space<vmem>>, vector<1x768xf32>
    %175 = vector.broadcast %174 : vector<1x768xf32> to vector<4x768xf32>
    %176 = arith.addf %173, %175 : vector<4x768xf32>
    %177 = vector.extract_strided_slice %171 {offsets = [0, 0], sizes = [4, 512], strides = [1, 1]} : vector<4x768xf32> to vector<4x512xf32>
    %178 = vector.extract_strided_slice %176 {offsets = [0, 0], sizes = [4, 512], strides = [1, 1]} : vector<4x768xf32> to vector<4x512xf32>
    %179 = arith.addf %177, %178 : vector<4x512xf32>
    %180 = arith.negf %179 : vector<4x512xf32>
    %181 = math.exp %180 : vector<4x512xf32>
    %cst_91 = arith.constant 1.000000e+00 : f32
    %182 = vector.broadcast %cst_91 : f32 to vector<4x512xf32>
    %183 = arith.addf %182, %181 : vector<4x512xf32>
    %184 = arith.divf %182, %183 : vector<4x512xf32>
    %185 = vector.extract_strided_slice %184 {offsets = [0, 0], sizes = [4, 256], strides = [1, 1]} : vector<4x512xf32> to vector<4x256xf32>
    %186 = vector.extract_strided_slice %184 {offsets = [0, 256], sizes = [4, 256], strides = [1, 1]} : vector<4x512xf32> to vector<4x256xf32>
    %187 = vector.extract_strided_slice %171 {offsets = [0, 512], sizes = [4, 256], strides = [1, 1]} : vector<4x768xf32> to vector<4x256xf32>
    %188 = vector.extract_strided_slice %176 {offsets = [0, 512], sizes = [4, 256], strides = [1, 1]} : vector<4x768xf32> to vector<4x256xf32>
    %189 = arith.mulf %185, %188 : vector<4x256xf32>
    %190 = arith.addf %187, %189 : vector<4x256xf32>
    %191 = math.tanh %190 : vector<4x256xf32>
    %cst_92 = arith.constant 1.000000e+00 : f32
    %192 = vector.broadcast %cst_92 : f32 to vector<4x256xf32>
    %193 = arith.subf %192, %186 : vector<4x256xf32>
    %194 = arith.mulf %193, %191 : vector<4x256xf32>
    %195 = arith.mulf %186, %156 : vector<4x256xf32>
    %196 = arith.addf %194, %195 : vector<4x256xf32>
    %197 = vector.extract_strided_slice %196 {offsets = [0, 0], sizes = [4, 128], strides = [1, 1]} : vector<4x256xf32> to vector<4x128xf32>
    %198 = vector.extract_strided_slice %196 {offsets = [0, 128], sizes = [4, 128], strides = [1, 1]} : vector<4x256xf32> to vector<4x128xf32>
    %199 = arith.index_cast %c3_i32 : i32 to index
    %c0_93 = arith.constant 0 : index
    %c0_94 = arith.constant 0 : index
    %200 = vector.load %arg8[%199, %c0_93, %c0_94] : memref<8x4x128xf32, #tpu.memory_space<vmem>>, vector<1x4x128xf32>
    %201 = vector.shape_cast %200 : vector<1x4x128xf32> to vector<4x128xf32>
    %202 = vector.shape_cast %197 : vector<4x128xf32> to vector<1x4x128xf32>
    tpu.vector_store %arg8[%199, %c0_93, %c0_94], %202 {strides = array<i32>} : memref<8x4x128xf32, #tpu.memory_space<vmem>>, vector<1x4x128xf32>,
    %203 = arith.index_cast %157 : i32 to index
    %c0_95 = arith.constant 0 : index
    %c0_96 = arith.constant 0 : index
    %204 = vector.load %arg9[%203, %c0_95, %c0_96] : memref<8x4x128xf32, #tpu.memory_space<vmem>>, vector<1x4x128xf32>
    %205 = vector.shape_cast %204 : vector<1x4x128xf32> to vector<4x128xf32>
    %206 = vector.shape_cast %198 : vector<4x128xf32> to vector<1x4x128xf32>
    tpu.vector_store %arg9[%203, %c0_95, %c0_96], %206 {strides = array<i32>} : memref<8x4x128xf32, #tpu.memory_space<vmem>>, vector<1x4x128xf32>,
    %207 = tpu.concatenate %197, %198 in 1 : vector<4x128xf32>, vector<4x128xf32> -> vector<4x256xf32>
    %c4_i32 = arith.constant 4 : i32
    %c7_i32_97 = arith.constant 7 : i32
    %208 = arith.subi %c7_i32_97, %c4_i32 : i32
    %209 = arith.index_cast %c4_i32 : i32 to index
    %c0_98 = arith.constant 0 : index
    %c0_99 = arith.constant 0 : index
    %210 = vector.load %arg1[%209, %c0_98, %c0_99] : memref<8x4x10xf32, #tpu.memory_space<vmem>>, vector<1x4x10xf32>
    %211 = vector.shape_cast %210 : vector<1x4x10xf32> to vector<4x10xf32>
    %c0_100 = arith.constant 0 : index
    %c0_101 = arith.constant 0 : index
    %212 = vector.load %arg3[%c0_100, %c0_101] : memref<10x768xf32, #tpu.memory_space<vmem>>, vector<10x768xf32>
    %cst_102 = arith.constant dense<0.000000e+00> : vector<4x768xf32>
    %213 = tpu.matmul %211, %212, %cst_102 {dimension_numbers = #tpu.dot_dimension_numbers<[1], [0], [0], [1], [0, 0, 1, 1], [], []>} : vector<4x10xf32>, vector<10x768xf32>, vector<4x768xf32> -> vector<4x768xf32>
    %214 = arith.index_cast %208 : i32 to index
    %c0_103 = arith.constant 0 : index
    %c0_104 = arith.constant 0 : index
    %215 = vector.load %arg2[%214, %c0_103, %c0_104] : memref<8x4x10xf32, #tpu.memory_space<vmem>>, vector<1x4x10xf32>
    %216 = vector.shape_cast %215 : vector<1x4x10xf32> to vector<4x10xf32>
    %c0_105 = arith.constant 0 : index
    %c0_106 = arith.constant 0 : index
    %217 = vector.load %arg4[%c0_105, %c0_106] : memref<10x768xf32, #tpu.memory_space<vmem>>, vector<10x768xf32>
    %cst_107 = arith.constant dense<0.000000e+00> : vector<4x768xf32>
    %218 = tpu.matmul %216, %217, %cst_107 {dimension_numbers = #tpu.dot_dimension_numbers<[1], [0], [0], [1], [0, 0, 1, 1], [], []>} : vector<4x10xf32>, vector<10x768xf32>, vector<4x768xf32> -> vector<4x768xf32>
    %219 = arith.addf %213, %218 : vector<4x768xf32>
    %c0_108 = arith.constant 0 : index
    %c0_109 = arith.constant 0 : index
    %220 = vector.load %arg5[%c0_108, %c0_109] : memref<1x768xf32, #tpu.memory_space<vmem>>, vector<1x768xf32>
    %221 = vector.broadcast %220 : vector<1x768xf32> to vector<4x768xf32>
    %222 = arith.addf %219, %221 : vector<4x768xf32>
    %c0_110 = arith.constant 0 : index
    %c0_111 = arith.constant 0 : index
    %223 = vector.load %arg6[%c0_110, %c0_111] : memref<256x768xf32, #tpu.memory_space<vmem>>, vector<256x768xf32>
    %cst_112 = arith.constant dense<0.000000e+00> : vector<4x768xf32>
    %224 = tpu.matmul %207, %223, %cst_112 {dimension_numbers = #tpu.dot_dimension_numbers<[1], [0], [0], [1], [0, 0, 1, 1], [], []>} : vector<4x256xf32>, vector<256x768xf32>, vector<4x768xf32> -> vector<4x768xf32>
    %c0_113 = arith.constant 0 : index
    %c0_114 = arith.constant 0 : index
    %225 = vector.load %arg7[%c0_113, %c0_114] : memref<1x768xf32, #tpu.memory_space<vmem>>, vector<1x768xf32>
    %226 = vector.broadcast %225 : vector<1x768xf32> to vector<4x768xf32>
    %227 = arith.addf %224, %226 : vector<4x768xf32>
    %228 = vector.extract_strided_slice %222 {offsets = [0, 0], sizes = [4, 512], strides = [1, 1]} : vector<4x768xf32> to vector<4x512xf32>
    %229 = vector.extract_strided_slice %227 {offsets = [0, 0], sizes = [4, 512], strides = [1, 1]} : vector<4x768xf32> to vector<4x512xf32>
    %230 = arith.addf %228, %229 : vector<4x512xf32>
    %231 = arith.negf %230 : vector<4x512xf32>
    %232 = math.exp %231 : vector<4x512xf32>
    %cst_115 = arith.constant 1.000000e+00 : f32
    %233 = vector.broadcast %cst_115 : f32 to vector<4x512xf32>
    %234 = arith.addf %233, %232 : vector<4x512xf32>
    %235 = arith.divf %233, %234 : vector<4x512xf32>
    %236 = vector.extract_strided_slice %235 {offsets = [0, 0], sizes = [4, 256], strides = [1, 1]} : vector<4x512xf32> to vector<4x256xf32>
    %237 = vector.extract_strided_slice %235 {offsets = [0, 256], sizes = [4, 256], strides = [1, 1]} : vector<4x512xf32> to vector<4x256xf32>
    %238 = vector.extract_strided_slice %222 {offsets = [0, 512], sizes = [4, 256], strides = [1, 1]} : vector<4x768xf32> to vector<4x256xf32>
    %239 = vector.extract_strided_slice %227 {offsets = [0, 512], sizes = [4, 256], strides = [1, 1]} : vector<4x768xf32> to vector<4x256xf32>
    %240 = arith.mulf %236, %239 : vector<4x256xf32>
    %241 = arith.addf %238, %240 : vector<4x256xf32>
    %242 = math.tanh %241 : vector<4x256xf32>
    %cst_116 = arith.constant 1.000000e+00 : f32
    %243 = vector.broadcast %cst_116 : f32 to vector<4x256xf32>
    %244 = arith.subf %243, %237 : vector<4x256xf32>
    %245 = arith.mulf %244, %242 : vector<4x256xf32>
    %246 = arith.mulf %237, %207 : vector<4x256xf32>
    %247 = arith.addf %245, %246 : vector<4x256xf32>
    %248 = vector.extract_strided_slice %247 {offsets = [0, 0], sizes = [4, 128], strides = [1, 1]} : vector<4x256xf32> to vector<4x128xf32>
    %249 = vector.extract_strided_slice %247 {offsets = [0, 128], sizes = [4, 128], strides = [1, 1]} : vector<4x256xf32> to vector<4x128xf32>
    %250 = arith.index_cast %c4_i32 : i32 to index
    %c0_117 = arith.constant 0 : index
    %c0_118 = arith.constant 0 : index
    %251 = vector.load %arg8[%250, %c0_117, %c0_118] : memref<8x4x128xf32, #tpu.memory_space<vmem>>, vector<1x4x128xf32>
    %252 = vector.shape_cast %251 : vector<1x4x128xf32> to vector<4x128xf32>
    %253 = vector.shape_cast %248 : vector<4x128xf32> to vector<1x4x128xf32>
    tpu.vector_store %arg8[%250, %c0_117, %c0_118], %253 {strides = array<i32>} : memref<8x4x128xf32, #tpu.memory_space<vmem>>, vector<1x4x128xf32>,
    %254 = arith.index_cast %208 : i32 to index
    %c0_119 = arith.constant 0 : index
    %c0_120 = arith.constant 0 : index
    %255 = vector.load %arg9[%254, %c0_119, %c0_120] : memref<8x4x128xf32, #tpu.memory_space<vmem>>, vector<1x4x128xf32>
    %256 = vector.shape_cast %255 : vector<1x4x128xf32> to vector<4x128xf32>
    %257 = vector.shape_cast %249 : vector<4x128xf32> to vector<1x4x128xf32>
    tpu.vector_store %arg9[%254, %c0_119, %c0_120], %257 {strides = array<i32>} : memref<8x4x128xf32, #tpu.memory_space<vmem>>, vector<1x4x128xf32>,
    %258 = tpu.concatenate %248, %249 in 1 : vector<4x128xf32>, vector<4x128xf32> -> vector<4x256xf32>
    %c5_i32 = arith.constant 5 : i32
    %c7_i32_121 = arith.constant 7 : i32
    %259 = arith.subi %c7_i32_121, %c5_i32 : i32
    %260 = arith.index_cast %c5_i32 : i32 to index
    %c0_122 = arith.constant 0 : index
    %c0_123 = arith.constant 0 : index
    %261 = vector.load %arg1[%260, %c0_122, %c0_123] : memref<8x4x10xf32, #tpu.memory_space<vmem>>, vector<1x4x10xf32>
    %262 = vector.shape_cast %261 : vector<1x4x10xf32> to vector<4x10xf32>
    %c0_124 = arith.constant 0 : index
    %c0_125 = arith.constant 0 : index
    %263 = vector.load %arg3[%c0_124, %c0_125] : memref<10x768xf32, #tpu.memory_space<vmem>>, vector<10x768xf32>
    %cst_126 = arith.constant dense<0.000000e+00> : vector<4x768xf32>
    %264 = tpu.matmul %262, %263, %cst_126 {dimension_numbers = #tpu.dot_dimension_numbers<[1], [0], [0], [1], [0, 0, 1, 1], [], []>} : vector<4x10xf32>, vector<10x768xf32>, vector<4x768xf32> -> vector<4x768xf32>
    %265 = arith.index_cast %259 : i32 to index
    %c0_127 = arith.constant 0 : index
    %c0_128 = arith.constant 0 : index
    %266 = vector.load %arg2[%265, %c0_127, %c0_128] : memref<8x4x10xf32, #tpu.memory_space<vmem>>, vector<1x4x10xf32>
    %267 = vector.shape_cast %266 : vector<1x4x10xf32> to vector<4x10xf32>
    %c0_129 = arith.constant 0 : index
    %c0_130 = arith.constant 0 : index
    %268 = vector.load %arg4[%c0_129, %c0_130] : memref<10x768xf32, #tpu.memory_space<vmem>>, vector<10x768xf32>
    %cst_131 = arith.constant dense<0.000000e+00> : vector<4x768xf32>
    %269 = tpu.matmul %267, %268, %cst_131 {dimension_numbers = #tpu.dot_dimension_numbers<[1], [0], [0], [1], [0, 0, 1, 1], [], []>} : vector<4x10xf32>, vector<10x768xf32>, vector<4x768xf32> -> vector<4x768xf32>
    %270 = arith.addf %264, %269 : vector<4x768xf32>
    %c0_132 = arith.constant 0 : index
    %c0_133 = arith.constant 0 : index
    %271 = vector.load %arg5[%c0_132, %c0_133] : memref<1x768xf32, #tpu.memory_space<vmem>>, vector<1x768xf32>
    %272 = vector.broadcast %271 : vector<1x768xf32> to vector<4x768xf32>
    %273 = arith.addf %270, %272 : vector<4x768xf32>
    %c0_134 = arith.constant 0 : index
    %c0_135 = arith.constant 0 : index
    %274 = vector.load %arg6[%c0_134, %c0_135] : memref<256x768xf32, #tpu.memory_space<vmem>>, vector<256x768xf32>
    %cst_136 = arith.constant dense<0.000000e+00> : vector<4x768xf32>
    %275 = tpu.matmul %258, %274, %cst_136 {dimension_numbers = #tpu.dot_dimension_numbers<[1], [0], [0], [1], [0, 0, 1, 1], [], []>} : vector<4x256xf32>, vector<256x768xf32>, vector<4x768xf32> -> vector<4x768xf32>
    %c0_137 = arith.constant 0 : index
    %c0_138 = arith.constant 0 : index
    %276 = vector.load %arg7[%c0_137, %c0_138] : memref<1x768xf32, #tpu.memory_space<vmem>>, vector<1x768xf32>
    %277 = vector.broadcast %276 : vector<1x768xf32> to vector<4x768xf32>
    %278 = arith.addf %275, %277 : vector<4x768xf32>
    %279 = vector.extract_strided_slice %273 {offsets = [0, 0], sizes = [4, 512], strides = [1, 1]} : vector<4x768xf32> to vector<4x512xf32>
    %280 = vector.extract_strided_slice %278 {offsets = [0, 0], sizes = [4, 512], strides = [1, 1]} : vector<4x768xf32> to vector<4x512xf32>
    %281 = arith.addf %279, %280 : vector<4x512xf32>
    %282 = arith.negf %281 : vector<4x512xf32>
    %283 = math.exp %282 : vector<4x512xf32>
    %cst_139 = arith.constant 1.000000e+00 : f32
    %284 = vector.broadcast %cst_139 : f32 to vector<4x512xf32>
    %285 = arith.addf %284, %283 : vector<4x512xf32>
    %286 = arith.divf %284, %285 : vector<4x512xf32>
    %287 = vector.extract_strided_slice %286 {offsets = [0, 0], sizes = [4, 256], strides = [1, 1]} : vector<4x512xf32> to vector<4x256xf32>
    %288 = vector.extract_strided_slice %286 {offsets = [0, 256], sizes = [4, 256], strides = [1, 1]} : vector<4x512xf32> to vector<4x256xf32>
    %289 = vector.extract_strided_slice %273 {offsets = [0, 512], sizes = [4, 256], strides = [1, 1]} : vector<4x768xf32> to vector<4x256xf32>
    %290 = vector.extract_strided_slice %278 {offsets = [0, 512], sizes = [4, 256], strides = [1, 1]} : vector<4x768xf32> to vector<4x256xf32>
    %291 = arith.mulf %287, %290 : vector<4x256xf32>
    %292 = arith.addf %289, %291 : vector<4x256xf32>
    %293 = math.tanh %292 : vector<4x256xf32>
    %cst_140 = arith.constant 1.000000e+00 : f32
    %294 = vector.broadcast %cst_140 : f32 to vector<4x256xf32>
    %295 = arith.subf %294, %288 : vector<4x256xf32>
    %296 = arith.mulf %295, %293 : vector<4x256xf32>
    %297 = arith.mulf %288, %258 : vector<4x256xf32>
    %298 = arith.addf %296, %297 : vector<4x256xf32>
    %299 = vector.extract_strided_slice %298 {offsets = [0, 0], sizes = [4, 128], strides = [1, 1]} : vector<4x256xf32> to vector<4x128xf32>
    %300 = vector.extract_strided_slice %298 {offsets = [0, 128], sizes = [4, 128], strides = [1, 1]} : vector<4x256xf32> to vector<4x128xf32>
    %301 = arith.index_cast %c5_i32 : i32 to index
    %c0_141 = arith.constant 0 : index
    %c0_142 = arith.constant 0 : index
    %302 = vector.load %arg8[%301, %c0_141, %c0_142] : memref<8x4x128xf32, #tpu.memory_space<vmem>>, vector<1x4x128xf32>
    %303 = vector.shape_cast %302 : vector<1x4x128xf32> to vector<4x128xf32>
    %304 = vector.shape_cast %299 : vector<4x128xf32> to vector<1x4x128xf32>
    tpu.vector_store %arg8[%301, %c0_141, %c0_142], %304 {strides = array<i32>} : memref<8x4x128xf32, #tpu.memory_space<vmem>>, vector<1x4x128xf32>,
    %305 = arith.index_cast %259 : i32 to index
    %c0_143 = arith.constant 0 : index
    %c0_144 = arith.constant 0 : index
    %306 = vector.load %arg9[%305, %c0_143, %c0_144] : memref<8x4x128xf32, #tpu.memory_space<vmem>>, vector<1x4x128xf32>
    %307 = vector.shape_cast %306 : vector<1x4x128xf32> to vector<4x128xf32>
    %308 = vector.shape_cast %300 : vector<4x128xf32> to vector<1x4x128xf32>
    tpu.vector_store %arg9[%305, %c0_143, %c0_144], %308 {strides = array<i32>} : memref<8x4x128xf32, #tpu.memory_space<vmem>>, vector<1x4x128xf32>,
    %309 = tpu.concatenate %299, %300 in 1 : vector<4x128xf32>, vector<4x128xf32> -> vector<4x256xf32>
    %c6_i32 = arith.constant 6 : i32
    %c7_i32_145 = arith.constant 7 : i32
    %310 = arith.subi %c7_i32_145, %c6_i32 : i32
    %311 = arith.index_cast %c6_i32 : i32 to index
    %c0_146 = arith.constant 0 : index
    %c0_147 = arith.constant 0 : index
    %312 = vector.load %arg1[%311, %c0_146, %c0_147] : memref<8x4x10xf32, #tpu.memory_space<vmem>>, vector<1x4x10xf32>
    %313 = vector.shape_cast %312 : vector<1x4x10xf32> to vector<4x10xf32>
    %c0_148 = arith.constant 0 : index
    %c0_149 = arith.constant 0 : index
    %314 = vector.load %arg3[%c0_148, %c0_149] : memref<10x768xf32, #tpu.memory_space<vmem>>, vector<10x768xf32>
    %cst_150 = arith.constant dense<0.000000e+00> : vector<4x768xf32>
    %315 = tpu.matmul %313, %314, %cst_150 {dimension_numbers = #tpu.dot_dimension_numbers<[1], [0], [0], [1], [0, 0, 1, 1], [], []>} : vector<4x10xf32>, vector<10x768xf32>, vector<4x768xf32> -> vector<4x768xf32>
    %316 = arith.index_cast %310 : i32 to index
    %c0_151 = arith.constant 0 : index
    %c0_152 = arith.constant 0 : index
    %317 = vector.load %arg2[%316, %c0_151, %c0_152] : memref<8x4x10xf32, #tpu.memory_space<vmem>>, vector<1x4x10xf32>
    %318 = vector.shape_cast %317 : vector<1x4x10xf32> to vector<4x10xf32>
    %c0_153 = arith.constant 0 : index
    %c0_154 = arith.constant 0 : index
    %319 = vector.load %arg4[%c0_153, %c0_154] : memref<10x768xf32, #tpu.memory_space<vmem>>, vector<10x768xf32>
    %cst_155 = arith.constant dense<0.000000e+00> : vector<4x768xf32>
    %320 = tpu.matmul %318, %319, %cst_155 {dimension_numbers = #tpu.dot_dimension_numbers<[1], [0], [0], [1], [0, 0, 1, 1], [], []>} : vector<4x10xf32>, vector<10x768xf32>, vector<4x768xf32> -> vector<4x768xf32>
    %321 = arith.addf %315, %320 : vector<4x768xf32>
    %c0_156 = arith.constant 0 : index
    %c0_157 = arith.constant 0 : index
    %322 = vector.load %arg5[%c0_156, %c0_157] : memref<1x768xf32, #tpu.memory_space<vmem>>, vector<1x768xf32>
    %323 = vector.broadcast %322 : vector<1x768xf32> to vector<4x768xf32>
    %324 = arith.addf %321, %323 : vector<4x768xf32>
    %c0_158 = arith.constant 0 : index
    %c0_159 = arith.constant 0 : index
    %325 = vector.load %arg6[%c0_158, %c0_159] : memref<256x768xf32, #tpu.memory_space<vmem>>, vector<256x768xf32>
    %cst_160 = arith.constant dense<0.000000e+00> : vector<4x768xf32>
    %326 = tpu.matmul %309, %325, %cst_160 {dimension_numbers = #tpu.dot_dimension_numbers<[1], [0], [0], [1], [0, 0, 1, 1], [], []>} : vector<4x256xf32>, vector<256x768xf32>, vector<4x768xf32> -> vector<4x768xf32>
    %c0_161 = arith.constant 0 : index
    %c0_162 = arith.constant 0 : index
    %327 = vector.load %arg7[%c0_161, %c0_162] : memref<1x768xf32, #tpu.memory_space<vmem>>, vector<1x768xf32>
    %328 = vector.broadcast %327 : vector<1x768xf32> to vector<4x768xf32>
    %329 = arith.addf %326, %328 : vector<4x768xf32>
    %330 = vector.extract_strided_slice %324 {offsets = [0, 0], sizes = [4, 512], strides = [1, 1]} : vector<4x768xf32> to vector<4x512xf32>
    %331 = vector.extract_strided_slice %329 {offsets = [0, 0], sizes = [4, 512], strides = [1, 1]} : vector<4x768xf32> to vector<4x512xf32>
    %332 = arith.addf %330, %331 : vector<4x512xf32>
    %333 = arith.negf %332 : vector<4x512xf32>
    %334 = math.exp %333 : vector<4x512xf32>
    %cst_163 = arith.constant 1.000000e+00 : f32
    %335 = vector.broadcast %cst_163 : f32 to vector<4x512xf32>
    %336 = arith.addf %335, %334 : vector<4x512xf32>
    %337 = arith.divf %335, %336 : vector<4x512xf32>
    %338 = vector.extract_strided_slice %337 {offsets = [0, 0], sizes = [4, 256], strides = [1, 1]} : vector<4x512xf32> to vector<4x256xf32>
    %339 = vector.extract_strided_slice %337 {offsets = [0, 256], sizes = [4, 256], strides = [1, 1]} : vector<4x512xf32> to vector<4x256xf32>
    %340 = vector.extract_strided_slice %324 {offsets = [0, 512], sizes = [4, 256], strides = [1, 1]} : vector<4x768xf32> to vector<4x256xf32>
    %341 = vector.extract_strided_slice %329 {offsets = [0, 512], sizes = [4, 256], strides = [1, 1]} : vector<4x768xf32> to vector<4x256xf32>
    %342 = arith.mulf %338, %341 : vector<4x256xf32>
    %343 = arith.addf %340, %342 : vector<4x256xf32>
    %344 = math.tanh %343 : vector<4x256xf32>
    %cst_164 = arith.constant 1.000000e+00 : f32
    %345 = vector.broadcast %cst_164 : f32 to vector<4x256xf32>
    %346 = arith.subf %345, %339 : vector<4x256xf32>
    %347 = arith.mulf %346, %344 : vector<4x256xf32>
    %348 = arith.mulf %339, %309 : vector<4x256xf32>
    %349 = arith.addf %347, %348 : vector<4x256xf32>
    %350 = vector.extract_strided_slice %349 {offsets = [0, 0], sizes = [4, 128], strides = [1, 1]} : vector<4x256xf32> to vector<4x128xf32>
    %351 = vector.extract_strided_slice %349 {offsets = [0, 128], sizes = [4, 128], strides = [1, 1]} : vector<4x256xf32> to vector<4x128xf32>
    %352 = arith.index_cast %c6_i32 : i32 to index
    %c0_165 = arith.constant 0 : index
    %c0_166 = arith.constant 0 : index
    %353 = vector.load %arg8[%352, %c0_165, %c0_166] : memref<8x4x128xf32, #tpu.memory_space<vmem>>, vector<1x4x128xf32>
    %354 = vector.shape_cast %353 : vector<1x4x128xf32> to vector<4x128xf32>
    %355 = vector.shape_cast %350 : vector<4x128xf32> to vector<1x4x128xf32>
    tpu.vector_store %arg8[%352, %c0_165, %c0_166], %355 {strides = array<i32>} : memref<8x4x128xf32, #tpu.memory_space<vmem>>, vector<1x4x128xf32>,
    %356 = arith.index_cast %310 : i32 to index
    %c0_167 = arith.constant 0 : index
    %c0_168 = arith.constant 0 : index
    %357 = vector.load %arg9[%356, %c0_167, %c0_168] : memref<8x4x128xf32, #tpu.memory_space<vmem>>, vector<1x4x128xf32>
    %358 = vector.shape_cast %357 : vector<1x4x128xf32> to vector<4x128xf32>
    %359 = vector.shape_cast %351 : vector<4x128xf32> to vector<1x4x128xf32>
    tpu.vector_store %arg9[%356, %c0_167, %c0_168], %359 {strides = array<i32>} : memref<8x4x128xf32, #tpu.memory_space<vmem>>, vector<1x4x128xf32>,
    %360 = tpu.concatenate %350, %351 in 1 : vector<4x128xf32>, vector<4x128xf32> -> vector<4x256xf32>
    %c7_i32_169 = arith.constant 7 : i32
    %c7_i32_170 = arith.constant 7 : i32
    %361 = arith.subi %c7_i32_170, %c7_i32_169 : i32
    %362 = arith.index_cast %c7_i32_169 : i32 to index
    %c0_171 = arith.constant 0 : index
    %c0_172 = arith.constant 0 : index
    %363 = vector.load %arg1[%362, %c0_171, %c0_172] : memref<8x4x10xf32, #tpu.memory_space<vmem>>, vector<1x4x10xf32>
    %364 = vector.shape_cast %363 : vector<1x4x10xf32> to vector<4x10xf32>
    %c0_173 = arith.constant 0 : index
    %c0_174 = arith.constant 0 : index
    %365 = vector.load %arg3[%c0_173, %c0_174] : memref<10x768xf32, #tpu.memory_space<vmem>>, vector<10x768xf32>
    %cst_175 = arith.constant dense<0.000000e+00> : vector<4x768xf32>
    %366 = tpu.matmul %364, %365, %cst_175 {dimension_numbers = #tpu.dot_dimension_numbers<[1], [0], [0], [1], [0, 0, 1, 1], [], []>} : vector<4x10xf32>, vector<10x768xf32>, vector<4x768xf32> -> vector<4x768xf32>
    %367 = arith.index_cast %361 : i32 to index
    %c0_176 = arith.constant 0 : index
    %c0_177 = arith.constant 0 : index
    %368 = vector.load %arg2[%367, %c0_176, %c0_177] : memref<8x4x10xf32, #tpu.memory_space<vmem>>, vector<1x4x10xf32>
    %369 = vector.shape_cast %368 : vector<1x4x10xf32> to vector<4x10xf32>
    %c0_178 = arith.constant 0 : index
    %c0_179 = arith.constant 0 : index
    %370 = vector.load %arg4[%c0_178, %c0_179] : memref<10x768xf32, #tpu.memory_space<vmem>>, vector<10x768xf32>
    %cst_180 = arith.constant dense<0.000000e+00> : vector<4x768xf32>
    %371 = tpu.matmul %369, %370, %cst_180 {dimension_numbers = #tpu.dot_dimension_numbers<[1], [0], [0], [1], [0, 0, 1, 1], [], []>} : vector<4x10xf32>, vector<10x768xf32>, vector<4x768xf32> -> vector<4x768xf32>
    %372 = arith.addf %366, %371 : vector<4x768xf32>
    %c0_181 = arith.constant 0 : index
    %c0_182 = arith.constant 0 : index
    %373 = vector.load %arg5[%c0_181, %c0_182] : memref<1x768xf32, #tpu.memory_space<vmem>>, vector<1x768xf32>
    %374 = vector.broadcast %373 : vector<1x768xf32> to vector<4x768xf32>
    %375 = arith.addf %372, %374 : vector<4x768xf32>
    %c0_183 = arith.constant 0 : index
    %c0_184 = arith.constant 0 : index
    %376 = vector.load %arg6[%c0_183, %c0_184] : memref<256x768xf32, #tpu.memory_space<vmem>>, vector<256x768xf32>
    %cst_185 = arith.constant dense<0.000000e+00> : vector<4x768xf32>
    %377 = tpu.matmul %360, %376, %cst_185 {dimension_numbers = #tpu.dot_dimension_numbers<[1], [0], [0], [1], [0, 0, 1, 1], [], []>} : vector<4x256xf32>, vector<256x768xf32>, vector<4x768xf32> -> vector<4x768xf32>
    %c0_186 = arith.constant 0 : index
    %c0_187 = arith.constant 0 : index
    %378 = vector.load %arg7[%c0_186, %c0_187] : memref<1x768xf32, #tpu.memory_space<vmem>>, vector<1x768xf32>
    %379 = vector.broadcast %378 : vector<1x768xf32> to vector<4x768xf32>
    %380 = arith.addf %377, %379 : vector<4x768xf32>
    %381 = vector.extract_strided_slice %375 {offsets = [0, 0], sizes = [4, 512], strides = [1, 1]} : vector<4x768xf32> to vector<4x512xf32>
    %382 = vector.extract_strided_slice %380 {offsets = [0, 0], sizes = [4, 512], strides = [1, 1]} : vector<4x768xf32> to vector<4x512xf32>
    %383 = arith.addf %381, %382 : vector<4x512xf32>
    %384 = arith.negf %383 : vector<4x512xf32>
    %385 = math.exp %384 : vector<4x512xf32>
    %cst_188 = arith.constant 1.000000e+00 : f32
    %386 = vector.broadcast %cst_188 : f32 to vector<4x512xf32>
    %387 = arith.addf %386, %385 : vector<4x512xf32>
    %388 = arith.divf %386, %387 : vector<4x512xf32>
    %389 = vector.extract_strided_slice %388 {offsets = [0, 0], sizes = [4, 256], strides = [1, 1]} : vector<4x512xf32> to vector<4x256xf32>
    %390 = vector.extract_strided_slice %388 {offsets = [0, 256], sizes = [4, 256], strides = [1, 1]} : vector<4x512xf32> to vector<4x256xf32>
    %391 = vector.extract_strided_slice %375 {offsets = [0, 512], sizes = [4, 256], strides = [1, 1]} : vector<4x768xf32> to vector<4x256xf32>
    %392 = vector.extract_strided_slice %380 {offsets = [0, 512], sizes = [4, 256], strides = [1, 1]} : vector<4x768xf32> to vector<4x256xf32>
    %393 = arith.mulf %389, %392 : vector<4x256xf32>
    %394 = arith.addf %391, %393 : vector<4x256xf32>
    %395 = math.tanh %394 : vector<4x256xf32>
    %cst_189 = arith.constant 1.000000e+00 : f32
    %396 = vector.broadcast %cst_189 : f32 to vector<4x256xf32>
    %397 = arith.subf %396, %390 : vector<4x256xf32>
    %398 = arith.mulf %397, %395 : vector<4x256xf32>
    %399 = arith.mulf %390, %360 : vector<4x256xf32>
    %400 = arith.addf %398, %399 : vector<4x256xf32>
    %401 = vector.extract_strided_slice %400 {offsets = [0, 0], sizes = [4, 128], strides = [1, 1]} : vector<4x256xf32> to vector<4x128xf32>
    %402 = vector.extract_strided_slice %400 {offsets = [0, 128], sizes = [4, 128], strides = [1, 1]} : vector<4x256xf32> to vector<4x128xf32>
    %403 = arith.index_cast %c7_i32_169 : i32 to index
    %c0_190 = arith.constant 0 : index
    %c0_191 = arith.constant 0 : index
    %404 = vector.load %arg8[%403, %c0_190, %c0_191] : memref<8x4x128xf32, #tpu.memory_space<vmem>>, vector<1x4x128xf32>
    %405 = vector.shape_cast %404 : vector<1x4x128xf32> to vector<4x128xf32>
    %406 = vector.shape_cast %401 : vector<4x128xf32> to vector<1x4x128xf32>
    tpu.vector_store %arg8[%403, %c0_190, %c0_191], %406 {strides = array<i32>} : memref<8x4x128xf32, #tpu.memory_space<vmem>>, vector<1x4x128xf32>,
    %407 = arith.index_cast %361 : i32 to index
    %c0_192 = arith.constant 0 : index
    %c0_193 = arith.constant 0 : index
    %408 = vector.load %arg9[%407, %c0_192, %c0_193] : memref<8x4x128xf32, #tpu.memory_space<vmem>>, vector<1x4x128xf32>
    %409 = vector.shape_cast %408 : vector<1x4x128xf32> to vector<4x128xf32>
    %410 = vector.shape_cast %402 : vector<4x128xf32> to vector<1x4x128xf32>
    tpu.vector_store %arg9[%407, %c0_192, %c0_193], %410 {strides = array<i32>} : memref<8x4x128xf32, #tpu.memory_space<vmem>>, vector<1x4x128xf32>,
    %411 = tpu.concatenate %401, %402 in 1 : vector<4x128xf32>, vector<4x128xf32> -> vector<4x256xf32>
    %c8_i32 = arith.constant 8 : i32
    %c0_194 = arith.constant 0 : index
    %c0_195 = arith.constant 0 : index
    %412 = vector.load %arg10[%c0_194, %c0_195] : memref<4x256xf32, #tpu.memory_space<vmem>>, vector<4x256xf32>
    tpu.vector_store %arg10[%c0_194, %c0_195], %411 {strides = array<i32>} : memref<4x256xf32, #tpu.memory_space<vmem>>, vector<4x256xf32>,
    return
  }
  func.func @transform_0(%arg0: i32) -> (i32, i32, i32) {
    %c0_i32 = arith.constant 0 : i32
    %c0_i32_0 = arith.constant 0 : i32
    %c0_i32_1 = arith.constant 0 : i32
    return %arg0, %c0_i32, %c0_i32_0 : i32, i32, i32
  }
  func.func @transform_1(%arg0: i32) -> (i32, i32, i32) {
    %c0_i32 = arith.constant 0 : i32
    %0 = arith.subi %c0_i32, %arg0 : i32
    %c0_i32_0 = arith.constant 0 : i32
    %c0_i32_1 = arith.constant 0 : i32
    %c0_i32_2 = arith.constant 0 : i32
    return %0, %c0_i32_0, %c0_i32_1 : i32, i32, i32
  }
  func.func @transform_2(%arg0: i32) -> (i32, i32) {
    %c0_i32 = arith.constant 0 : i32
    %c0_i32_0 = arith.constant 0 : i32
    %c0_i32_1 = arith.constant 0 : i32
    return %c0_i32, %c0_i32_0 : i32, i32
  }
  func.func @transform_3(%arg0: i32) -> (i32, i32) {
    %c0_i32 = arith.constant 0 : i32
    %c0_i32_0 = arith.constant 0 : i32
    %c0_i32_1 = arith.constant 0 : i32
    return %c0_i32, %c0_i32_0 : i32, i32
  }
  func.func @transform_4(%arg0: i32) -> (i32, i32) {
    %c0_i32 = arith.constant 0 : i32
    %c0_i32_0 = arith.constant 0 : i32
    %c0_i32_1 = arith.constant 0 : i32
    return %c0_i32, %c0_i32_0 : i32, i32
  }
  func.func @transform_5(%arg0: i32) -> (i32, i32) {
    %c0_i32 = arith.constant 0 : i32
    %c0_i32_0 = arith.constant 0 : i32
    %c0_i32_1 = arith.constant 0 : i32
    return %c0_i32, %c0_i32_0 : i32, i32
  }
  func.func @transform_6(%arg0: i32) -> (i32, i32) {
    %c0_i32 = arith.constant 0 : i32
    %c0_i32_0 = arith.constant 0 : i32
    %c0_i32_1 = arith.constant 0 : i32
    return %c0_i32, %c0_i32_0 : i32, i32
  }
  func.func @transform_7(%arg0: i32) -> (i32, i32, i32) {
    %c0_i32 = arith.constant 0 : i32
    %c0_i32_0 = arith.constant 0 : i32
    %c0_i32_1 = arith.constant 0 : i32
    return %arg0, %c0_i32, %c0_i32_0 : i32, i32, i32
  }
  func.func @transform_8(%arg0: i32) -> (i32, i32, i32) {
    %c0_i32 = arith.constant 0 : i32
    %0 = arith.subi %c0_i32, %arg0 : i32
    %c0_i32_0 = arith.constant 0 : i32
    %c0_i32_1 = arith.constant 0 : i32
    %c0_i32_2 = arith.constant 0 : i32
    return %0, %c0_i32_0, %c0_i32_1 : i32, i32, i32
  }
}

module attributes {stable_mosaic.version = 11 : i64} {
  func.func @_mlp_kernel(%arg0: i32, %arg1: memref<32x128xf32, #tpu.memory_space<vmem>>, %arg2: memref<32x128xf32, #tpu.memory_space<vmem>>, %arg3: memref<256x128xf32, #tpu.memory_space<vmem>>, %arg4: memref<1x128xf32, #tpu.memory_space<vmem>>, %arg5: memref<128x128xf32, #tpu.memory_space<vmem>>, %arg6: memref<1x128xf32, #tpu.memory_space<vmem>>, %arg7: memref<1x128xf32, #tpu.memory_space<vmem>>, %arg8: memref<3xf32, #tpu.memory_space<smem>>, %arg9: memref<1x32xf32, #tpu.memory_space<vmem>>) attributes {dimension_semantics = [#tpu.dimension_semantics<parallel>], iteration_bounds = array<i64: 1>, scalar_prefetch = 0 : i64, scratch_operands = 0 : i64, tpu.core_type = #tpu.core_type<tc>, window_params = [{transform_indices = @transform_0, window_bounds = array<i64: 32, 128>}, {transform_indices = @transform_1, window_bounds = array<i64: 32, 128>}, {pipeline_mode = #tpu.pipeline_mode<synchronous>, transform_indices = @transform_2, window_bounds = array<i64: 256, 128>}, {pipeline_mode = #tpu.pipeline_mode<synchronous>, transform_indices = @transform_3, window_bounds = array<i64: 1, 128>}, {pipeline_mode = #tpu.pipeline_mode<synchronous>, transform_indices = @transform_4, window_bounds = array<i64: 128, 128>}, {pipeline_mode = #tpu.pipeline_mode<synchronous>, transform_indices = @transform_5, window_bounds = array<i64: 1, 128>}, {pipeline_mode = #tpu.pipeline_mode<synchronous>, transform_indices = @transform_6, window_bounds = array<i64: 1, 128>}, {transform_indices = @transform_7, window_bounds = array<i64: 3>}, {transform_indices = @transform_8, window_bounds = array<i64: 1, 32>}]} {
    %c0 = arith.constant 0 : index
    %0 = memref.load %arg8[%c0] : memref<3xf32, #tpu.memory_space<smem>>
    %c1 = arith.constant 1 : index
    %1 = memref.load %arg8[%c1] : memref<3xf32, #tpu.memory_space<smem>>
    %c2 = arith.constant 2 : index
    %2 = memref.load %arg8[%c2] : memref<3xf32, #tpu.memory_space<smem>>
    %c0_0 = arith.constant 0 : index
    %c0_1 = arith.constant 0 : index
    %3 = vector.load %arg1[%c0_0, %c0_1] : memref<32x128xf32, #tpu.memory_space<vmem>>, vector<32x128xf32>
    %c0_2 = arith.constant 0 : index
    %c0_3 = arith.constant 0 : index
    %4 = vector.load %arg2[%c0_2, %c0_3] : memref<32x128xf32, #tpu.memory_space<vmem>>, vector<32x128xf32>
    %5 = tpu.concatenate %3, %4 in 1 : vector<32x128xf32>, vector<32x128xf32> -> vector<32x256xf32>
    %c0_4 = arith.constant 0 : index
    %c0_5 = arith.constant 0 : index
    %6 = vector.load %arg3[%c0_4, %c0_5] : memref<256x128xf32, #tpu.memory_space<vmem>>, vector<256x128xf32>
    %cst = arith.constant dense<0.000000e+00> : vector<32x128xf32>
    %7 = tpu.matmul %5, %6, %cst {dimension_numbers = #tpu.dot_dimension_numbers<[1], [0], [0], [1], [0, 0, 1, 1], [], []>} : vector<32x256xf32>, vector<256x128xf32>, vector<32x128xf32> -> vector<32x128xf32>
    %c0_6 = arith.constant 0 : index
    %c0_7 = arith.constant 0 : index
    %8 = vector.load %arg4[%c0_6, %c0_7] : memref<1x128xf32, #tpu.memory_space<vmem>>, vector<1x128xf32>
    %9 = vector.broadcast %8 : vector<1x128xf32> to vector<32x128xf32>
    %10 = arith.addf %7, %9 : vector<32x128xf32>
    %cst_8 = arith.constant 0.000000e+00 : f32
    %11 = vector.broadcast %cst_8 : f32 to vector<32x128xf32>
    %12 = arith.maximumf %10, %11 : vector<32x128xf32>
    %cst_9 = arith.constant 0.000000e+00 : f32
    %13 = vector.broadcast %cst_9 : f32 to vector<32x128xf32>
    %14 = arith.minimumf %10, %13 : vector<32x128xf32>
    %15 = vector.broadcast %0 : f32 to vector<32x128xf32>
    %16 = arith.mulf %15, %14 : vector<32x128xf32>
    %17 = arith.addf %12, %16 : vector<32x128xf32>
    %c0_10 = arith.constant 0 : index
    %c0_11 = arith.constant 0 : index
    %18 = vector.load %arg5[%c0_10, %c0_11] : memref<128x128xf32, #tpu.memory_space<vmem>>, vector<128x128xf32>
    %cst_12 = arith.constant dense<0.000000e+00> : vector<32x128xf32>
    %19 = tpu.matmul %17, %18, %cst_12 {dimension_numbers = #tpu.dot_dimension_numbers<[1], [0], [0], [1], [0, 0, 1, 1], [], []>} : vector<32x128xf32>, vector<128x128xf32>, vector<32x128xf32> -> vector<32x128xf32>
    %c0_13 = arith.constant 0 : index
    %c0_14 = arith.constant 0 : index
    %20 = vector.load %arg6[%c0_13, %c0_14] : memref<1x128xf32, #tpu.memory_space<vmem>>, vector<1x128xf32>
    %21 = vector.broadcast %20 : vector<1x128xf32> to vector<32x128xf32>
    %22 = arith.addf %19, %21 : vector<32x128xf32>
    %cst_15 = arith.constant 0.000000e+00 : f32
    %23 = vector.broadcast %cst_15 : f32 to vector<32x128xf32>
    %24 = arith.maximumf %22, %23 : vector<32x128xf32>
    %cst_16 = arith.constant 0.000000e+00 : f32
    %25 = vector.broadcast %cst_16 : f32 to vector<32x128xf32>
    %26 = arith.minimumf %22, %25 : vector<32x128xf32>
    %27 = vector.broadcast %1 : f32 to vector<32x128xf32>
    %28 = arith.mulf %27, %26 : vector<32x128xf32>
    %29 = arith.addf %24, %28 : vector<32x128xf32>
    %c0_17 = arith.constant 0 : index
    %c0_18 = arith.constant 0 : index
    %30 = vector.load %arg7[%c0_17, %c0_18] : memref<1x128xf32, #tpu.memory_space<vmem>>, vector<1x128xf32>
    %cst_19 = arith.constant dense<0.000000e+00> : vector<1x32xf32>
    %31 = tpu.matmul %30, %29, %cst_19 {dimension_numbers = #tpu.dot_dimension_numbers<[1], [1], [0], [0], [0, 0, 1, 0], [], []>} : vector<1x128xf32>, vector<32x128xf32>, vector<1x32xf32> -> vector<1x32xf32>
    %32 = vector.broadcast %2 : f32 to vector<1x32xf32>
    %33 = arith.addf %31, %32 : vector<1x32xf32>
    %c0_20 = arith.constant 0 : index
    %c0_21 = arith.constant 0 : index
    %34 = vector.load %arg9[%c0_20, %c0_21] : memref<1x32xf32, #tpu.memory_space<vmem>>, vector<1x32xf32>
    tpu.vector_store %arg9[%c0_20, %c0_21], %33 {strides = array<i32>} : memref<1x32xf32, #tpu.memory_space<vmem>>, vector<1x32xf32>,
    return
  }
  func.func @transform_0(%arg0: i32) -> (i32, i32) {
    %c0_i32 = arith.constant 0 : i32
    %c0_i32_0 = arith.constant 0 : i32
    return %arg0, %c0_i32 : i32, i32
  }
  func.func @transform_1(%arg0: i32) -> (i32, i32) {
    %c0_i32 = arith.constant 0 : i32
    %c0_i32_0 = arith.constant 0 : i32
    return %arg0, %c0_i32 : i32, i32
  }
  func.func @transform_2(%arg0: i32) -> (i32, i32) {
    %c0_i32 = arith.constant 0 : i32
    %c0_i32_0 = arith.constant 0 : i32
    %c0_i32_1 = arith.constant 0 : i32
    return %c0_i32, %c0_i32_0 : i32, i32
  }
  func.func @transform_3(%arg0: i32) -> (i32, i32) {
    %c0_i32 = arith.constant 0 : i32
    %c0_i32_0 = arith.constant 0 : i32
    %c0_i32_1 = arith.constant 0 : i32
    return %c0_i32, %c0_i32_0 : i32, i32
  }
  func.func @transform_4(%arg0: i32) -> (i32, i32) {
    %c0_i32 = arith.constant 0 : i32
    %c0_i32_0 = arith.constant 0 : i32
    %c0_i32_1 = arith.constant 0 : i32
    return %c0_i32, %c0_i32_0 : i32, i32
  }
  func.func @transform_5(%arg0: i32) -> (i32, i32) {
    %c0_i32 = arith.constant 0 : i32
    %c0_i32_0 = arith.constant 0 : i32
    %c0_i32_1 = arith.constant 0 : i32
    return %c0_i32, %c0_i32_0 : i32, i32
  }
  func.func @transform_6(%arg0: i32) -> (i32, i32) {
    %c0_i32 = arith.constant 0 : i32
    %c0_i32_0 = arith.constant 0 : i32
    %c0_i32_1 = arith.constant 0 : i32
    return %c0_i32, %c0_i32_0 : i32, i32
  }
  func.func @transform_7(%arg0: i32) -> i32 {
    %c0_i32 = arith.constant 0 : i32
    %c0_i32_0 = arith.constant 0 : i32
    return %c0_i32 : i32
  }
  func.func @transform_8(%arg0: i32) -> (i32, i32) {
    %c0_i32 = arith.constant 0 : i32
    %c0_i32_0 = arith.constant 0 : i32
    return %c0_i32, %arg0 : i32, i32
  }
}

</mosaic_0001>

<llo_original>
// kernel: squeeze.3
$region0: #{squeeze.3}
  %s0 = inlined_call_operand.vmem [shape: f32[32], index: 0, kind: input, shape index: {}]
  %s1 = inlined_call_operand.vmem [shape: f32[8,4,1], index: 1, kind: output, shape index: {}]
  $region1: #{squeeze.3} parent=0
    #allocation0 [shape = 'u8[4096]{0}', space=vmem, size = 0x1000, scoped, tag = 'scoped mem for input reshape']
    %s3 = sshllo.u32 0, 1
    %v4 = vld [vmem:[%s0] sm:%s3]
    %5 = vst [vmem:[#allocation0] sm:%s3] %v4
    %v6 = vld [vmem:[#allocation0] sm:$0x1]
    %vm7 = vcmask 31744
    %8 = vst.msk [vmem:[%s1] sm:$0x1] %vm7, %v6
    %v9 = vld [vmem:[#allocation0] sm:$0x1]
    %10 = vrot.lane.b32.xlu0 %v9, 124
    %v11 = vpop.permute.xlu0 %10
    %vm12 = vcmask 31744
    %s13 = scalar_lea.vmem %s1, 1
    %14 = vst.msk [vmem:[%s13] sm:$0x1] %vm12, %v11
    %v15 = vld [vmem:[#allocation0] sm:$0x1]
    %16 = vrot.lane.b32.xlu0 %v15, 120
    %v17 = vpop.permute.xlu0 %16
    %vm18 = vcmask 31744
    %s19 = scalar_lea.vmem %s1, 2
    %20 = vst.msk [vmem:[%s19] sm:$0x1] %vm18, %v17
    %v21 = vld [vmem:[#allocation0] sm:$0x1]
    %22 = vrot.lane.b32.xlu0 %v21, 116
    %v23 = vpop.permute.xlu0 %22
    %vm24 = vcmask 31744
    %s25 = scalar_lea.vmem %s1, 3
    %26 = vst.msk [vmem:[%s25] sm:$0x1] %vm24, %v23
    %v27 = vld [vmem:[#allocation0] sm:$0x1]
    %28 = vrot.lane.b32.xlu0 %v27, 112
    %v29 = vpop.permute.xlu0 %28
    %vm30 = vcmask 31744
    %s31 = scalar_lea.vmem %s1, 4
    %32 = vst.msk [vmem:[%s31] sm:$0x1] %vm30, %v29
    %v33 = vld [vmem:[#allocation0] sm:$0x1]
    %34 = vrot.lane.b32.xlu0 %v33, 108
    %v35 = vpop.permute.xlu0 %34
    %vm36 = vcmask 31744
    %s37 = scalar_lea.vmem %s1, 5
    %38 = vst.msk [vmem:[%s37] sm:$0x1] %vm36, %v35
    %v39 = vld [vmem:[#allocation0] sm:$0x1]
    %40 = vrot.lane.b32.xlu0 %v39, 104
    %v41 = vpop.permute.xlu0 %40
    %vm42 = vcmask 31744
    %s43 = scalar_lea.vmem %s1, 6
    %44 = vst.msk [vmem:[%s43] sm:$0x1] %vm42, %v41
    %v45 = vld [vmem:[#allocation0] sm:$0x1]
    %46 = vrot.lane.b32.xlu0 %v45, 100
    %v47 = vpop.permute.xlu0 %46
    %vm48 = vcmask 31744
    %s49 = scalar_lea.vmem %s1, 7
    %50 = vst.msk [vmem:[%s49] sm:$0x1] %vm48, %v47

// kernel: arrival_rate_estimator_forward.3
$region0: #{arrival_rate_estimator_forward.3}
  #allocation0 [shape = 'u32[]', space=smem, size = 0x4, offset = 0x4, fixed_abs, tag = 'smem constant byte address 0x4 - core index']
  #allocation1 [shape = 'u32[144,128]{1,0:T(1,128)}', space=vmem, size = 0x12000, scoped, tag = 'internal scratch']
  %s0 = inlined_call_operand.vmem [shape: f32[32,128], index: 0, kind: input, shape index: {}]
  %s1 = inlined_call_operand.vmem [shape: f32[32,128], index: 1, kind: input, shape index: {}]
  %s2 = inlined_call_operand.vmem [shape: f32[256,128], index: 2, kind: input, shape index: {}]
  %s3 = inlined_call_operand.vmem [shape: f32[1,128], index: 3, kind: input, shape index: {}]
  %s4 = inlined_call_operand.vmem [shape: f32[128,128], index: 4, kind: input, shape index: {}]
  %s5 = inlined_call_operand.vmem [shape: f32[1,128], index: 5, kind: input, shape index: {}]
  %s6 = inlined_call_operand.vmem [shape: f32[1,128], index: 6, kind: input, shape index: {}]
  %s7 = inlined_call_operand.vmem [shape: f32[3], index: 7, kind: input, shape index: {}]
  %s8 = inlined_call_operand.vmem [shape: f32[1,32], index: 8, kind: output, shape index: {}]
  %s9 = sld [smem:[#allocation0]]
  $region46: #{arrival_rate_estimator_forward.3} parent=0
    _
  %s11 = ssub.s32 1, %s9
  %s12 = scalar_select 0, %s11, %s9
  $region1: #{arrival_rate_estimator_forward.3} parent=0
    #allocation2 [shape = 'u8[512]{0}', space=smem, size = 0x200, scoped, tag = 'input window, operand 7, single buffered']
    #allocation3 [shape = 's32[1]{0}', space=sflag, size = 0x4, scoped, tag = 'scoped memory for arrival_rate_estimator_forward.3']
    %13 = vsyncpa [#allocation3], 0
    // Predicated region
    $region2: #{arrival_rate_estimator_forward.3} parent=1 // pred_check
      _
    $region3: #{arrival_rate_estimator_forward.3} parent=1 // pred_check_branch
      %15 = sbr.rel (0) target = $region5
    $region4: #{arrival_rate_estimator_forward.3} parent=1 // pred_region
      _
    $region5: #{arrival_rate_estimator_forward.3} parent=1 // pred_fallthru
      _
    // Predicated region
    $region6: #{arrival_rate_estimator_forward.3} parent=1 // pred_check
      _
    $region7: #{arrival_rate_estimator_forward.3} parent=1 // pred_check_branch
      %17 = sbr.rel (0) target = $region9
    $region8: #{arrival_rate_estimator_forward.3} parent=1 // pred_region
      _
    $region9: #{arrival_rate_estimator_forward.3} parent=1 // pred_fallthru
      _
    // Predicated region
    $region10: #{arrival_rate_estimator_forward.3} parent=1 // pred_check
      _
    $region11: #{arrival_rate_estimator_forward.3} parent=1 // pred_check_branch
      %19 = sbr.rel (0) target = $region13
    $region12: #{arrival_rate_estimator_forward.3} parent=1 // pred_region
      _
    $region13: #{arrival_rate_estimator_forward.3} parent=1 // pred_fallthru
      _
    // Predicated region
    $region14: #{arrival_rate_estimator_forward.3} parent=1 // pred_check
      _
    $region15: #{arrival_rate_estimator_forward.3} parent=1 // pred_check_branch
      %21 = sbr.rel (0) target = $region17
    $region16: #{arrival_rate_estimator_forward.3} parent=1 // pred_region
      _
    $region17: #{arrival_rate_estimator_forward.3} parent=1 // pred_fallthru
      _
    // Predicated region
    $region18: #{arrival_rate_estimator_forward.3} parent=1 // pred_check
      _
    $region19: #{arrival_rate_estimator_forward.3} parent=1 // pred_check_branch
      %23 = sbr.rel (0) target = $region21
    $region20: #{arrival_rate_estimator_forward.3} parent=1 // pred_region
      _
    $region21: #{arrival_rate_estimator_forward.3} parent=1 // pred_fallthru
      _
    // Predicated region
    $region22: #{arrival_rate_estimator_forward.3} parent=1 // pred_check
      _
    $region23: #{arrival_rate_estimator_forward.3} parent=1 // pred_check_branch
      %25 = sbr.rel (0) target = $region25
    $region24: #{arrival_rate_estimator_forward.3} parent=1 // pred_region
      _
    $region25: #{arrival_rate_estimator_forward.3} parent=1 // pred_fallthru
      _
    // Predicated region
    $region26: #{arrival_rate_estimator_forward.3} parent=1 // pred_check
      _
    $region27: #{arrival_rate_estimator_forward.3} parent=1 // pred_check_branch
      %27 = sbr.rel (0) target = $region29
    $region28: #{arrival_rate_estimator_forward.3} parent=1 // pred_region
      _
    $region29: #{arrival_rate_estimator_forward.3} parent=1 // pred_fallthru
      _
    // Predicated region
    $region30: #{arrival_rate_estimator_forward.3} parent=1 // pred_check
      _
    $region31: #{arrival_rate_estimator_forward.3} parent=1 // pred_check_branch
      %29 = sbr.rel (0) target = $region33
    $region32: #{arrival_rate_estimator_forward.3} parent=1 // pred_region
      %s31 = ssub.s32 16, 16
      %32 = vsyncadd [#allocation3], %s31
      %s34 = sshll.u32 %s7, 4
      %s35 = int_to_ptr.vmem [resolvable:$true] %s34
      %37 = dma.vmem_to_smem %s35, 16, [#allocation2], [#allocation3]
    $region33: #{arrival_rate_estimator_forward.3} parent=1 // pred_fallthru
      _
    // Predicated region
    $region34: #{arrival_rate_estimator_forward.3} parent=1 // pred_check
      _
    $region35: #{arrival_rate_estimator_forward.3} parent=1 // pred_check_branch
      %39 = sbr.rel (0) target = $region37
    $region36: #{arrival_rate_estimator_forward.3} parent=1 // pred_region
      %40 = dma.done [#allocation3], 16
    $region37: #{arrival_rate_estimator_forward.3} parent=1 // pred_fallthru
      _
    %41 = sfence
    %s42 = sld [smem:[#allocation2]]
    %s43 = sld [smem:[#allocation2 + $0x1]]
    %s44 = sld [smem:[#allocation2 + $0x2]]
    %v45 = vld [vmem:[%s0] sm:$0xff]
    %v46 = vld [vmem:[%s0 + $0x8] sm:$0xff]
    %v47 = vld [vmem:[%s0 + $0x10] sm:$0xff]
    %v48 = vld [vmem:[%s0 + $0x18] sm:$0xff]
    %v49 = vld [vmem:[%s1] sm:$0xff]
    %v50 = vld [vmem:[%s1 + $0x8] sm:$0xff]
    %v51 = vld [vmem:[%s1 + $0x10] sm:$0xff]
    %v52 = vld [vmem:[%s1 + $0x18] sm:$0xff]
    %v53 = vld [vmem:[%s2] sm:$0xff]
    %v54 = vld [vmem:[%s2 + $0x8] sm:$0xff]
    %v55 = vld [vmem:[%s2 + $0x10] sm:$0xff]
    %v56 = vld [vmem:[%s2 + $0x18] sm:$0xff]
    %v57 = vld [vmem:[%s2 + $0x20] sm:$0xff]
    %v58 = vld [vmem:[%s2 + $0x28] sm:$0xff]
    %v59 = vld [vmem:[%s2 + $0x30] sm:$0xff]
    %v60 = vld [vmem:[%s2 + $0x38] sm:$0xff]
    %v61 = vld [vmem:[%s2 + $0x40] sm:$0xff]
    %v62 = vld [vmem:[%s2 + $0x48] sm:$0xff]
    %v63 = vld [vmem:[%s2 + $0x50] sm:$0xff]
    %v64 = vld [vmem:[%s2 + $0x58] sm:$0xff]
    %v65 = vld [vmem:[%s2 + $0x60] sm:$0xff]
    %v66 = vld [vmem:[%s2 + $0x68] sm:$0xff]
    %v67 = vld [vmem:[%s2 + $0x70] sm:$0xff]
    %v68 = vld [vmem:[%s2 + $0x78] sm:$0xff]
    %v69 = vld [vmem:[%s2 + $0x80] sm:$0xff]
    %v70 = vld [vmem:[%s2 + $0x88] sm:$0xff]
    %v71 = vld [vmem:[%s2 + $0x90] sm:$0xff]
    %v72 = vld [vmem:[%s2 + $0x98] sm:$0xff]
    %v73 = vld [vmem:[%s2 + $0xa0] sm:$0xff]
    %v74 = vld [vmem:[%s2 + $0xa8] sm:$0xff]
    %v75 = vld [vmem:[%s2 + $0xb0] sm:$0xff]
    %v76 = vld [vmem:[%s2 + $0xb8] sm:$0xff]
    %v77 = vld [vmem:[%s2 + $0xc0] sm:$0xff]
    %v78 = vld [vmem:[%s2 + $0xc8] sm:$0xff]
    %v79 = vld [vmem:[%s2 + $0xd0] sm:$0xff]
    %v80 = vld [vmem:[%s2 + $0xd8] sm:$0xff]
    %v81 = vld [vmem:[%s2 + $0xe0] sm:$0xff]
    %v82 = vld [vmem:[%s2 + $0xe8] sm:$0xff]
    %v83 = vld [vmem:[%s2 + $0xf0] sm:$0xff]
    %v84 = vld [vmem:[%s2 + $0xf8] sm:$0xff]
    %v85 = vld [vmem:[%s3] sm:$0x1]
    %v87 = vlaneseq
    %v88 = vshrl.u32 %v87, 7
    %v89 = vsub.s32 0, %v88
    %v90 = vrot.slane %v85, %v89
    %92 = vmatprep.subr.mxu0 0.0
    %93 = vmatpush1.msra.mxu0 %v53
    %94 = vmatprep.subr.mxu0 0.0
    %95 = vmatpush1.msra.mxu0 %v54
    %96 = vmatprep.subr.mxu0 0.0
    %97 = vmatpush1.msra.mxu0 %v55
    %98 = vmatprep.subr.mxu0 0.0
    %99 = vmatpush1.msra.mxu0 %v56
    %100 = vmatprep.subr.mxu0 0.0
    %101 = vmatpush1.msra.mxu0 %v57
    %102 = vmatprep.subr.mxu0 0.0
    %103 = vmatpush1.msra.mxu0 %v58
    %104 = vmatprep.subr.mxu0 0.0
    %105 = vmatpush1.msra.mxu0 %v59
    %106 = vmatprep.subr.mxu0 0.0
    %107 = vmatpush1.msra.mxu0 %v60
    %108 = vmatprep.subr.mxu0 0.0
    %109 = vmatpush1.msra.mxu0 %v61
    %110 = vmatprep.subr.mxu0 0.0
    %111 = vmatpush1.msra.mxu0 %v62
    %112 = vmatprep.subr.mxu0 0.0
    %113 = vmatpush1.msra.mxu0 %v63
    %114 = vmatprep.subr.mxu0 0.0
    %115 = vmatpush1.msra.mxu0 %v64
    %116 = vmatprep.subr.mxu0 0.0
    %117 = vmatpush1.msra.mxu0 %v65
    %118 = vmatprep.subr.mxu0 0.0
    %119 = vmatpush1.msra.mxu0 %v66
    %120 = vmatprep.subr.mxu0 0.0
    %121 = vmatpush1.msra.mxu0 %v67
    %122 = vmatprep.subr.mxu0 0.0
    %123 = vmatpush1.msra.mxu0 %v68
    %124 = vmatprep.subr.mxu0 0.0
    %125 = vmatpush1.msra.mxu0 %v69
    %126 = vmatprep.subr.mxu0 0.0
    %127 = vmatpush1.msra.mxu0 %v70
    %128 = vmatprep.subr.mxu0 0.0
    %129 = vmatpush1.msra.mxu0 %v71
    %130 = vmatprep.subr.mxu0 0.0
    %131 = vmatpush1.msra.mxu0 %v72
    %132 = vmatprep.subr.mxu0 0.0
    %133 = vmatpush1.msra.mxu0 %v73
    %134 = vmatprep.subr.mxu0 0.0
    %135 = vmatpush1.msra.mxu0 %v74
    %136 = vmatprep.subr.mxu0 0.0
    %137 = vmatpush1.msra.mxu0 %v75
    %138 = vmatprep.subr.mxu0 0.0
    %139 = vmatpush1.msra.mxu0 %v76
    %140 = vmatprep.subr.mxu0 0.0
    %141 = vmatpush1.msra.mxu0 %v77
    %142 = vmatprep.subr.mxu0 0.0
    %143 = vmatpush1.msra.mxu0 %v78
    %144 = vmatprep.subr.mxu0 0.0
    %145 = vmatpush1.msra.mxu0 %v79
    %146 = vmatprep.subr.mxu0 0.0
    %147 = vmatpush1.msra.mxu0 %v80
    %148 = vmatprep.subr.mxu0 0.0
    %149 = vmatpush1.msra.mxu0 %v81
    %150 = vmatprep.subr.mxu0 0.0
    %151 = vmatpush1.msra.mxu0 %v82
    %152 = vmatprep.subr.mxu0 0.0
    %153 = vmatpush1.msra.mxu0 %v83
    %154 = vmatprep.subr.mxu0 0.0
    %155 = vmatpush1.msra.mxu0 %v84
    %156 = vmatprep.mubr.f32.mxu0 %v49
    %157 = vmatmul.mubr.f32.gmra.mrb[0].mxu0 %v45
    %v158 = vpop.f32.mrb[0].mxu0
    %v159 = vadd.f32 %v90, %v158
    %v160 = vpop.f32.mrb[0].mxu0
    %161 = vmatprep.mubr.f32.mxu0 %v50
    %162 = vmatmul.mubr.f32.gmra.mrb[0].mxu0 %v46
    %v163 = vpop.f32.mrb[0].mxu0
    %v164 = vadd.f32 %v90, %v163
    %v165 = vpop.f32.mrb[0].mxu0
    %166 = vmatprep.mubr.f32.mxu0 %v51
    %167 = vmatmul.mubr.f32.gmra.mrb[0].mxu0 %v47
    %v168 = vpop.f32.mrb[0].mxu0
    %v169 = vadd.f32 %v90, %v168
    %v170 = vpop.f32.mrb[0].mxu0
    %171 = vmatprep.mubr.f32.mxu0 %v52
    %172 = vmatmul.mubr.f32.gmra.mrb[0].mxu0 %v48
    %v173 = vpop.f32.mrb[0].mxu0
    %v174 = vadd.f32 %v90, %v173
    %v175 = vpop.f32.mrb[0].mxu0
    %176 = vdwg.mxu0
    %v177 = vmax.f32 %v159, 0.0
    %v178 = vmax.f32 %v164, 0.0
    %v179 = vmax.f32 %v169, 0.0
    %v180 = vmax.f32 %v174, 0.0
    %v181 = vmin.f32 %v159, 0.0
    %v182 = vmin.f32 %v164, 0.0
    %v183 = vmin.f32 %v169, 0.0
    %v184 = vmin.f32 %v174, 0.0
    %v185 = vstv %s42
    %v186 = vmul.f32 %v185, %v181
    %v187 = vmul.f32 %v185, %v182
    %v188 = vmul.f32 %v185, %v183
    %v189 = vmul.f32 %v185, %v184
    %v190 = vadd.f32 %v177, %v186
    %v191 = vadd.f32 %v178, %v187
    %v192 = vadd.f32 %v179, %v188
    %v193 = vadd.f32 %v180, %v189
    %v194 = vld [vmem:[%s4] sm:$0xff]
    %v195 = vld [vmem:[%s4 + $0x8] sm:$0xff]
    %v196 = vld [vmem:[%s4 + $0x10] sm:$0xff]
    %v197 = vld [vmem:[%s4 + $0x18] sm:$0xff]
    %v198 = vld [vmem:[%s4 + $0x20] sm:$0xff]
    %v199 = vld [vmem:[%s4 + $0x28] sm:$0xff]
    %v200 = vld [vmem:[%s4 + $0x30] sm:$0xff]
    %v201 = vld [vmem:[%s4 + $0x38] sm:$0xff]
    %v202 = vld [vmem:[%s4 + $0x40] sm:$0xff]
    %v203 = vld [vmem:[%s4 + $0x48] sm:$0xff]
    %v204 = vld [vmem:[%s4 + $0x50] sm:$0xff]
    %v205 = vld [vmem:[%s4 + $0x58] sm:$0xff]
    %v206 = vld [vmem:[%s4 + $0x60] sm:$0xff]
    %v207 = vld [vmem:[%s4 + $0x68] sm:$0xff]
    %v208 = vld [vmem:[%s4 + $0x70] sm:$0xff]
    %v209 = vld [vmem:[%s4 + $0x78] sm:$0xff]
    %v210 = vld [vmem:[%s5] sm:$0x1]
    %v212 = vlaneseq
    %v213 = vshrl.u32 %v212, 7
    %v214 = vsub.s32 0, %v213
    %v215 = vrot.slane %v210, %v214
    %217 = vmatprep.subr.mxu0 0.0
    %218 = vmatpush1.msra.mxu0 %v194
    %219 = vmatprep.subr.mxu0 0.0
    %220 = vmatpush1.msra.mxu0 %v195
    %221 = vmatprep.subr.mxu0 0.0
    %222 = vmatpush1.msra.mxu0 %v196
    %223 = vmatprep.subr.mxu0 0.0
    %224 = vmatpush1.msra.mxu0 %v197
    %225 = vmatprep.subr.mxu0 0.0
    %226 = vmatpush1.msra.mxu0 %v198
    %227 = vmatprep.subr.mxu0 0.0
    %228 = vmatpush1.msra.mxu0 %v199
    %229 = vmatprep.subr.mxu0 0.0
    %230 = vmatpush1.msra.mxu0 %v200
    %231 = vmatprep.subr.mxu0 0.0
    %232 = vmatpush1.msra.mxu0 %v201
    %233 = vmatprep.subr.mxu0 0.0
    %234 = vmatpush1.msra.mxu0 %v202
    %235 = vmatprep.subr.mxu0 0.0
    %236 = vmatpush1.msra.mxu0 %v203
    %237 = vmatprep.subr.mxu0 0.0
    %238 = vmatpush1.msra.mxu0 %v204
    %239 = vmatprep.subr.mxu0 0.0
    %240 = vmatpush1.msra.mxu0 %v205
    %241 = vmatprep.subr.mxu0 0.0
    %242 = vmatpush1.msra.mxu0 %v206
    %243 = vmatprep.subr.mxu0 0.0
    %244 = vmatpush1.msra.mxu0 %v207
    %245 = vmatprep.subr.mxu0 0.0
    %246 = vmatpush1.msra.mxu0 %v208
    %247 = vmatprep.subr.mxu0 0.0
    %248 = vmatpush1.msra.mxu0 %v209
    %249 = vmatprep.subr.mxu0 0.0
    %250 = vmatpush1.msra.mxu0 0.0
    %251 = vmatprep.subr.mxu0 0.0
    %252 = vmatpush1.msra.mxu0 0.0
    %253 = vmatprep.subr.mxu0 0.0
    %254 = vmatpush1.msra.mxu0 0.0
    %255 = vmatprep.subr.mxu0 0.0
    %256 = vmatpush1.msra.mxu0 0.0
    %257 = vmatprep.subr.mxu0 0.0
    %258 = vmatpush1.msra.mxu0 0.0
    %259 = vmatprep.subr.mxu0 0.0
    %260 = vmatpush1.msra.mxu0 0.0
    %261 = vmatprep.subr.mxu0 0.0
    %262 = vmatpush1.msra.mxu0 0.0
    %263 = vmatprep.subr.mxu0 0.0
    %264 = vmatpush1.msra.mxu0 0.0
    %265 = vmatprep.subr.mxu0 0.0
    %266 = vmatpush1.msra.mxu0 0.0
    %267 = vmatprep.subr.mxu0 0.0
    %268 = vmatpush1.msra.mxu0 0.0
    %269 = vmatprep.subr.mxu0 0.0
    %270 = vmatpush1.msra.mxu0 0.0
    %271 = vmatprep.subr.mxu0 0.0
    %272 = vmatpush1.msra.mxu0 0.0
    %273 = vmatprep.subr.mxu0 0.0
    %274 = vmatpush1.msra.mxu0 0.0
    %275 = vmatprep.subr.mxu0 0.0
    %276 = vmatpush1.msra.mxu0 0.0
    %277 = vmatprep.subr.mxu0 0.0
    %278 = vmatpush1.msra.mxu0 0.0
    %279 = vmatprep.subr.mxu0 0.0
    %280 = vmatpush1.msra.mxu0 0.0
    %281 = vmatprep.mubr.f32.mxu0 0.0
    %282 = vmatmul.mubr.f32.gmra.mrb[0].mxu0 %v190
    %v283 = vpop.f32.mrb[0].mxu0
    %v284 = vadd.f32 %v215, %v283
    %v285 = vpop.f32.mrb[0].mxu0
    %286 = vmatprep.mubr.f32.mxu0 0.0
    %287 = vmatmul.mubr.f32.gmra.mrb[0].mxu0 %v191
    %v288 = vpop.f32.mrb[0].mxu0
    %v289 = vadd.f32 %v215, %v288
    %v290 = vpop.f32.mrb[0].mxu0
    %291 = vmatprep.mubr.f32.mxu0 0.0
    %292 = vmatmul.mubr.f32.gmra.mrb[0].mxu0 %v192
    %v293 = vpop.f32.mrb[0].mxu0
    %v294 = vadd.f32 %v215, %v293
    %v295 = vpop.f32.mrb[0].mxu0
    %296 = vmatprep.mubr.f32.mxu0 0.0
    %297 = vmatmul.mubr.f32.gmra.mrb[0].mxu0 %v193
    %v298 = vpop.f32.mrb[0].mxu0
    %v299 = vadd.f32 %v215, %v298
    %v300 = vpop.f32.mrb[0].mxu0
    %301 = vdwg.mxu0
    %v302 = vmax.f32 %v284, 0.0
    %v303 = vmax.f32 %v289, 0.0
    %v304 = vmax.f32 %v294, 0.0
    %v305 = vmax.f32 %v299, 0.0
    %v306 = vmin.f32 %v284, 0.0
    %v307 = vmin.f32 %v289, 0.0
    %v308 = vmin.f32 %v294, 0.0
    %v309 = vmin.f32 %v299, 0.0
    %v310 = vstv %s43
    %v311 = vmul.f32 %v310, %v306
    %v312 = vmul.f32 %v310, %v307
    %v313 = vmul.f32 %v310, %v308
    %v314 = vmul.f32 %v310, %v309
    %v315 = vadd.f32 %v302, %v311
    %v316 = vadd.f32 %v303, %v312
    %v317 = vadd.f32 %v304, %v313
    %v318 = vadd.f32 %v305, %v314
    %v319 = vld [vmem:[%s6] sm:$0x1]
    %v320 = vstv %s44
    %321 = vmatprep.subr.mxu0 0.0
    %322 = vmatpush1.xpose.msra.mxu0 %v315
    %323 = vmatprep.subr.mxu0 0.0
    %324 = vmatpush1.xpose.msra.mxu0 %v316
    %325 = vmatprep.subr.mxu0 0.0
    %326 = vmatpush1.xpose.msra.mxu0 %v317
    %327 = vmatprep.subr.mxu0 0.0
    %328 = vmatpush1.xpose.msra.mxu0 %v318
    %329 = vmatprep.subr.mxu0 0.0
    %330 = vmatpush1.xpose.msra.mxu0 0.0
    %331 = vmatprep.subr.mxu0 0.0
    %332 = vmatpush1.xpose.msra.mxu0 0.0
    %333 = vmatprep.subr.mxu0 0.0
    %334 = vmatpush1.xpose.msra.mxu0 0.0
    %335 = vmatprep.subr.mxu0 0.0
    %336 = vmatpush1.xpose.msra.mxu0 0.0
    %337 = vmatprep.subr.mxu0 0.0
    %338 = vmatpush1.xpose.msra.mxu0 0.0
    %339 = vmatprep.subr.mxu0 0.0
    %340 = vmatpush1.xpose.msra.mxu0 0.0
    %341 = vmatprep.subr.mxu0 0.0
    %342 = vmatpush1.xpose.msra.mxu0 0.0
    %343 = vmatprep.subr.mxu0 0.0
    %344 = vmatpush1.xpose.msra.mxu0 0.0
    %345 = vmatprep.subr.mxu0 0.0
    %346 = vmatpush1.xpose.msra.mxu0 0.0
    %347 = vmatprep.subr.mxu0 0.0
    %348 = vmatpush1.xpose.msra.mxu0 0.0
    %349 = vmatprep.subr.mxu0 0.0
    %350 = vmatpush1.xpose.msra.mxu0 0.0
    %351 = vmatprep.subr.mxu0 0.0
    %352 = vmatpush1.xpose.msra.mxu0 0.0
    %353 = vmatprep.subr.mxu0 0.0
    %354 = vmatpush1.xpose.msra.mxu0 0.0
    %355 = vmatprep.subr.mxu0 0.0
    %356 = vmatpush1.xpose.msra.mxu0 0.0
    %357 = vmatprep.subr.mxu0 0.0
    %358 = vmatpush1.xpose.msra.mxu0 0.0
    %359 = vmatprep.subr.mxu0 0.0
    %360 = vmatpush1.xpose.msra.mxu0 0.0
    %361 = vmatprep.subr.mxu0 0.0
    %362 = vmatpush1.xpose.msra.mxu0 0.0
    %363 = vmatprep.subr.mxu0 0.0
    %364 = vmatpush1.xpose.msra.mxu0 0.0
    %365 = vmatprep.subr.mxu0 0.0
    %366 = vmatpush1.xpose.msra.mxu0 0.0
    %367 = vmatprep.subr.mxu0 0.0
    %368 = vmatpush1.xpose.msra.mxu0 0.0
    %369 = vmatprep.subr.mxu0 0.0
    %370 = vmatpush1.xpose.msra.mxu0 0.0
    %371 = vmatprep.subr.mxu0 0.0
    %372 = vmatpush1.xpose.msra.mxu0 0.0
    %373 = vmatprep.subr.mxu0 0.0
    %374 = vmatpush1.xpose.msra.mxu0 0.0
    %375 = vmatprep.subr.mxu0 0.0
    %376 = vmatpush1.xpose.msra.mxu0 0.0
    %377 = vmatprep.subr.mxu0 0.0
    %378 = vmatpush1.xpose.msra.mxu0 0.0
    %379 = vmatprep.subr.mxu0 0.0
    %380 = vmatpush1.xpose.msra.mxu0 0.0
    %381 = vmatprep.subr.mxu0 0.0
    %382 = vmatpush1.xpose.msra.mxu0 0.0
    %383 = vmatprep.subr.mxu0 0.0
    %384 = vmatpush1.xpose.msra.mxu0 0.0
    %385 = vmatprep.mubr.f32.mxu0 0.0
    %386 = vmatmul.mubr.f32.gmra.mrb[0].mxu0 %v319
    %v387 = vpop.f32.mrb[0].mxu0
    %v388 = vadd.f32 %v320, %v387
    %v389 = vpop.f32.mrb[0].mxu0
    %390 = vdwg.mxu0
    %vm391 = vcmask 253952
    %392 = vst.msk [vmem:[%s8] sm:$0x1] %vm391, %v388
    // Predicated region
    $region38: #{arrival_rate_estimator_forward.3} parent=1 // pred_check
      _
    $region39: #{arrival_rate_estimator_forward.3} parent=1 // pred_check_branch
      %394 = sbr.rel (0) target = $region41
    $region40: #{arrival_rate_estimator_forward.3} parent=1 // pred_region
      _
    $region41: #{arrival_rate_estimator_forward.3} parent=1 // pred_fallthru
      _
    // Predicated region
    $region42: #{arrival_rate_estimator_forward.3} parent=1 // pred_check
      _
    $region43: #{arrival_rate_estimator_forward.3} parent=1 // pred_check_branch
      %396 = sbr.rel (0) target = $region45
    $region44: #{arrival_rate_estimator_forward.3} parent=1 // pred_region
      _
    $region45: #{arrival_rate_estimator_forward.3} parent=1 // pred_fallthru
      _
    %397 = vsyncpa [#allocation3], 1

// kernel: arrival_rate_estimator_forward.2
$region0: #{arrival_rate_estimator_forward.2}
  #allocation0 [shape = 'u32[]', space=smem, size = 0x4, offset = 0x4, fixed_abs, tag = 'smem constant byte address 0x4 - core index']
  #allocation1 [shape = 'u32[144,128]{1,0:T(1,128)}', space=vmem, size = 0x12000, scoped, tag = 'internal scratch']
  #allocation2 [shape = 'f32[4,256]{1,0:T(4,128)}', space=vmem, size = 0x1000, scoped, tag = 'scratch operand']
  %s0 = inlined_call_operand.vmem [shape: f32[8,4,10], index: 0, kind: input, shape index: {}, may-alias: {0,1}]
  %s1 = inlined_call_operand.vmem [shape: f32[8,4,10], index: 1, kind: input, shape index: {}, may-alias: {0,1}]
  %s2 = inlined_call_operand.vmem [shape: f32[10,768], index: 2, kind: input, shape index: {}]
  %s3 = inlined_call_operand.vmem [shape: f32[10,768], index: 3, kind: input, shape index: {}]
  %s4 = inlined_call_operand.vmem [shape: f32[1,768], index: 4, kind: input, shape index: {}]
  %s5 = inlined_call_operand.vmem [shape: f32[256,768], index: 5, kind: input, shape index: {}]
  %s6 = inlined_call_operand.vmem [shape: f32[1,768], index: 6, kind: input, shape index: {}]
  %s7 = inlined_call_operand.vmem [shape: f32[8,4,128], index: 7, kind: output, shape index: {0}]
  %s8 = inlined_call_operand.vmem [shape: f32[8,4,128], index: 8, kind: output, shape index: {1}]
  %9 = xla_tuple %s7, %s8
  %s10 = sld [smem:[#allocation0]]
  $region50: #{arrival_rate_estimator_forward.2} parent=0
    _
  %s12 = ssub.s32 1, %s10
  %s13 = scalar_select 0, %s12, %s10
  // Predicated region
  $region2: #{arrival_rate_estimator_forward.2} parent=0 // pred_check
    _
  $region3: #{arrival_rate_estimator_forward.2} parent=0 // pred_check_branch
    %15 = sbr.rel (0) target = $region5
  $region4: #{arrival_rate_estimator_forward.2} parent=0 // pred_region
    _
  $region5: #{arrival_rate_estimator_forward.2} parent=0 // pred_fallthru
    _
  // Predicated region
  $region6: #{arrival_rate_estimator_forward.2} parent=0 // pred_check
    _
  $region7: #{arrival_rate_estimator_forward.2} parent=0 // pred_check_branch
    %17 = sbr.rel (0) target = $region9
  $region8: #{arrival_rate_estimator_forward.2} parent=0 // pred_region
    %s18 = ssub.s32 0, 0
    %s19 = smul.u32 8, %s18
    %p20 = scmp.lt.s32.totalorder %s19, 7
    %s21 = scalar_select %p20, %s19, 7
    %s22 = smul.addr %s21, 4
    %s23 = scalar_lea.vmem %s1, %s22
    %s24 = ssub.s32 0, 0
    %s25 = smul.u32 8, %s24
  $region9: #{arrival_rate_estimator_forward.2} parent=0 // pred_fallthru
    _
  // Predicated region
  $region10: #{arrival_rate_estimator_forward.2} parent=0 // pred_check
    _
  $region11: #{arrival_rate_estimator_forward.2} parent=0 // pred_check_branch
    %27 = sbr.rel (0) target = $region13
  $region12: #{arrival_rate_estimator_forward.2} parent=0 // pred_region
    _
  $region13: #{arrival_rate_estimator_forward.2} parent=0 // pred_fallthru
    _
  // Predicated region
  $region14: #{arrival_rate_estimator_forward.2} parent=0 // pred_check
    _
  $region15: #{arrival_rate_estimator_forward.2} parent=0 // pred_check_branch
    %29 = sbr.rel (0) target = $region17
  $region16: #{arrival_rate_estimator_forward.2} parent=0 // pred_region
    _
  $region17: #{arrival_rate_estimator_forward.2} parent=0 // pred_fallthru
    _
  // Predicated region
  $region18: #{arrival_rate_estimator_forward.2} parent=0 // pred_check
    _
  $region19: #{arrival_rate_estimator_forward.2} parent=0 // pred_check_branch
    %31 = sbr.rel (0) target = $region21
  $region20: #{arrival_rate_estimator_forward.2} parent=0 // pred_region
    _
  $region21: #{arrival_rate_estimator_forward.2} parent=0 // pred_fallthru
    _
  // Predicated region
  $region22: #{arrival_rate_estimator_forward.2} parent=0 // pred_check
    _
  $region23: #{arrival_rate_estimator_forward.2} parent=0 // pred_check_branch
    %33 = sbr.rel (0) target = $region25
  $region24: #{arrival_rate_estimator_forward.2} parent=0 // pred_region
    _
  $region25: #{arrival_rate_estimator_forward.2} parent=0 // pred_fallthru
    _
  // Predicated region
  $region26: #{arrival_rate_estimator_forward.2} parent=0 // pred_check
    _
  $region27: #{arrival_rate_estimator_forward.2} parent=0 // pred_check_branch
    %35 = sbr.rel (0) target = $region29
  $region28: #{arrival_rate_estimator_forward.2} parent=0 // pred_region
    _
  $region29: #{arrival_rate_estimator_forward.2} parent=0 // pred_fallthru
    _
  %s36 = ssub.s32 0, 0
  %s37 = smul.u32 8, %s36
  %p38 = scmp.lt.s32.totalorder %s37, 7
  %s39 = scalar_select %p38, %s37, 7
  %s40 = smul.addr %s39, 4
  %s41 = scalar_lea.vmem %s1, %s40
  %s42 = ssub.s32 0, 0
  %s43 = smul.u32 8, %s42
  %p44 = scmp.lt.s32.totalorder %s43, 7
  %s45 = scalar_select %p44, %s43, 7
  %s46 = smul.addr %s45, 4
  %s47 = scalar_lea.vmem %s8, %s46
  %s48 = ssub.s32 0, 0
  %s49 = smul.u32 8, %s48
  %p50 = scmp.lt.s32.totalorder %s49, 7
  %s51 = scalar_select %p50, %s49, 7
  %s52 = smul.addr %s51, 4
  %s53 = scalar_lea.vmem %s1, %s52
  %s54 = ssub.s32 0, 0
  %s55 = smul.u32 8, %s54
  %s56 = ssub.s32 0, 0
  %s57 = smul.u32 8, %s56
  %p58 = scmp.lt.s32.totalorder %s57, 7
  %s59 = scalar_select %p58, %s57, 7
  %s60 = smul.addr %s59, 4
  %s61 = scalar_lea.vmem %s8, %s60
  %s62 = ssub.s32 0, 0
  %s63 = smul.u32 8, %s62
  %p64 = scmp.eq.s32.totalorder 0, 0
  // Predicated region
  $region30: #{arrival_rate_estimator_forward.2} parent=0 // pred_check
    %p65 = pneg %p64
  $region31: #{arrival_rate_estimator_forward.2} parent=0 // pred_check_branch
    %67 = sbr.rel (%p65) target = $region33
  $region32: #{arrival_rate_estimator_forward.2} parent=0 // pred_region
    %68 = vst [vmem:[#allocation2] sm:$0xff] 0.0
  $region33: #{arrival_rate_estimator_forward.2} parent=0 // pred_fallthru
    _
  %v69 = vld [vmem:[#allocation2] sm:$0xff]
  %v70 = vld [vmem:[%s0] sm:$0xf]
  %v71 = vld [vmem:[%s2] sm:$0xff]
  %v72 = vld [vmem:[%s2 + $0x8] sm:$0xff]
  %v73 = vld [vmem:[%s2 + $0x10] sm:$0xff]
  %v74 = vld [vmem:[%s2 + $0x18] sm:$0xff]
  %v75 = vld [vmem:[%s2 + $0x20] sm:$0xff]
  %v76 = vld [vmem:[%s2 + $0x28] sm:$0xff]
  %v77 = vld [vmem:[%s2 + $0x30] sm:$0x3]
  %v78 = vld [vmem:[%s2 + $0x38] sm:$0x3]
  %v79 = vld [vmem:[%s2 + $0x40] sm:$0x3]
  %v80 = vld [vmem:[%s2 + $0x48] sm:$0x3]
  %v81 = vld [vmem:[%s2 + $0x50] sm:$0x3]
  %v82 = vld [vmem:[%s2 + $0x58] sm:$0x3]
  %s83 = scalar_lea.vmem %s53, 28
  %v84 = vld [vmem:[%s83] sm:$0xf]
  %v85 = vld [vmem:[%s3] sm:$0xff]
  %v86 = vld [vmem:[%s3 + $0x8] sm:$0xff]
  %v87 = vld [vmem:[%s3 + $0x10] sm:$0xff]
  %v88 = vld [vmem:[%s3 + $0x18] sm:$0xff]
  %v89 = vld [vmem:[%s3 + $0x20] sm:$0xff]
  %v90 = vld [vmem:[%s3 + $0x28] sm:$0xff]
  %v91 = vld [vmem:[%s3 + $0x30] sm:$0x3]
  %v92 = vld [vmem:[%s3 + $0x38] sm:$0x3]
  %v93 = vld [vmem:[%s3 + $0x40] sm:$0x3]
  %v94 = vld [vmem:[%s3 + $0x48] sm:$0x3]
  %v95 = vld [vmem:[%s3 + $0x50] sm:$0x3]
  %v96 = vld [vmem:[%s3 + $0x58] sm:$0x3]
  %vm97 = vcmask 80896
  %v99 = vsel %vm97, %v84, 0
  %vm101 = vcmask 1041408
  %v103 = vsel %vm101, %v91, 0
  %v106 = vsel %vm101, %v92, 0
  %v109 = vsel %vm101, %v93, 0
  %v112 = vsel %vm101, %v94, 0
  %v115 = vsel %vm101, %v95, 0
  %v118 = vsel %vm101, %v96, 0
  %120 = vmatprep.subr.mxu0 %v86
  %121 = vmatpush1.msra.mxu0 %v85
  %122 = vmatprep.subr.mxu0 %v106
  %123 = vmatpush1.msra.mxu0 %v103
  %124 = vmatprep.subr.mxu0 0.0
  %125 = vmatpush1.msra.mxu0 0.0
  %126 = vmatprep.subr.mxu0 0.0
  %127 = vmatpush1.msra.mxu0 0.0
  %128 = vmatprep.subr.mxu0 0.0
  %129 = vmatpush1.msra.mxu0 0.0
  %130 = vmatprep.subr.mxu0 0.0
  %131 = vmatpush1.msra.mxu0 0.0
  %132 = vmatprep.subr.mxu0 0.0
  %133 = vmatpush1.msra.mxu0 0.0
  %134 = vmatprep.subr.mxu0 0.0
  %135 = vmatpush1.msra.mxu0 0.0
  %136 = vmatprep.subr.mxu0 0.0
  %137 = vmatpush1.msra.mxu0 0.0
  %138 = vmatprep.subr.mxu0 0.0
  %139 = vmatpush1.msra.mxu0 0.0
  %140 = vmatprep.subr.mxu0 0.0
  %141 = vmatpush1.msra.mxu0 0.0
  %142 = vmatprep.subr.mxu0 0.0
  %143 = vmatpush1.msra.mxu0 0.0
  %144 = vmatprep.subr.mxu0 0.0
  %145 = vmatpush1.msra.mxu0 0.0
  %146 = vmatprep.subr.mxu0 0.0
  %147 = vmatpush1.msra.mxu0 0.0
  %148 = vmatprep.subr.mxu0 0.0
  %149 = vmatpush1.msra.mxu0 0.0
  %150 = vmatprep.subr.mxu0 0.0
  %151 = vmatpush1.msra.mxu0 0.0
  %152 = vmatprep.subr.mxu0 0.0
  %153 = vmatpush1.msra.mxu0 0.0
  %154 = vmatprep.subr.mxu0 0.0
  %155 = vmatpush1.msra.mxu0 0.0
  %156 = vmatprep.subr.mxu0 0.0
  %157 = vmatpush1.msra.mxu0 0.0
  %158 = vmatprep.subr.mxu0 0.0
  %159 = vmatpush1.msra.mxu0 0.0
  %160 = vmatprep.subr.mxu0 0.0
  %161 = vmatpush1.msra.mxu0 0.0
  %162 = vmatprep.subr.mxu0 0.0
  %163 = vmatpush1.msra.mxu0 0.0
  %164 = vmatprep.subr.mxu0 0.0
  %165 = vmatpush1.msra.mxu0 0.0
  %166 = vmatprep.subr.mxu0 0.0
  %167 = vmatpush1.msra.mxu0 0.0
  %168 = vmatprep.subr.mxu0 0.0
  %169 = vmatpush1.msra.mxu0 0.0
  %170 = vmatprep.subr.mxu0 0.0
  %171 = vmatpush1.msra.mxu0 0.0
  %172 = vmatprep.subr.mxu0 0.0
  %173 = vmatpush1.msra.mxu0 0.0
  %174 = vmatprep.subr.mxu0 0.0
  %175 = vmatpush1.msra.mxu0 0.0
  %176 = vmatprep.subr.mxu0 0.0
  %177 = vmatpush1.msra.mxu0 0.0
  %178 = vmatprep.subr.mxu0 0.0
  %179 = vmatpush1.msra.mxu0 0.0
  %180 = vmatprep.subr.mxu0 0.0
  %181 = vmatpush1.msra.mxu0 0.0
  %182 = vmatprep.subr.mxu0 0.0
  %183 = vmatpush1.msra.mxu0 0.0
  %184 = vmatprep.mubr.f32.mxu0 0.0
  %185 = vmatmul.mubr.f32.gmra.mrb[0].mxu0 %v99
  %v186 = vpop.f32.mrb[0].mxu0
  %v187 = vadd.f32 0.0, %v186
  %v188 = vpop.f32.mrb[0].mxu0
  %v189 = vadd.f32 0.0, %v188
  %190 = vdwg.mxu0
  %191 = vmatprep.subr.mxu0 %v88
  %192 = vmatpush1.msra.mxu0 %v87
  %193 = vmatprep.subr.mxu0 %v112
  %194 = vmatpush1.msra.mxu0 %v109
  %195 = vmatprep.subr.mxu0 0.0
  %196 = vmatpush1.msra.mxu0 0.0
  %197 = vmatprep.subr.mxu0 0.0
  %198 = vmatpush1.msra.mxu0 0.0
  %199 = vmatprep.subr.mxu0 0.0
  %200 = vmatpush1.msra.mxu0 0.0
  %201 = vmatprep.subr.mxu0 0.0
  %202 = vmatpush1.msra.mxu0 0.0
  %203 = vmatprep.subr.mxu0 0.0
  %204 = vmatpush1.msra.mxu0 0.0
  %205 = vmatprep.subr.mxu0 0.0
  %206 = vmatpush1.msra.mxu0 0.0
  %207 = vmatprep.subr.mxu0 0.0
  %208 = vmatpush1.msra.mxu0 0.0
  %209 = vmatprep.subr.mxu0 0.0
  %210 = vmatpush1.msra.mxu0 0.0
  %211 = vmatprep.subr.mxu0 0.0
  %212 = vmatpush1.msra.mxu0 0.0
  %213 = vmatprep.subr.mxu0 0.0
  %214 = vmatpush1.msra.mxu0 0.0
  %215 = vmatprep.subr.mxu0 0.0
  %216 = vmatpush1.msra.mxu0 0.0
  %217 = vmatprep.subr.mxu0 0.0
  %218 = vmatpush1.msra.mxu0 0.0
  %219 = vmatprep.subr.mxu0 0.0
  %220 = vmatpush1.msra.mxu0 0.0
  %221 = vmatprep.subr.mxu0 0.0
  %222 = vmatpush1.msra.mxu0 0.0
  %223 = vmatprep.subr.mxu0 0.0
  %224 = vmatpush1.msra.mxu0 0.0
  %225 = vmatprep.subr.mxu0 0.0
  %226 = vmatpush1.msra.mxu0 0.0
  %227 = vmatprep.subr.mxu0 0.0
  %228 = vmatpush1.msra.mxu0 0.0
  %229 = vmatprep.subr.mxu0 0.0
  %230 = vmatpush1.msra.mxu0 0.0
  %231 = vmatprep.subr.mxu0 0.0
  %232 = vmatpush1.msra.mxu0 0.0
  %233 = vmatprep.subr.mxu0 0.0
  %234 = vmatpush1.msra.mxu0 0.0
  %235 = vmatprep.subr.mxu0 0.0
  %236 = vmatpush1.msra.mxu0 0.0
  %237 = vmatprep.subr.mxu0 0.0
  %238 = vmatpush1.msra.mxu0 0.0
  %239 = vmatprep.subr.mxu0 0.0
  %240 = vmatpush1.msra.mxu0 0.0
  %241 = vmatprep.subr.mxu0 0.0
  %242 = vmatpush1.msra.mxu0 0.0
  %243 = vmatprep.subr.mxu0 0.0
  %244 = vmatpush1.msra.mxu0 0.0
  %245 = vmatprep.subr.mxu0 0.0
  %246 = vmatpush1.msra.mxu0 0.0
  %247 = vmatprep.subr.mxu0 0.0
  %248 = vmatpush1.msra.mxu0 0.0
  %249 = vmatprep.subr.mxu0 0.0
  %250 = vmatpush1.msra.mxu0 0.0
  %251 = vmatprep.subr.mxu0 0.0
  %252 = vmatpush1.msra.mxu0 0.0
  %253 = vmatprep.subr.mxu0 0.0
  %254 = vmatpush1.msra.mxu0 0.0
  %255 = vmatprep.mubr.f32.mxu0 0.0
  %256 = vmatmul.mubr.f32.gmra.mrb[0].mxu0 %v99
  %v257 = vpop.f32.mrb[0].mxu0
  %v258 = vadd.f32 0.0, %v257
  %v259 = vpop.f32.mrb[0].mxu0
  %v260 = vadd.f32 0.0, %v259
  %261 = vdwg.mxu0
  %262 = vmatprep.subr.mxu0 %v90
  %263 = vmatpush1.msra.mxu0 %v89
  %264 = vmatprep.subr.mxu0 %v118
  %265 = vmatpush1.msra.mxu0 %v115
  %266 = vmatprep.subr.mxu0 0.0
  %267 = vmatpush1.msra.mxu0 0.0
  %268 = vmatprep.subr.mxu0 0.0
  %269 = vmatpush1.msra.mxu0 0.0
  %270 = vmatprep.subr.mxu0 0.0
  %271 = vmatpush1.msra.mxu0 0.0
  %272 = vmatprep.subr.mxu0 0.0
  %273 = vmatpush1.msra.mxu0 0.0
  %274 = vmatprep.subr.mxu0 0.0
  %275 = vmatpush1.msra.mxu0 0.0
  %276 = vmatprep.subr.mxu0 0.0
  %277 = vmatpush1.msra.mxu0 0.0
  %278 = vmatprep.subr.mxu0 0.0
  %279 = vmatpush1.msra.mxu0 0.0
  %280 = vmatprep.subr.mxu0 0.0
  %281 = vmatpush1.msra.mxu0 0.0
  %282 = vmatprep.subr.mxu0 0.0
  %283 = vmatpush1.msra.mxu0 0.0
  %284 = vmatprep.subr.mxu0 0.0
  %285 = vmatpush1.msra.mxu0 0.0
  %286 = vmatprep.subr.mxu0 0.0
  %287 = vmatpush1.msra.mxu0 0.0
  %288 = vmatprep.subr.mxu0 0.0
  %289 = vmatpush1.msra.mxu0 0.0
  %290 = vmatprep.subr.mxu0 0.0
  %291 = vmatpush1.msra.mxu0 0.0
  %292 = vmatprep.subr.mxu0 0.0
  %293 = vmatpush1.msra.mxu0 0.0
  %294 = vmatprep.subr.mxu0 0.0
  %295 = vmatpush1.msra.mxu0 0.0
  %296 = vmatprep.subr.mxu0 0.0
  %297 = vmatpush1.msra.mxu0 0.0
  %298 = vmatprep.subr.mxu0 0.0
  %299 = vmatpush1.msra.mxu0 0.0
  %300 = vmatprep.subr.mxu0 0.0
  %301 = vmatpush1.msra.mxu0 0.0
  %302 = vmatprep.subr.mxu0 0.0
  %303 = vmatpush1.msra.mxu0 0.0
  %304 = vmatprep.subr.mxu0 0.0
  %305 = vmatpush1.msra.mxu0 0.0
  %306 = vmatprep.subr.mxu0 0.0
  %307 = vmatpush1.msra.mxu0 0.0
  %308 = vmatprep.subr.mxu0 0.0
  %309 = vmatpush1.msra.mxu0 0.0
  %310 = vmatprep.subr.mxu0 0.0
  %311 = vmatpush1.msra.mxu0 0.0
  %312 = vmatprep.subr.mxu0 0.0
  %313 = vmatpush1.msra.mxu0 0.0
  %314 = vmatprep.subr.mxu0 0.0
  %315 = vmatpush1.msra.mxu0 0.0
  %316 = vmatprep.subr.mxu0 0.0
  %317 = vmatpush1.msra.mxu0 0.0
  %318 = vmatprep.subr.mxu0 0.0
  %319 = vmatpush1.msra.mxu0 0.0
  %320 = vmatprep.subr.mxu0 0.0
  %321 = vmatpush1.msra.mxu0 0.0
  %322 = vmatprep.subr.mxu0 0.0
  %323 = vmatpush1.msra.mxu0 0.0
  %324 = vmatprep.subr.mxu0 0.0
  %325 = vmatpush1.msra.mxu0 0.0
  %326 = vmatprep.mubr.f32.mxu0 0.0
  %327 = vmatmul.mubr.f32.gmra.mrb[0].mxu0 %v99
  %v328 = vpop.f32.mrb[0].mxu0
  %v329 = vadd.f32 0.0, %v328
  %v330 = vpop.f32.mrb[0].mxu0
  %v331 = vadd.f32 0.0, %v330
  %332 = vdwg.mxu0
  %v334 = vsel %vm97, %v70, 0
  %v337 = vsel %vm101, %v77, 0
  %v340 = vsel %vm101, %v78, 0
  %v343 = vsel %vm101, %v79, 0
  %v346 = vsel %vm101, %v80, 0
  %v349 = vsel %vm101, %v81, 0
  %v352 = vsel %vm101, %v82, 0
  %354 = vmatprep.subr.mxu0 %v72
  %355 = vmatpush1.msra.mxu0 %v71
  %356 = vmatprep.subr.mxu0 %v340
  %357 = vmatpush1.msra.mxu0 %v337
  %358 = vmatprep.subr.mxu0 0.0
  %359 = vmatpush1.msra.mxu0 0.0
  %360 = vmatprep.subr.mxu0 0.0
  %361 = vmatpush1.msra.mxu0 0.0
  %362 = vmatprep.subr.mxu0 0.0
  %363 = vmatpush1.msra.mxu0 0.0
  %364 = vmatprep.subr.mxu0 0.0
  %365 = vmatpush1.msra.mxu0 0.0
  %366 = vmatprep.subr.mxu0 0.0
  %367 = vmatpush1.msra.mxu0 0.0
  %368 = vmatprep.subr.mxu0 0.0
  %369 = vmatpush1.msra.mxu0 0.0
  %370 = vmatprep.subr.mxu0 0.0
  %371 = vmatpush1.msra.mxu0 0.0
  %372 = vmatprep.subr.mxu0 0.0
  %373 = vmatpush1.msra.mxu0 0.0
  %374 = vmatprep.subr.mxu0 0.0
  %375 = vmatpush1.msra.mxu0 0.0
  %376 = vmatprep.subr.mxu0 0.0
  %377 = vmatpush1.msra.mxu0 0.0
  %378 = vmatprep.subr.mxu0 0.0
  %379 = vmatpush1.msra.mxu0 0.0
  %380 = vmatprep.subr.mxu0 0.0
  %381 = vmatpush1.msra.mxu0 0.0
  %382 = vmatprep.subr.mxu0 0.0
  %383 = vmatpush1.msra.mxu0 0.0
  %384 = vmatprep.subr.mxu0 0.0
  %385 = vmatpush1.msra.mxu0 0.0
  %386 = vmatprep.subr.mxu0 0.0
  %387 = vmatpush1.msra.mxu0 0.0
  %388 = vmatprep.subr.mxu0 0.0
  %389 = vmatpush1.msra.mxu0 0.0
  %390 = vmatprep.subr.mxu0 0.0
  %391 = vmatpush1.msra.mxu0 0.0
  %392 = vmatprep.subr.mxu0 0.0
  %393 = vmatpush1.msra.mxu0 0.0
  %394 = vmatprep.subr.mxu0 0.0
  %395 = vmatpush1.msra.mxu0 0.0
  %396 = vmatprep.subr.mxu0 0.0
  %397 = vmatpush1.msra.mxu0 0.0
  %398 = vmatprep.subr.mxu0 0.0
  %399 = vmatpush1.msra.mxu0 0.0
  %400 = vmatprep.subr.mxu0 0.0
  %401 = vmatpush1.msra.mxu0 0.0
  %402 = vmatprep.subr.mxu0 0.0
  %403 = vmatpush1.msra.mxu0 0.0
  %404 = vmatprep.subr.mxu0 0.0
  %405 = vmatpush1.msra.mxu0 0.0
  %406 = vmatprep.subr.mxu0 0.0
  %407 = vmatpush1.msra.mxu0 0.0
  %408 = vmatprep.subr.mxu0 0.0
  %409 = vmatpush1.msra.mxu0 0.0
  %410 = vmatprep.subr.mxu0 0.0
  %411 = vmatpush1.msra.mxu0 0.0
  %412 = vmatprep.subr.mxu0 0.0
  %413 = vmatpush1.msra.mxu0 0.0
  %414 = vmatprep.subr.mxu0 0.0
  %415 = vmatpush1.msra.mxu0 0.0
  %416 = vmatprep.subr.mxu0 0.0
  %417 = vmatpush1.msra.mxu0 0.0
  %418 = vmatprep.mubr.f32.mxu0 0.0
  %419 = vmatmul.mubr.f32.gmra.mrb[0].mxu0 %v334
  %v420 = vpop.f32.mrb[0].mxu0
  %v421 = vadd.f32 %v187, %v420
  %v422 = vpop.f32.mrb[0].mxu0
  %v423 = vadd.f32 %v189, %v422
  %424 = vdwg.mxu0
  %425 = vmatprep.subr.mxu0 %v74
  %426 = vmatpush1.msra.mxu0 %v73
  %427 = vmatprep.subr.mxu0 %v346
  %428 = vmatpush1.msra.mxu0 %v343
  %429 = vmatprep.subr.mxu0 0.0
  %430 = vmatpush1.msra.mxu0 0.0
  %431 = vmatprep.subr.mxu0 0.0
  %432 = vmatpush1.msra.mxu0 0.0
  %433 = vmatprep.subr.mxu0 0.0
  %434 = vmatpush1.msra.mxu0 0.0
  %435 = vmatprep.subr.mxu0 0.0
  %436 = vmatpush1.msra.mxu0 0.0
  %437 = vmatprep.subr.mxu0 0.0
  %438 = vmatpush1.msra.mxu0 0.0
  %439 = vmatprep.subr.mxu0 0.0
  %440 = vmatpush1.msra.mxu0 0.0
  %441 = vmatprep.subr.mxu0 0.0
  %442 = vmatpush1.msra.mxu0 0.0
  %443 = vmatprep.subr.mxu0 0.0
  %444 = vmatpush1.msra.mxu0 0.0
  %445 = vmatprep.subr.mxu0 0.0
  %446 = vmatpush1.msra.mxu0 0.0
  %447 = vmatprep.subr.mxu0 0.0
  %448 = vmatpush1.msra.mxu0 0.0
  %449 = vmatprep.subr.mxu0 0.0
  %450 = vmatpush1.msra.mxu0 0.0
  %451 = vmatprep.subr.mxu0 0.0
  %452 = vmatpush1.msra.mxu0 0.0
  %453 = vmatprep.subr.mxu0 0.0
  %454 = vmatpush1.msra.mxu0 0.0
  %455 = vmatprep.subr.mxu0 0.0
  %456 = vmatpush1.msra.mxu0 0.0
  %457 = vmatprep.subr.mxu0 0.0
  %458 = vmatpush1.msra.mxu0 0.0
  %459 = vmatprep.subr.mxu0 0.0
  %460 = vmatpush1.msra.mxu0 0.0
  %461 = vmatprep.subr.mxu0 0.0
  %462 = vmatpush1.msra.mxu0 0.0
  %463 = vmatprep.subr.mxu0 0.0
  %464 = vmatpush1.msra.mxu0 0.0
  %465 = vmatprep.subr.mxu0 0.0
  %466 = vmatpush1.msra.mxu0 0.0
  %467 = vmatprep.subr.mxu0 0.0
  %468 = vmatpush1.msra.mxu0 0.0
  %469 = vmatprep.subr.mxu0 0.0
  %470 = vmatpush1.msra.mxu0 0.0
  %471 = vmatprep.subr.mxu0 0.0
  %472 = vmatpush1.msra.mxu0 0.0
  %473 = vmatprep.subr.mxu0 0.0
  %474 = vmatpush1.msra.mxu0 0.0
  %475 = vmatprep.subr.mxu0 0.0
  %476 = vmatpush1.msra.mxu0 0.0
  %477 = vmatprep.subr.mxu0 0.0
  %478 = vmatpush1.msra.mxu0 0.0
  %479 = vmatprep.subr.mxu0 0.0
  %480 = vmatpush1.msra.mxu0 0.0
  %481 = vmatprep.subr.mxu0 0.0
  %482 = vmatpush1.msra.mxu0 0.0
  %483 = vmatprep.subr.mxu0 0.0
  %484 = vmatpush1.msra.mxu0 0.0
  %485 = vmatprep.subr.mxu0 0.0
  %486 = vmatpush1.msra.mxu0 0.0
  %487 = vmatprep.subr.mxu0 0.0
  %488 = vmatpush1.msra.mxu0 0.0
  %489 = vmatprep.mubr.f32.mxu0 0.0
  %490 = vmatmul.mubr.f32.gmra.mrb[0].mxu0 %v334
  %v491 = vpop.f32.mrb[0].mxu0
  %v492 = vadd.f32 %v258, %v491
  %v493 = vpop.f32.mrb[0].mxu0
  %v494 = vadd.f32 %v260, %v493
  %495 = vdwg.mxu0
  %496 = vmatprep.subr.mxu0 %v76
  %497 = vmatpush1.msra.mxu0 %v75
  %498 = vmatprep.subr.mxu0 %v352
  %499 = vmatpush1.msra.mxu0 %v349
  %500 = vmatprep.subr.mxu0 0.0
  %501 = vmatpush1.msra.mxu0 0.0
  %502 = vmatprep.subr.mxu0 0.0
  %503 = vmatpush1.msra.mxu0 0.0
  %504 = vmatprep.subr.mxu0 0.0
  %505 = vmatpush1.msra.mxu0 0.0
  %506 = vmatprep.subr.mxu0 0.0
  %507 = vmatpush1.msra.mxu0 0.0
  %508 = vmatprep.subr.mxu0 0.0
  %509 = vmatpush1.msra.mxu0 0.0
  %510 = vmatprep.subr.mxu0 0.0
  %511 = vmatpush1.msra.mxu0 0.0
  %512 = vmatprep.subr.mxu0 0.0
  %513 = vmatpush1.msra.mxu0 0.0
  %514 = vmatprep.subr.mxu0 0.0
  %515 = vmatpush1.msra.mxu0 0.0
  %516 = vmatprep.subr.mxu0 0.0
  %517 = vmatpush1.msra.mxu0 0.0
  %518 = vmatprep.subr.mxu0 0.0
  %519 = vmatpush1.msra.mxu0 0.0
  %520 = vmatprep.subr.mxu0 0.0
  %521 = vmatpush1.msra.mxu0 0.0
  %522 = vmatprep.subr.mxu0 0.0
  %523 = vmatpush1.msra.mxu0 0.0
  %524 = vmatprep.subr.mxu0 0.0
  %525 = vmatpush1.msra.mxu0 0.0
  %526 = vmatprep.subr.mxu0 0.0
  %527 = vmatpush1.msra.mxu0 0.0
  %528 = vmatprep.subr.mxu0 0.0
  %529 = vmatpush1.msra.mxu0 0.0
  %530 = vmatprep.subr.mxu0 0.0
  %531 = vmatpush1.msra.mxu0 0.0
  %532 = vmatprep.subr.mxu0 0.0
  %533 = vmatpush1.msra.mxu0 0.0
  %534 = vmatprep.subr.mxu0 0.0
  %535 = vmatpush1.msra.mxu0 0.0
  %536 = vmatprep.subr.mxu0 0.0
  %537 = vmatpush1.msra.mxu0 0.0
  %538 = vmatprep.subr.mxu0 0.0
  %539 = vmatpush1.msra.mxu0 0.0
  %540 = vmatprep.subr.mxu0 0.0
  %541 = vmatpush1.msra.mxu0 0.0
  %542 = vmatprep.subr.mxu0 0.0
  %543 = vmatpush1.msra.mxu0 0.0
  %544 = vmatprep.subr.mxu0 0.0
  %545 = vmatpush1.msra.mxu0 0.0
  %546 = vmatprep.subr.mxu0 0.0
  %547 = vmatpush1.msra.mxu0 0.0
  %548 = vmatprep.subr.mxu0 0.0
  %549 = vmatpush1.msra.mxu0 0.0
  %550 = vmatprep.subr.mxu0 0.0
  %551 = vmatpush1.msra.mxu0 0.0
  %552 = vmatprep.subr.mxu0 0.0
  %553 = vmatpush1.msra.mxu0 0.0
  %554 = vmatprep.subr.mxu0 0.0
  %555 = vmatpush1.msra.mxu0 0.0
  %556 = vmatprep.subr.mxu0 0.0
  %557 = vmatpush1.msra.mxu0 0.0
  %558 = vmatprep.subr.mxu0 0.0
  %559 = vmatpush1.msra.mxu0 0.0
  %560 = vmatprep.mubr.f32.mxu0 0.0
  %561 = vmatmul.mubr.f32.gmra.mrb[0].mxu0 %v334
  %v562 = vpop.f32.mrb[0].mxu0
  %v563 = vadd.f32 %v329, %v562
  %v564 = vpop.f32.mrb[0].mxu0
  %v565 = vadd.f32 %v331, %v564
  %566 = vdwg.mxu0
  %v567 = vld [vmem:[%s4] sm:$0x3f]
  %v569 = vlaneseq
  %v570 = vshrl.u32 %v569, 7
  %v571 = vsub.s32 0, %v570
  %v572 = vrot.slane %v567, %v571
  %v573 = vlaneseq
  %v574 = vshrl.u32 %v573, 7
  %v575 = vsub.s32 1, %v574
  %v576 = vrot.slane %v567, %v575
  %v577 = vlaneseq
  %v578 = vshrl.u32 %v577, 7
  %v579 = vsub.s32 2, %v578
  %v580 = vrot.slane %v567, %v579
  %v581 = vlaneseq
  %v582 = vshrl.u32 %v581, 7
  %v583 = vsub.s32 3, %v582
  %v584 = vrot.slane %v567, %v583
  %v585 = vlaneseq
  %v586 = vshrl.u32 %v585, 7
  %v587 = vsub.s32 4, %v586
  %v588 = vrot.slane %v567, %v587
  %v589 = vlaneseq
  %v590 = vshrl.u32 %v589, 7
  %v591 = vsub.s32 5, %v590
  %v592 = vrot.slane %v567, %v591
  %v599 = vadd.f32 %v421, %v572
  %v600 = vadd.f32 %v423, %v576
  %v601 = vadd.f32 %v492, %v580
  %v602 = vadd.f32 %v494, %v584
  %v603 = vadd.f32 %v563, %v588
  %v604 = vadd.f32 %v565, %v592
  %v605 = vld [vmem:[%s5] sm:$0xff]
  %v606 = vld [vmem:[%s5 + $0x8] sm:$0xff]
  %v607 = vld [vmem:[%s5 + $0x10] sm:$0xff]
  %v608 = vld [vmem:[%s5 + $0x18] sm:$0xff]
  %v609 = vld [vmem:[%s5 + $0x20] sm:$0xff]
  %v610 = vld [vmem:[%s5 + $0x28] sm:$0xff]
  %v611 = vld [vmem:[%s5 + $0x30] sm:$0xff]
  %v612 = vld [vmem:[%s5 + $0x38] sm:$0xff]
  %v613 = vld [vmem:[%s5 + $0x40] sm:$0xff]
  %v614 = vld [vmem:[%s5 + $0x48] sm:$0xff]
  %v615 = vld [vmem:[%s5 + $0x50] sm:$0xff]
  %v616 = vld [vmem:[%s5 + $0x58] sm:$0xff]
  %v617 = vld [vmem:[%s5 + $0x60] sm:$0xff]
  %v618 = vld [vmem:[%s5 + $0x68] sm:$0xff]
  %v619 = vld [vmem:[%s5 + $0x70] sm:$0xff]
  %v620 = vld [vmem:[%s5 + $0x78] sm:$0xff]
  %v621 = vld [vmem:[%s5 + $0x80] sm:$0xff]
  %v622 = vld [vmem:[%s5 + $0x88] sm:$0xff]
  %v623 = vld [vmem:[%s5 + $0x90] sm:$0xff]
  %v624 = vld [vmem:[%s5 + $0x98] sm:$0xff]
  %v625 = vld [vmem:[%s5 + $0xa0] sm:$0xff]
  %v626 = vld [vmem:[%s5 + $0xa8] sm:$0xff]
  %v627 = vld [vmem:[%s5 + $0xb0] sm:$0xff]
  %v628 = vld [vmem:[%s5 + $0xb8] sm:$0xff]
  %v629 = vld [vmem:[%s5 + $0xc0] sm:$0xff]
  %v630 = vld [vmem:[%s5 + $0xc8] sm:$0xff]
  %v631 = vld [vmem:[%s5 + $0xd0] sm:$0xff]
  %v632 = vld [vmem:[%s5 + $0xd8] sm:$0xff]
  %v633 = vld [vmem:[%s5 + $0xe0] sm:$0xff]
  %v634 = vld [vmem:[%s5 + $0xe8] sm:$0xff]
  %v635 = vld [vmem:[%s5 + $0xf0] sm:$0xff]
  %v636 = vld [vmem:[%s5 + $0xf8] sm:$0xff]
  %v637 = vld [vmem:[%s5 + $0x100] sm:$0xff]
  %v638 = vld [vmem:[%s5 + $0x108] sm:$0xff]
  %v639 = vld [vmem:[%s5 + $0x110] sm:$0xff]
  %v640 = vld [vmem:[%s5 + $0x118] sm:$0xff]
  %v641 = vld [vmem:[%s5 + $0x120] sm:$0xff]
  %v642 = vld [vmem:[%s5 + $0x128] sm:$0xff]
  %v643 = vld [vmem:[%s5 + $0x130] sm:$0xff]
  %v644 = vld [vmem:[%s5 + $0x138] sm:$0xff]
  %v645 = vld [vmem:[%s5 + $0x140] sm:$0xff]
  %v646 = vld [vmem:[%s5 + $0x148] sm:$0xff]
  %v647 = vld [vmem:[%s5 + $0x150] sm:$0xff]
  %v648 = vld [vmem:[%s5 + $0x158] sm:$0xff]
  %v649 = vld [vmem:[%s5 + $0x160] sm:$0xff]
  %v650 = vld [vmem:[%s5 + $0x168] sm:$0xff]
  %v651 = vld [vmem:[%s5 + $0x170] sm:$0xff]
  %v652 = vld [vmem:[%s5 + $0x178] sm:$0xff]
  %v653 = vld [vmem:[%s5 + $0x180] sm:$0xff]
  %v654 = vld [vmem:[%s5 + $0x188] sm:$0xff]
  %v655 = vld [vmem:[%s5 + $0x190] sm:$0xff]
  %v656 = vld [vmem:[%s5 + $0x198] sm:$0xff]
  %v657 = vld [vmem:[%s5 + $0x1a0] sm:$0xff]
  %v658 = vld [vmem:[%s5 + $0x1a8] sm:$0xff]
  %v659 = vld [vmem:[%s5 + $0x1b0] sm:$0xff]
  %v660 = vld [vmem:[%s5 + $0x1b8] sm:$0xff]
  %v661 = vld [vmem:[%s5 + $0x1c0] sm:$0xff]
  %v662 = vld [vmem:[%s5 + $0x1c8] sm:$0xff]
  %v663 = vld [vmem:[%s5 + $0x1d0] sm:$0xff]
  %v664 = vld [vmem:[%s5 + $0x1d8] sm:$0xff]
  %v665 = vld [vmem:[%s5 + $0x1e0] sm:$0xff]
  %v666 = vld [vmem:[%s5 + $0x1e8] sm:$0xff]
  %v667 = vld [vmem:[%s5 + $0x1f0] sm:$0xff]
  %v668 = vld [vmem:[%s5 + $0x1f8] sm:$0xff]
  %v669 = vld [vmem:[%s5 + $0x200] sm:$0xff]
  %v670 = vld [vmem:[%s5 + $0x208] sm:$0xff]
  %v671 = vld [vmem:[%s5 + $0x210] sm:$0xff]
  %v672 = vld [vmem:[%s5 + $0x218] sm:$0xff]
  %v673 = vld [vmem:[%s5 + $0x220] sm:$0xff]
  %v674 = vld [vmem:[%s5 + $0x228] sm:$0xff]
  %v675 = vld [vmem:[%s5 + $0x230] sm:$0xff]
  %v676 = vld [vmem:[%s5 + $0x238] sm:$0xff]
  %v677 = vld [vmem:[%s5 + $0x240] sm:$0xff]
  %v678 = vld [vmem:[%s5 + $0x248] sm:$0xff]
  %v679 = vld [vmem:[%s5 + $0x250] sm:$0xff]
  %v680 = vld [vmem:[%s5 + $0x258] sm:$0xff]
  %v681 = vld [vmem:[%s5 + $0x260] sm:$0xff]
  %v682 = vld [vmem:[%s5 + $0x268] sm:$0xff]
  %v683 = vld [vmem:[%s5 + $0x270] sm:$0xff]
  %v684 = vld [vmem:[%s5 + $0x278] sm:$0xff]
  %v685 = vld [vmem:[%s5 + $0x280] sm:$0xff]
  %v686 = vld [vmem:[%s5 + $0x288] sm:$0xff]
  %v687 = vld [vmem:[%s5 + $0x290] sm:$0xff]
  %v688 = vld [vmem:[%s5 + $0x298] sm:$0xff]
  %v689 = vld [vmem:[%s5 + $0x2a0] sm:$0xff]
  %v690 = vld [vmem:[%s5 + $0x2a8] sm:$0xff]
  %v691 = vld [vmem:[%s5 + $0x2b0] sm:$0xff]
  %v692 = vld [vmem:[%s5 + $0x2b8] sm:$0xff]
  %v693 = vld [vmem:[%s5 + $0x2c0] sm:$0xff]
  %v694 = vld [vmem:[%s5 + $0x2c8] sm:$0xff]
  %v695 = vld [vmem:[%s5 + $0x2d0] sm:$0xff]
  %v696 = vld [vmem:[%s5 + $0x2d8] sm:$0xff]
  %v697 = vld [vmem:[%s5 + $0x2e0] sm:$0xff]
  %v698 = vld [vmem:[%s5 + $0x2e8] sm:$0xff]
  %v699 = vld [vmem:[%s5 + $0x2f0] sm:$0xff]
  %v700 = vld [vmem:[%s5 + $0x2f8] sm:$0xff]
  %v701 = vld [vmem:[%s5 + $0x300] sm:$0xff]
  %v702 = vld [vmem:[%s5 + $0x308] sm:$0xff]
  %v703 = vld [vmem:[%s5 + $0x310] sm:$0xff]
  %v704 = vld [vmem:[%s5 + $0x318] sm:$0xff]
  %v705 = vld [vmem:[%s5 + $0x320] sm:$0xff]
  %v706 = vld [vmem:[%s5 + $0x328] sm:$0xff]
  %v707 = vld [vmem:[%s5 + $0x330] sm:$0xff]
  %v708 = vld [vmem:[%s5 + $0x338] sm:$0xff]
  %v709 = vld [vmem:[%s5 + $0x340] sm:$0xff]
  %v710 = vld [vmem:[%s5 + $0x348] sm:$0xff]
  %v711 = vld [vmem:[%s5 + $0x350] sm:$0xff]
  %v712 = vld [vmem:[%s5 + $0x358] sm:$0xff]
  %v713 = vld [vmem:[%s5 + $0x360] sm:$0xff]
  %v714 = vld [vmem:[%s5 + $0x368] sm:$0xff]
  %v715 = vld [vmem:[%s5 + $0x370] sm:$0xff]
  %v716 = vld [vmem:[%s5 + $0x378] sm:$0xff]
  %v717 = vld [vmem:[%s5 + $0x380] sm:$0xff]
  %v718 = vld [vmem:[%s5 + $0x388] sm:$0xff]
  %v719 = vld [vmem:[%s5 + $0x390] sm:$0xff]
  %v720 = vld [vmem:[%s5 + $0x398] sm:$0xff]
  %v721 = vld [vmem:[%s5 + $0x3a0] sm:$0xff]
  %v722 = vld [vmem:[%s5 + $0x3a8] sm:$0xff]
  %v723 = vld [vmem:[%s5 + $0x3b0] sm:$0xff]
  %v724 = vld [vmem:[%s5 + $0x3b8] sm:$0xff]
  %v725 = vld [vmem:[%s5 + $0x3c0] sm:$0xff]
  %v726 = vld [vmem:[%s5 + $0x3c8] sm:$0xff]
  %v727 = vld [vmem:[%s5 + $0x3d0] sm:$0xff]
  %v728 = vld [vmem:[%s5 + $0x3d8] sm:$0xff]
  %v729 = vld [vmem:[%s5 + $0x3e0] sm:$0xff]
  %v730 = vld [vmem:[%s5 + $0x3e8] sm:$0xff]
  %v731 = vld [vmem:[%s5 + $0x3f0] sm:$0xff]
  %v732 = vld [vmem:[%s5 + $0x3f8] sm:$0xff]
  %v733 = vld [vmem:[%s5 + $0x400] sm:$0xff]
  %v734 = vld [vmem:[%s5 + $0x408] sm:$0xff]
  %v735 = vld [vmem:[%s5 + $0x410] sm:$0xff]
  %v736 = vld [vmem:[%s5 + $0x418] sm:$0xff]
  %v737 = vld [vmem:[%s5 + $0x420] sm:$0xff]
  %v738 = vld [vmem:[%s5 + $0x428] sm:$0xff]
  %v739 = vld [vmem:[%s5 + $0x430] sm:$0xff]
  %v740 = vld [vmem:[%s5 + $0x438] sm:$0xff]
  %v741 = vld [vmem:[%s5 + $0x440] sm:$0xff]
  %v742 = vld [vmem:[%s5 + $0x448] sm:$0xff]
  %v743 = vld [vmem:[%s5 + $0x450] sm:$0xff]
  %v744 = vld [vmem:[%s5 + $0x458] sm:$0xff]
  %v745 = vld [vmem:[%s5 + $0x460] sm:$0xff]
  %v746 = vld [vmem:[%s5 + $0x468] sm:$0xff]
  %v747 = vld [vmem:[%s5 + $0x470] sm:$0xff]
  %v748 = vld [vmem:[%s5 + $0x478] sm:$0xff]
  %v749 = vld [vmem:[%s5 + $0x480] sm:$0xff]
  %v750 = vld [vmem:[%s5 + $0x488] sm:$0xff]
  %v751 = vld [vmem:[%s5 + $0x490] sm:$0xff]
  %v752 = vld [vmem:[%s5 + $0x498] sm:$0xff]
  %v753 = vld [vmem:[%s5 + $0x4a0] sm:$0xff]
  %v754 = vld [vmem:[%s5 + $0x4a8] sm:$0xff]
  %v755 = vld [vmem:[%s5 + $0x4b0] sm:$0xff]
  %v756 = vld [vmem:[%s5 + $0x4b8] sm:$0xff]
  %v757 = vld [vmem:[%s5 + $0x4c0] sm:$0xff]
  %v758 = vld [vmem:[%s5 + $0x4c8] sm:$0xff]
  %v759 = vld [vmem:[%s5 + $0x4d0] sm:$0xff]
  %v760 = vld [vmem:[%s5 + $0x4d8] sm:$0xff]
  %v761 = vld [vmem:[%s5 + $0x4e0] sm:$0xff]
  %v762 = vld [vmem:[%s5 + $0x4e8] sm:$0xff]
  %v763 = vld [vmem:[%s5 + $0x4f0] sm:$0xff]
  %v764 = vld [vmem:[%s5 + $0x4f8] sm:$0xff]
  %v765 = vld [vmem:[%s5 + $0x500] sm:$0xff]
  %v766 = vld [vmem:[%s5 + $0x508] sm:$0xff]
  %v767 = vld [vmem:[%s5 + $0x510] sm:$0xff]
  %v768 = vld [vmem:[%s5 + $0x518] sm:$0xff]
  %v769 = vld [vmem:[%s5 + $0x520] sm:$0xff]
  %v770 = vld [vmem:[%s5 + $0x528] sm:$0xff]
  %v771 = vld [vmem:[%s5 + $0x530] sm:$0xff]
  %v772 = vld [vmem:[%s5 + $0x538] sm:$0xff]
  %v773 = vld [vmem:[%s5 + $0x540] sm:$0xff]
  %v774 = vld [vmem:[%s5 + $0x548] sm:$0xff]
  %v775 = vld [vmem:[%s5 + $0x550] sm:$0xff]
  %v776 = vld [vmem:[%s5 + $0x558] sm:$0xff]
  %v777 = vld [vmem:[%s5 + $0x560] sm:$0xff]
  %v778 = vld [vmem:[%s5 + $0x568] sm:$0xff]
  %v779 = vld [vmem:[%s5 + $0x570] sm:$0xff]
  %v780 = vld [vmem:[%s5 + $0x578] sm:$0xff]
  %v781 = vld [vmem:[%s5 + $0x580] sm:$0xff]
  %v782 = vld [vmem:[%s5 + $0x588] sm:$0xff]
  %v783 = vld [vmem:[%s5 + $0x590] sm:$0xff]
  %v784 = vld [vmem:[%s5 + $0x598] sm:$0xff]
  %v785 = vld [vmem:[%s5 + $0x5a0] sm:$0xff]
  %v786 = vld [vmem:[%s5 + $0x5a8] sm:$0xff]
  %v787 = vld [vmem:[%s5 + $0x5b0] sm:$0xff]
  %v788 = vld [vmem:[%s5 + $0x5b8] sm:$0xff]
  %v789 = vld [vmem:[%s5 + $0x5c0] sm:$0xff]
  %v790 = vld [vmem:[%s5 + $0x5c8] sm:$0xff]
  %v791 = vld [vmem:[%s5 + $0x5d0] sm:$0xff]
  %v792 = vld [vmem:[%s5 + $0x5d8] sm:$0xff]
  %v793 = vld [vmem:[%s5 + $0x5e0] sm:$0xff]
  %v794 = vld [vmem:[%s5 + $0x5e8] sm:$0xff]
  %v795 = vld [vmem:[%s5 + $0x5f0] sm:$0xff]
  %v796 = vld [vmem:[%s5 + $0x5f8] sm:$0xff]
  %v797 = vld [vmem:[%s6] sm:$0x3f]
  %v799 = vlaneseq
  %v800 = vshrl.u32 %v799, 7
  %v801 = vsub.s32 0, %v800
  %v802 = vrot.slane %v797, %v801
  %v803 = vlaneseq
  %v804 = vshrl.u32 %v803, 7
  %v805 = vsub.s32 1, %v804
  %v806 = vrot.slane %v797, %v805
  %v807 = vlaneseq
  %v808 = vshrl.u32 %v807, 7
  %v809 = vsub.s32 2, %v808
  %v810 = vrot.slane %v797, %v809
  %v811 = vlaneseq
  %v812 = vshrl.u32 %v811, 7
  %v813 = vsub.s32 3, %v812
  %v814 = vrot.slane %v797, %v813
  %v815 = vlaneseq
  %v816 = vshrl.u32 %v815, 7
  %v817 = vsub.s32 4, %v816
  %v818 = vrot.slane %v797, %v817
  %v819 = vlaneseq
  %v820 = vshrl.u32 %v819, 7
  %v821 = vsub.s32 5, %v820
  %v822 = vrot.slane %v797, %v821
  %v830 = vcombine.high %v69, %v69
  %832 = vmatprep.subr.mxu0 %v606
  %833 = vmatpush1.msra.mxu0 %v605
  %834 = vmatprep.subr.mxu0 %v612
  %835 = vmatpush1.msra.mxu0 %v611
  %836 = vmatprep.subr.mxu0 %v618
  %837 = vmatpush1.msra.mxu0 %v617
  %838 = vmatprep.subr.mxu0 %v624
  %839 = vmatpush1.msra.mxu0 %v623
  %840 = vmatprep.subr.mxu0 %v630
  %841 = vmatpush1.msra.mxu0 %v629
  %842 = vmatprep.subr.mxu0 %v636
  %843 = vmatpush1.msra.mxu0 %v635
  %844 = vmatprep.subr.mxu0 %v642
  %845 = vmatpush1.msra.mxu0 %v641
  %846 = vmatprep.subr.mxu0 %v648
  %847 = vmatpush1.msra.mxu0 %v647
  %848 = vmatprep.subr.mxu0 %v654
  %849 = vmatpush1.msra.mxu0 %v653
  %850 = vmatprep.subr.mxu0 %v660
  %851 = vmatpush1.msra.mxu0 %v659
  %852 = vmatprep.subr.mxu0 %v666
  %853 = vmatpush1.msra.mxu0 %v665
  %854 = vmatprep.subr.mxu0 %v672
  %855 = vmatpush1.msra.mxu0 %v671
  %856 = vmatprep.subr.mxu0 %v678
  %857 = vmatpush1.msra.mxu0 %v677
  %858 = vmatprep.subr.mxu0 %v684
  %859 = vmatpush1.msra.mxu0 %v683
  %860 = vmatprep.subr.mxu0 %v690
  %861 = vmatpush1.msra.mxu0 %v689
  %862 = vmatprep.subr.mxu0 %v696
  %863 = vmatpush1.msra.mxu0 %v695
  %864 = vmatprep.subr.mxu0 %v702
  %865 = vmatpush1.msra.mxu0 %v701
  %866 = vmatprep.subr.mxu0 %v708
  %867 = vmatpush1.msra.mxu0 %v707
  %868 = vmatprep.subr.mxu0 %v714
  %869 = vmatpush1.msra.mxu0 %v713
  %870 = vmatprep.subr.mxu0 %v720
  %871 = vmatpush1.msra.mxu0 %v719
  %872 = vmatprep.subr.mxu0 %v726
  %873 = vmatpush1.msra.mxu0 %v725
  %874 = vmatprep.subr.mxu0 %v732
  %875 = vmatpush1.msra.mxu0 %v731
  %876 = vmatprep.subr.mxu0 %v738
  %877 = vmatpush1.msra.mxu0 %v737
  %878 = vmatprep.subr.mxu0 %v744
  %879 = vmatpush1.msra.mxu0 %v743
  %880 = vmatprep.subr.mxu0 %v750
  %881 = vmatpush1.msra.mxu0 %v749
  %882 = vmatprep.subr.mxu0 %v756
  %883 = vmatpush1.msra.mxu0 %v755
  %884 = vmatprep.subr.mxu0 %v762
  %885 = vmatpush1.msra.mxu0 %v761
  %886 = vmatprep.subr.mxu0 %v768
  %887 = vmatpush1.msra.mxu0 %v767
  %888 = vmatprep.subr.mxu0 %v774
  %889 = vmatpush1.msra.mxu0 %v773
  %890 = vmatprep.subr.mxu0 %v780
  %891 = vmatpush1.msra.mxu0 %v779
  %892 = vmatprep.subr.mxu0 %v786
  %893 = vmatpush1.msra.mxu0 %v785
  %894 = vmatprep.subr.mxu0 %v792
  %895 = vmatpush1.msra.mxu0 %v791
  %896 = vmatprep.mubr.f32.mxu0 %v830
  %897 = vmatmul.mubr.f32.gmra.mrb[0].mxu0 %v69
  %v898 = vpop.f32.mrb[0].mxu0
  %v899 = vadd.f32 %v802, %v898
  %v900 = vpop.f32.mrb[0].mxu0
  %v901 = vadd.f32 %v806, %v900
  %902 = vdwg.mxu0
  %903 = vmatprep.subr.mxu0 %v608
  %904 = vmatpush1.msra.mxu0 %v607
  %905 = vmatprep.subr.mxu0 %v614
  %906 = vmatpush1.msra.mxu0 %v613
  %907 = vmatprep.subr.mxu0 %v620
  %908 = vmatpush1.msra.mxu0 %v619
  %909 = vmatprep.subr.mxu0 %v626
  %910 = vmatpush1.msra.mxu0 %v625
  %911 = vmatprep.subr.mxu0 %v632
  %912 = vmatpush1.msra.mxu0 %v631
  %913 = vmatprep.subr.mxu0 %v638
  %914 = vmatpush1.msra.mxu0 %v637
  %915 = vmatprep.subr.mxu0 %v644
  %916 = vmatpush1.msra.mxu0 %v643
  %917 = vmatprep.subr.mxu0 %v650
  %918 = vmatpush1.msra.mxu0 %v649
  %919 = vmatprep.subr.mxu0 %v656
  %920 = vmatpush1.msra.mxu0 %v655
  %921 = vmatprep.subr.mxu0 %v662
  %922 = vmatpush1.msra.mxu0 %v661
  %923 = vmatprep.subr.mxu0 %v668
  %924 = vmatpush1.msra.mxu0 %v667
  %925 = vmatprep.subr.mxu0 %v674
  %926 = vmatpush1.msra.mxu0 %v673
  %927 = vmatprep.subr.mxu0 %v680
  %928 = vmatpush1.msra.mxu0 %v679
  %929 = vmatprep.subr.mxu0 %v686
  %930 = vmatpush1.msra.mxu0 %v685
  %931 = vmatprep.subr.mxu0 %v692
  %932 = vmatpush1.msra.mxu0 %v691
  %933 = vmatprep.subr.mxu0 %v698
  %934 = vmatpush1.msra.mxu0 %v697
  %935 = vmatprep.subr.mxu0 %v704
  %936 = vmatpush1.msra.mxu0 %v703
  %937 = vmatprep.subr.mxu0 %v710
  %938 = vmatpush1.msra.mxu0 %v709
  %939 = vmatprep.subr.mxu0 %v716
  %940 = vmatpush1.msra.mxu0 %v715
  %941 = vmatprep.subr.mxu0 %v722
  %942 = vmatpush1.msra.mxu0 %v721
  %943 = vmatprep.subr.mxu0 %v728
  %944 = vmatpush1.msra.mxu0 %v727
  %945 = vmatprep.subr.mxu0 %v734
  %946 = vmatpush1.msra.mxu0 %v733
  %947 = vmatprep.subr.mxu0 %v740
  %948 = vmatpush1.msra.mxu0 %v739
  %949 = vmatprep.subr.mxu0 %v746
  %950 = vmatpush1.msra.mxu0 %v745
  %951 = vmatprep.subr.mxu0 %v752
  %952 = vmatpush1.msra.mxu0 %v751
  %953 = vmatprep.subr.mxu0 %v758
  %954 = vmatpush1.msra.mxu0 %v757
  %955 = vmatprep.subr.mxu0 %v764
  %956 = vmatpush1.msra.mxu0 %v763
  %957 = vmatprep.subr.mxu0 %v770
  %958 = vmatpush1.msra.mxu0 %v769
  %959 = vmatprep.subr.mxu0 %v776
  %960 = vmatpush1.msra.mxu0 %v775
  %961 = vmatprep.subr.mxu0 %v782
  %962 = vmatpush1.msra.mxu0 %v781
  %963 = vmatprep.subr.mxu0 %v788
  %964 = vmatpush1.msra.mxu0 %v787
  %965 = vmatprep.subr.mxu0 %v794
  %966 = vmatpush1.msra.mxu0 %v793
  %967 = vmatprep.mubr.f32.mxu0 %v830
  %968 = vmatmul.mubr.f32.gmra.mrb[0].mxu0 %v69
  %v969 = vpop.f32.mrb[0].mxu0
  %v970 = vadd.f32 %v810, %v969
  %v971 = vpop.f32.mrb[0].mxu0
  %v972 = vadd.f32 %v814, %v971
  %973 = vdwg.mxu0
  %974 = vmatprep.subr.mxu0 %v610
  %975 = vmatpush1.msra.mxu0 %v609
  %976 = vmatprep.subr.mxu0 %v616
  %977 = vmatpush1.msra.mxu0 %v615
  %978 = vmatprep.subr.mxu0 %v622
  %979 = vmatpush1.msra.mxu0 %v621
  %980 = vmatprep.subr.mxu0 %v628
  %981 = vmatpush1.msra.mxu0 %v627
  %982 = vmatprep.subr.mxu0 %v634
  %983 = vmatpush1.msra.mxu0 %v633
  %984 = vmatprep.subr.mxu0 %v640
  %985 = vmatpush1.msra.mxu0 %v639
  %986 = vmatprep.subr.mxu0 %v646
  %987 = vmatpush1.msra.mxu0 %v645
  %988 = vmatprep.subr.mxu0 %v652
  %989 = vmatpush1.msra.mxu0 %v651
  %990 = vmatprep.subr.mxu0 %v658
  %991 = vmatpush1.msra.mxu0 %v657
  %992 = vmatprep.subr.mxu0 %v664
  %993 = vmatpush1.msra.mxu0 %v663
  %994 = vmatprep.subr.mxu0 %v670
  %995 = vmatpush1.msra.mxu0 %v669
  %996 = vmatprep.subr.mxu0 %v676
  %997 = vmatpush1.msra.mxu0 %v675
  %998 = vmatprep.subr.mxu0 %v682
  %999 = vmatpush1.msra.mxu0 %v681
  %1000 = vmatprep.subr.mxu0 %v688
  %1001 = vmatpush1.msra.mxu0 %v687
  %1002 = vmatprep.subr.mxu0 %v694
  %1003 = vmatpush1.msra.mxu0 %v693
  %1004 = vmatprep.subr.mxu0 %v700
  %1005 = vmatpush1.msra.mxu0 %v699
  %1006 = vmatprep.subr.mxu0 %v706
  %1007 = vmatpush1.msra.mxu0 %v705
  %1008 = vmatprep.subr.mxu0 %v712
  %1009 = vmatpush1.msra.mxu0 %v711
  %1010 = vmatprep.subr.mxu0 %v718
  %1011 = vmatpush1.msra.mxu0 %v717
  %1012 = vmatprep.subr.mxu0 %v724
  %1013 = vmatpush1.msra.mxu0 %v723
  %1014 = vmatprep.subr.mxu0 %v730
  %1015 = vmatpush1.msra.mxu0 %v729
  %1016 = vmatprep.subr.mxu0 %v736
  %1017 = vmatpush1.msra.mxu0 %v735
  %1018 = vmatprep.subr.mxu0 %v742
  %1019 = vmatpush1.msra.mxu0 %v741
  %1020 = vmatprep.subr.mxu0 %v748
  %1021 = vmatpush1.msra.mxu0 %v747
  %1022 = vmatprep.subr.mxu0 %v754
  %1023 = vmatpush1.msra.mxu0 %v753
  %1024 = vmatprep.subr.mxu0 %v760
  %1025 = vmatpush1.msra.mxu0 %v759
  %1026 = vmatprep.subr.mxu0 %v766
  %1027 = vmatpush1.msra.mxu0 %v765
  %1028 = vmatprep.subr.mxu0 %v772
  %1029 = vmatpush1.msra.mxu0 %v771
  %1030 = vmatprep.subr.mxu0 %v778
  %1031 = vmatpush1.msra.mxu0 %v777
  %1032 = vmatprep.subr.mxu0 %v784
  %1033 = vmatpush1.msra.mxu0 %v783
  %1034 = vmatprep.subr.mxu0 %v790
  %1035 = vmatpush1.msra.mxu0 %v789
  %1036 = vmatprep.subr.mxu0 %v796
  %1037 = vmatpush1.msra.mxu0 %v795
  %1038 = vmatprep.mubr.f32.mxu0 %v830
  %1039 = vmatmul.mubr.f32.gmra.mrb[0].mxu0 %v69
  %v1040 = vpop.f32.mrb[0].mxu0
  %v1041 = vadd.f32 %v818, %v1040
  %v1042 = vpop.f32.mrb[0].mxu0
  %v1043 = vadd.f32 %v822, %v1042
  %1044 = vdwg.mxu0
  %v1045 = vadd.f32 %v599, %v899
  %v1046 = vadd.f32 %v600, %v901
  %v1047 = vadd.f32 %v601, %v970
  %v1048 = vadd.f32 %v602, %v972
  %v1049 = vxor.u32 %v1045, 2147483648
  %v1050 = vxor.u32 %v1046, 2147483648
  %v1051 = vxor.u32 %v1047, 2147483648
  %v1052 = vxor.u32 %v1048, 2147483648
  %v1053 = vmul.f32 %v1049, 1.442695
  %v1054 = vpow.pop %v1053
  %v1055 = vmul.f32 %v1050, 1.442695
  %v1056 = vpow.pop %v1055
  %v1057 = vmul.f32 %v1051, 1.442695
  %v1058 = vpow.pop %v1057
  %v1059 = vmul.f32 %v1052, 1.442695
  %v1060 = vpow.pop %v1059
  %v1061 = vadd.f32 %v1054, 1.0
  %v1062 = vadd.f32 %v1056, 1.0
  %v1063 = vadd.f32 %v1058, 1.0
  %v1064 = vadd.f32 %v1060, 1.0
  %v1065 = vrcp.pop %v1061
  %v1066 = vmul.f32 1.0, %v1065
  %v1067 = vrcp.pop %v1062
  %v1068 = vmul.f32 1.0, %v1067
  %v1069 = vrcp.pop %v1063
  %v1070 = vmul.f32 1.0, %v1069
  %v1071 = vrcp.pop %v1064
  %v1072 = vmul.f32 1.0, %v1071
  %v1073 = vmul.f32 %v1066, %v1041
  %v1074 = vmul.f32 %v1068, %v1043
  %v1075 = vadd.f32 %v603, %v1073
  %v1076 = vadd.f32 %v604, %v1074
  %v1077 = vtanh.pop %v1075
  %v1078 = vtanh.pop %v1076
  %v1079 = vsub.f32 1.0, %v1070
  %v1080 = vsub.f32 1.0, %v1072
  %v1081 = vmul.f32 %v1079, %v1077
  %v1082 = vmul.f32 %v1080, %v1078
  %v1083 = vmul.f32 %v1070, %v69
  %v1084 = vmul.f32 %v1072, %v830
  %v1085 = vadd.f32 %v1081, %v1083
  %v1086 = vadd.f32 %v1082, %v1084
  %1087 = vst [vmem:[%s7] sm:$0xf] %v1085
  %s1088 = scalar_lea.vmem %s61, 28
  %1089 = vst [vmem:[%s1088] sm:$0xf] %v1086
  %s1090 = scalar_lea.vmem %s0, 4
  %v1091 = vld [vmem:[%s1090] sm:$0xf]
  %v1092 = vld [vmem:[%s2] sm:$0xff]
  %v1093 = vld [vmem:[%s2 + $0x8] sm:$0xff]
  %v1094 = vld [vmem:[%s2 + $0x10] sm:$0xff]
  %v1095 = vld [vmem:[%s2 + $0x18] sm:$0xff]
  %v1096 = vld [vmem:[%s2 + $0x20] sm:$0xff]
  %v1097 = vld [vmem:[%s2 + $0x28] sm:$0xff]
  %v1098 = vld [vmem:[%s2 + $0x30] sm:$0x3]
  %v1099 = vld [vmem:[%s2 + $0x38] sm:$0x3]
  %v1100 = vld [vmem:[%s2 + $0x40] sm:$0x3]
  %v1101 = vld [vmem:[%s2 + $0x48] sm:$0x3]
  %v1102 = vld [vmem:[%s2 + $0x50] sm:$0x3]
  %v1103 = vld [vmem:[%s2 + $0x58] sm:$0x3]
  %s1104 = scalar_lea.vmem %s53, 24
  %v1105 = vld [vmem:[%s1104] sm:$0xf]
  %v1106 = vld [vmem:[%s3] sm:$0xff]
  %v1107 = vld [vmem:[%s3 + $0x8] sm:$0xff]
  %v1108 = vld [vmem:[%s3 + $0x10] sm:$0xff]
  %v1109 = vld [vmem:[%s3 + $0x18] sm:$0xff]
  %v1110 = vld [vmem:[%s3 + $0x20] sm:$0xff]
  %v1111 = vld [vmem:[%s3 + $0x28] sm:$0xff]
  %v1112 = vld [vmem:[%s3 + $0x30] sm:$0x3]
  %v1113 = vld [vmem:[%s3 + $0x38] sm:$0x3]
  %v1114 = vld [vmem:[%s3 + $0x40] sm:$0x3]
  %v1115 = vld [vmem:[%s3 + $0x48] sm:$0x3]
  %v1116 = vld [vmem:[%s3 + $0x50] sm:$0x3]
  %v1117 = vld [vmem:[%s3 + $0x58] sm:$0x3]
  %v1119 = vsel %vm97, %v1105, 0
  %v1122 = vsel %vm101, %v1112, 0
  %v1125 = vsel %vm101, %v1113, 0
  %v1128 = vsel %vm101, %v1114, 0
  %v1131 = vsel %vm101, %v1115, 0
  %v1134 = vsel %vm101, %v1116, 0
  %v1137 = vsel %vm101, %v1117, 0
  %1139 = vmatprep.subr.mxu0 %v1107
  %1140 = vmatpush1.msra.mxu0 %v1106
  %1141 = vmatprep.subr.mxu0 %v1125
  %1142 = vmatpush1.msra.mxu0 %v1122
  %1143 = vmatprep.subr.mxu0 0.0
  %1144 = vmatpush1.msra.mxu0 0.0
  %1145 = vmatprep.subr.mxu0 0.0
  %1146 = vmatpush1.msra.mxu0 0.0
  %1147 = vmatprep.subr.mxu0 0.0
  %1148 = vmatpush1.msra.mxu0 0.0
  %1149 = vmatprep.subr.mxu0 0.0
  %1150 = vmatpush1.msra.mxu0 0.0
  %1151 = vmatprep.subr.mxu0 0.0
  %1152 = vmatpush1.msra.mxu0 0.0
  %1153 = vmatprep.subr.mxu0 0.0
  %1154 = vmatpush1.msra.mxu0 0.0
  %1155 = vmatprep.subr.mxu0 0.0
  %1156 = vmatpush1.msra.mxu0 0.0
  %1157 = vmatprep.subr.mxu0 0.0
  %1158 = vmatpush1.msra.mxu0 0.0
  %1159 = vmatprep.subr.mxu0 0.0
  %1160 = vmatpush1.msra.mxu0 0.0
  %1161 = vmatprep.subr.mxu0 0.0
  %1162 = vmatpush1.msra.mxu0 0.0
  %1163 = vmatprep.subr.mxu0 0.0
  %1164 = vmatpush1.msra.mxu0 0.0
  %1165 = vmatprep.subr.mxu0 0.0
  %1166 = vmatpush1.msra.mxu0 0.0
  %1167 = vmatprep.subr.mxu0 0.0
  %1168 = vmatpush1.msra.mxu0 0.0
  %1169 = vmatprep.subr.mxu0 0.0
  %1170 = vmatpush1.msra.mxu0 0.0
  %1171 = vmatprep.subr.mxu0 0.0
  %1172 = vmatpush1.msra.mxu0 0.0
  %1173 = vmatprep.subr.mxu0 0.0
  %1174 = vmatpush1.msra.mxu0 0.0
  %1175 = vmatprep.subr.mxu0 0.0
  %1176 = vmatpush1.msra.mxu0 0.0
  %1177 = vmatprep.subr.mxu0 0.0
  %1178 = vmatpush1.msra.mxu0 0.0
  %1179 = vmatprep.subr.mxu0 0.0
  %1180 = vmatpush1.msra.mxu0 0.0
  %1181 = vmatprep.subr.mxu0 0.0
  %1182 = vmatpush1.msra.mxu0 0.0
  %1183 = vmatprep.subr.mxu0 0.0
  %1184 = vmatpush1.msra.mxu0 0.0
  %1185 = vmatprep.subr.mxu0 0.0
  %1186 = vmatpush1.msra.mxu0 0.0
  %1187 = vmatprep.subr.mxu0 0.0
  %1188 = vmatpush1.msra.mxu0 0.0
  %1189 = vmatprep.subr.mxu0 0.0
  %1190 = vmatpush1.msra.mxu0 0.0
  %1191 = vmatprep.subr.mxu0 0.0
  %1192 = vmatpush1.msra.mxu0 0.0
  %1193 = vmatprep.subr.mxu0 0.0
  %1194 = vmatpush1.msra.mxu0 0.0
  %1195 = vmatprep.subr.mxu0 0.0
  %1196 = vmatpush1.msra.mxu0 0.0
  %1197 = vmatprep.subr.mxu0 0.0
  %1198 = vmatpush1.msra.mxu0 0.0
  %1199 = vmatprep.subr.mxu0 0.0
  %1200 = vmatpush1.msra.mxu0 0.0
  %1201 = vmatprep.subr.mxu0 0.0
  %1202 = vmatpush1.msra.mxu0 0.0
  %1203 = vmatprep.mubr.f32.mxu0 0.0
  %1204 = vmatmul.mubr.f32.gmra.mrb[0].mxu0 %v1119
  %v1205 = vpop.f32.mrb[0].mxu0
  %v1206 = vadd.f32 0.0, %v1205
  %v1207 = vpop.f32.mrb[0].mxu0
  %v1208 = vadd.f32 0.0, %v1207
  %1209 = vdwg.mxu0
  %1210 = vmatprep.subr.mxu0 %v1109
  %1211 = vmatpush1.msra.mxu0 %v1108
  %1212 = vmatprep.subr.mxu0 %v1131
  %1213 = vmatpush1.msra.mxu0 %v1128
  %1214 = vmatprep.subr.mxu0 0.0
  %1215 = vmatpush1.msra.mxu0 0.0
  %1216 = vmatprep.subr.mxu0 0.0
  %1217 = vmatpush1.msra.mxu0 0.0
  %1218 = vmatprep.subr.mxu0 0.0
  %1219 = vmatpush1.msra.mxu0 0.0
  %1220 = vmatprep.subr.mxu0 0.0
  %1221 = vmatpush1.msra.mxu0 0.0
  %1222 = vmatprep.subr.mxu0 0.0
  %1223 = vmatpush1.msra.mxu0 0.0
  %1224 = vmatprep.subr.mxu0 0.0
  %1225 = vmatpush1.msra.mxu0 0.0
  %1226 = vmatprep.subr.mxu0 0.0
  %1227 = vmatpush1.msra.mxu0 0.0
  %1228 = vmatprep.subr.mxu0 0.0
  %1229 = vmatpush1.msra.mxu0 0.0
  %1230 = vmatprep.subr.mxu0 0.0
  %1231 = vmatpush1.msra.mxu0 0.0
  %1232 = vmatprep.subr.mxu0 0.0
  %1233 = vmatpush1.msra.mxu0 0.0
  %1234 = vmatprep.subr.mxu0 0.0
  %1235 = vmatpush1.msra.mxu0 0.0
  %1236 = vmatprep.subr.mxu0 0.0
  %1237 = vmatpush1.msra.mxu0 0.0
  %1238 = vmatprep.subr.mxu0 0.0
  %1239 = vmatpush1.msra.mxu0 0.0
  %1240 = vmatprep.subr.mxu0 0.0
  %1241 = vmatpush1.msra.mxu0 0.0
  %1242 = vmatprep.subr.mxu0 0.0
  %1243 = vmatpush1.msra.mxu0 0.0
  %1244 = vmatprep.subr.mxu0 0.0
  %1245 = vmatpush1.msra.mxu0 0.0
  %1246 = vmatprep.subr.mxu0 0.0
  %1247 = vmatpush1.msra.mxu0 0.0
  %1248 = vmatprep.subr.mxu0 0.0
  %1249 = vmatpush1.msra.mxu0 0.0
  %1250 = vmatprep.subr.mxu0 0.0
  %1251 = vmatpush1.msra.mxu0 0.0
  %1252 = vmatprep.subr.mxu0 0.0
  %1253 = vmatpush1.msra.mxu0 0.0
  %1254 = vmatprep.subr.mxu0 0.0
  %1255 = vmatpush1.msra.mxu0 0.0
  %1256 = vmatprep.subr.mxu0 0.0
  %1257 = vmatpush1.msra.mxu0 0.0
  %1258 = vmatprep.subr.mxu0 0.0
  %1259 = vmatpush1.msra.mxu0 0.0
  %1260 = vmatprep.subr.mxu0 0.0
  %1261 = vmatpush1.msra.mxu0 0.0
  %1262 = vmatprep.subr.mxu0 0.0
  %1263 = vmatpush1.msra.mxu0 0.0
  %1264 = vmatprep.subr.mxu0 0.0
  %1265 = vmatpush1.msra.mxu0 0.0
  %1266 = vmatprep.subr.mxu0 0.0
  %1267 = vmatpush1.msra.mxu0 0.0
  %1268 = vmatprep.subr.mxu0 0.0
  %1269 = vmatpush1.msra.mxu0 0.0
  %1270 = vmatprep.subr.mxu0 0.0
  %1271 = vmatpush1.msra.mxu0 0.0
  %1272 = vmatprep.subr.mxu0 0.0
  %1273 = vmatpush1.msra.mxu0 0.0
  %1274 = vmatprep.mubr.f32.mxu0 0.0
  %1275 = vmatmul.mubr.f32.gmra.mrb[0].mxu0 %v1119
  %v1276 = vpop.f32.mrb[0].mxu0
  %v1277 = vadd.f32 0.0, %v1276
  %v1278 = vpop.f32.mrb[0].mxu0
  %v1279 = vadd.f32 0.0, %v1278
  %1280 = vdwg.mxu0
  %1281 = vmatprep.subr.mxu0 %v1111
  %1282 = vmatpush1.msra.mxu0 %v1110
  %1283 = vmatprep.subr.mxu0 %v1137
  %1284 = vmatpush1.msra.mxu0 %v1134
  %1285 = vmatprep.subr.mxu0 0.0
  %1286 = vmatpush1.msra.mxu0 0.0
  %1287 = vmatprep.subr.mxu0 0.0
  %1288 = vmatpush1.msra.mxu0 0.0
  %1289 = vmatprep.subr.mxu0 0.0
  %1290 = vmatpush1.msra.mxu0 0.0
  %1291 = vmatprep.subr.mxu0 0.0
  %1292 = vmatpush1.msra.mxu0 0.0
  %1293 = vmatprep.subr.mxu0 0.0
  %1294 = vmatpush1.msra.mxu0 0.0
  %1295 = vmatprep.subr.mxu0 0.0
  %1296 = vmatpush1.msra.mxu0 0.0
  %1297 = vmatprep.subr.mxu0 0.0
  %1298 = vmatpush1.msra.mxu0 0.0
  %1299 = vmatprep.subr.mxu0 0.0
  %1300 = vmatpush1.msra.mxu0 0.0
  %1301 = vmatprep.subr.mxu0 0.0
  %1302 = vmatpush1.msra.mxu0 0.0
  %1303 = vmatprep.subr.mxu0 0.0
  %1304 = vmatpush1.msra.mxu0 0.0
  %1305 = vmatprep.subr.mxu0 0.0
  %1306 = vmatpush1.msra.mxu0 0.0
  %1307 = vmatprep.subr.mxu0 0.0
  %1308 = vmatpush1.msra.mxu0 0.0
  %1309 = vmatprep.subr.mxu0 0.0
  %1310 = vmatpush1.msra.mxu0 0.0
  %1311 = vmatprep.subr.mxu0 0.0
  %1312 = vmatpush1.msra.mxu0 0.0
  %1313 = vmatprep.subr.mxu0 0.0
  %1314 = vmatpush1.msra.mxu0 0.0
  %1315 = vmatprep.subr.mxu0 0.0
  %1316 = vmatpush1.msra.mxu0 0.0
  %1317 = vmatprep.subr.mxu0 0.0
  %1318 = vmatpush1.msra.mxu0 0.0
  %1319 = vmatprep.subr.mxu0 0.0
  %1320 = vmatpush1.msra.mxu0 0.0
  %1321 = vmatprep.subr.mxu0 0.0
  %1322 = vmatpush1.msra.mxu0 0.0
  %1323 = vmatprep.subr.mxu0 0.0
  %1324 = vmatpush1.msra.mxu0 0.0
  %1325 = vmatprep.subr.mxu0 0.0
  %1326 = vmatpush1.msra.mxu0 0.0
  %1327 = vmatprep.subr.mxu0 0.0
  %1328 = vmatpush1.msra.mxu0 0.0
  %1329 = vmatprep.subr.mxu0 0.0
  %1330 = vmatpush1.msra.mxu0 0.0
  %1331 = vmatprep.subr.mxu0 0.0
  %1332 = vmatpush1.msra.mxu0 0.0
  %1333 = vmatprep.subr.mxu0 0.0
  %1334 = vmatpush1.msra.mxu0 0.0
  %1335 = vmatprep.subr.mxu0 0.0
  %1336 = vmatpush1.msra.mxu0 0.0
  %1337 = vmatprep.subr.mxu0 0.0
  %1338 = vmatpush1.msra.mxu0 0.0
  %1339 = vmatprep.subr.mxu0 0.0
  %1340 = vmatpush1.msra.mxu0 0.0
  %1341 = vmatprep.subr.mxu0 0.0
  %1342 = vmatpush1.msra.mxu0 0.0
  %1343 = vmatprep.subr.mxu0 0.0
  %1344 = vmatpush1.msra.mxu0 0.0
  %1345 = vmatprep.mubr.f32.mxu0 0.0
  %1346 = vmatmul.mubr.f32.gmra.mrb[0].mxu0 %v1119
  %v1347 = vpop.f32.mrb[0].mxu0
  %v1348 = vadd.f32 0.0, %v1347
  %v1349 = vpop.f32.mrb[0].mxu0
  %v1350 = vadd.f32 0.0, %v1349
  %1351 = vdwg.mxu0
  %v1353 = vsel %vm97, %v1091, 0
  %v1356 = vsel %vm101, %v1098, 0
  %v1359 = vsel %vm101, %v1099, 0
  %v1362 = vsel %vm101, %v1100, 0
  %v1365 = vsel %vm101, %v1101, 0
  %v1368 = vsel %vm101, %v1102, 0
  %v1371 = vsel %vm101, %v1103, 0
  %1373 = vmatprep.subr.mxu0 %v1093
  %1374 = vmatpush1.msra.mxu0 %v1092
  %1375 = vmatprep.subr.mxu0 %v1359
  %1376 = vmatpush1.msra.mxu0 %v1356
  %1377 = vmatprep.subr.mxu0 0.0
  %1378 = vmatpush1.msra.mxu0 0.0
  %1379 = vmatprep.subr.mxu0 0.0
  %1380 = vmatpush1.msra.mxu0 0.0
  %1381 = vmatprep.subr.mxu0 0.0
  %1382 = vmatpush1.msra.mxu0 0.0
  %1383 = vmatprep.subr.mxu0 0.0
  %1384 = vmatpush1.msra.mxu0 0.0
  %1385 = vmatprep.subr.mxu0 0.0
  %1386 = vmatpush1.msra.mxu0 0.0
  %1387 = vmatprep.subr.mxu0 0.0
  %1388 = vmatpush1.msra.mxu0 0.0
  %1389 = vmatprep.subr.mxu0 0.0
  %1390 = vmatpush1.msra.mxu0 0.0
  %1391 = vmatprep.subr.mxu0 0.0
  %1392 = vmatpush1.msra.mxu0 0.0
  %1393 = vmatprep.subr.mxu0 0.0
  %1394 = vmatpush1.msra.mxu0 0.0
  %1395 = vmatprep.subr.mxu0 0.0
  %1396 = vmatpush1.msra.mxu0 0.0
  %1397 = vmatprep.subr.mxu0 0.0
  %1398 = vmatpush1.msra.mxu0 0.0
  %1399 = vmatprep.subr.mxu0 0.0
  %1400 = vmatpush1.msra.mxu0 0.0
  %1401 = vmatprep.subr.mxu0 0.0
  %1402 = vmatpush1.msra.mxu0 0.0
  %1403 = vmatprep.subr.mxu0 0.0
  %1404 = vmatpush1.msra.mxu0 0.0
  %1405 = vmatprep.subr.mxu0 0.0
  %1406 = vmatpush1.msra.mxu0 0.0
  %1407 = vmatprep.subr.mxu0 0.0
  %1408 = vmatpush1.msra.mxu0 0.0
  %1409 = vmatprep.subr.mxu0 0.0
  %1410 = vmatpush1.msra.mxu0 0.0
  %1411 = vmatprep.subr.mxu0 0.0
  %1412 = vmatpush1.msra.mxu0 0.0
  %1413 = vmatprep.subr.mxu0 0.0
  %1414 = vmatpush1.msra.mxu0 0.0
  %1415 = vmatprep.subr.mxu0 0.0
  %1416 = vmatpush1.msra.mxu0 0.0
  %1417 = vmatprep.subr.mxu0 0.0
  %1418 = vmatpush1.msra.mxu0 0.0
  %1419 = vmatprep.subr.mxu0 0.0
  %1420 = vmatpush1.msra.mxu0 0.0
  %1421 = vmatprep.subr.mxu0 0.0
  %1422 = vmatpush1.msra.mxu0 0.0
  %1423 = vmatprep.subr.mxu0 0.0
  %1424 = vmatpush1.msra.mxu0 0.0
  %1425 = vmatprep.subr.mxu0 0.0
  %1426 = vmatpush1.msra.mxu0 0.0
  %1427 = vmatprep.subr.mxu0 0.0
  %1428 = vmatpush1.msra.mxu0 0.0
  %1429 = vmatprep.subr.mxu0 0.0
  %1430 = vmatpush1.msra.mxu0 0.0
  %1431 = vmatprep.subr.mxu0 0.0
  %1432 = vmatpush1.msra.mxu0 0.0
  %1433 = vmatprep.subr.mxu0 0.0
  %1434 = vmatpush1.msra.mxu0 0.0
  %1435 = vmatprep.subr.mxu0 0.0
  %1436 = vmatpush1.msra.mxu0 0.0
  %1437 = vmatprep.mubr.f32.mxu0 0.0
  %1438 = vmatmul.mubr.f32.gmra.mrb[0].mxu0 %v1353
  %v1439 = vpop.f32.mrb[0].mxu0
  %v1440 = vadd.f32 %v1206, %v1439
  %v1441 = vpop.f32.mrb[0].mxu0
  %v1442 = vadd.f32 %v1208, %v1441
  %1443 = vdwg.mxu0
  %1444 = vmatprep.subr.mxu0 %v1095
  %1445 = vmatpush1.msra.mxu0 %v1094
  %1446 = vmatprep.subr.mxu0 %v1365
  %1447 = vmatpush1.msra.mxu0 %v1362
  %1448 = vmatprep.subr.mxu0 0.0
  %1449 = vmatpush1.msra.mxu0 0.0
  %1450 = vmatprep.subr.mxu0 0.0
  %1451 = vmatpush1.msra.mxu0 0.0
  %1452 = vmatprep.subr.mxu0 0.0
  %1453 = vmatpush1.msra.mxu0 0.0
  %1454 = vmatprep.subr.mxu0 0.0
  %1455 = vmatpush1.msra.mxu0 0.0
  %1456 = vmatprep.subr.mxu0 0.0
  %1457 = vmatpush1.msra.mxu0 0.0
  %1458 = vmatprep.subr.mxu0 0.0
  %1459 = vmatpush1.msra.mxu0 0.0
  %1460 = vmatprep.subr.mxu0 0.0
  %1461 = vmatpush1.msra.mxu0 0.0
  %1462 = vmatprep.subr.mxu0 0.0
  %1463 = vmatpush1.msra.mxu0 0.0
  %1464 = vmatprep.subr.mxu0 0.0
  %1465 = vmatpush1.msra.mxu0 0.0
  %1466 = vmatprep.subr.mxu0 0.0
  %1467 = vmatpush1.msra.mxu0 0.0
  %1468 = vmatprep.subr.mxu0 0.0
  %1469 = vmatpush1.msra.mxu0 0.0
  %1470 = vmatprep.subr.mxu0 0.0
  %1471 = vmatpush1.msra.mxu0 0.0
  %1472 = vmatprep.subr.mxu0 0.0
  %1473 = vmatpush1.msra.mxu0 0.0
  %1474 = vmatprep.subr.mxu0 0.0
  %1475 = vmatpush1.msra.mxu0 0.0
  %1476 = vmatprep.subr.mxu0 0.0
  %1477 = vmatpush1.msra.mxu0 0.0
  %1478 = vmatprep.subr.mxu0 0.0
  %1479 = vmatpush1.msra.mxu0 0.0
  %1480 = vmatprep.subr.mxu0 0.0
  %1481 = vmatpush1.msra.mxu0 0.0
  %1482 = vmatprep.subr.mxu0 0.0
  %1483 = vmatpush1.msra.mxu0 0.0
  %1484 = vmatprep.subr.mxu0 0.0
  %1485 = vmatpush1.msra.mxu0 0.0
  %1486 = vmatprep.subr.mxu0 0.0
  %1487 = vmatpush1.msra.mxu0 0.0
  %1488 = vmatprep.subr.mxu0 0.0
  %1489 = vmatpush1.msra.mxu0 0.0
  %1490 = vmatprep.subr.mxu0 0.0
  %1491 = vmatpush1.msra.mxu0 0.0
  %1492 = vmatprep.subr.mxu0 0.0
  %1493 = vmatpush1.msra.mxu0 0.0
  %1494 = vmatprep.subr.mxu0 0.0
  %1495 = vmatpush1.msra.mxu0 0.0
  %1496 = vmatprep.subr.mxu0 0.0
  %1497 = vmatpush1.msra.mxu0 0.0
  %1498 = vmatprep.subr.mxu0 0.0
  %1499 = vmatpush1.msra.mxu0 0.0
  %1500 = vmatprep.subr.mxu0 0.0
  %1501 = vmatpush1.msra.mxu0 0.0
  %1502 = vmatprep.subr.mxu0 0.0
  %1503 = vmatpush1.msra.mxu0 0.0
  %1504 = vmatprep.subr.mxu0 0.0
  %1505 = vmatpush1.msra.mxu0 0.0
  %1506 = vmatprep.subr.mxu0 0.0
  %1507 = vmatpush1.msra.mxu0 0.0
  %1508 = vmatprep.mubr.f32.mxu0 0.0
  %1509 = vmatmul.mubr.f32.gmra.mrb[0].mxu0 %v1353
  %v1510 = vpop.f32.mrb[0].mxu0
  %v1511 = vadd.f32 %v1277, %v1510
  %v1512 = vpop.f32.mrb[0].mxu0
  %v1513 = vadd.f32 %v1279, %v1512
  %1514 = vdwg.mxu0
  %1515 = vmatprep.subr.mxu0 %v1097
  %1516 = vmatpush1.msra.mxu0 %v1096
  %1517 = vmatprep.subr.mxu0 %v1371
  %1518 = vmatpush1.msra.mxu0 %v1368
  %1519 = vmatprep.subr.mxu0 0.0
  %1520 = vmatpush1.msra.mxu0 0.0
  %1521 = vmatprep.subr.mxu0 0.0
  %1522 = vmatpush1.msra.mxu0 0.0
  %1523 = vmatprep.subr.mxu0 0.0
  %1524 = vmatpush1.msra.mxu0 0.0
  %1525 = vmatprep.subr.mxu0 0.0
  %1526 = vmatpush1.msra.mxu0 0.0
  %1527 = vmatprep.subr.mxu0 0.0
  %1528 = vmatpush1.msra.mxu0 0.0
  %1529 = vmatprep.subr.mxu0 0.0
  %1530 = vmatpush1.msra.mxu0 0.0
  %1531 = vmatprep.subr.mxu0 0.0
  %1532 = vmatpush1.msra.mxu0 0.0
  %1533 = vmatprep.subr.mxu0 0.0
  %1534 = vmatpush1.msra.mxu0 0.0
  %1535 = vmatprep.subr.mxu0 0.0
  %1536 = vmatpush1.msra.mxu0 0.0
  %1537 = vmatprep.subr.mxu0 0.0
  %1538 = vmatpush1.msra.mxu0 0.0
  %1539 = vmatprep.subr.mxu0 0.0
  %1540 = vmatpush1.msra.mxu0 0.0
  %1541 = vmatprep.subr.mxu0 0.0
  %1542 = vmatpush1.msra.mxu0 0.0
  %1543 = vmatprep.subr.mxu0 0.0
  %1544 = vmatpush1.msra.mxu0 0.0
  %1545 = vmatprep.subr.mxu0 0.0
  %1546 = vmatpush1.msra.mxu0 0.0
  %1547 = vmatprep.subr.mxu0 0.0
  %1548 = vmatpush1.msra.mxu0 0.0
  %1549 = vmatprep.subr.mxu0 0.0
  %1550 = vmatpush1.msra.mxu0 0.0
  %1551 = vmatprep.subr.mxu0 0.0
  %1552 = vmatpush1.msra.mxu0 0.0
  %1553 = vmatprep.subr.mxu0 0.0
  %1554 = vmatpush1.msra.mxu0 0.0
  %1555 = vmatprep.subr.mxu0 0.0
  %1556 = vmatpush1.msra.mxu0 0.0
  %1557 = vmatprep.subr.mxu0 0.0
  %1558 = vmatpush1.msra.mxu0 0.0
  %1559 = vmatprep.subr.mxu0 0.0
  %1560 = vmatpush1.msra.mxu0 0.0
  %1561 = vmatprep.subr.mxu0 0.0
  %1562 = vmatpush1.msra.mxu0 0.0
  %1563 = vmatprep.subr.mxu0 0.0
  %1564 = vmatpush1.msra.mxu0 0.0
  %1565 = vmatprep.subr.mxu0 0.0
  %1566 = vmatpush1.msra.mxu0 0.0
  %1567 = vmatprep.subr.mxu0 0.0
  %1568 = vmatpush1.msra.mxu0 0.0
  %1569 = vmatprep.subr.mxu0 0.0
  %1570 = vmatpush1.msra.mxu0 0.0
  %1571 = vmatprep.subr.mxu0 0.0
  %1572 = vmatpush1.msra.mxu0 0.0
  %1573 = vmatprep.subr.mxu0 0.0
  %1574 = vmatpush1.msra.mxu0 0.0
  %1575 = vmatprep.subr.mxu0 0.0
  %1576 = vmatpush1.msra.mxu0 0.0
  %1577 = vmatprep.subr.mxu0 0.0
  %1578 = vmatpush1.msra.mxu0 0.0
  %1579 = vmatprep.mubr.f32.mxu0 0.0
  %1580 = vmatmul.mubr.f32.gmra.mrb[0].mxu0 %v1353
  %v1581 = vpop.f32.mrb[0].mxu0
  %v1582 = vadd.f32 %v1348, %v1581
  %v1583 = vpop.f32.mrb[0].mxu0
  %v1584 = vadd.f32 %v1350, %v1583
  %1585 = vdwg.mxu0
  %v1586 = vld [vmem:[%s4] sm:$0x3f]
  %v1588 = vlaneseq
  %v1589 = vshrl.u32 %v1588, 7
  %v1590 = vsub.s32 0, %v1589
  %v1591 = vrot.slane %v1586, %v1590
  %v1592 = vlaneseq
  %v1593 = vshrl.u32 %v1592, 7
  %v1594 = vsub.s32 1, %v1593
  %v1595 = vrot.slane %v1586, %v1594
  %v1596 = vlaneseq
  %v1597 = vshrl.u32 %v1596, 7
  %v1598 = vsub.s32 2, %v1597
  %v1599 = vrot.slane %v1586, %v1598
  %v1600 = vlaneseq
  %v1601 = vshrl.u32 %v1600, 7
  %v1602 = vsub.s32 3, %v1601
  %v1603 = vrot.slane %v1586, %v1602
  %v1604 = vlaneseq
  %v1605 = vshrl.u32 %v1604, 7
  %v1606 = vsub.s32 4, %v1605
  %v1607 = vrot.slane %v1586, %v1606
  %v1608 = vlaneseq
  %v1609 = vshrl.u32 %v1608, 7
  %v1610 = vsub.s32 5, %v1609
  %v1611 = vrot.slane %v1586, %v1610
  %v1618 = vadd.f32 %v1440, %v1591
  %v1619 = vadd.f32 %v1442, %v1595
  %v1620 = vadd.f32 %v1511, %v1599
  %v1621 = vadd.f32 %v1513, %v1603
  %v1622 = vadd.f32 %v1582, %v1607
  %v1623 = vadd.f32 %v1584, %v1611
  %v1624 = vld [vmem:[%s5] sm:$0xff]
  %v1625 = vld [vmem:[%s5 + $0x8] sm:$0xff]
  %v1626 = vld [vmem:[%s5 + $0x10] sm:$0xff]
  %v1627 = vld [vmem:[%s5 + $0x18] sm:$0xff]
  %v1628 = vld [vmem:[%s5 + $0x20] sm:$0xff]
  %v1629 = vld [vmem:[%s5 + $0x28] sm:$0xff]
  %v1630 = vld [vmem:[%s5 + $0x30] sm:$0xff]
  %v1631 = vld [vmem:[%s5 + $0x38] sm:$0xff]
  %v1632 = vld [vmem:[%s5 + $0x40] sm:$0xff]
  %v1633 = vld [vmem:[%s5 + $0x48] sm:$0xff]
  %v1634 = vld [vmem:[%s5 + $0x50] sm:$0xff]
  %v1635 = vld [vmem:[%s5 + $0x58] sm:$0xff]
  %v1636 = vld [vmem:[%s5 + $0x60] sm:$0xff]
  %v1637 = vld [vmem:[%s5 + $0x68] sm:$0xff]
  %v1638 = vld [vmem:[%s5 + $0x70] sm:$0xff]
  %v1639 = vld [vmem:[%s5 + $0x78] sm:$0xff]
  %v1640 = vld [vmem:[%s5 + $0x80] sm:$0xff]
  %v1641 = vld [vmem:[%s5 + $0x88] sm:$0xff]
  %v1642 = vld [vmem:[%s5 + $0x90] sm:$0xff]
  %v1643 = vld [vmem:[%s5 + $0x98] sm:$0xff]
  %v1644 = vld [vmem:[%s5 + $0xa0] sm:$0xff]
  %v1645 = vld [vmem:[%s5 + $0xa8] sm:$0xff]
  %v1646 = vld [vmem:[%s5 + $0xb0] sm:$0xff]
  %v1647 = vld [vmem:[%s5 + $0xb8] sm:$0xff]
  %v1648 = vld [vmem:[%s5 + $0xc0] sm:$0xff]
  %v1649 = vld [vmem:[%s5 + $0xc8] sm:$0xff]
  %v1650 = vld [vmem:[%s5 + $0xd0] sm:$0xff]
  %v1651 = vld [vmem:[%s5 + $0xd8] sm:$0xff]
  %v1652 = vld [vmem:[%s5 + $0xe0] sm:$0xff]
  %v1653 = vld [vmem:[%s5 + $0xe8] sm:$0xff]
  %v1654 = vld [vmem:[%s5 + $0xf0] sm:$0xff]
  %v1655 = vld [vmem:[%s5 + $0xf8] sm:$0xff]
  %v1656 = vld [vmem:[%s5 + $0x100] sm:$0xff]
  %v1657 = vld [vmem:[%s5 + $0x108] sm:$0xff]
  %v1658 = vld [vmem:[%s5 + $0x110] sm:$0xff]
  %v1659 = vld [vmem:[%s5 + $0x118] sm:$0xff]
  %v1660 = vld [vmem:[%s5 + $0x120] sm:$0xff]
  %v1661 = vld [vmem:[%s5 + $0x128] sm:$0xff]
  %v1662 = vld [vmem:[%s5 + $0x130] sm:$0xff]
  %v1663 = vld [vmem:[%s5 + $0x138] sm:$0xff]
  %v1664 = vld [vmem:[%s5 + $0x140] sm:$0xff]
  %v1665 = vld [vmem:[%s5 + $0x148] sm:$0xff]
  %v1666 = vld [vmem:[%s5 + $0x150] sm:$0xff]
  %v1667 = vld [vmem:[%s5 + $0x158] sm:$0xff]
  %v1668 = vld [vmem:[%s5 + $0x160] sm:$0xff]
  %v1669 = vld [vmem:[%s5 + $0x168] sm:$0xff]
  %v1670 = vld [vmem:[%s5 + $0x170] sm:$0xff]
  %v1671 = vld [vmem:[%s5 + $0x178] sm:$0xff]
  %v1672 = vld [vmem:[%s5 + $0x180] sm:$0xff]
  %v1673 = vld [vmem:[%s5 + $0x188] sm:$0xff]
  %v1674 = vld [vmem:[%s5 + $0x190] sm:$0xff]
  %v1675 = vld [vmem:[%s5 + $0x198] sm:$0xff]
  %v1676 = vld [vmem:[%s5 + $0x1a0] sm:$0xff]
  %v1677 = vld [vmem:[%s5 + $0x1a8] sm:$0xff]
  %v1678 = vld [vmem:[%s5 + $0x1b0] sm:$0xff]
  %v1679 = vld [vmem:[%s5 + $0x1b8] sm:$0xff]
  %v1680 = vld [vmem:[%s5 + $0x1c0] sm:$0xff]
  %v1681 = vld [vmem:[%s5 + $0x1c8] sm:$0xff]
  %v1682 = vld [vmem:[%s5 + $0x1d0] sm:$0xff]
  %v1683 = vld [vmem:[%s5 + $0x1d8] sm:$0xff]
  %v1684 = vld [vmem:[%s5 + $0x1e0] sm:$0xff]
  %v1685 = vld [vmem:[%s5 + $0x1e8] sm:$0xff]
  %v1686 = vld [vmem:[%s5 + $0x1f0] sm:$0xff]
  %v1687 = vld [vmem:[%s5 + $0x1f8] sm:$0xff]
  %v1688 = vld [vmem:[%s5 + $0x200] sm:$0xff]
  %v1689 = vld [vmem:[%s5 + $0x208] sm:$0xff]
  %v1690 = vld [vmem:[%s5 + $0x210] sm:$0xff]
  %v1691 = vld [vmem:[%s5 + $0x218] sm:$0xff]
  %v1692 = vld [vmem:[%s5 + $0x220] sm:$0xff]
  %v1693 = vld [vmem:[%s5 + $0x228] sm:$0xff]
  %v1694 = vld [vmem:[%s5 + $0x230] sm:$0xff]
  %v1695 = vld [vmem:[%s5 + $0x238] sm:$0xff]
  %v1696 = vld [vmem:[%s5 + $0x240] sm:$0xff]
  %v1697 = vld [vmem:[%s5 + $0x248] sm:$0xff]
  %v1698 = vld [vmem:[%s5 + $0x250] sm:$0xff]
  %v1699 = vld [vmem:[%s5 + $0x258] sm:$0xff]
  %v1700 = vld [vmem:[%s5 + $0x260] sm:$0xff]
  %v1701 = vld [vmem:[%s5 + $0x268] sm:$0xff]
  %v1702 = vld [vmem:[%s5 + $0x270] sm:$0xff]
  %v1703 = vld [vmem:[%s5 + $0x278] sm:$0xff]
  %v1704 = vld [vmem:[%s5 + $0x280] sm:$0xff]
  %v1705 = vld [vmem:[%s5 + $0x288] sm:$0xff]
  %v1706 = vld [vmem:[%s5 + $0x290] sm:$0xff]
  %v1707 = vld [vmem:[%s5 + $0x298] sm:$0xff]
  %v1708 = vld [vmem:[%s5 + $0x2a0] sm:$0xff]
  %v1709 = vld [vmem:[%s5 + $0x2a8] sm:$0xff]
  %v1710 = vld [vmem:[%s5 + $0x2b0] sm:$0xff]
  %v1711 = vld [vmem:[%s5 + $0x2b8] sm:$0xff]
  %v1712 = vld [vmem:[%s5 + $0x2c0] sm:$0xff]
  %v1713 = vld [vmem:[%s5 + $0x2c8] sm:$0xff]
  %v1714 = vld [vmem:[%s5 + $0x2d0] sm:$0xff]
  %v1715 = vld [vmem:[%s5 + $0x2d8] sm:$0xff]
  %v1716 = vld [vmem:[%s5 + $0x2e0] sm:$0xff]
  %v1717 = vld [vmem:[%s5 + $0x2e8] sm:$0xff]
  %v1718 = vld [vmem:[%s5 + $0x2f0] sm:$0xff]
  %v1719 = vld [vmem:[%s5 + $0x2f8] sm:$0xff]
  %v1720 = vld [vmem:[%s5 + $0x300] sm:$0xff]
  %v1721 = vld [vmem:[%s5 + $0x308] sm:$0xff]
  %v1722 = vld [vmem:[%s5 + $0x310] sm:$0xff]
  %v1723 = vld [vmem:[%s5 + $0x318] sm:$0xff]
  %v1724 = vld [vmem:[%s5 + $0x320] sm:$0xff]
  %v1725 = vld [vmem:[%s5 + $0x328] sm:$0xff]
  %v1726 = vld [vmem:[%s5 + $0x330] sm:$0xff]
  %v1727 = vld [vmem:[%s5 + $0x338] sm:$0xff]
  %v1728 = vld [vmem:[%s5 + $0x340] sm:$0xff]
  %v1729 = vld [vmem:[%s5 + $0x348] sm:$0xff]
  %v1730 = vld [vmem:[%s5 + $0x350] sm:$0xff]
  %v1731 = vld [vmem:[%s5 + $0x358] sm:$0xff]
  %v1732 = vld [vmem:[%s5 + $0x360] sm:$0xff]
  %v1733 = vld [vmem:[%s5 + $0x368] sm:$0xff]
  %v1734 = vld [vmem:[%s5 + $0x370] sm:$0xff]
  %v1735 = vld [vmem:[%s5 + $0x378] sm:$0xff]
  %v1736 = vld [vmem:[%s5 + $0x380] sm:$0xff]
  %v1737 = vld [vmem:[%s5 + $0x388] sm:$0xff]
  %v1738 = vld [vmem:[%s5 + $0x390] sm:$0xff]
  %v1739 = vld [vmem:[%s5 + $0x398] sm:$0xff]
  %v1740 = vld [vmem:[%s5 + $0x3a0] sm:$0xff]
  %v1741 = vld [vmem:[%s5 + $0x3a8] sm:$0xff]
  %v1742 = vld [vmem:[%s5 + $0x3b0] sm:$0xff]
  %v1743 = vld [vmem:[%s5 + $0x3b8] sm:$0xff]
  %v1744 = vld [vmem:[%s5 + $0x3c0] sm:$0xff]
  %v1745 = vld [vmem:[%s5 + $0x3c8] sm:$0xff]
  %v1746 = vld [vmem:[%s5 + $0x3d0] sm:$0xff]
  %v1747 = vld [vmem:[%s5 + $0x3d8] sm:$0xff]
  %v1748 = vld [vmem:[%s5 + $0x3e0] sm:$0xff]
  %v1749 = vld [vmem:[%s5 + $0x3e8] sm:$0xff]
  %v1750 = vld [vmem:[%s5 + $0x3f0] sm:$0xff]
  %v1751 = vld [vmem:[%s5 + $0x3f8] sm:$0xff]
  %v1752 = vld [vmem:[%s5 + $0x400] sm:$0xff]
  %v1753 = vld [vmem:[%s5 + $0x408] sm:$0xff]
  %v1754 = vld [vmem:[%s5 + $0x410] sm:$0xff]
  %v1755 = vld [vmem:[%s5 + $0x418] sm:$0xff]
  %v1756 = vld [vmem:[%s5 + $0x420] sm:$0xff]
  %v1757 = vld [vmem:[%s5 + $0x428] sm:$0xff]
  %v1758 = vld [vmem:[%s5 + $0x430] sm:$0xff]
  %v1759 = vld [vmem:[%s5 + $0x438] sm:$0xff]
  %v1760 = vld [vmem:[%s5 + $0x440] sm:$0xff]
  %v1761 = vld [vmem:[%s5 + $0x448] sm:$0xff]
  %v1762 = vld [vmem:[%s5 + $0x450] sm:$0xff]
  %v1763 = vld [vmem:[%s5 + $0x458] sm:$0xff]
  %v1764 = vld [vmem:[%s5 + $0x460] sm:$0xff]
  %v1765 = vld [vmem:[%s5 + $0x468] sm:$0xff]
  %v1766 = vld [vmem:[%s5 + $0x470] sm:$0xff]
  %v1767 = vld [vmem:[%s5 + $0x478] sm:$0xff]
  %v1768 = vld [vmem:[%s5 + $0x480] sm:$0xff]
  %v1769 = vld [vmem:[%s5 + $0x488] sm:$0xff]
  %v1770 = vld [vmem:[%s5 + $0x490] sm:$0xff]
  %v1771 = vld [vmem:[%s5 + $0x498] sm:$0xff]
  %v1772 = vld [vmem:[%s5 + $0x4a0] sm:$0xff]
  %v1773 = vld [vmem:[%s5 + $0x4a8] sm:$0xff]
  %v1774 = vld [vmem:[%s5 + $0x4b0] sm:$0xff]
  %v1775 = vld [vmem:[%s5 + $0x4b8] sm:$0xff]
  %v1776 = vld [vmem:[%s5 + $0x4c0] sm:$0xff]
  %v1777 = vld [vmem:[%s5 + $0x4c8] sm:$0xff]
  %v1778 = vld [vmem:[%s5 + $0x4d0] sm:$0xff]
  %v1779 = vld [vmem:[%s5 + $0x4d8] sm:$0xff]
  %v1780 = vld [vmem:[%s5 + $0x4e0] sm:$0xff]
  %v1781 = vld [vmem:[%s5 + $0x4e8] sm:$0xff]
  %v1782 = vld [vmem:[%s5 + $0x4f0] sm:$0xff]
  %v1783 = vld [vmem:[%s5 + $0x4f8] sm:$0xff]
  %v1784 = vld [vmem:[%s5 + $0x500] sm:$0xff]
  %v1785 = vld [vmem:[%s5 + $0x508] sm:$0xff]
  %v1786 = vld [vmem:[%s5 + $0x510] sm:$0xff]
  %v1787 = vld [vmem:[%s5 + $0x518] sm:$0xff]
  %v1788 = vld [vmem:[%s5 + $0x520] sm:$0xff]
  %v1789 = vld [vmem:[%s5 + $0x528] sm:$0xff]
  %v1790 = vld [vmem:[%s5 + $0x530] sm:$0xff]
  %v1791 = vld [vmem:[%s5 + $0x538] sm:$0xff]
  %v1792 = vld [vmem:[%s5 + $0x540] sm:$0xff]
  %v1793 = vld [vmem:[%s5 + $0x548] sm:$0xff]
  %v1794 = vld [vmem:[%s5 + $0x550] sm:$0xff]
  %v1795 = vld [vmem:[%s5 + $0x558] sm:$0xff]
  %v1796 = vld [vmem:[%s5 + $0x560] sm:$0xff]
  %v1797 = vld [vmem:[%s5 + $0x568] sm:$0xff]
  %v1798 = vld [vmem:[%s5 + $0x570] sm:$0xff]
  %v1799 = vld [vmem:[%s5 + $0x578] sm:$0xff]
  %v1800 = vld [vmem:[%s5 + $0x580] sm:$0xff]
  %v1801 = vld [vmem:[%s5 + $0x588] sm:$0xff]
  %v1802 = vld [vmem:[%s5 + $0x590] sm:$0xff]
  %v1803 = vld [vmem:[%s5 + $0x598] sm:$0xff]
  %v1804 = vld [vmem:[%s5 + $0x5a0] sm:$0xff]
  %v1805 = vld [vmem:[%s5 + $0x5a8] sm:$0xff]
  %v1806 = vld [vmem:[%s5 + $0x5b0] sm:$0xff]
  %v1807 = vld [vmem:[%s5 + $0x5b8] sm:$0xff]
  %v1808 = vld [vmem:[%s5 + $0x5c0] sm:$0xff]
  %v1809 = vld [vmem:[%s5 + $0x5c8] sm:$0xff]
  %v1810 = vld [vmem:[%s5 + $0x5d0] sm:$0xff]
  %v1811 = vld [vmem:[%s5 + $0x5d8] sm:$0xff]
  %v1812 = vld [vmem:[%s5 + $0x5e0] sm:$0xff]
  %v1813 = vld [vmem:[%s5 + $0x5e8] sm:$0xff]
  %v1814 = vld [vmem:[%s5 + $0x5f0] sm:$0xff]
  %v1815 = vld [vmem:[%s5 + $0x5f8] sm:$0xff]
  %v1816 = vld [vmem:[%s6] sm:$0x3f]
  %v1818 = vlaneseq
  %v1819 = vshrl.u32 %v1818, 7
  %v1820 = vsub.s32 0, %v1819
  %v1821 = vrot.slane %v1816, %v1820
  %v1822 = vlaneseq
  %v1823 = vshrl.u32 %v1822, 7
  %v1824 = vsub.s32 1, %v1823
  %v1825 = vrot.slane %v1816, %v1824
  %v1826 = vlaneseq
  %v1827 = vshrl.u32 %v1826, 7
  %v1828 = vsub.s32 2, %v1827
  %v1829 = vrot.slane %v1816, %v1828
  %v1830 = vlaneseq
  %v1831 = vshrl.u32 %v1830, 7
  %v1832 = vsub.s32 3, %v1831
  %v1833 = vrot.slane %v1816, %v1832
  %v1834 = vlaneseq
  %v1835 = vshrl.u32 %v1834, 7
  %v1836 = vsub.s32 4, %v1835
  %v1837 = vrot.slane %v1816, %v1836
  %v1838 = vlaneseq
  %v1839 = vshrl.u32 %v1838, 7
  %v1840 = vsub.s32 5, %v1839
  %v1841 = vrot.slane %v1816, %v1840
  %1848 = vmatprep.subr.mxu0 %v1625
  %1849 = vmatpush1.msra.mxu0 %v1624
  %1850 = vmatprep.subr.mxu0 %v1631
  %1851 = vmatpush1.msra.mxu0 %v1630
  %1852 = vmatprep.subr.mxu0 %v1637
  %1853 = vmatpush1.msra.mxu0 %v1636
  %1854 = vmatprep.subr.mxu0 %v1643
  %1855 = vmatpush1.msra.mxu0 %v1642
  %1856 = vmatprep.subr.mxu0 %v1649
  %1857 = vmatpush1.msra.mxu0 %v1648
  %1858 = vmatprep.subr.mxu0 %v1655
  %1859 = vmatpush1.msra.mxu0 %v1654
  %1860 = vmatprep.subr.mxu0 %v1661
  %1861 = vmatpush1.msra.mxu0 %v1660
  %1862 = vmatprep.subr.mxu0 %v1667
  %1863 = vmatpush1.msra.mxu0 %v1666
  %1864 = vmatprep.subr.mxu0 %v1673
  %1865 = vmatpush1.msra.mxu0 %v1672
  %1866 = vmatprep.subr.mxu0 %v1679
  %1867 = vmatpush1.msra.mxu0 %v1678
  %1868 = vmatprep.subr.mxu0 %v1685
  %1869 = vmatpush1.msra.mxu0 %v1684
  %1870 = vmatprep.subr.mxu0 %v1691
  %1871 = vmatpush1.msra.mxu0 %v1690
  %1872 = vmatprep.subr.mxu0 %v1697
  %1873 = vmatpush1.msra.mxu0 %v1696
  %1874 = vmatprep.subr.mxu0 %v1703
  %1875 = vmatpush1.msra.mxu0 %v1702
  %1876 = vmatprep.subr.mxu0 %v1709
  %1877 = vmatpush1.msra.mxu0 %v1708
  %1878 = vmatprep.subr.mxu0 %v1715
  %1879 = vmatpush1.msra.mxu0 %v1714
  %1880 = vmatprep.subr.mxu0 %v1721
  %1881 = vmatpush1.msra.mxu0 %v1720
  %1882 = vmatprep.subr.mxu0 %v1727
  %1883 = vmatpush1.msra.mxu0 %v1726
  %1884 = vmatprep.subr.mxu0 %v1733
  %1885 = vmatpush1.msra.mxu0 %v1732
  %1886 = vmatprep.subr.mxu0 %v1739
  %1887 = vmatpush1.msra.mxu0 %v1738
  %1888 = vmatprep.subr.mxu0 %v1745
  %1889 = vmatpush1.msra.mxu0 %v1744
  %1890 = vmatprep.subr.mxu0 %v1751
  %1891 = vmatpush1.msra.mxu0 %v1750
  %1892 = vmatprep.subr.mxu0 %v1757
  %1893 = vmatpush1.msra.mxu0 %v1756
  %1894 = vmatprep.subr.mxu0 %v1763
  %1895 = vmatpush1.msra.mxu0 %v1762
  %1896 = vmatprep.subr.mxu0 %v1769
  %1897 = vmatpush1.msra.mxu0 %v1768
  %1898 = vmatprep.subr.mxu0 %v1775
  %1899 = vmatpush1.msra.mxu0 %v1774
  %1900 = vmatprep.subr.mxu0 %v1781
  %1901 = vmatpush1.msra.mxu0 %v1780
  %1902 = vmatprep.subr.mxu0 %v1787
  %1903 = vmatpush1.msra.mxu0 %v1786
  %1904 = vmatprep.subr.mxu0 %v1793
  %1905 = vmatpush1.msra.mxu0 %v1792
  %1906 = vmatprep.subr.mxu0 %v1799
  %1907 = vmatpush1.msra.mxu0 %v1798
  %1908 = vmatprep.subr.mxu0 %v1805
  %1909 = vmatpush1.msra.mxu0 %v1804
  %1910 = vmatprep.subr.mxu0 %v1811
  %1911 = vmatpush1.msra.mxu0 %v1810
  %1912 = vmatprep.mubr.f32.mxu0 %v1086
  %1913 = vmatmul.mubr.f32.gmra.mrb[0].mxu0 %v1085
  %v1914 = vpop.f32.mrb[0].mxu0
  %v1915 = vadd.f32 %v1821, %v1914
  %v1916 = vpop.f32.mrb[0].mxu0
  %v1917 = vadd.f32 %v1825, %v1916
  %1918 = vdwg.mxu0
  %1919 = vmatprep.subr.mxu0 %v1627
  %1920 = vmatpush1.msra.mxu0 %v1626
  %1921 = vmatprep.subr.mxu0 %v1633
  %1922 = vmatpush1.msra.mxu0 %v1632
  %1923 = vmatprep.subr.mxu0 %v1639
  %1924 = vmatpush1.msra.mxu0 %v1638
  %1925 = vmatprep.subr.mxu0 %v1645
  %1926 = vmatpush1.msra.mxu0 %v1644
  %1927 = vmatprep.subr.mxu0 %v1651
  %1928 = vmatpush1.msra.mxu0 %v1650
  %1929 = vmatprep.subr.mxu0 %v1657
  %1930 = vmatpush1.msra.mxu0 %v1656
  %1931 = vmatprep.subr.mxu0 %v1663
  %1932 = vmatpush1.msra.mxu0 %v1662
  %1933 = vmatprep.subr.mxu0 %v1669
  %1934 = vmatpush1.msra.mxu0 %v1668
  %1935 = vmatprep.subr.mxu0 %v1675
  %1936 = vmatpush1.msra.mxu0 %v1674
  %1937 = vmatprep.subr.mxu0 %v1681
  %1938 = vmatpush1.msra.mxu0 %v1680
  %1939 = vmatprep.subr.mxu0 %v1687
  %1940 = vmatpush1.msra.mxu0 %v1686
  %1941 = vmatprep.subr.mxu0 %v1693
  %1942 = vmatpush1.msra.mxu0 %v1692
  %1943 = vmatprep.subr.mxu0 %v1699
  %1944 = vmatpush1.msra.mxu0 %v1698
  %1945 = vmatprep.subr.mxu0 %v1705
  %1946 = vmatpush1.msra.mxu0 %v1704
  %1947 = vmatprep.subr.mxu0 %v1711
  %1948 = vmatpush1.msra.mxu0 %v1710
  %1949 = vmatprep.subr.mxu0 %v1717
  %1950 = vmatpush1.msra.mxu0 %v1716
  %1951 = vmatprep.subr.mxu0 %v1723
  %1952 = vmatpush1.msra.mxu0 %v1722
  %1953 = vmatprep.subr.mxu0 %v1729
  %1954 = vmatpush1.msra.mxu0 %v1728
  %1955 = vmatprep.subr.mxu0 %v1735
  %1956 = vmatpush1.msra.mxu0 %v1734
  %1957 = vmatprep.subr.mxu0 %v1741
  %1958 = vmatpush1.msra.mxu0 %v1740
  %1959 = vmatprep.subr.mxu0 %v1747
  %1960 = vmatpush1.msra.mxu0 %v1746
  %1961 = vmatprep.subr.mxu0 %v1753
  %1962 = vmatpush1.msra.mxu0 %v1752
  %1963 = vmatprep.subr.mxu0 %v1759
  %1964 = vmatpush1.msra.mxu0 %v1758
  %1965 = vmatprep.subr.mxu0 %v1765
  %1966 = vmatpush1.msra.mxu0 %v1764
  %1967 = vmatprep.subr.mxu0 %v1771
  %1968 = vmatpush1.msra.mxu0 %v1770
  %1969 = vmatprep.subr.mxu0 %v1777
  %1970 = vmatpush1.msra.mxu0 %v1776
  %1971 = vmatprep.subr.mxu0 %v1783
  %1972 = vmatpush1.msra.mxu0 %v1782
  %1973 = vmatprep.subr.mxu0 %v1789
  %1974 = vmatpush1.msra.mxu0 %v1788
  %1975 = vmatprep.subr.mxu0 %v1795
  %1976 = vmatpush1.msra.mxu0 %v1794
  %1977 = vmatprep.subr.mxu0 %v1801
  %1978 = vmatpush1.msra.mxu0 %v1800
  %1979 = vmatprep.subr.mxu0 %v1807
  %1980 = vmatpush1.msra.mxu0 %v1806
  %1981 = vmatprep.subr.mxu0 %v1813
  %1982 = vmatpush1.msra.mxu0 %v1812
  %1983 = vmatprep.mubr.f32.mxu0 %v1086
  %1984 = vmatmul.mubr.f32.gmra.mrb[0].mxu0 %v1085
  %v1985 = vpop.f32.mrb[0].mxu0
  %v1986 = vadd.f32 %v1829, %v1985
  %v1987 = vpop.f32.mrb[0].mxu0
  %v1988 = vadd.f32 %v1833, %v1987
  %1989 = vdwg.mxu0
  %1990 = vmatprep.subr.mxu0 %v1629
  %1991 = vmatpush1.msra.mxu0 %v1628
  %1992 = vmatprep.subr.mxu0 %v1635
  %1993 = vmatpush1.msra.mxu0 %v1634
  %1994 = vmatprep.subr.mxu0 %v1641
  %1995 = vmatpush1.msra.mxu0 %v1640
  %1996 = vmatprep.subr.mxu0 %v1647
  %1997 = vmatpush1.msra.mxu0 %v1646
  %1998 = vmatprep.subr.mxu0 %v1653
  %1999 = vmatpush1.msra.mxu0 %v1652
  %2000 = vmatprep.subr.mxu0 %v1659
  %2001 = vmatpush1.msra.mxu0 %v1658
  %2002 = vmatprep.subr.mxu0 %v1665
  %2003 = vmatpush1.msra.mxu0 %v1664
  %2004 = vmatprep.subr.mxu0 %v1671
  %2005 = vmatpush1.msra.mxu0 %v1670
  %2006 = vmatprep.subr.mxu0 %v1677
  %2007 = vmatpush1.msra.mxu0 %v1676
  %2008 = vmatprep.subr.mxu0 %v1683
  %2009 = vmatpush1.msra.mxu0 %v1682
  %2010 = vmatprep.subr.mxu0 %v1689
  %2011 = vmatpush1.msra.mxu0 %v1688
  %2012 = vmatprep.subr.mxu0 %v1695
  %2013 = vmatpush1.msra.mxu0 %v1694
  %2014 = vmatprep.subr.mxu0 %v1701
  %2015 = vmatpush1.msra.mxu0 %v1700
  %2016 = vmatprep.subr.mxu0 %v1707
  %2017 = vmatpush1.msra.mxu0 %v1706
  %2018 = vmatprep.subr.mxu0 %v1713
  %2019 = vmatpush1.msra.mxu0 %v1712
  %2020 = vmatprep.subr.mxu0 %v1719
  %2021 = vmatpush1.msra.mxu0 %v1718
  %2022 = vmatprep.subr.mxu0 %v1725
  %2023 = vmatpush1.msra.mxu0 %v1724
  %2024 = vmatprep.subr.mxu0 %v1731
  %2025 = vmatpush1.msra.mxu0 %v1730
  %2026 = vmatprep.subr.mxu0 %v1737
  %2027 = vmatpush1.msra.mxu0 %v1736
  %2028 = vmatprep.subr.mxu0 %v1743
  %2029 = vmatpush1.msra.mxu0 %v1742
  %2030 = vmatprep.subr.mxu0 %v1749
  %2031 = vmatpush1.msra.mxu0 %v1748
  %2032 = vmatprep.subr.mxu0 %v1755
  %2033 = vmatpush1.msra.mxu0 %v1754
  %2034 = vmatprep.subr.mxu0 %v1761
  %2035 = vmatpush1.msra.mxu0 %v1760
  %2036 = vmatprep.subr.mxu0 %v1767
  %2037 = vmatpush1.msra.mxu0 %v1766
  %2038 = vmatprep.subr.mxu0 %v1773
  %2039 = vmatpush1.msra.mxu0 %v1772
  %2040 = vmatprep.subr.mxu0 %v1779
  %2041 = vmatpush1.msra.mxu0 %v1778
  %2042 = vmatprep.subr.mxu0 %v1785
  %2043 = vmatpush1.msra.mxu0 %v1784
  %2044 = vmatprep.subr.mxu0 %v1791
  %2045 = vmatpush1.msra.mxu0 %v1790
  %2046 = vmatprep.subr.mxu0 %v1797
  %2047 = vmatpush1.msra.mxu0 %v1796
  %2048 = vmatprep.subr.mxu0 %v1803
  %2049 = vmatpush1.msra.mxu0 %v1802
  %2050 = vmatprep.subr.mxu0 %v1809
  %2051 = vmatpush1.msra.mxu0 %v1808
  %2052 = vmatprep.subr.mxu0 %v1815
  %2053 = vmatpush1.msra.mxu0 %v1814
  %2054 = vmatprep.mubr.f32.mxu0 %v1086
  %2055 = vmatmul.mubr.f32.gmra.mrb[0].mxu0 %v1085
  %v2056 = vpop.f32.mrb[0].mxu0
  %v2057 = vadd.f32 %v1837, %v2056
  %v2058 = vpop.f32.mrb[0].mxu0
  %v2059 = vadd.f32 %v1841, %v2058
  %2060 = vdwg.mxu0
  %v2061 = vadd.f32 %v1618, %v1915
  %v2062 = vadd.f32 %v1619, %v1917
  %v2063 = vadd.f32 %v1620, %v1986
  %v2064 = vadd.f32 %v1621, %v1988
  %v2065 = vxor.u32 %v2061, 2147483648
  %v2066 = vxor.u32 %v2062, 2147483648
  %v2067 = vxor.u32 %v2063, 2147483648
  %v2068 = vxor.u32 %v2064, 2147483648
  %v2069 = vmul.f32 %v2065, 1.442695
  %v2070 = vpow.pop %v2069
  %v2071 = vmul.f32 %v2066, 1.442695
  %v2072 = vpow.pop %v2071
  %v2073 = vmul.f32 %v2067, 1.442695
  %v2074 = vpow.pop %v2073
  %v2075 = vmul.f32 %v2068, 1.442695
  %v2076 = vpow.pop %v2075
  %v2077 = vadd.f32 %v2070, 1.0
  %v2078 = vadd.f32 %v2072, 1.0
  %v2079 = vadd.f32 %v2074, 1.0
  %v2080 = vadd.f32 %v2076, 1.0
  %v2081 = vrcp.pop %v2077
  %v2082 = vmul.f32 1.0, %v2081
  %v2083 = vrcp.pop %v2078
  %v2084 = vmul.f32 1.0, %v2083
  %v2085 = vrcp.pop %v2079
  %v2086 = vmul.f32 1.0, %v2085
  %v2087 = vrcp.pop %v2080
  %v2088 = vmul.f32 1.0, %v2087
  %v2089 = vmul.f32 %v2082, %v2057
  %v2090 = vmul.f32 %v2084, %v2059
  %v2091 = vadd.f32 %v1622, %v2089
  %v2092 = vadd.f32 %v1623, %v2090
  %v2093 = vtanh.pop %v2091
  %v2094 = vtanh.pop %v2092
  %v2095 = vsub.f32 1.0, %v2086
  %v2096 = vsub.f32 1.0, %v2088
  %v2097 = vmul.f32 %v2095, %v2093
  %v2098 = vmul.f32 %v2096, %v2094
  %v2099 = vmul.f32 %v2086, %v1085
  %v2100 = vmul.f32 %v2088, %v1086
  %v2101 = vadd.f32 %v2097, %v2099
  %v2102 = vadd.f32 %v2098, %v2100
  %s2103 = scalar_lea.vmem %s7, 4
  %2104 = vst [vmem:[%s2103] sm:$0xf] %v2101
  %s2105 = scalar_lea.vmem %s61, 24
  %2106 = vst [vmem:[%s2105] sm:$0xf] %v2102
  %s2107 = scalar_lea.vmem %s0, 8
  %v2108 = vld [vmem:[%s2107] sm:$0xf]
  %v2109 = vld [vmem:[%s2] sm:$0xff]
  %v2110 = vld [vmem:[%s2 + $0x8] sm:$0xff]
  %v2111 = vld [vmem:[%s2 + $0x10] sm:$0xff]
  %v2112 = vld [vmem:[%s2 + $0x18] sm:$0xff]
  %v2113 = vld [vmem:[%s2 + $0x20] sm:$0xff]
  %v2114 = vld [vmem:[%s2 + $0x28] sm:$0xff]
  %v2115 = vld [vmem:[%s2 + $0x30] sm:$0x3]
  %v2116 = vld [vmem:[%s2 + $0x38] sm:$0x3]
  %v2117 = vld [vmem:[%s2 + $0x40] sm:$0x3]
  %v2118 = vld [vmem:[%s2 + $0x48] sm:$0x3]
  %v2119 = vld [vmem:[%s2 + $0x50] sm:$0x3]
  %v2120 = vld [vmem:[%s2 + $0x58] sm:$0x3]
  %s2121 = scalar_lea.vmem %s53, 20
  %v2122 = vld [vmem:[%s2121] sm:$0xf]
  %v2123 = vld [vmem:[%s3] sm:$0xff]
  %v2124 = vld [vmem:[%s3 + $0x8] sm:$0xff]
  %v2125 = vld [vmem:[%s3 + $0x10] sm:$0xff]
  %v2126 = vld [vmem:[%s3 + $0x18] sm:$0xff]
  %v2127 = vld [vmem:[%s3 + $0x20] sm:$0xff]
  %v2128 = vld [vmem:[%s3 + $0x28] sm:$0xff]
  %v2129 = vld [vmem:[%s3 + $0x30] sm:$0x3]
  %v2130 = vld [vmem:[%s3 + $0x38] sm:$0x3]
  %v2131 = vld [vmem:[%s3 + $0x40] sm:$0x3]
  %v2132 = vld [vmem:[%s3 + $0x48] sm:$0x3]
  %v2133 = vld [vmem:[%s3 + $0x50] sm:$0x3]
  %v2134 = vld [vmem:[%s3 + $0x58] sm:$0x3]
  %v2136 = vsel %vm97, %v2122, 0
  %v2139 = vsel %vm101, %v2129, 0
  %v2142 = vsel %vm101, %v2130, 0
  %v2145 = vsel %vm101, %v2131, 0
  %v2148 = vsel %vm101, %v2132, 0
  %v2151 = vsel %vm101, %v2133, 0
  %v2154 = vsel %vm101, %v2134, 0
  %2156 = vmatprep.subr.mxu0 %v2124
  %2157 = vmatpush1.msra.mxu0 %v2123
  %2158 = vmatprep.subr.mxu0 %v2142
  %2159 = vmatpush1.msra.mxu0 %v2139
  %2160 = vmatprep.subr.mxu0 0.0
  %2161 = vmatpush1.msra.mxu0 0.0
  %2162 = vmatprep.subr.mxu0 0.0
  %2163 = vmatpush1.msra.mxu0 0.0
  %2164 = vmatprep.subr.mxu0 0.0
  %2165 = vmatpush1.msra.mxu0 0.0
  %2166 = vmatprep.subr.mxu0 0.0
  %2167 = vmatpush1.msra.mxu0 0.0
  %2168 = vmatprep.subr.mxu0 0.0
  %2169 = vmatpush1.msra.mxu0 0.0
  %2170 = vmatprep.subr.mxu0 0.0
  %2171 = vmatpush1.msra.mxu0 0.0
  %2172 = vmatprep.subr.mxu0 0.0
  %2173 = vmatpush1.msra.mxu0 0.0
  %2174 = vmatprep.subr.mxu0 0.0
  %2175 = vmatpush1.msra.mxu0 0.0
  %2176 = vmatprep.subr.mxu0 0.0
  %2177 = vmatpush1.msra.mxu0 0.0
  %2178 = vmatprep.subr.mxu0 0.0
  %2179 = vmatpush1.msra.mxu0 0.0
  %2180 = vmatprep.subr.mxu0 0.0
  %2181 = vmatpush1.msra.mxu0 0.0
  %2182 = vmatprep.subr.mxu0 0.0
  %2183 = vmatpush1.msra.mxu0 0.0
  %2184 = vmatprep.subr.mxu0 0.0
  %2185 = vmatpush1.msra.mxu0 0.0
  %2186 = vmatprep.subr.mxu0 0.0
  %2187 = vmatpush1.msra.mxu0 0.0
  %2188 = vmatprep.subr.mxu0 0.0
  %2189 = vmatpush1.msra.mxu0 0.0
  %2190 = vmatprep.subr.mxu0 0.0
  %2191 = vmatpush1.msra.mxu0 0.0
  %2192 = vmatprep.subr.mxu0 0.0
  %2193 = vmatpush1.msra.mxu0 0.0
  %2194 = vmatprep.subr.mxu0 0.0
  %2195 = vmatpush1.msra.mxu0 0.0
  %2196 = vmatprep.subr.mxu0 0.0
  %2197 = vmatpush1.msra.mxu0 0.0
  %2198 = vmatprep.subr.mxu0 0.0
  %2199 = vmatpush1.msra.mxu0 0.0
  %2200 = vmatprep.subr.mxu0 0.0
  %2201 = vmatpush1.msra.mxu0 0.0
  %2202 = vmatprep.subr.mxu0 0.0
  %2203 = vmatpush1.msra.mxu0 0.0
  %2204 = vmatprep.subr.mxu0 0.0
  %2205 = vmatpush1.msra.mxu0 0.0
  %2206 = vmatprep.subr.mxu0 0.0
  %2207 = vmatpush1.msra.mxu0 0.0
  %2208 = vmatprep.subr.mxu0 0.0
  %2209 = vmatpush1.msra.mxu0 0.0
  %2210 = vmatprep.subr.mxu0 0.0
  %2211 = vmatpush1.msra.mxu0 0.0
  %2212 = vmatprep.subr.mxu0 0.0
  %2213 = vmatpush1.msra.mxu0 0.0
  %2214 = vmatprep.subr.mxu0 0.0
  %2215 = vmatpush1.msra.mxu0 0.0
  %2216 = vmatprep.subr.mxu0 0.0
  %2217 = vmatpush1.msra.mxu0 0.0
  %2218 = vmatprep.subr.mxu0 0.0
  %2219 = vmatpush1.msra.mxu0 0.0
  %2220 = vmatprep.mubr.f32.mxu0 0.0
  %2221 = vmatmul.mubr.f32.gmra.mrb[0].mxu0 %v2136
  %v2222 = vpop.f32.mrb[0].mxu0
  %v2223 = vadd.f32 0.0, %v2222
  %v2224 = vpop.f32.mrb[0].mxu0
  %v2225 = vadd.f32 0.0, %v2224
  %2226 = vdwg.mxu0
  %2227 = vmatprep.subr.mxu0 %v2126
  %2228 = vmatpush1.msra.mxu0 %v2125
  %2229 = vmatprep.subr.mxu0 %v2148
  %2230 = vmatpush1.msra.mxu0 %v2145
  %2231 = vmatprep.subr.mxu0 0.0
  %2232 = vmatpush1.msra.mxu0 0.0
  %2233 = vmatprep.subr.mxu0 0.0
  %2234 = vmatpush1.msra.mxu0 0.0
  %2235 = vmatprep.subr.mxu0 0.0
  %2236 = vmatpush1.msra.mxu0 0.0
  %2237 = vmatprep.subr.mxu0 0.0
  %2238 = vmatpush1.msra.mxu0 0.0
  %2239 = vmatprep.subr.mxu0 0.0
  %2240 = vmatpush1.msra.mxu0 0.0
  %2241 = vmatprep.subr.mxu0 0.0
  %2242 = vmatpush1.msra.mxu0 0.0
  %2243 = vmatprep.subr.mxu0 0.0
  %2244 = vmatpush1.msra.mxu0 0.0
  %2245 = vmatprep.subr.mxu0 0.0
  %2246 = vmatpush1.msra.mxu0 0.0
  %2247 = vmatprep.subr.mxu0 0.0
  %2248 = vmatpush1.msra.mxu0 0.0
  %2249 = vmatprep.subr.mxu0 0.0
  %2250 = vmatpush1.msra.mxu0 0.0
  %2251 = vmatprep.subr.mxu0 0.0
  %2252 = vmatpush1.msra.mxu0 0.0
  %2253 = vmatprep.subr.mxu0 0.0
  %2254 = vmatpush1.msra.mxu0 0.0
  %2255 = vmatprep.subr.mxu0 0.0
  %2256 = vmatpush1.msra.mxu0 0.0
  %2257 = vmatprep.subr.mxu0 0.0
  %2258 = vmatpush1.msra.mxu0 0.0
  %2259 = vmatprep.subr.mxu0 0.0
  %2260 = vmatpush1.msra.mxu0 0.0
  %2261 = vmatprep.subr.mxu0 0.0
  %2262 = vmatpush1.msra.mxu0 0.0
  %2263 = vmatprep.subr.mxu0 0.0
  %2264 = vmatpush1.msra.mxu0 0.0
  %2265 = vmatprep.subr.mxu0 0.0
  %2266 = vmatpush1.msra.mxu0 0.0
  %2267 = vmatprep.subr.mxu0 0.0
  %2268 = vmatpush1.msra.mxu0 0.0
  %2269 = vmatprep.subr.mxu0 0.0
  %2270 = vmatpush1.msra.mxu0 0.0
  %2271 = vmatprep.subr.mxu0 0.0
  %2272 = vmatpush1.msra.mxu0 0.0
  %2273 = vmatprep.subr.mxu0 0.0
  %2274 = vmatpush1.msra.mxu0 0.0
  %2275 = vmatprep.subr.mxu0 0.0
  %2276 = vmatpush1.msra.mxu0 0.0
  %2277 = vmatprep.subr.mxu0 0.0
  %2278 = vmatpush1.msra.mxu0 0.0
  %2279 = vmatprep.subr.mxu0 0.0
  %2280 = vmatpush1.msra.mxu0 0.0
  %2281 = vmatprep.subr.mxu0 0.0
  %2282 = vmatpush1.msra.mxu0 0.0
  %2283 = vmatprep.subr.mxu0 0.0
  %2284 = vmatpush1.msra.mxu0 0.0
  %2285 = vmatprep.subr.mxu0 0.0
  %2286 = vmatpush1.msra.mxu0 0.0
  %2287 = vmatprep.subr.mxu0 0.0
  %2288 = vmatpush1.msra.mxu0 0.0
  %2289 = vmatprep.subr.mxu0 0.0
  %2290 = vmatpush1.msra.mxu0 0.0
  %2291 = vmatprep.mubr.f32.mxu0 0.0
  %2292 = vmatmul.mubr.f32.gmra.mrb[0].mxu0 %v2136
  %v2293 = vpop.f32.mrb[0].mxu0
  %v2294 = vadd.f32 0.0, %v2293
  %v2295 = vpop.f32.mrb[0].mxu0
  %v2296 = vadd.f32 0.0, %v2295
  %2297 = vdwg.mxu0
  %2298 = vmatprep.subr.mxu0 %v2128
  %2299 = vmatpush1.msra.mxu0 %v2127
  %2300 = vmatprep.subr.mxu0 %v2154
  %2301 = vmatpush1.msra.mxu0 %v2151
  %2302 = vmatprep.subr.mxu0 0.0
  %2303 = vmatpush1.msra.mxu0 0.0
  %2304 = vmatprep.subr.mxu0 0.0
  %2305 = vmatpush1.msra.mxu0 0.0
  %2306 = vmatprep.subr.mxu0 0.0
  %2307 = vmatpush1.msra.mxu0 0.0
  %2308 = vmatprep.subr.mxu0 0.0
  %2309 = vmatpush1.msra.mxu0 0.0
  %2310 = vmatprep.subr.mxu0 0.0
  %2311 = vmatpush1.msra.mxu0 0.0
  %2312 = vmatprep.subr.mxu0 0.0
  %2313 = vmatpush1.msra.mxu0 0.0
  %2314 = vmatprep.subr.mxu0 0.0
  %2315 = vmatpush1.msra.mxu0 0.0
  %2316 = vmatprep.subr.mxu0 0.0
  %2317 = vmatpush1.msra.mxu0 0.0
  %2318 = vmatprep.subr.mxu0 0.0
  %2319 = vmatpush1.msra.mxu0 0.0
  %2320 = vmatprep.subr.mxu0 0.0
  %2321 = vmatpush1.msra.mxu0 0.0
  %2322 = vmatprep.subr.mxu0 0.0
  %2323 = vmatpush1.msra.mxu0 0.0
  %2324 = vmatprep.subr.mxu0 0.0
  %2325 = vmatpush1.msra.mxu0 0.0
  %2326 = vmatprep.subr.mxu0 0.0
  %2327 = vmatpush1.msra.mxu0 0.0
  %2328 = vmatprep.subr.mxu0 0.0
  %2329 = vmatpush1.msra.mxu0 0.0
  %2330 = vmatprep.subr.mxu0 0.0
  %2331 = vmatpush1.msra.mxu0 0.0
  %2332 = vmatprep.subr.mxu0 0.0
  %2333 = vmatpush1.msra.mxu0 0.0
  %2334 = vmatprep.subr.mxu0 0.0
  %2335 = vmatpush1.msra.mxu0 0.0
  %2336 = vmatprep.subr.mxu0 0.0
  %2337 = vmatpush1.msra.mxu0 0.0
  %2338 = vmatprep.subr.mxu0 0.0
  %2339 = vmatpush1.msra.mxu0 0.0
  %2340 = vmatprep.subr.mxu0 0.0
  %2341 = vmatpush1.msra.mxu0 0.0
  %2342 = vmatprep.subr.mxu0 0.0
  %2343 = vmatpush1.msra.mxu0 0.0
  %2344 = vmatprep.subr.mxu0 0.0
  %2345 = vmatpush1.msra.mxu0 0.0
  %2346 = vmatprep.subr.mxu0 0.0
  %2347 = vmatpush1.msra.mxu0 0.0
  %2348 = vmatprep.subr.mxu0 0.0
  %2349 = vmatpush1.msra.mxu0 0.0
  %2350 = vmatprep.subr.mxu0 0.0
  %2351 = vmatpush1.msra.mxu0 0.0
  %2352 = vmatprep.subr.mxu0 0.0
  %2353 = vmatpush1.msra.mxu0 0.0
  %2354 = vmatprep.subr.mxu0 0.0
  %2355 = vmatpush1.msra.mxu0 0.0
  %2356 = vmatprep.subr.mxu0 0.0
  %2357 = vmatpush1.msra.mxu0 0.0
  %2358 = vmatprep.subr.mxu0 0.0
  %2359 = vmatpush1.msra.mxu0 0.0
  %2360 = vmatprep.subr.mxu0 0.0
  %2361 = vmatpush1.msra.mxu0 0.0
  %2362 = vmatprep.mubr.f32.mxu0 0.0
  %2363 = vmatmul.mubr.f32.gmra.mrb[0].mxu0 %v2136
  %v2364 = vpop.f32.mrb[0].mxu0
  %v2365 = vadd.f32 0.0, %v2364
  %v2366 = vpop.f32.mrb[0].mxu0
  %v2367 = vadd.f32 0.0, %v2366
  %2368 = vdwg.mxu0
  %v2370 = vsel %vm97, %v2108, 0
  %v2373 = vsel %vm101, %v2115, 0
  %v2376 = vsel %vm101, %v2116, 0
  %v2379 = vsel %vm101, %v2117, 0
  %v2382 = vsel %vm101, %v2118, 0
  %v2385 = vsel %vm101, %v2119, 0
  %v2388 = vsel %vm101, %v2120, 0
  %2390 = vmatprep.subr.mxu0 %v2110
  %2391 = vmatpush1.msra.mxu0 %v2109
  %2392 = vmatprep.subr.mxu0 %v2376
  %2393 = vmatpush1.msra.mxu0 %v2373
  %2394 = vmatprep.subr.mxu0 0.0
  %2395 = vmatpush1.msra.mxu0 0.0
  %2396 = vmatprep.subr.mxu0 0.0
  %2397 = vmatpush1.msra.mxu0 0.0
  %2398 = vmatprep.subr.mxu0 0.0
  %2399 = vmatpush1.msra.mxu0 0.0
  %2400 = vmatprep.subr.mxu0 0.0
  %2401 = vmatpush1.msra.mxu0 0.0
  %2402 = vmatprep.subr.mxu0 0.0
  %2403 = vmatpush1.msra.mxu0 0.0
  %2404 = vmatprep.subr.mxu0 0.0
  %2405 = vmatpush1.msra.mxu0 0.0
  %2406 = vmatprep.subr.mxu0 0.0
  %2407 = vmatpush1.msra.mxu0 0.0
  %2408 = vmatprep.subr.mxu0 0.0
  %2409 = vmatpush1.msra.mxu0 0.0
  %2410 = vmatprep.subr.mxu0 0.0
  %2411 = vmatpush1.msra.mxu0 0.0
  %2412 = vmatprep.subr.mxu0 0.0
  %2413 = vmatpush1.msra.mxu0 0.0
  %2414 = vmatprep.subr.mxu0 0.0
  %2415 = vmatpush1.msra.mxu0 0.0
  %2416 = vmatprep.subr.mxu0 0.0
  %2417 = vmatpush1.msra.mxu0 0.0
  %2418 = vmatprep.subr.mxu0 0.0
  %2419 = vmatpush1.msra.mxu0 0.0
  %2420 = vmatprep.subr.mxu0 0.0
  %2421 = vmatpush1.msra.mxu0 0.0
  %2422 = vmatprep.subr.mxu0 0.0
  %2423 = vmatpush1.msra.mxu0 0.0
  %2424 = vmatprep.subr.mxu0 0.0
  %2425 = vmatpush1.msra.mxu0 0.0
  %2426 = vmatprep.subr.mxu0 0.0
  %2427 = vmatpush1.msra.mxu0 0.0
  %2428 = vmatprep.subr.mxu0 0.0
  %2429 = vmatpush1.msra.mxu0 0.0
  %2430 = vmatprep.subr.mxu0 0.0
  %2431 = vmatpush1.msra.mxu0 0.0
  %2432 = vmatprep.subr.mxu0 0.0
  %2433 = vmatpush1.msra.mxu0 0.0
  %2434 = vmatprep.subr.mxu0 0.0
  %2435 = vmatpush1.msra.mxu0 0.0
  %2436 = vmatprep.subr.mxu0 0.0
  %2437 = vmatpush1.msra.mxu0 0.0
  %2438 = vmatprep.subr.mxu0 0.0
  %2439 = vmatpush1.msra.mxu0 0.0
  %2440 = vmatprep.subr.mxu0 0.0
  %2441 = vmatpush1.msra.mxu0 0.0
  %2442 = vmatprep.subr.mxu0 0.0
  %2443 = vmatpush1.msra.mxu0 0.0
  %2444 = vmatprep.subr.mxu0 0.0
  %2445 = vmatpush1.msra.mxu0 0.0
  %2446 = vmatprep.subr.mxu0 0.0
  %2447 = vmatpush1.msra.mxu0 0.0
  %2448 = vmatprep.subr.mxu0 0.0
  %2449 = vmatpush1.msra.mxu0 0.0
  %2450 = vmatprep.subr.mxu0 0.0
  %2451 = vmatpush1.msra.mxu0 0.0
  %2452 = vmatprep.subr.mxu0 0.0
  %2453 = vmatpush1.msra.mxu0 0.0
  %2454 = vmatprep.mubr.f32.mxu0 0.0
  %2455 = vmatmul.mubr.f32.gmra.mrb[0].mxu0 %v2370
  %v2456 = vpop.f32.mrb[0].mxu0
  %v2457 = vadd.f32 %v2223, %v2456
  %v2458 = vpop.f32.mrb[0].mxu0
  %v2459 = vadd.f32 %v2225, %v2458
  %2460 = vdwg.mxu0
  %2461 = vmatprep.subr.mxu0 %v2112
  %2462 = vmatpush1.msra.mxu0 %v2111
  %2463 = vmatprep.subr.mxu0 %v2382
  %2464 = vmatpush1.msra.mxu0 %v2379
  %2465 = vmatprep.subr.mxu0 0.0
  %2466 = vmatpush1.msra.mxu0 0.0
  %2467 = vmatprep.subr.mxu0 0.0
  %2468 = vmatpush1.msra.mxu0 0.0
  %2469 = vmatprep.subr.mxu0 0.0
  %2470 = vmatpush1.msra.mxu0 0.0
  %2471 = vmatprep.subr.mxu0 0.0
  %2472 = vmatpush1.msra.mxu0 0.0
  %2473 = vmatprep.subr.mxu0 0.0
  %2474 = vmatpush1.msra.mxu0 0.0
  %2475 = vmatprep.subr.mxu0 0.0
  %2476 = vmatpush1.msra.mxu0 0.0
  %2477 = vmatprep.subr.mxu0 0.0
  %2478 = vmatpush1.msra.mxu0 0.0
  %2479 = vmatprep.subr.mxu0 0.0
  %2480 = vmatpush1.msra.mxu0 0.0
  %2481 = vmatprep.subr.mxu0 0.0
  %2482 = vmatpush1.msra.mxu0 0.0
  %2483 = vmatprep.subr.mxu0 0.0
  %2484 = vmatpush1.msra.mxu0 0.0
  %2485 = vmatprep.subr.mxu0 0.0
  %2486 = vmatpush1.msra.mxu0 0.0
  %2487 = vmatprep.subr.mxu0 0.0
  %2488 = vmatpush1.msra.mxu0 0.0
  %2489 = vmatprep.subr.mxu0 0.0
  %2490 = vmatpush1.msra.mxu0 0.0
  %2491 = vmatprep.subr.mxu0 0.0
  %2492 = vmatpush1.msra.mxu0 0.0
  %2493 = vmatprep.subr.mxu0 0.0
  %2494 = vmatpush1.msra.mxu0 0.0
  %2495 = vmatprep.subr.mxu0 0.0
  %2496 = vmatpush1.msra.mxu0 0.0
  %2497 = vmatprep.subr.mxu0 0.0
  %2498 = vmatpush1.msra.mxu0 0.0
  %2499 = vmatprep.subr.mxu0 0.0
  %2500 = vmatpush1.msra.mxu0 0.0
  %2501 = vmatprep.subr.mxu0 0.0
  %2502 = vmatpush1.msra.mxu0 0.0
  %2503 = vmatprep.subr.mxu0 0.0
  %2504 = vmatpush1.msra.mxu0 0.0
  %2505 = vmatprep.subr.mxu0 0.0
  %2506 = vmatpush1.msra.mxu0 0.0
  %2507 = vmatprep.subr.mxu0 0.0
  %2508 = vmatpush1.msra.mxu0 0.0
  %2509 = vmatprep.subr.mxu0 0.0
  %2510 = vmatpush1.msra.mxu0 0.0
  %2511 = vmatprep.subr.mxu0 0.0
  %2512 = vmatpush1.msra.mxu0 0.0
  %2513 = vmatprep.subr.mxu0 0.0
  %2514 = vmatpush1.msra.mxu0 0.0
  %2515 = vmatprep.subr.mxu0 0.0
  %2516 = vmatpush1.msra.mxu0 0.0
  %2517 = vmatprep.subr.mxu0 0.0
  %2518 = vmatpush1.msra.mxu0 0.0
  %2519 = vmatprep.subr.mxu0 0.0
  %2520 = vmatpush1.msra.mxu0 0.0
  %2521 = vmatprep.subr.mxu0 0.0
  %2522 = vmatpush1.msra.mxu0 0.0
  %2523 = vmatprep.subr.mxu0 0.0
  %2524 = vmatpush1.msra.mxu0 0.0
  %2525 = vmatprep.mubr.f32.mxu0 0.0
  %2526 = vmatmul.mubr.f32.gmra.mrb[0].mxu0 %v2370
  %v2527 = vpop.f32.mrb[0].mxu0
  %v2528 = vadd.f32 %v2294, %v2527
  %v2529 = vpop.f32.mrb[0].mxu0
  %v2530 = vadd.f32 %v2296, %v2529
  %2531 = vdwg.mxu0
  %2532 = vmatprep.subr.mxu0 %v2114
  %2533 = vmatpush1.msra.mxu0 %v2113
  %2534 = vmatprep.subr.mxu0 %v2388
  %2535 = vmatpush1.msra.mxu0 %v2385
  %2536 = vmatprep.subr.mxu0 0.0
  %2537 = vmatpush1.msra.mxu0 0.0
  %2538 = vmatprep.subr.mxu0 0.0
  %2539 = vmatpush1.msra.mxu0 0.0
  %2540 = vmatprep.subr.mxu0 0.0
  %2541 = vmatpush1.msra.mxu0 0.0
  %2542 = vmatprep.subr.mxu0 0.0
  %2543 = vmatpush1.msra.mxu0 0.0
  %2544 = vmatprep.subr.mxu0 0.0
  %2545 = vmatpush1.msra.mxu0 0.0
  %2546 = vmatprep.subr.mxu0 0.0
  %2547 = vmatpush1.msra.mxu0 0.0
  %2548 = vmatprep.subr.mxu0 0.0
  %2549 = vmatpush1.msra.mxu0 0.0
  %2550 = vmatprep.subr.mxu0 0.0
  %2551 = vmatpush1.msra.mxu0 0.0
  %2552 = vmatprep.subr.mxu0 0.0
  %2553 = vmatpush1.msra.mxu0 0.0
  %2554 = vmatprep.subr.mxu0 0.0
  %2555 = vmatpush1.msra.mxu0 0.0
  %2556 = vmatprep.subr.mxu0 0.0
  %2557 = vmatpush1.msra.mxu0 0.0
  %2558 = vmatprep.subr.mxu0 0.0
  %2559 = vmatpush1.msra.mxu0 0.0
  %2560 = vmatprep.subr.mxu0 0.0
  %2561 = vmatpush1.msra.mxu0 0.0
  %2562 = vmatprep.subr.mxu0 0.0
  %2563 = vmatpush1.msra.mxu0 0.0
  %2564 = vmatprep.subr.mxu0 0.0
  %2565 = vmatpush1.msra.mxu0 0.0
  %2566 = vmatprep.subr.mxu0 0.0
  %2567 = vmatpush1.msra.mxu0 0.0
  %2568 = vmatprep.subr.mxu0 0.0
  %2569 = vmatpush1.msra.mxu0 0.0
  %2570 = vmatprep.subr.mxu0 0.0
  %2571 = vmatpush1.msra.mxu0 0.0
  %2572 = vmatprep.subr.mxu0 0.0
  %2573 = vmatpush1.msra.mxu0 0.0
  %2574 = vmatprep.subr.mxu0 0.0
  %2575 = vmatpush1.msra.mxu0 0.0
  %2576 = vmatprep.subr.mxu0 0.0
  %2577 = vmatpush1.msra.mxu0 0.0
  %2578 = vmatprep.subr.mxu0 0.0
  %2579 = vmatpush1.msra.mxu0 0.0
  %2580 = vmatprep.subr.mxu0 0.0
  %2581 = vmatpush1.msra.mxu0 0.0
  %2582 = vmatprep.subr.mxu0 0.0
  %2583 = vmatpush1.msra.mxu0 0.0
  %2584 = vmatprep.subr.mxu0 0.0
  %2585 = vmatpush1.msra.mxu0 0.0
  %2586 = vmatprep.subr.mxu0 0.0
  %2587 = vmatpush1.msra.mxu0 0.0
  %2588 = vmatprep.subr.mxu0 0.0
  %2589 = vmatpush1.msra.mxu0 0.0
  %2590 = vmatprep.subr.mxu0 0.0
  %2591 = vmatpush1.msra.mxu0 0.0
  %2592 = vmatprep.subr.mxu0 0.0
  %2593 = vmatpush1.msra.mxu0 0.0
  %2594 = vmatprep.subr.mxu0 0.0
  %2595 = vmatpush1.msra.mxu0 0.0
  %2596 = vmatprep.mubr.f32.mxu0 0.0
  %2597 = vmatmul.mubr.f32.gmra.mrb[0].mxu0 %v2370
  %v2598 = vpop.f32.mrb[0].mxu0
  %v2599 = vadd.f32 %v2365, %v2598
  %v2600 = vpop.f32.mrb[0].mxu0
  %v2601 = vadd.f32 %v2367, %v2600
  %2602 = vdwg.mxu0
  %v2603 = vld [vmem:[%s4] sm:$0x3f]
  %v2605 = vlaneseq
  %v2606 = vshrl.u32 %v2605, 7
  %v2607 = vsub.s32 0, %v2606
  %v2608 = vrot.slane %v2603, %v2607
  %v2609 = vlaneseq
  %v2610 = vshrl.u32 %v2609, 7
  %v2611 = vsub.s32 1, %v2610
  %v2612 = vrot.slane %v2603, %v2611
  %v2613 = vlaneseq
  %v2614 = vshrl.u32 %v2613, 7
  %v2615 = vsub.s32 2, %v2614
  %v2616 = vrot.slane %v2603, %v2615
  %v2617 = vlaneseq
  %v2618 = vshrl.u32 %v2617, 7
  %v2619 = vsub.s32 3, %v2618
  %v2620 = vrot.slane %v2603, %v2619
  %v2621 = vlaneseq
  %v2622 = vshrl.u32 %v2621, 7
  %v2623 = vsub.s32 4, %v2622
  %v2624 = vrot.slane %v2603, %v2623
  %v2625 = vlaneseq
  %v2626 = vshrl.u32 %v2625, 7
  %v2627 = vsub.s32 5, %v2626
  %v2628 = vrot.slane %v2603, %v2627
  %v2635 = vadd.f32 %v2457, %v2608
  %v2636 = vadd.f32 %v2459, %v2612
  %v2637 = vadd.f32 %v2528, %v2616
  %v2638 = vadd.f32 %v2530, %v2620
  %v2639 = vadd.f32 %v2599, %v2624
  %v2640 = vadd.f32 %v2601, %v2628
  %v2641 = vld [vmem:[%s5] sm:$0xff]
  %v2642 = vld [vmem:[%s5 + $0x8] sm:$0xff]
  %v2643 = vld [vmem:[%s5 + $0x10] sm:$0xff]
  %v2644 = vld [vmem:[%s5 + $0x18] sm:$0xff]
  %v2645 = vld [vmem:[%s5 + $0x20] sm:$0xff]
  %v2646 = vld [vmem:[%s5 + $0x28] sm:$0xff]
  %v2647 = vld [vmem:[%s5 + $0x30] sm:$0xff]
  %v2648 = vld [vmem:[%s5 + $0x38] sm:$0xff]
  %v2649 = vld [vmem:[%s5 + $0x40] sm:$0xff]
  %v2650 = vld [vmem:[%s5 + $0x48] sm:$0xff]
  %v2651 = vld [vmem:[%s5 + $0x50] sm:$0xff]
  %v2652 = vld [vmem:[%s5 + $0x58] sm:$0xff]
  %v2653 = vld [vmem:[%s5 + $0x60] sm:$0xff]
  %v2654 = vld [vmem:[%s5 + $0x68] sm:$0xff]
  %v2655 = vld [vmem:[%s5 + $0x70] sm:$0xff]
  %v2656 = vld [vmem:[%s5 + $0x78] sm:$0xff]
  %v2657 = vld [vmem:[%s5 + $0x80] sm:$0xff]
  %v2658 = vld [vmem:[%s5 + $0x88] sm:$0xff]
  %v2659 = vld [vmem:[%s5 + $0x90] sm:$0xff]
  %v2660 = vld [vmem:[%s5 + $0x98] sm:$0xff]
  %v2661 = vld [vmem:[%s5 + $0xa0] sm:$0xff]
  %v2662 = vld [vmem:[%s5 + $0xa8] sm:$0xff]
  %v2663 = vld [vmem:[%s5 + $0xb0] sm:$0xff]
  %v2664 = vld [vmem:[%s5 + $0xb8] sm:$0xff]
  %v2665 = vld [vmem:[%s5 + $0xc0] sm:$0xff]
  %v2666 = vld [vmem:[%s5 + $0xc8] sm:$0xff]
  %v2667 = vld [vmem:[%s5 + $0xd0] sm:$0xff]
  %v2668 = vld [vmem:[%s5 + $0xd8] sm:$0xff]
  %v2669 = vld [vmem:[%s5 + $0xe0] sm:$0xff]
  %v2670 = vld [vmem:[%s5 + $0xe8] sm:$0xff]
  %v2671 = vld [vmem:[%s5 + $0xf0] sm:$0xff]
  %v2672 = vld [vmem:[%s5 + $0xf8] sm:$0xff]
  %v2673 = vld [vmem:[%s5 + $0x100] sm:$0xff]
  %v2674 = vld [vmem:[%s5 + $0x108] sm:$0xff]
  %v2675 = vld [vmem:[%s5 + $0x110] sm:$0xff]
  %v2676 = vld [vmem:[%s5 + $0x118] sm:$0xff]
  %v2677 = vld [vmem:[%s5 + $0x120] sm:$0xff]
  %v2678 = vld [vmem:[%s5 + $0x128] sm:$0xff]
  %v2679 = vld [vmem:[%s5 + $0x130] sm:$0xff]
  %v2680 = vld [vmem:[%s5 + $0x138] sm:$0xff]
  %v2681 = vld [vmem:[%s5 + $0x140] sm:$0xff]
  %v2682 = vld [vmem:[%s5 + $0x148] sm:$0xff]
  %v2683 = vld [vmem:[%s5 + $0x150] sm:$0xff]
  %v2684 = vld [vmem:[%s5 + $0x158] sm:$0xff]
  %v2685 = vld [vmem:[%s5 + $0x160] sm:$0xff]
  %v2686 = vld [vmem:[%s5 + $0x168] sm:$0xff]
  %v2687 = vld [vmem:[%s5 + $0x170] sm:$0xff]
  %v2688 = vld [vmem:[%s5 + $0x178] sm:$0xff]
  %v2689 = vld [vmem:[%s5 + $0x180] sm:$0xff]
  %v2690 = vld [vmem:[%s5 + $0x188] sm:$0xff]
  %v2691 = vld [vmem:[%s5 + $0x190] sm:$0xff]
  %v2692 = vld [vmem:[%s5 + $0x198] sm:$0xff]
  %v2693 = vld [vmem:[%s5 + $0x1a0] sm:$0xff]
  %v2694 = vld [vmem:[%s5 + $0x1a8] sm:$0xff]
  %v2695 = vld [vmem:[%s5 + $0x1b0] sm:$0xff]
  %v2696 = vld [vmem:[%s5 + $0x1b8] sm:$0xff]
  %v2697 = vld [vmem:[%s5 + $0x1c0] sm:$0xff]
  %v2698 = vld [vmem:[%s5 + $0x1c8] sm:$0xff]
  %v2699 = vld [vmem:[%s5 + $0x1d0] sm:$0xff]
  %v2700 = vld [vmem:[%s5 + $0x1d8] sm:$0xff]
  %v2701 = vld [vmem:[%s5 + $0x1e0] sm:$0xff]
  %v2702 = vld [vmem:[%s5 + $0x1e8] sm:$0xff]
  %v2703 = vld [vmem:[%s5 + $0x1f0] sm:$0xff]
  %v2704 = vld [vmem:[%s5 + $0x1f8] sm:$0xff]
  %v2705 = vld [vmem:[%s5 + $0x200] sm:$0xff]
  %v2706 = vld [vmem:[%s5 + $0x208] sm:$0xff]
  %v2707 = vld [vmem:[%s5 + $0x210] sm:$0xff]
  %v2708 = vld [vmem:[%s5 + $0x218] sm:$0xff]
  %v2709 = vld [vmem:[%s5 + $0x220] sm:$0xff]
  %v2710 = vld [vmem:[%s5 + $0x228] sm:$0xff]
  %v2711 = vld [vmem:[%s5 + $0x230] sm:$0xff]
  %v2712 = vld [vmem:[%s5 + $0x238] sm:$0xff]
  %v2713 = vld [vmem:[%s5 + $0x240] sm:$0xff]
  %v2714 = vld [vmem:[%s5 + $0x248] sm:$0xff]
  %v2715 = vld [vmem:[%s5 + $0x250] sm:$0xff]
  %v2716 = vld [vmem:[%s5 + $0x258] sm:$0xff]
  %v2717 = vld [vmem:[%s5 + $0x260] sm:$0xff]
  %v2718 = vld [vmem:[%s5 + $0x268] sm:$0xff]
  %v2719 = vld [vmem:[%s5 + $0x270] sm:$0xff]
  %v2720 = vld [vmem:[%s5 + $0x278] sm:$0xff]
  %v2721 = vld [vmem:[%s5 + $0x280] sm:$0xff]
  %v2722 = vld [vmem:[%s5 + $0x288] sm:$0xff]
  %v2723 = vld [vmem:[%s5 + $0x290] sm:$0xff]
  %v2724 = vld [vmem:[%s5 + $0x298] sm:$0xff]
  %v2725 = vld [vmem:[%s5 + $0x2a0] sm:$0xff]
  %v2726 = vld [vmem:[%s5 + $0x2a8] sm:$0xff]
  %v2727 = vld [vmem:[%s5 + $0x2b0] sm:$0xff]
  %v2728 = vld [vmem:[%s5 + $0x2b8] sm:$0xff]
  %v2729 = vld [vmem:[%s5 + $0x2c0] sm:$0xff]
  %v2730 = vld [vmem:[%s5 + $0x2c8] sm:$0xff]
  %v2731 = vld [vmem:[%s5 + $0x2d0] sm:$0xff]
  %v2732 = vld [vmem:[%s5 + $0x2d8] sm:$0xff]
  %v2733 = vld [vmem:[%s5 + $0x2e0] sm:$0xff]
  %v2734 = vld [vmem:[%s5 + $0x2e8] sm:$0xff]
  %v2735 = vld [vmem:[%s5 + $0x2f0] sm:$0xff]
  %v2736 = vld [vmem:[%s5 + $0x2f8] sm:$0xff]
  %v2737 = vld [vmem:[%s5 + $0x300] sm:$0xff]
  %v2738 = vld [vmem:[%s5 + $0x308] sm:$0xff]
  %v2739 = vld [vmem:[%s5 + $0x310] sm:$0xff]
  %v2740 = vld [vmem:[%s5 + $0x318] sm:$0xff]
  %v2741 = vld [vmem:[%s5 + $0x320] sm:$0xff]
  %v2742 = vld [vmem:[%s5 + $0x328] sm:$0xff]
  %v2743 = vld [vmem:[%s5 + $0x330] sm:$0xff]
  %v2744 = vld [vmem:[%s5 + $0x338] sm:$0xff]
  %v2745 = vld [vmem:[%s5 + $0x340] sm:$0xff]
  %v2746 = vld [vmem:[%s5 + $0x348] sm:$0xff]
  %v2747 = vld [vmem:[%s5 + $0x350] sm:$0xff]
  %v2748 = vld [vmem:[%s5 + $0x358] sm:$0xff]
  %v2749 = vld [vmem:[%s5 + $0x360] sm:$0xff]
  %v2750 = vld [vmem:[%s5 + $0x368] sm:$0xff]
  %v2751 = vld [vmem:[%s5 + $0x370] sm:$0xff]
  %v2752 = vld [vmem:[%s5 + $0x378] sm:$0xff]
  %v2753 = vld [vmem:[%s5 + $0x380] sm:$0xff]
  %v2754 = vld [vmem:[%s5 + $0x388] sm:$0xff]
  %v2755 = vld [vmem:[%s5 + $0x390] sm:$0xff]
  %v2756 = vld [vmem:[%s5 + $0x398] sm:$0xff]
  %v2757 = vld [vmem:[%s5 + $0x3a0] sm:$0xff]
  %v2758 = vld [vmem:[%s5 + $0x3a8] sm:$0xff]
  %v2759 = vld [vmem:[%s5 + $0x3b0] sm:$0xff]
  %v2760 = vld [vmem:[%s5 + $0x3b8] sm:$0xff]
  %v2761 = vld [vmem:[%s5 + $0x3c0] sm:$0xff]
  %v2762 = vld [vmem:[%s5 + $0x3c8] sm:$0xff]
  %v2763 = vld [vmem:[%s5 + $0x3d0] sm:$0xff]
  %v2764 = vld [vmem:[%s5 + $0x3d8] sm:$0xff]
  %v2765 = vld [vmem:[%s5 + $0x3e0] sm:$0xff]
  %v2766 = vld [vmem:[%s5 + $0x3e8] sm:$0xff]
  %v2767 = vld [vmem:[%s5 + $0x3f0] sm:$0xff]
  %v2768 = vld [vmem:[%s5 + $0x3f8] sm:$0xff]
  %v2769 = vld [vmem:[%s5 + $0x400] sm:$0xff]
  %v2770 = vld [vmem:[%s5 + $0x408] sm:$0xff]
  %v2771 = vld [vmem:[%s5 + $0x410] sm:$0xff]
  %v2772 = vld [vmem:[%s5 + $0x418] sm:$0xff]
  %v2773 = vld [vmem:[%s5 + $0x420] sm:$0xff]
  %v2774 = vld [vmem:[%s5 + $0x428] sm:$0xff]
  %v2775 = vld [vmem:[%s5 + $0x430] sm:$0xff]
  %v2776 = vld [vmem:[%s5 + $0x438] sm:$0xff]
  %v2777 = vld [vmem:[%s5 + $0x440] sm:$0xff]
  %v2778 = vld [vmem:[%s5 + $0x448] sm:$0xff]
  %v2779 = vld [vmem:[%s5 + $0x450] sm:$0xff]
  %v2780 = vld [vmem:[%s5 + $0x458] sm:$0xff]
  %v2781 = vld [vmem:[%s5 + $0x460] sm:$0xff]
  %v2782 = vld [vmem:[%s5 + $0x468] sm:$0xff]
  %v2783 = vld [vmem:[%s5 + $0x470] sm:$0xff]
  %v2784 = vld [vmem:[%s5 + $0x478] sm:$0xff]
  %v2785 = vld [vmem:[%s5 + $0x480] sm:$0xff]
  %v2786 = vld [vmem:[%s5 + $0x488] sm:$0xff]
  %v2787 = vld [vmem:[%s5 + $0x490] sm:$0xff]
  %v2788 = vld [vmem:[%s5 + $0x498] sm:$0xff]
  %v2789 = vld [vmem:[%s5 + $0x4a0] sm:$0xff]
  %v2790 = vld [vmem:[%s5 + $0x4a8] sm:$0xff]
  %v2791 = vld [vmem:[%s5 + $0x4b0] sm:$0xff]
  %v2792 = vld [vmem:[%s5 + $0x4b8] sm:$0xff]
  %v2793 = vld [vmem:[%s5 + $0x4c0] sm:$0xff]
  %v2794 = vld [vmem:[%s5 + $0x4c8] sm:$0xff]
  %v2795 = vld [vmem:[%s5 + $0x4d0] sm:$0xff]
  %v2796 = vld [vmem:[%s5 + $0x4d8] sm:$0xff]
  %v2797 = vld [vmem:[%s5 + $0x4e0] sm:$0xff]
  %v2798 = vld [vmem:[%s5 + $0x4e8] sm:$0xff]
  %v2799 = vld [vmem:[%s5 + $0x4f0] sm:$0xff]
  %v2800 = vld [vmem:[%s5 + $0x4f8] sm:$0xff]
  %v2801 = vld [vmem:[%s5 + $0x500] sm:$0xff]
  %v2802 = vld [vmem:[%s5 + $0x508] sm:$0xff]
  %v2803 = vld [vmem:[%s5 + $0x510] sm:$0xff]
  %v2804 = vld [vmem:[%s5 + $0x518] sm:$0xff]
  %v2805 = vld [vmem:[%s5 + $0x520] sm:$0xff]
  %v2806 = vld [vmem:[%s5 + $0x528] sm:$0xff]
  %v2807 = vld [vmem:[%s5 + $0x530] sm:$0xff]
  %v2808 = vld [vmem:[%s5 + $0x538] sm:$0xff]
  %v2809 = vld [vmem:[%s5 + $0x540] sm:$0xff]
  %v2810 = vld [vmem:[%s5 + $0x548] sm:$0xff]
  %v2811 = vld [vmem:[%s5 + $0x550] sm:$0xff]
  %v2812 = vld [vmem:[%s5 + $0x558] sm:$0xff]
  %v2813 = vld [vmem:[%s5 + $0x560] sm:$0xff]
  %v2814 = vld [vmem:[%s5 + $0x568] sm:$0xff]
  %v2815 = vld [vmem:[%s5 + $0x570] sm:$0xff]
  %v2816 = vld [vmem:[%s5 + $0x578] sm:$0xff]
  %v2817 = vld [vmem:[%s5 + $0x580] sm:$0xff]
  %v2818 = vld [vmem:[%s5 + $0x588] sm:$0xff]
  %v2819 = vld [vmem:[%s5 + $0x590] sm:$0xff]
  %v2820 = vld [vmem:[%s5 + $0x598] sm:$0xff]
  %v2821 = vld [vmem:[%s5 + $0x5a0] sm:$0xff]
  %v2822 = vld [vmem:[%s5 + $0x5a8] sm:$0xff]
  %v2823 = vld [vmem:[%s5 + $0x5b0] sm:$0xff]
  %v2824 = vld [vmem:[%s5 + $0x5b8] sm:$0xff]
  %v2825 = vld [vmem:[%s5 + $0x5c0] sm:$0xff]
  %v2826 = vld [vmem:[%s5 + $0x5c8] sm:$0xff]
  %v2827 = vld [vmem:[%s5 + $0x5d0] sm:$0xff]
  %v2828 = vld [vmem:[%s5 + $0x5d8] sm:$0xff]
  %v2829 = vld [vmem:[%s5 + $0x5e0] sm:$0xff]
  %v2830 = vld [vmem:[%s5 + $0x5e8] sm:$0xff]
  %v2831 = vld [vmem:[%s5 + $0x5f0] sm:$0xff]
  %v2832 = vld [vmem:[%s5 + $0x5f8] sm:$0xff]
  %v2833 = vld [vmem:[%s6] sm:$0x3f]
  %v2835 = vlaneseq
  %v2836 = vshrl.u32 %v2835, 7
  %v2837 = vsub.s32 0, %v2836
  %v2838 = vrot.slane %v2833, %v2837
  %v2839 = vlaneseq
  %v2840 = vshrl.u32 %v2839, 7
  %v2841 = vsub.s32 1, %v2840
  %v2842 = vrot.slane %v2833, %v2841
  %v2843 = vlaneseq
  %v2844 = vshrl.u32 %v2843, 7
  %v2845 = vsub.s32 2, %v2844
  %v2846 = vrot.slane %v2833, %v2845
  %v2847 = vlaneseq
  %v2848 = vshrl.u32 %v2847, 7
  %v2849 = vsub.s32 3, %v2848
  %v2850 = vrot.slane %v2833, %v2849
  %v2851 = vlaneseq
  %v2852 = vshrl.u32 %v2851, 7
  %v2853 = vsub.s32 4, %v2852
  %v2854 = vrot.slane %v2833, %v2853
  %v2855 = vlaneseq
  %v2856 = vshrl.u32 %v2855, 7
  %v2857 = vsub.s32 5, %v2856
  %v2858 = vrot.slane %v2833, %v2857
  %2865 = vmatprep.subr.mxu0 %v2642
  %2866 = vmatpush1.msra.mxu0 %v2641
  %2867 = vmatprep.subr.mxu0 %v2648
  %2868 = vmatpush1.msra.mxu0 %v2647
  %2869 = vmatprep.subr.mxu0 %v2654
  %2870 = vmatpush1.msra.mxu0 %v2653
  %2871 = vmatprep.subr.mxu0 %v2660
  %2872 = vmatpush1.msra.mxu0 %v2659
  %2873 = vmatprep.subr.mxu0 %v2666
  %2874 = vmatpush1.msra.mxu0 %v2665
  %2875 = vmatprep.subr.mxu0 %v2672
  %2876 = vmatpush1.msra.mxu0 %v2671
  %2877 = vmatprep.subr.mxu0 %v2678
  %2878 = vmatpush1.msra.mxu0 %v2677
  %2879 = vmatprep.subr.mxu0 %v2684
  %2880 = vmatpush1.msra.mxu0 %v2683
  %2881 = vmatprep.subr.mxu0 %v2690
  %2882 = vmatpush1.msra.mxu0 %v2689
  %2883 = vmatprep.subr.mxu0 %v2696
  %2884 = vmatpush1.msra.mxu0 %v2695
  %2885 = vmatprep.subr.mxu0 %v2702
  %2886 = vmatpush1.msra.mxu0 %v2701
  %2887 = vmatprep.subr.mxu0 %v2708
  %2888 = vmatpush1.msra.mxu0 %v2707
  %2889 = vmatprep.subr.mxu0 %v2714
  %2890 = vmatpush1.msra.mxu0 %v2713
  %2891 = vmatprep.subr.mxu0 %v2720
  %2892 = vmatpush1.msra.mxu0 %v2719
  %2893 = vmatprep.subr.mxu0 %v2726
  %2894 = vmatpush1.msra.mxu0 %v2725
  %2895 = vmatprep.subr.mxu0 %v2732
  %2896 = vmatpush1.msra.mxu0 %v2731
  %2897 = vmatprep.subr.mxu0 %v2738
  %2898 = vmatpush1.msra.mxu0 %v2737
  %2899 = vmatprep.subr.mxu0 %v2744
  %2900 = vmatpush1.msra.mxu0 %v2743
  %2901 = vmatprep.subr.mxu0 %v2750
  %2902 = vmatpush1.msra.mxu0 %v2749
  %2903 = vmatprep.subr.mxu0 %v2756
  %2904 = vmatpush1.msra.mxu0 %v2755
  %2905 = vmatprep.subr.mxu0 %v2762
  %2906 = vmatpush1.msra.mxu0 %v2761
  %2907 = vmatprep.subr.mxu0 %v2768
  %2908 = vmatpush1.msra.mxu0 %v2767
  %2909 = vmatprep.subr.mxu0 %v2774
  %2910 = vmatpush1.msra.mxu0 %v2773
  %2911 = vmatprep.subr.mxu0 %v2780
  %2912 = vmatpush1.msra.mxu0 %v2779
  %2913 = vmatprep.subr.mxu0 %v2786
  %2914 = vmatpush1.msra.mxu0 %v2785
  %2915 = vmatprep.subr.mxu0 %v2792
  %2916 = vmatpush1.msra.mxu0 %v2791
  %2917 = vmatprep.subr.mxu0 %v2798
  %2918 = vmatpush1.msra.mxu0 %v2797
  %2919 = vmatprep.subr.mxu0 %v2804
  %2920 = vmatpush1.msra.mxu0 %v2803
  %2921 = vmatprep.subr.mxu0 %v2810
  %2922 = vmatpush1.msra.mxu0 %v2809
  %2923 = vmatprep.subr.mxu0 %v2816
  %2924 = vmatpush1.msra.mxu0 %v2815
  %2925 = vmatprep.subr.mxu0 %v2822
  %2926 = vmatpush1.msra.mxu0 %v2821
  %2927 = vmatprep.subr.mxu0 %v2828
  %2928 = vmatpush1.msra.mxu0 %v2827
  %2929 = vmatprep.mubr.f32.mxu0 %v2102
  %2930 = vmatmul.mubr.f32.gmra.mrb[0].mxu0 %v2101
  %v2931 = vpop.f32.mrb[0].mxu0
  %v2932 = vadd.f32 %v2838, %v2931
  %v2933 = vpop.f32.mrb[0].mxu0
  %v2934 = vadd.f32 %v2842, %v2933
  %2935 = vdwg.mxu0
  %2936 = vmatprep.subr.mxu0 %v2644
  %2937 = vmatpush1.msra.mxu0 %v2643
  %2938 = vmatprep.subr.mxu0 %v2650
  %2939 = vmatpush1.msra.mxu0 %v2649
  %2940 = vmatprep.subr.mxu0 %v2656
  %2941 = vmatpush1.msra.mxu0 %v2655
  %2942 = vmatprep.subr.mxu0 %v2662
  %2943 = vmatpush1.msra.mxu0 %v2661
  %2944 = vmatprep.subr.mxu0 %v2668
  %2945 = vmatpush1.msra.mxu0 %v2667
  %2946 = vmatprep.subr.mxu0 %v2674
  %2947 = vmatpush1.msra.mxu0 %v2673
  %2948 = vmatprep.subr.mxu0 %v2680
  %2949 = vmatpush1.msra.mxu0 %v2679
  %2950 = vmatprep.subr.mxu0 %v2686
  %2951 = vmatpush1.msra.mxu0 %v2685
  %2952 = vmatprep.subr.mxu0 %v2692
  %2953 = vmatpush1.msra.mxu0 %v2691
  %2954 = vmatprep.subr.mxu0 %v2698
  %2955 = vmatpush1.msra.mxu0 %v2697
  %2956 = vmatprep.subr.mxu0 %v2704
  %2957 = vmatpush1.msra.mxu0 %v2703
  %2958 = vmatprep.subr.mxu0 %v2710
  %2959 = vmatpush1.msra.mxu0 %v2709
  %2960 = vmatprep.subr.mxu0 %v2716
  %2961 = vmatpush1.msra.mxu0 %v2715
  %2962 = vmatprep.subr.mxu0 %v2722
  %2963 = vmatpush1.msra.mxu0 %v2721
  %2964 = vmatprep.subr.mxu0 %v2728
  %2965 = vmatpush1.msra.mxu0 %v2727
  %2966 = vmatprep.subr.mxu0 %v2734
  %2967 = vmatpush1.msra.mxu0 %v2733
  %2968 = vmatprep.subr.mxu0 %v2740
  %2969 = vmatpush1.msra.mxu0 %v2739
  %2970 = vmatprep.subr.mxu0 %v2746
  %2971 = vmatpush1.msra.mxu0 %v2745
  %2972 = vmatprep.subr.mxu0 %v2752
  %2973 = vmatpush1.msra.mxu0 %v2751
  %2974 = vmatprep.subr.mxu0 %v2758
  %2975 = vmatpush1.msra.mxu0 %v2757
  %2976 = vmatprep.subr.mxu0 %v2764
  %2977 = vmatpush1.msra.mxu0 %v2763
  %2978 = vmatprep.subr.mxu0 %v2770
  %2979 = vmatpush1.msra.mxu0 %v2769
  %2980 = vmatprep.subr.mxu0 %v2776
  %2981 = vmatpush1.msra.mxu0 %v2775
  %2982 = vmatprep.subr.mxu0 %v2782
  %2983 = vmatpush1.msra.mxu0 %v2781
  %2984 = vmatprep.subr.mxu0 %v2788
  %2985 = vmatpush1.msra.mxu0 %v2787
  %2986 = vmatprep.subr.mxu0 %v2794
  %2987 = vmatpush1.msra.mxu0 %v2793
  %2988 = vmatprep.subr.mxu0 %v2800
  %2989 = vmatpush1.msra.mxu0 %v2799
  %2990 = vmatprep.subr.mxu0 %v2806
  %2991 = vmatpush1.msra.mxu0 %v2805
  %2992 = vmatprep.subr.mxu0 %v2812
  %2993 = vmatpush1.msra.mxu0 %v2811
  %2994 = vmatprep.subr.mxu0 %v2818
  %2995 = vmatpush1.msra.mxu0 %v2817
  %2996 = vmatprep.subr.mxu0 %v2824
  %2997 = vmatpush1.msra.mxu0 %v2823
  %2998 = vmatprep.subr.mxu0 %v2830
  %2999 = vmatpush1.msra.mxu0 %v2829
  %3000 = vmatprep.mubr.f32.mxu0 %v2102
  %3001 = vmatmul.mubr.f32.gmra.mrb[0].mxu0 %v2101
  %v3002 = vpop.f32.mrb[0].mxu0
  %v3003 = vadd.f32 %v2846, %v3002
  %v3004 = vpop.f32.mrb[0].mxu0
  %v3005 = vadd.f32 %v2850, %v3004
  %3006 = vdwg.mxu0
  %3007 = vmatprep.subr.mxu0 %v2646
  %3008 = vmatpush1.msra.mxu0 %v2645
  %3009 = vmatprep.subr.mxu0 %v2652
  %3010 = vmatpush1.msra.mxu0 %v2651
  %3011 = vmatprep.subr.mxu0 %v2658
  %3012 = vmatpush1.msra.mxu0 %v2657
  %3013 = vmatprep.subr.mxu0 %v2664
  %3014 = vmatpush1.msra.mxu0 %v2663
  %3015 = vmatprep.subr.mxu0 %v2670
  %3016 = vmatpush1.msra.mxu0 %v2669
  %3017 = vmatprep.subr.mxu0 %v2676
  %3018 = vmatpush1.msra.mxu0 %v2675
  %3019 = vmatprep.subr.mxu0 %v2682
  %3020 = vmatpush1.msra.mxu0 %v2681
  %3021 = vmatprep.subr.mxu0 %v2688
  %3022 = vmatpush1.msra.mxu0 %v2687
  %3023 = vmatprep.subr.mxu0 %v2694
  %3024 = vmatpush1.msra.mxu0 %v2693
  %3025 = vmatprep.subr.mxu0 %v2700
  %3026 = vmatpush1.msra.mxu0 %v2699
  %3027 = vmatprep.subr.mxu0 %v2706
  %3028 = vmatpush1.msra.mxu0 %v2705
  %3029 = vmatprep.subr.mxu0 %v2712
  %3030 = vmatpush1.msra.mxu0 %v2711
  %3031 = vmatprep.subr.mxu0 %v2718
  %3032 = vmatpush1.msra.mxu0 %v2717
  %3033 = vmatprep.subr.mxu0 %v2724
  %3034 = vmatpush1.msra.mxu0 %v2723
  %3035 = vmatprep.subr.mxu0 %v2730
  %3036 = vmatpush1.msra.mxu0 %v2729
  %3037 = vmatprep.subr.mxu0 %v2736
  %3038 = vmatpush1.msra.mxu0 %v2735
  %3039 = vmatprep.subr.mxu0 %v2742
  %3040 = vmatpush1.msra.mxu0 %v2741
  %3041 = vmatprep.subr.mxu0 %v2748
  %3042 = vmatpush1.msra.mxu0 %v2747
  %3043 = vmatprep.subr.mxu0 %v2754
  %3044 = vmatpush1.msra.mxu0 %v2753
  %3045 = vmatprep.subr.mxu0 %v2760
  %3046 = vmatpush1.msra.mxu0 %v2759
  %3047 = vmatprep.subr.mxu0 %v2766
  %3048 = vmatpush1.msra.mxu0 %v2765
  %3049 = vmatprep.subr.mxu0 %v2772
  %3050 = vmatpush1.msra.mxu0 %v2771
  %3051 = vmatprep.subr.mxu0 %v2778
  %3052 = vmatpush1.msra.mxu0 %v2777
  %3053 = vmatprep.subr.mxu0 %v2784
  %3054 = vmatpush1.msra.mxu0 %v2783
  %3055 = vmatprep.subr.mxu0 %v2790
  %3056 = vmatpush1.msra.mxu0 %v2789
  %3057 = vmatprep.subr.mxu0 %v2796
  %3058 = vmatpush1.msra.mxu0 %v2795
  %3059 = vmatprep.subr.mxu0 %v2802
  %3060 = vmatpush1.msra.mxu0 %v2801
  %3061 = vmatprep.subr.mxu0 %v2808
  %3062 = vmatpush1.msra.mxu0 %v2807
  %3063 = vmatprep.subr.mxu0 %v2814
  %3064 = vmatpush1.msra.mxu0 %v2813
  %3065 = vmatprep.subr.mxu0 %v2820
  %3066 = vmatpush1.msra.mxu0 %v2819
  %3067 = vmatprep.subr.mxu0 %v2826
  %3068 = vmatpush1.msra.mxu0 %v2825
  %3069 = vmatprep.subr.mxu0 %v2832
  %3070 = vmatpush1.msra.mxu0 %v2831
  %3071 = vmatprep.mubr.f32.mxu0 %v2102
  %3072 = vmatmul.mubr.f32.gmra.mrb[0].mxu0 %v2101
  %v3073 = vpop.f32.mrb[0].mxu0
  %v3074 = vadd.f32 %v2854, %v3073
  %v3075 = vpop.f32.mrb[0].mxu0
  %v3076 = vadd.f32 %v2858, %v3075
  %3077 = vdwg.mxu0
  %v3078 = vadd.f32 %v2635, %v2932
  %v3079 = vadd.f32 %v2636, %v2934
  %v3080 = vadd.f32 %v2637, %v3003
  %v3081 = vadd.f32 %v2638, %v3005
  %v3082 = vxor.u32 %v3078, 2147483648
  %v3083 = vxor.u32 %v3079, 2147483648
  %v3084 = vxor.u32 %v3080, 2147483648
  %v3085 = vxor.u32 %v3081, 2147483648
  %v3086 = vmul.f32 %v3082, 1.442695
  %v3087 = vpow.pop %v3086
  %v3088 = vmul.f32 %v3083, 1.442695
  %v3089 = vpow.pop %v3088
  %v3090 = vmul.f32 %v3084, 1.442695
  %v3091 = vpow.pop %v3090
  %v3092 = vmul.f32 %v3085, 1.442695
  %v3093 = vpow.pop %v3092
  %v3094 = vadd.f32 %v3087, 1.0
  %v3095 = vadd.f32 %v3089, 1.0
  %v3096 = vadd.f32 %v3091, 1.0
  %v3097 = vadd.f32 %v3093, 1.0
  %v3098 = vrcp.pop %v3094
  %v3099 = vmul.f32 1.0, %v3098
  %v3100 = vrcp.pop %v3095
  %v3101 = vmul.f32 1.0, %v3100
  %v3102 = vrcp.pop %v3096
  %v3103 = vmul.f32 1.0, %v3102
  %v3104 = vrcp.pop %v3097
  %v3105 = vmul.f32 1.0, %v3104
  %v3106 = vmul.f32 %v3099, %v3074
  %v3107 = vmul.f32 %v3101, %v3076
  %v3108 = vadd.f32 %v2639, %v3106
  %v3109 = vadd.f32 %v2640, %v3107
  %v3110 = vtanh.pop %v3108
  %v3111 = vtanh.pop %v3109
  %v3112 = vsub.f32 1.0, %v3103
  %v3113 = vsub.f32 1.0, %v3105
  %v3114 = vmul.f32 %v3112, %v3110
  %v3115 = vmul.f32 %v3113, %v3111
  %v3116 = vmul.f32 %v3103, %v2101
  %v3117 = vmul.f32 %v3105, %v2102
  %v3118 = vadd.f32 %v3114, %v3116
  %v3119 = vadd.f32 %v3115, %v3117
  %s3120 = scalar_lea.vmem %s7, 8
  %3121 = vst [vmem:[%s3120] sm:$0xf] %v3118
  %s3122 = scalar_lea.vmem %s61, 20
  %3123 = vst [vmem:[%s3122] sm:$0xf] %v3119
  %s3124 = scalar_lea.vmem %s0, 12
  %v3125 = vld [vmem:[%s3124] sm:$0xf]
  %v3126 = vld [vmem:[%s2] sm:$0xff]
  %v3127 = vld [vmem:[%s2 + $0x8] sm:$0xff]
  %v3128 = vld [vmem:[%s2 + $0x10] sm:$0xff]
  %v3129 = vld [vmem:[%s2 + $0x18] sm:$0xff]
  %v3130 = vld [vmem:[%s2 + $0x20] sm:$0xff]
  %v3131 = vld [vmem:[%s2 + $0x28] sm:$0xff]
  %v3132 = vld [vmem:[%s2 + $0x30] sm:$0x3]
  %v3133 = vld [vmem:[%s2 + $0x38] sm:$0x3]
  %v3134 = vld [vmem:[%s2 + $0x40] sm:$0x3]
  %v3135 = vld [vmem:[%s2 + $0x48] sm:$0x3]
  %v3136 = vld [vmem:[%s2 + $0x50] sm:$0x3]
  %v3137 = vld [vmem:[%s2 + $0x58] sm:$0x3]
  %s3138 = scalar_lea.vmem %s53, 16
  %v3139 = vld [vmem:[%s3138] sm:$0xf]
  %v3140 = vld [vmem:[%s3] sm:$0xff]
  %v3141 = vld [vmem:[%s3 + $0x8] sm:$0xff]
  %v3142 = vld [vmem:[%s3 + $0x10] sm:$0xff]
  %v3143 = vld [vmem:[%s3 + $0x18] sm:$0xff]
  %v3144 = vld [vmem:[%s3 + $0x20] sm:$0xff]
  %v3145 = vld [vmem:[%s3 + $0x28] sm:$0xff]
  %v3146 = vld [vmem:[%s3 + $0x30] sm:$0x3]
  %v3147 = vld [vmem:[%s3 + $0x38] sm:$0x3]
  %v3148 = vld [vmem:[%s3 + $0x40] sm:$0x3]
  %v3149 = vld [vmem:[%s3 + $0x48] sm:$0x3]
  %v3150 = vld [vmem:[%s3 + $0x50] sm:$0x3]
  %v3151 = vld [vmem:[%s3 + $0x58] sm:$0x3]
  %v3153 = vsel %vm97, %v3139, 0
  %v3156 = vsel %vm101, %v3146, 0
  %v3159 = vsel %vm101, %v3147, 0
  %v3162 = vsel %vm101, %v3148, 0
  %v3165 = vsel %vm101, %v3149, 0
  %v3168 = vsel %vm101, %v3150, 0
  %v3171 = vsel %vm101, %v3151, 0
  %3173 = vmatprep.subr.mxu0 %v3141
  %3174 = vmatpush1.msra.mxu0 %v3140
  %3175 = vmatprep.subr.mxu0 %v3159
  %3176 = vmatpush1.msra.mxu0 %v3156
  %3177 = vmatprep.subr.mxu0 0.0
  %3178 = vmatpush1.msra.mxu0 0.0
  %3179 = vmatprep.subr.mxu0 0.0
  %3180 = vmatpush1.msra.mxu0 0.0
  %3181 = vmatprep.subr.mxu0 0.0
  %3182 = vmatpush1.msra.mxu0 0.0
  %3183 = vmatprep.subr.mxu0 0.0
  %3184 = vmatpush1.msra.mxu0 0.0
  %3185 = vmatprep.subr.mxu0 0.0
  %3186 = vmatpush1.msra.mxu0 0.0
  %3187 = vmatprep.subr.mxu0 0.0
  %3188 = vmatpush1.msra.mxu0 0.0
  %3189 = vmatprep.subr.mxu0 0.0
  %3190 = vmatpush1.msra.mxu0 0.0
  %3191 = vmatprep.subr.mxu0 0.0
  %3192 = vmatpush1.msra.mxu0 0.0
  %3193 = vmatprep.subr.mxu0 0.0
  %3194 = vmatpush1.msra.mxu0 0.0
  %3195 = vmatprep.subr.mxu0 0.0
  %3196 = vmatpush1.msra.mxu0 0.0
  %3197 = vmatprep.subr.mxu0 0.0
  %3198 = vmatpush1.msra.mxu0 0.0
  %3199 = vmatprep.subr.mxu0 0.0
  %3200 = vmatpush1.msra.mxu0 0.0
  %3201 = vmatprep.subr.mxu0 0.0
  %3202 = vmatpush1.msra.mxu0 0.0
  %3203 = vmatprep.subr.mxu0 0.0
  %3204 = vmatpush1.msra.mxu0 0.0
  %3205 = vmatprep.subr.mxu0 0.0
  %3206 = vmatpush1.msra.mxu0 0.0
  %3207 = vmatprep.subr.mxu0 0.0
  %3208 = vmatpush1.msra.mxu0 0.0
  %3209 = vmatprep.subr.mxu0 0.0
  %3210 = vmatpush1.msra.mxu0 0.0
  %3211 = vmatprep.subr.mxu0 0.0
  %3212 = vmatpush1.msra.mxu0 0.0
  %3213 = vmatprep.subr.mxu0 0.0
  %3214 = vmatpush1.msra.mxu0 0.0
  %3215 = vmatprep.subr.mxu0 0.0
  %3216 = vmatpush1.msra.mxu0 0.0
  %3217 = vmatprep.subr.mxu0 0.0
  %3218 = vmatpush1.msra.mxu0 0.0
  %3219 = vmatprep.subr.mxu0 0.0
  %3220 = vmatpush1.msra.mxu0 0.0
  %3221 = vmatprep.subr.mxu0 0.0
  %3222 = vmatpush1.msra.mxu0 0.0
  %3223 = vmatprep.subr.mxu0 0.0
  %3224 = vmatpush1.msra.mxu0 0.0
  %3225 = vmatprep.subr.mxu0 0.0
  %3226 = vmatpush1.msra.mxu0 0.0
  %3227 = vmatprep.subr.mxu0 0.0
  %3228 = vmatpush1.msra.mxu0 0.0
  %3229 = vmatprep.subr.mxu0 0.0
  %3230 = vmatpush1.msra.mxu0 0.0
  %3231 = vmatprep.subr.mxu0 0.0
  %3232 = vmatpush1.msra.mxu0 0.0
  %3233 = vmatprep.subr.mxu0 0.0
  %3234 = vmatpush1.msra.mxu0 0.0
  %3235 = vmatprep.subr.mxu0 0.0
  %3236 = vmatpush1.msra.mxu0 0.0
  %3237 = vmatprep.mubr.f32.mxu0 0.0
  %3238 = vmatmul.mubr.f32.gmra.mrb[0].mxu0 %v3153
  %v3239 = vpop.f32.mrb[0].mxu0
  %v3240 = vadd.f32 0.0, %v3239
  %v3241 = vpop.f32.mrb[0].mxu0
  %v3242 = vadd.f32 0.0, %v3241
  %3243 = vdwg.mxu0
  %3244 = vmatprep.subr.mxu0 %v3143
  %3245 = vmatpush1.msra.mxu0 %v3142
  %3246 = vmatprep.subr.mxu0 %v3165
  %3247 = vmatpush1.msra.mxu0 %v3162
  %3248 = vmatprep.subr.mxu0 0.0
  %3249 = vmatpush1.msra.mxu0 0.0
  %3250 = vmatprep.subr.mxu0 0.0
  %3251 = vmatpush1.msra.mxu0 0.0
  %3252 = vmatprep.subr.mxu0 0.0
  %3253 = vmatpush1.msra.mxu0 0.0
  %3254 = vmatprep.subr.mxu0 0.0
  %3255 = vmatpush1.msra.mxu0 0.0
  %3256 = vmatprep.subr.mxu0 0.0
  %3257 = vmatpush1.msra.mxu0 0.0
  %3258 = vmatprep.subr.mxu0 0.0
  %3259 = vmatpush1.msra.mxu0 0.0
  %3260 = vmatprep.subr.mxu0 0.0
  %3261 = vmatpush1.msra.mxu0 0.0
  %3262 = vmatprep.subr.mxu0 0.0
  %3263 = vmatpush1.msra.mxu0 0.0
  %3264 = vmatprep.subr.mxu0 0.0
  %3265 = vmatpush1.msra.mxu0 0.0
  %3266 = vmatprep.subr.mxu0 0.0
  %3267 = vmatpush1.msra.mxu0 0.0
  %3268 = vmatprep.subr.mxu0 0.0
  %3269 = vmatpush1.msra.mxu0 0.0
  %3270 = vmatprep.subr.mxu0 0.0
  %3271 = vmatpush1.msra.mxu0 0.0
  %3272 = vmatprep.subr.mxu0 0.0
  %3273 = vmatpush1.msra.mxu0 0.0
  %3274 = vmatprep.subr.mxu0 0.0
  %3275 = vmatpush1.msra.mxu0 0.0
  %3276 = vmatprep.subr.mxu0 0.0
  %3277 = vmatpush1.msra.mxu0 0.0
  %3278 = vmatprep.subr.mxu0 0.0
  %3279 = vmatpush1.msra.mxu0 0.0
  %3280 = vmatprep.subr.mxu0 0.0
  %3281 = vmatpush1.msra.mxu0 0.0
  %3282 = vmatprep.subr.mxu0 0.0
  %3283 = vmatpush1.msra.mxu0 0.0
  %3284 = vmatprep.subr.mxu0 0.0
  %3285 = vmatpush1.msra.mxu0 0.0
  %3286 = vmatprep.subr.mxu0 0.0
  %3287 = vmatpush1.msra.mxu0 0.0
  %3288 = vmatprep.subr.mxu0 0.0
  %3289 = vmatpush1.msra.mxu0 0.0
  %3290 = vmatprep.subr.mxu0 0.0
  %3291 = vmatpush1.msra.mxu0 0.0
  %3292 = vmatprep.subr.mxu0 0.0
  %3293 = vmatpush1.msra.mxu0 0.0
  %3294 = vmatprep.subr.mxu0 0.0
  %3295 = vmatpush1.msra.mxu0 0.0
  %3296 = vmatprep.subr.mxu0 0.0
  %3297 = vmatpush1.msra.mxu0 0.0
  %3298 = vmatprep.subr.mxu0 0.0
  %3299 = vmatpush1.msra.mxu0 0.0
  %3300 = vmatprep.subr.mxu0 0.0
  %3301 = vmatpush1.msra.mxu0 0.0
  %3302 = vmatprep.subr.mxu0 0.0
  %3303 = vmatpush1.msra.mxu0 0.0
  %3304 = vmatprep.subr.mxu0 0.0
  %3305 = vmatpush1.msra.mxu0 0.0
  %3306 = vmatprep.subr.mxu0 0.0
  %3307 = vmatpush1.msra.mxu0 0.0
  %3308 = vmatprep.mubr.f32.mxu0 0.0
  %3309 = vmatmul.mubr.f32.gmra.mrb[0].mxu0 %v3153
  %v3310 = vpop.f32.mrb[0].mxu0
  %v3311 = vadd.f32 0.0, %v3310
  %v3312 = vpop.f32.mrb[0].mxu0
  %v3313 = vadd.f32 0.0, %v3312
  %3314 = vdwg.mxu0
  %3315 = vmatprep.subr.mxu0 %v3145
  %3316 = vmatpush1.msra.mxu0 %v3144
  %3317 = vmatprep.subr.mxu0 %v3171
  %3318 = vmatpush1.msra.mxu0 %v3168
  %3319 = vmatprep.subr.mxu0 0.0
  %3320 = vmatpush1.msra.mxu0 0.0
  %3321 = vmatprep.subr.mxu0 0.0
  %3322 = vmatpush1.msra.mxu0 0.0
  %3323 = vmatprep.subr.mxu0 0.0
  %3324 = vmatpush1.msra.mxu0 0.0
  %3325 = vmatprep.subr.mxu0 0.0
  %3326 = vmatpush1.msra.mxu0 0.0
  %3327 = vmatprep.subr.mxu0 0.0
  %3328 = vmatpush1.msra.mxu0 0.0
  %3329 = vmatprep.subr.mxu0 0.0
  %3330 = vmatpush1.msra.mxu0 0.0
  %3331 = vmatprep.subr.mxu0 0.0
  %3332 = vmatpush1.msra.mxu0 0.0
  %3333 = vmatprep.subr.mxu0 0.0
  %3334 = vmatpush1.msra.mxu0 0.0
  %3335 = vmatprep.subr.mxu0 0.0
  %3336 = vmatpush1.msra.mxu0 0.0
  %3337 = vmatprep.subr.mxu0 0.0
  %3338 = vmatpush1.msra.mxu0 0.0
  %3339 = vmatprep.subr.mxu0 0.0
  %3340 = vmatpush1.msra.mxu0 0.0
  %3341 = vmatprep.subr.mxu0 0.0
  %3342 = vmatpush1.msra.mxu0 0.0
  %3343 = vmatprep.subr.mxu0 0.0
  %3344 = vmatpush1.msra.mxu0 0.0
  %3345 = vmatprep.subr.mxu0 0.0
  %3346 = vmatpush1.msra.mxu0 0.0
  %3347 = vmatprep.subr.mxu0 0.0
  %3348 = vmatpush1.msra.mxu0 0.0
  %3349 = vmatprep.subr.mxu0 0.0
  %3350 = vmatpush1.msra.mxu0 0.0
  %3351 = vmatprep.subr.mxu0 0.0
  %3352 = vmatpush1.msra.mxu0 0.0
  %3353 = vmatprep.subr.mxu0 0.0
  %3354 = vmatpush1.msra.mxu0 0.0
  %3355 = vmatprep.subr.mxu0 0.0
  %3356 = vmatpush1.msra.mxu0 0.0
  %3357 = vmatprep.subr.mxu0 0.0
  %3358 = vmatpush1.msra.mxu0 0.0
  %3359 = vmatprep.subr.mxu0 0.0
  %3360 = vmatpush1.msra.mxu0 0.0
  %3361 = vmatprep.subr.mxu0 0.0
  %3362 = vmatpush1.msra.mxu0 0.0
  %3363 = vmatprep.subr.mxu0 0.0
  %3364 = vmatpush1.msra.mxu0 0.0
  %3365 = vmatprep.subr.mxu0 0.0
  %3366 = vmatpush1.msra.mxu0 0.0
  %3367 = vmatprep.subr.mxu0 0.0
  %3368 = vmatpush1.msra.mxu0 0.0
  %3369 = vmatprep.subr.mxu0 0.0
  %3370 = vmatpush1.msra.mxu0 0.0
  %3371 = vmatprep.subr.mxu0 0.0
  %3372 = vmatpush1.msra.mxu0 0.0
  %3373 = vmatprep.subr.mxu0 0.0
  %3374 = vmatpush1.msra.mxu0 0.0
  %3375 = vmatprep.subr.mxu0 0.0
  %3376 = vmatpush1.msra.mxu0 0.0
  %3377 = vmatprep.subr.mxu0 0.0
  %3378 = vmatpush1.msra.mxu0 0.0
  %3379 = vmatprep.mubr.f32.mxu0 0.0
  %3380 = vmatmul.mubr.f32.gmra.mrb[0].mxu0 %v3153
  %v3381 = vpop.f32.mrb[0].mxu0
  %v3382 = vadd.f32 0.0, %v3381
  %v3383 = vpop.f32.mrb[0].mxu0
  %v3384 = vadd.f32 0.0, %v3383
  %3385 = vdwg.mxu0
  %v3387 = vsel %vm97, %v3125, 0
  %v3390 = vsel %vm101, %v3132, 0
  %v3393 = vsel %vm101, %v3133, 0
  %v3396 = vsel %vm101, %v3134, 0
  %v3399 = vsel %vm101, %v3135, 0
  %v3402 = vsel %vm101, %v3136, 0
  %v3405 = vsel %vm101, %v3137, 0
  %3407 = vmatprep.subr.mxu0 %v3127
  %3408 = vmatpush1.msra.mxu0 %v3126
  %3409 = vmatprep.subr.mxu0 %v3393
  %3410 = vmatpush1.msra.mxu0 %v3390
  %3411 = vmatprep.subr.mxu0 0.0
  %3412 = vmatpush1.msra.mxu0 0.0
  %3413 = vmatprep.subr.mxu0 0.0
  %3414 = vmatpush1.msra.mxu0 0.0
  %3415 = vmatprep.subr.mxu0 0.0
  %3416 = vmatpush1.msra.mxu0 0.0
  %3417 = vmatprep.subr.mxu0 0.0
  %3418 = vmatpush1.msra.mxu0 0.0
  %3419 = vmatprep.subr.mxu0 0.0
  %3420 = vmatpush1.msra.mxu0 0.0
  %3421 = vmatprep.subr.mxu0 0.0
  %3422 = vmatpush1.msra.mxu0 0.0
  %3423 = vmatprep.subr.mxu0 0.0
  %3424 = vmatpush1.msra.mxu0 0.0
  %3425 = vmatprep.subr.mxu0 0.0
  %3426 = vmatpush1.msra.mxu0 0.0
  %3427 = vmatprep.subr.mxu0 0.0
  %3428 = vmatpush1.msra.mxu0 0.0
  %3429 = vmatprep.subr.mxu0 0.0
  %3430 = vmatpush1.msra.mxu0 0.0
  %3431 = vmatprep.subr.mxu0 0.0
  %3432 = vmatpush1.msra.mxu0 0.0
  %3433 = vmatprep.subr.mxu0 0.0
  %3434 = vmatpush1.msra.mxu0 0.0
  %3435 = vmatprep.subr.mxu0 0.0
  %3436 = vmatpush1.msra.mxu0 0.0
  %3437 = vmatprep.subr.mxu0 0.0
  %3438 = vmatpush1.msra.mxu0 0.0
  %3439 = vmatprep.subr.mxu0 0.0
  %3440 = vmatpush1.msra.mxu0 0.0
  %3441 = vmatprep.subr.mxu0 0.0
  %3442 = vmatpush1.msra.mxu0 0.0
  %3443 = vmatprep.subr.mxu0 0.0
  %3444 = vmatpush1.msra.mxu0 0.0
  %3445 = vmatprep.subr.mxu0 0.0
  %3446 = vmatpush1.msra.mxu0 0.0
  %3447 = vmatprep.subr.mxu0 0.0
  %3448 = vmatpush1.msra.mxu0 0.0
  %3449 = vmatprep.subr.mxu0 0.0
  %3450 = vmatpush1.msra.mxu0 0.0
  %3451 = vmatprep.subr.mxu0 0.0
  %3452 = vmatpush1.msra.mxu0 0.0
  %3453 = vmatprep.subr.mxu0 0.0
  %3454 = vmatpush1.msra.mxu0 0.0
  %3455 = vmatprep.subr.mxu0 0.0
  %3456 = vmatpush1.msra.mxu0 0.0
  %3457 = vmatprep.subr.mxu0 0.0
  %3458 = vmatpush1.msra.mxu0 0.0
  %3459 = vmatprep.subr.mxu0 0.0
  %3460 = vmatpush1.msra.mxu0 0.0
  %3461 = vmatprep.subr.mxu0 0.0
  %3462 = vmatpush1.msra.mxu0 0.0
  %3463 = vmatprep.subr.mxu0 0.0
  %3464 = vmatpush1.msra.mxu0 0.0
  %3465 = vmatprep.subr.mxu0 0.0
  %3466 = vmatpush1.msra.mxu0 0.0
  %3467 = vmatprep.subr.mxu0 0.0
  %3468 = vmatpush1.msra.mxu0 0.0
  %3469 = vmatprep.subr.mxu0 0.0
  %3470 = vmatpush1.msra.mxu0 0.0
  %3471 = vmatprep.mubr.f32.mxu0 0.0
  %3472 = vmatmul.mubr.f32.gmra.mrb[0].mxu0 %v3387
  %v3473 = vpop.f32.mrb[0].mxu0
  %v3474 = vadd.f32 %v3240, %v3473
  %v3475 = vpop.f32.mrb[0].mxu0
  %v3476 = vadd.f32 %v3242, %v3475
  %3477 = vdwg.mxu0
  %3478 = vmatprep.subr.mxu0 %v3129
  %3479 = vmatpush1.msra.mxu0 %v3128
  %3480 = vmatprep.subr.mxu0 %v3399
  %3481 = vmatpush1.msra.mxu0 %v3396
  %3482 = vmatprep.subr.mxu0 0.0
  %3483 = vmatpush1.msra.mxu0 0.0
  %3484 = vmatprep.subr.mxu0 0.0
  %3485 = vmatpush1.msra.mxu0 0.0
  %3486 = vmatprep.subr.mxu0 0.0
  %3487 = vmatpush1.msra.mxu0 0.0
  %3488 = vmatprep.subr.mxu0 0.0
  %3489 = vmatpush1.msra.mxu0 0.0
  %3490 = vmatprep.subr.mxu0 0.0
  %3491 = vmatpush1.msra.mxu0 0.0
  %3492 = vmatprep.subr.mxu0 0.0
  %3493 = vmatpush1.msra.mxu0 0.0
  %3494 = vmatprep.subr.mxu0 0.0
  %3495 = vmatpush1.msra.mxu0 0.0
  %3496 = vmatprep.subr.mxu0 0.0
  %3497 = vmatpush1.msra.mxu0 0.0
  %3498 = vmatprep.subr.mxu0 0.0
  %3499 = vmatpush1.msra.mxu0 0.0
  %3500 = vmatprep.subr.mxu0 0.0
  %3501 = vmatpush1.msra.mxu0 0.0
  %3502 = vmatprep.subr.mxu0 0.0
  %3503 = vmatpush1.msra.mxu0 0.0
  %3504 = vmatprep.subr.mxu0 0.0
  %3505 = vmatpush1.msra.mxu0 0.0
  %3506 = vmatprep.subr.mxu0 0.0
  %3507 = vmatpush1.msra.mxu0 0.0
  %3508 = vmatprep.subr.mxu0 0.0
  %3509 = vmatpush1.msra.mxu0 0.0
  %3510 = vmatprep.subr.mxu0 0.0
  %3511 = vmatpush1.msra.mxu0 0.0
  %3512 = vmatprep.subr.mxu0 0.0
  %3513 = vmatpush1.msra.mxu0 0.0
  %3514 = vmatprep.subr.mxu0 0.0
  %3515 = vmatpush1.msra.mxu0 0.0
  %3516 = vmatprep.subr.mxu0 0.0
  %3517 = vmatpush1.msra.mxu0 0.0
  %3518 = vmatprep.subr.mxu0 0.0
  %3519 = vmatpush1.msra.mxu0 0.0
  %3520 = vmatprep.subr.mxu0 0.0
  %3521 = vmatpush1.msra.mxu0 0.0
  %3522 = vmatprep.subr.mxu0 0.0
  %3523 = vmatpush1.msra.mxu0 0.0
  %3524 = vmatprep.subr.mxu0 0.0
  %3525 = vmatpush1.msra.mxu0 0.0
  %3526 = vmatprep.subr.mxu0 0.0
  %3527 = vmatpush1.msra.mxu0 0.0
  %3528 = vmatprep.subr.mxu0 0.0
  %3529 = vmatpush1.msra.mxu0 0.0
  %3530 = vmatprep.subr.mxu0 0.0
  %3531 = vmatpush1.msra.mxu0 0.0
  %3532 = vmatprep.subr.mxu0 0.0
  %3533 = vmatpush1.msra.mxu0 0.0
  %3534 = vmatprep.subr.mxu0 0.0
  %3535 = vmatpush1.msra.mxu0 0.0
  %3536 = vmatprep.subr.mxu0 0.0
  %3537 = vmatpush1.msra.mxu0 0.0
  %3538 = vmatprep.subr.mxu0 0.0
  %3539 = vmatpush1.msra.mxu0 0.0
  %3540 = vmatprep.subr.mxu0 0.0
  %3541 = vmatpush1.msra.mxu0 0.0
  %3542 = vmatprep.mubr.f32.mxu0 0.0
  %3543 = vmatmul.mubr.f32.gmra.mrb[0].mxu0 %v3387
  %v3544 = vpop.f32.mrb[0].mxu0
  %v3545 = vadd.f32 %v3311, %v3544
  %v3546 = vpop.f32.mrb[0].mxu0
  %v3547 = vadd.f32 %v3313, %v3546
  %3548 = vdwg.mxu0
  %3549 = vmatprep.subr.mxu0 %v3131
  %3550 = vmatpush1.msra.mxu0 %v3130
  %3551 = vmatprep.subr.mxu0 %v3405
  %3552 = vmatpush1.msra.mxu0 %v3402
  %3553 = vmatprep.subr.mxu0 0.0
  %3554 = vmatpush1.msra.mxu0 0.0
  %3555 = vmatprep.subr.mxu0 0.0
  %3556 = vmatpush1.msra.mxu0 0.0
  %3557 = vmatprep.subr.mxu0 0.0
  %3558 = vmatpush1.msra.mxu0 0.0
  %3559 = vmatprep.subr.mxu0 0.0
  %3560 = vmatpush1.msra.mxu0 0.0
  %3561 = vmatprep.subr.mxu0 0.0
  %3562 = vmatpush1.msra.mxu0 0.0
  %3563 = vmatprep.subr.mxu0 0.0
  %3564 = vmatpush1.msra.mxu0 0.0
  %3565 = vmatprep.subr.mxu0 0.0
  %3566 = vmatpush1.msra.mxu0 0.0
  %3567 = vmatprep.subr.mxu0 0.0
  %3568 = vmatpush1.msra.mxu0 0.0
  %3569 = vmatprep.subr.mxu0 0.0
  %3570 = vmatpush1.msra.mxu0 0.0
  %3571 = vmatprep.subr.mxu0 0.0
  %3572 = vmatpush1.msra.mxu0 0.0
  %3573 = vmatprep.subr.mxu0 0.0
  %3574 = vmatpush1.msra.mxu0 0.0
  %3575 = vmatprep.subr.mxu0 0.0
  %3576 = vmatpush1.msra.mxu0 0.0
  %3577 = vmatprep.subr.mxu0 0.0
  %3578 = vmatpush1.msra.mxu0 0.0
  %3579 = vmatprep.subr.mxu0 0.0
  %3580 = vmatpush1.msra.mxu0 0.0
  %3581 = vmatprep.subr.mxu0 0.0
  %3582 = vmatpush1.msra.mxu0 0.0
  %3583 = vmatprep.subr.mxu0 0.0
  %3584 = vmatpush1.msra.mxu0 0.0
  %3585 = vmatprep.subr.mxu0 0.0
  %3586 = vmatpush1.msra.mxu0 0.0
  %3587 = vmatprep.subr.mxu0 0.0
  %3588 = vmatpush1.msra.mxu0 0.0
  %3589 = vmatprep.subr.mxu0 0.0
  %3590 = vmatpush1.msra.mxu0 0.0
  %3591 = vmatprep.subr.mxu0 0.0
  %3592 = vmatpush1.msra.mxu0 0.0
  %3593 = vmatprep.subr.mxu0 0.0
  %3594 = vmatpush1.msra.mxu0 0.0
  %3595 = vmatprep.subr.mxu0 0.0
  %3596 = vmatpush1.msra.mxu0 0.0
  %3597 = vmatprep.subr.mxu0 0.0
  %3598 = vmatpush1.msra.mxu0 0.0
  %3599 = vmatprep.subr.mxu0 0.0
  %3600 = vmatpush1.msra.mxu0 0.0
  %3601 = vmatprep.subr.mxu0 0.0
  %3602 = vmatpush1.msra.mxu0 0.0
  %3603 = vmatprep.subr.mxu0 0.0
  %3604 = vmatpush1.msra.mxu0 0.0
  %3605 = vmatprep.subr.mxu0 0.0
  %3606 = vmatpush1.msra.mxu0 0.0
  %3607 = vmatprep.subr.mxu0 0.0
  %3608 = vmatpush1.msra.mxu0 0.0
  %3609 = vmatprep.subr.mxu0 0.0
  %3610 = vmatpush1.msra.mxu0 0.0
  %3611 = vmatprep.subr.mxu0 0.0
  %3612 = vmatpush1.msra.mxu0 0.0
  %3613 = vmatprep.mubr.f32.mxu0 0.0
  %3614 = vmatmul.mubr.f32.gmra.mrb[0].mxu0 %v3387
  %v3615 = vpop.f32.mrb[0].mxu0
  %v3616 = vadd.f32 %v3382, %v3615
  %v3617 = vpop.f32.mrb[0].mxu0
  %v3618 = vadd.f32 %v3384, %v3617
  %3619 = vdwg.mxu0
  %v3620 = vld [vmem:[%s4] sm:$0x3f]
  %v3622 = vlaneseq
  %v3623 = vshrl.u32 %v3622, 7
  %v3624 = vsub.s32 0, %v3623
  %v3625 = vrot.slane %v3620, %v3624
  %v3626 = vlaneseq
  %v3627 = vshrl.u32 %v3626, 7
  %v3628 = vsub.s32 1, %v3627
  %v3629 = vrot.slane %v3620, %v3628
  %v3630 = vlaneseq
  %v3631 = vshrl.u32 %v3630, 7
  %v3632 = vsub.s32 2, %v3631
  %v3633 = vrot.slane %v3620, %v3632
  %v3634 = vlaneseq
  %v3635 = vshrl.u32 %v3634, 7
  %v3636 = vsub.s32 3, %v3635
  %v3637 = vrot.slane %v3620, %v3636
  %v3638 = vlaneseq
  %v3639 = vshrl.u32 %v3638, 7
  %v3640 = vsub.s32 4, %v3639
  %v3641 = vrot.slane %v3620, %v3640
  %v3642 = vlaneseq
  %v3643 = vshrl.u32 %v3642, 7
  %v3644 = vsub.s32 5, %v3643
  %v3645 = vrot.slane %v3620, %v3644
  %v3652 = vadd.f32 %v3474, %v3625
  %v3653 = vadd.f32 %v3476, %v3629
  %v3654 = vadd.f32 %v3545, %v3633
  %v3655 = vadd.f32 %v3547, %v3637
  %v3656 = vadd.f32 %v3616, %v3641
  %v3657 = vadd.f32 %v3618, %v3645
  %v3658 = vld [vmem:[%s5] sm:$0xff]
  %v3659 = vld [vmem:[%s5 + $0x8] sm:$0xff]
  %v3660 = vld [vmem:[%s5 + $0x10] sm:$0xff]
  %v3661 = vld [vmem:[%s5 + $0x18] sm:$0xff]
  %v3662 = vld [vmem:[%s5 + $0x20] sm:$0xff]
  %v3663 = vld [vmem:[%s5 + $0x28] sm:$0xff]
  %v3664 = vld [vmem:[%s5 + $0x30] sm:$0xff]
  %v3665 = vld [vmem:[%s5 + $0x38] sm:$0xff]
  %v3666 = vld [vmem:[%s5 + $0x40] sm:$0xff]
  %v3667 = vld [vmem:[%s5 + $0x48] sm:$0xff]
  %v3668 = vld [vmem:[%s5 + $0x50] sm:$0xff]
  %v3669 = vld [vmem:[%s5 + $0x58] sm:$0xff]
  %v3670 = vld [vmem:[%s5 + $0x60] sm:$0xff]
  %v3671 = vld [vmem:[%s5 + $0x68] sm:$0xff]
  %v3672 = vld [vmem:[%s5 + $0x70] sm:$0xff]
  %v3673 = vld [vmem:[%s5 + $0x78] sm:$0xff]
  %v3674 = vld [vmem:[%s5 + $0x80] sm:$0xff]
  %v3675 = vld [vmem:[%s5 + $0x88] sm:$0xff]
  %v3676 = vld [vmem:[%s5 + $0x90] sm:$0xff]
  %v3677 = vld [vmem:[%s5 + $0x98] sm:$0xff]
  %v3678 = vld [vmem:[%s5 + $0xa0] sm:$0xff]
  %v3679 = vld [vmem:[%s5 + $0xa8] sm:$0xff]
  %v3680 = vld [vmem:[%s5 + $0xb0] sm:$0xff]
  %v3681 = vld [vmem:[%s5 + $0xb8] sm:$0xff]
  %v3682 = vld [vmem:[%s5 + $0xc0] sm:$0xff]
  %v3683 = vld [vmem:[%s5 + $0xc8] sm:$0xff]
  %v3684 = vld [vmem:[%s5 + $0xd0] sm:$0xff]
  %v3685 = vld [vmem:[%s5 + $0xd8] sm:$0xff]
  %v3686 = vld [vmem:[%s5 + $0xe0] sm:$0xff]
  %v3687 = vld [vmem:[%s5 + $0xe8] sm:$0xff]
  %v3688 = vld [vmem:[%s5 + $0xf0] sm:$0xff]
  %v3689 = vld [vmem:[%s5 + $0xf8] sm:$0xff]
  %v3690 = vld [vmem:[%s5 + $0x100] sm:$0xff]
  %v3691 = vld [vmem:[%s5 + $0x108] sm:$0xff]
  %v3692 = vld [vmem:[%s5 + $0x110] sm:$0xff]
  %v3693 = vld [vmem:[%s5 + $0x118] sm:$0xff]
  %v3694 = vld [vmem:[%s5 + $0x120] sm:$0xff]
  %v3695 = vld [vmem:[%s5 + $0x128] sm:$0xff]
  %v3696 = vld [vmem:[%s5 + $0x130] sm:$0xff]
  %v3697 = vld [vmem:[%s5 + $0x138] sm:$0xff]
  %v3698 = vld [vmem:[%s5 + $0x140] sm:$0xff]
  %v3699 = vld [vmem:[%s5 + $0x148] sm:$0xff]
  %v3700 = vld [vmem:[%s5 + $0x150] sm:$0xff]
  %v3701 = vld [vmem:[%s5 + $0x158] sm:$0xff]
  %v3702 = vld [vmem:[%s5 + $0x160] sm:$0xff]
  %v3703 = vld [vmem:[%s5 + $0x168] sm:$0xff]
  %v3704 = vld [vmem:[%s5 + $0x170] sm:$0xff]
  %v3705 = vld [vmem:[%s5 + $0x178] sm:$0xff]
  %v3706 = vld [vmem:[%s5 + $0x180] sm:$0xff]
  %v3707 = vld [vmem:[%s5 + $0x188] sm:$0xff]
  %v3708 = vld [vmem:[%s5 + $0x190] sm:$0xff]
  %v3709 = vld [vmem:[%s5 + $0x198] sm:$0xff]
  %v3710 = vld [vmem:[%s5 + $0x1a0] sm:$0xff]
  %v3711 = vld [vmem:[%s5 + $0x1a8] sm:$0xff]
  %v3712 = vld [vmem:[%s5 + $0x1b0] sm:$0xff]
  %v3713 = vld [vmem:[%s5 + $0x1b8] sm:$0xff]
  %v3714 = vld [vmem:[%s5 + $0x1c0] sm:$0xff]
  %v3715 = vld [vmem:[%s5 + $0x1c8] sm:$0xff]
  %v3716 = vld [vmem:[%s5 + $0x1d0] sm:$0xff]
  %v3717 = vld [vmem:[%s5 + $0x1d8] sm:$0xff]
  %v3718 = vld [vmem:[%s5 + $0x1e0] sm:$0xff]
  %v3719 = vld [vmem:[%s5 + $0x1e8] sm:$0xff]
  %v3720 = vld [vmem:[%s5 + $0x1f0] sm:$0xff]
  %v3721 = vld [vmem:[%s5 + $0x1f8] sm:$0xff]
  %v3722 = vld [vmem:[%s5 + $0x200] sm:$0xff]
  %v3723 = vld [vmem:[%s5 + $0x208] sm:$0xff]
  %v3724 = vld [vmem:[%s5 + $0x210] sm:$0xff]
  %v3725 = vld [vmem:[%s5 + $0x218] sm:$0xff]
  %v3726 = vld [vmem:[%s5 + $0x220] sm:$0xff]
  %v3727 = vld [vmem:[%s5 + $0x228] sm:$0xff]
  %v3728 = vld [vmem:[%s5 + $0x230] sm:$0xff]
  %v3729 = vld [vmem:[%s5 + $0x238] sm:$0xff]
  %v3730 = vld [vmem:[%s5 + $0x240] sm:$0xff]
  %v3731 = vld [vmem:[%s5 + $0x248] sm:$0xff]
  %v3732 = vld [vmem:[%s5 + $0x250] sm:$0xff]
  %v3733 = vld [vmem:[%s5 + $0x258] sm:$0xff]
  %v3734 = vld [vmem:[%s5 + $0x260] sm:$0xff]
  %v3735 = vld [vmem:[%s5 + $0x268] sm:$0xff]
  %v3736 = vld [vmem:[%s5 + $0x270] sm:$0xff]
  %v3737 = vld [vmem:[%s5 + $0x278] sm:$0xff]
  %v3738 = vld [vmem:[%s5 + $0x280] sm:$0xff]
  %v3739 = vld [vmem:[%s5 + $0x288] sm:$0xff]
  %v3740 = vld [vmem:[%s5 + $0x290] sm:$0xff]
  %v3741 = vld [vmem:[%s5 + $0x298] sm:$0xff]
  %v3742 = vld [vmem:[%s5 + $0x2a0] sm:$0xff]
  %v3743 = vld [vmem:[%s5 + $0x2a8] sm:$0xff]
  %v3744 = vld [vmem:[%s5 + $0x2b0] sm:$0xff]
  %v3745 = vld [vmem:[%s5 + $0x2b8] sm:$0xff]
  %v3746 = vld [vmem:[%s5 + $0x2c0] sm:$0xff]
  %v3747 = vld [vmem:[%s5 + $0x2c8] sm:$0xff]
  %v3748 = vld [vmem:[%s5 + $0x2d0] sm:$0xff]
  %v3749 = vld [vmem:[%s5 + $0x2d8] sm:$0xff]
  %v3750 = vld [vmem:[%s5 + $0x2e0] sm:$0xff]
  %v3751 = vld [vmem:[%s5 + $0x2e8] sm:$0xff]
  %v3752 = vld [vmem:[%s5 + $0x2f0] sm:$0xff]
  %v3753 = vld [vmem:[%s5 + $0x2f8] sm:$0xff]
  %v3754 = vld [vmem:[%s5 + $0x300] sm:$0xff]
  %v3755 = vld [vmem:[%s5 + $0x308] sm:$0xff]
  %v3756 = vld [vmem:[%s5 + $0x310] sm:$0xff]
  %v3757 = vld [vmem:[%s5 + $0x318] sm:$0xff]
  %v3758 = vld [vmem:[%s5 + $0x320] sm:$0xff]
  %v3759 = vld [vmem:[%s5 + $0x328] sm:$0xff]
  %v3760 = vld [vmem:[%s5 + $0x330] sm:$0xff]
  %v3761 = vld [vmem:[%s5 + $0x338] sm:$0xff]
  %v3762 = vld [vmem:[%s5 + $0x340] sm:$0xff]
  %v3763 = vld [vmem:[%s5 + $0x348] sm:$0xff]
  %v3764 = vld [vmem:[%s5 + $0x350] sm:$0xff]
  %v3765 = vld [vmem:[%s5 + $0x358] sm:$0xff]
  %v3766 = vld [vmem:[%s5 + $0x360] sm:$0xff]
  %v3767 = vld [vmem:[%s5 + $0x368] sm:$0xff]
  %v3768 = vld [vmem:[%s5 + $0x370] sm:$0xff]
  %v3769 = vld [vmem:[%s5 + $0x378] sm:$0xff]
  %v3770 = vld [vmem:[%s5 + $0x380] sm:$0xff]
  %v3771 = vld [vmem:[%s5 + $0x388] sm:$0xff]
  %v3772 = vld [vmem:[%s5 + $0x390] sm:$0xff]
  %v3773 = vld [vmem:[%s5 + $0x398] sm:$0xff]
  %v3774 = vld [vmem:[%s5 + $0x3a0] sm:$0xff]
  %v3775 = vld [vmem:[%s5 + $0x3a8] sm:$0xff]
  %v3776 = vld [vmem:[%s5 + $0x3b0] sm:$0xff]
  %v3777 = vld [vmem:[%s5 + $0x3b8] sm:$0xff]
  %v3778 = vld [vmem:[%s5 + $0x3c0] sm:$0xff]
  %v3779 = vld [vmem:[%s5 + $0x3c8] sm:$0xff]
  %v3780 = vld [vmem:[%s5 + $0x3d0] sm:$0xff]
  %v3781 = vld [vmem:[%s5 + $0x3d8] sm:$0xff]
  %v3782 = vld [vmem:[%s5 + $0x3e0] sm:$0xff]
  %v3783 = vld [vmem:[%s5 + $0x3e8] sm:$0xff]
  %v3784 = vld [vmem:[%s5 + $0x3f0] sm:$0xff]
  %v3785 = vld [vmem:[%s5 + $0x3f8] sm:$0xff]
  %v3786 = vld [vmem:[%s5 + $0x400] sm:$0xff]
  %v3787 = vld [vmem:[%s5 + $0x408] sm:$0xff]
  %v3788 = vld [vmem:[%s5 + $0x410] sm:$0xff]
  %v3789 = vld [vmem:[%s5 + $0x418] sm:$0xff]
  %v3790 = vld [vmem:[%s5 + $0x420] sm:$0xff]
  %v3791 = vld [vmem:[%s5 + $0x428] sm:$0xff]
  %v3792 = vld [vmem:[%s5 + $0x430] sm:$0xff]
  %v3793 = vld [vmem:[%s5 + $0x438] sm:$0xff]
  %v3794 = vld [vmem:[%s5 + $0x440] sm:$0xff]
  %v3795 = vld [vmem:[%s5 + $0x448] sm:$0xff]
  %v3796 = vld [vmem:[%s5 + $0x450] sm:$0xff]
  %v3797 = vld [vmem:[%s5 + $0x458] sm:$0xff]
  %v3798 = vld [vmem:[%s5 + $0x460] sm:$0xff]
  %v3799 = vld [vmem:[%s5 + $0x468] sm:$0xff]
  %v3800 = vld [vmem:[%s5 + $0x470] sm:$0xff]
  %v3801 = vld [vmem:[%s5 + $0x478] sm:$0xff]
  %v3802 = vld [vmem:[%s5 + $0x480] sm:$0xff]
  %v3803 = vld [vmem:[%s5 + $0x488] sm:$0xff]
  %v3804 = vld [vmem:[%s5 + $0x490] sm:$0xff]
  %v3805 = vld [vmem:[%s5 + $0x498] sm:$0xff]
  %v3806 = vld [vmem:[%s5 + $0x4a0] sm:$0xff]
  %v3807 = vld [vmem:[%s5 + $0x4a8] sm:$0xff]
  %v3808 = vld [vmem:[%s5 + $0x4b0] sm:$0xff]
  %v3809 = vld [vmem:[%s5 + $0x4b8] sm:$0xff]
  %v3810 = vld [vmem:[%s5 + $0x4c0] sm:$0xff]
  %v3811 = vld [vmem:[%s5 + $0x4c8] sm:$0xff]
  %v3812 = vld [vmem:[%s5 + $0x4d0] sm:$0xff]
  %v3813 = vld [vmem:[%s5 + $0x4d8] sm:$0xff]
  %v3814 = vld [vmem:[%s5 + $0x4e0] sm:$0xff]
  %v3815 = vld [vmem:[%s5 + $0x4e8] sm:$0xff]
  %v3816 = vld [vmem:[%s5 + $0x4f0] sm:$0xff]
  %v3817 = vld [vmem:[%s5 + $0x4f8] sm:$0xff]
  %v3818 = vld [vmem:[%s5 + $0x500] sm:$0xff]
  %v3819 = vld [vmem:[%s5 + $0x508] sm:$0xff]
  %v3820 = vld [vmem:[%s5 + $0x510] sm:$0xff]
  %v3821 = vld [vmem:[%s5 + $0x518] sm:$0xff]
  %v3822 = vld [vmem:[%s5 + $0x520] sm:$0xff]
  %v3823 = vld [vmem:[%s5 + $0x528] sm:$0xff]
  %v3824 = vld [vmem:[%s5 + $0x530] sm:$0xff]
  %v3825 = vld [vmem:[%s5 + $0x538] sm:$0xff]
  %v3826 = vld [vmem:[%s5 + $0x540] sm:$0xff]
  %v3827 = vld [vmem:[%s5 + $0x548] sm:$0xff]
  %v3828 = vld [vmem:[%s5 + $0x550] sm:$0xff]
  %v3829 = vld [vmem:[%s5 + $0x558] sm:$0xff]
  %v3830 = vld [vmem:[%s5 + $0x560] sm:$0xff]
  %v3831 = vld [vmem:[%s5 + $0x568] sm:$0xff]
  %v3832 = vld [vmem:[%s5 + $0x570] sm:$0xff]
  %v3833 = vld [vmem:[%s5 + $0x578] sm:$0xff]
  %v3834 = vld [vmem:[%s5 + $0x580] sm:$0xff]
  %v3835 = vld [vmem:[%s5 + $0x588] sm:$0xff]
  %v3836 = vld [vmem:[%s5 + $0x590] sm:$0xff]
  %v3837 = vld [vmem:[%s5 + $0x598] sm:$0xff]
  %v3838 = vld [vmem:[%s5 + $0x5a0] sm:$0xff]
  %v3839 = vld [vmem:[%s5 + $0x5a8] sm:$0xff]
  %v3840 = vld [vmem:[%s5 + $0x5b0] sm:$0xff]
  %v3841 = vld [vmem:[%s5 + $0x5b8] sm:$0xff]
  %v3842 = vld [vmem:[%s5 + $0x5c0] sm:$0xff]
  %v3843 = vld [vmem:[%s5 + $0x5c8] sm:$0xff]
  %v3844 = vld [vmem:[%s5 + $0x5d0] sm:$0xff]
  %v3845 = vld [vmem:[%s5 + $0x5d8] sm:$0xff]
  %v3846 = vld [vmem:[%s5 + $0x5e0] sm:$0xff]
  %v3847 = vld [vmem:[%s5 + $0x5e8] sm:$0xff]
  %v3848 = vld [vmem:[%s5 + $0x5f0] sm:$0xff]
  %v3849 = vld [vmem:[%s5 + $0x5f8] sm:$0xff]
  %v3850 = vld [vmem:[%s6] sm:$0x3f]
  %v3852 = vlaneseq
  %v3853 = vshrl.u32 %v3852, 7
  %v3854 = vsub.s32 0, %v3853
  %v3855 = vrot.slane %v3850, %v3854
  %v3856 = vlaneseq
  %v3857 = vshrl.u32 %v3856, 7
  %v3858 = vsub.s32 1, %v3857
  %v3859 = vrot.slane %v3850, %v3858
  %v3860 = vlaneseq
  %v3861 = vshrl.u32 %v3860, 7
  %v3862 = vsub.s32 2, %v3861
  %v3863 = vrot.slane %v3850, %v3862
  %v3864 = vlaneseq
  %v3865 = vshrl.u32 %v3864, 7
  %v3866 = vsub.s32 3, %v3865
  %v3867 = vrot.slane %v3850, %v3866
  %v3868 = vlaneseq
  %v3869 = vshrl.u32 %v3868, 7
  %v3870 = vsub.s32 4, %v3869
  %v3871 = vrot.slane %v3850, %v3870
  %v3872 = vlaneseq
  %v3873 = vshrl.u32 %v3872, 7
  %v3874 = vsub.s32 5, %v3873
  %v3875 = vrot.slane %v3850, %v3874
  %3882 = vmatprep.subr.mxu0 %v3659
  %3883 = vmatpush1.msra.mxu0 %v3658
  %3884 = vmatprep.subr.mxu0 %v3665
  %3885 = vmatpush1.msra.mxu0 %v3664
  %3886 = vmatprep.subr.mxu0 %v3671
  %3887 = vmatpush1.msra.mxu0 %v3670
  %3888 = vmatprep.subr.mxu0 %v3677
  %3889 = vmatpush1.msra.mxu0 %v3676
  %3890 = vmatprep.subr.mxu0 %v3683
  %3891 = vmatpush1.msra.mxu0 %v3682
  %3892 = vmatprep.subr.mxu0 %v3689
  %3893 = vmatpush1.msra.mxu0 %v3688
  %3894 = vmatprep.subr.mxu0 %v3695
  %3895 = vmatpush1.msra.mxu0 %v3694
  %3896 = vmatprep.subr.mxu0 %v3701
  %3897 = vmatpush1.msra.mxu0 %v3700
  %3898 = vmatprep.subr.mxu0 %v3707
  %3899 = vmatpush1.msra.mxu0 %v3706
  %3900 = vmatprep.subr.mxu0 %v3713
  %3901 = vmatpush1.msra.mxu0 %v3712
  %3902 = vmatprep.subr.mxu0 %v3719
  %3903 = vmatpush1.msra.mxu0 %v3718
  %3904 = vmatprep.subr.mxu0 %v3725
  %3905 = vmatpush1.msra.mxu0 %v3724
  %3906 = vmatprep.subr.mxu0 %v3731
  %3907 = vmatpush1.msra.mxu0 %v3730
  %3908 = vmatprep.subr.mxu0 %v3737
  %3909 = vmatpush1.msra.mxu0 %v3736
  %3910 = vmatprep.subr.mxu0 %v3743
  %3911 = vmatpush1.msra.mxu0 %v3742
  %3912 = vmatprep.subr.mxu0 %v3749
  %3913 = vmatpush1.msra.mxu0 %v3748
  %3914 = vmatprep.subr.mxu0 %v3755
  %3915 = vmatpush1.msra.mxu0 %v3754
  %3916 = vmatprep.subr.mxu0 %v3761
  %3917 = vmatpush1.msra.mxu0 %v3760
  %3918 = vmatprep.subr.mxu0 %v3767
  %3919 = vmatpush1.msra.mxu0 %v3766
  %3920 = vmatprep.subr.mxu0 %v3773
  %3921 = vmatpush1.msra.mxu0 %v3772
  %3922 = vmatprep.subr.mxu0 %v3779
  %3923 = vmatpush1.msra.mxu0 %v3778
  %3924 = vmatprep.subr.mxu0 %v3785
  %3925 = vmatpush1.msra.mxu0 %v3784
  %3926 = vmatprep.subr.mxu0 %v3791
  %3927 = vmatpush1.msra.mxu0 %v3790
  %3928 = vmatprep.subr.mxu0 %v3797
  %3929 = vmatpush1.msra.mxu0 %v3796
  %3930 = vmatprep.subr.mxu0 %v3803
  %3931 = vmatpush1.msra.mxu0 %v3802
  %3932 = vmatprep.subr.mxu0 %v3809
  %3933 = vmatpush1.msra.mxu0 %v3808
  %3934 = vmatprep.subr.mxu0 %v3815
  %3935 = vmatpush1.msra.mxu0 %v3814
  %3936 = vmatprep.subr.mxu0 %v3821
  %3937 = vmatpush1.msra.mxu0 %v3820
  %3938 = vmatprep.subr.mxu0 %v3827
  %3939 = vmatpush1.msra.mxu0 %v3826
  %3940 = vmatprep.subr.mxu0 %v3833
  %3941 = vmatpush1.msra.mxu0 %v3832
  %3942 = vmatprep.subr.mxu0 %v3839
  %3943 = vmatpush1.msra.mxu0 %v3838
  %3944 = vmatprep.subr.mxu0 %v3845
  %3945 = vmatpush1.msra.mxu0 %v3844
  %3946 = vmatprep.mubr.f32.mxu0 %v3119
  %3947 = vmatmul.mubr.f32.gmra.mrb[0].mxu0 %v3118
  %v3948 = vpop.f32.mrb[0].mxu0
  %v3949 = vadd.f32 %v3855, %v3948
  %v3950 = vpop.f32.mrb[0].mxu0
  %v3951 = vadd.f32 %v3859, %v3950
  %3952 = vdwg.mxu0
  %3953 = vmatprep.subr.mxu0 %v3661
  %3954 = vmatpush1.msra.mxu0 %v3660
  %3955 = vmatprep.subr.mxu0 %v3667
  %3956 = vmatpush1.msra.mxu0 %v3666
  %3957 = vmatprep.subr.mxu0 %v3673
  %3958 = vmatpush1.msra.mxu0 %v3672
  %3959 = vmatprep.subr.mxu0 %v3679
  %3960 = vmatpush1.msra.mxu0 %v3678
  %3961 = vmatprep.subr.mxu0 %v3685
  %3962 = vmatpush1.msra.mxu0 %v3684
  %3963 = vmatprep.subr.mxu0 %v3691
  %3964 = vmatpush1.msra.mxu0 %v3690
  %3965 = vmatprep.subr.mxu0 %v3697
  %3966 = vmatpush1.msra.mxu0 %v3696
  %3967 = vmatprep.subr.mxu0 %v3703
  %3968 = vmatpush1.msra.mxu0 %v3702
  %3969 = vmatprep.subr.mxu0 %v3709
  %3970 = vmatpush1.msra.mxu0 %v3708
  %3971 = vmatprep.subr.mxu0 %v3715
  %3972 = vmatpush1.msra.mxu0 %v3714
  %3973 = vmatprep.subr.mxu0 %v3721
  %3974 = vmatpush1.msra.mxu0 %v3720
  %3975 = vmatprep.subr.mxu0 %v3727
  %3976 = vmatpush1.msra.mxu0 %v3726
  %3977 = vmatprep.subr.mxu0 %v3733
  %3978 = vmatpush1.msra.mxu0 %v3732
  %3979 = vmatprep.subr.mxu0 %v3739
  %3980 = vmatpush1.msra.mxu0 %v3738
  %3981 = vmatprep.subr.mxu0 %v3745
  %3982 = vmatpush1.msra.mxu0 %v3744
  %3983 = vmatprep.subr.mxu0 %v3751
  %3984 = vmatpush1.msra.mxu0 %v3750
  %3985 = vmatprep.subr.mxu0 %v3757
  %3986 = vmatpush1.msra.mxu0 %v3756
  %3987 = vmatprep.subr.mxu0 %v3763
  %3988 = vmatpush1.msra.mxu0 %v3762
  %3989 = vmatprep.subr.mxu0 %v3769
  %3990 = vmatpush1.msra.mxu0 %v3768
  %3991 = vmatprep.subr.mxu0 %v3775
  %3992 = vmatpush1.msra.mxu0 %v3774
  %3993 = vmatprep.subr.mxu0 %v3781
  %3994 = vmatpush1.msra.mxu0 %v3780
  %3995 = vmatprep.subr.mxu0 %v3787
  %3996 = vmatpush1.msra.mxu0 %v3786
  %3997 = vmatprep.subr.mxu0 %v3793
  %3998 = vmatpush1.msra.mxu0 %v3792
  %3999 = vmatprep.subr.mxu0 %v3799
  %4000 = vmatpush1.msra.mxu0 %v3798
  %4001 = vmatprep.subr.mxu0 %v3805
  %4002 = vmatpush1.msra.mxu0 %v3804
  %4003 = vmatprep.subr.mxu0 %v3811
  %4004 = vmatpush1.msra.mxu0 %v3810
  %4005 = vmatprep.subr.mxu0 %v3817
  %4006 = vmatpush1.msra.mxu0 %v3816
  %4007 = vmatprep.subr.mxu0 %v3823
  %4008 = vmatpush1.msra.mxu0 %v3822
  %4009 = vmatprep.subr.mxu0 %v3829
  %4010 = vmatpush1.msra.mxu0 %v3828
  %4011 = vmatprep.subr.mxu0 %v3835
  %4012 = vmatpush1.msra.mxu0 %v3834
  %4013 = vmatprep.subr.mxu0 %v3841
  %4014 = vmatpush1.msra.mxu0 %v3840
  %4015 = vmatprep.subr.mxu0 %v3847
  %4016 = vmatpush1.msra.mxu0 %v3846
  %4017 = vmatprep.mubr.f32.mxu0 %v3119
  %4018 = vmatmul.mubr.f32.gmra.mrb[0].mxu0 %v3118
  %v4019 = vpop.f32.mrb[0].mxu0
  %v4020 = vadd.f32 %v3863, %v4019
  %v4021 = vpop.f32.mrb[0].mxu0
  %v4022 = vadd.f32 %v3867, %v4021
  %4023 = vdwg.mxu0
  %4024 = vmatprep.subr.mxu0 %v3663
  %4025 = vmatpush1.msra.mxu0 %v3662
  %4026 = vmatprep.subr.mxu0 %v3669
  %4027 = vmatpush1.msra.mxu0 %v3668
  %4028 = vmatprep.subr.mxu0 %v3675
  %4029 = vmatpush1.msra.mxu0 %v3674
  %4030 = vmatprep.subr.mxu0 %v3681
  %4031 = vmatpush1.msra.mxu0 %v3680
  %4032 = vmatprep.subr.mxu0 %v3687
  %4033 = vmatpush1.msra.mxu0 %v3686
  %4034 = vmatprep.subr.mxu0 %v3693
  %4035 = vmatpush1.msra.mxu0 %v3692
  %4036 = vmatprep.subr.mxu0 %v3699
  %4037 = vmatpush1.msra.mxu0 %v3698
  %4038 = vmatprep.subr.mxu0 %v3705
  %4039 = vmatpush1.msra.mxu0 %v3704
  %4040 = vmatprep.subr.mxu0 %v3711
  %4041 = vmatpush1.msra.mxu0 %v3710
  %4042 = vmatprep.subr.mxu0 %v3717
  %4043 = vmatpush1.msra.mxu0 %v3716
  %4044 = vmatprep.subr.mxu0 %v3723
  %4045 = vmatpush1.msra.mxu0 %v3722
  %4046 = vmatprep.subr.mxu0 %v3729
  %4047 = vmatpush1.msra.mxu0 %v3728
  %4048 = vmatprep.subr.mxu0 %v3735
  %4049 = vmatpush1.msra.mxu0 %v3734
  %4050 = vmatprep.subr.mxu0 %v3741
  %4051 = vmatpush1.msra.mxu0 %v3740
  %4052 = vmatprep.subr.mxu0 %v3747
  %4053 = vmatpush1.msra.mxu0 %v3746
  %4054 = vmatprep.subr.mxu0 %v3753
  %4055 = vmatpush1.msra.mxu0 %v3752
  %4056 = vmatprep.subr.mxu0 %v3759
  %4057 = vmatpush1.msra.mxu0 %v3758
  %4058 = vmatprep.subr.mxu0 %v3765
  %4059 = vmatpush1.msra.mxu0 %v3764
  %4060 = vmatprep.subr.mxu0 %v3771
  %4061 = vmatpush1.msra.mxu0 %v3770
  %4062 = vmatprep.subr.mxu0 %v3777
  %4063 = vmatpush1.msra.mxu0 %v3776
  %4064 = vmatprep.subr.mxu0 %v3783
  %4065 = vmatpush1.msra.mxu0 %v3782
  %4066 = vmatprep.subr.mxu0 %v3789
  %4067 = vmatpush1.msra.mxu0 %v3788
  %4068 = vmatprep.subr.mxu0 %v3795
  %4069 = vmatpush1.msra.mxu0 %v3794
  %4070 = vmatprep.subr.mxu0 %v3801
  %4071 = vmatpush1.msra.mxu0 %v3800
  %4072 = vmatprep.subr.mxu0 %v3807
  %4073 = vmatpush1.msra.mxu0 %v3806
  %4074 = vmatprep.subr.mxu0 %v3813
  %4075 = vmatpush1.msra.mxu0 %v3812
  %4076 = vmatprep.subr.mxu0 %v3819
  %4077 = vmatpush1.msra.mxu0 %v3818
  %4078 = vmatprep.subr.mxu0 %v3825
  %4079 = vmatpush1.msra.mxu0 %v3824
  %4080 = vmatprep.subr.mxu0 %v3831
  %4081 = vmatpush1.msra.mxu0 %v3830
  %4082 = vmatprep.subr.mxu0 %v3837
  %4083 = vmatpush1.msra.mxu0 %v3836
  %4084 = vmatprep.subr.mxu0 %v3843
  %4085 = vmatpush1.msra.mxu0 %v3842
  %4086 = vmatprep.subr.mxu0 %v3849
  %4087 = vmatpush1.msra.mxu0 %v3848
  %4088 = vmatprep.mubr.f32.mxu0 %v3119
  %4089 = vmatmul.mubr.f32.gmra.mrb[0].mxu0 %v3118
  %v4090 = vpop.f32.mrb[0].mxu0
  %v4091 = vadd.f32 %v3871, %v4090
  %v4092 = vpop.f32.mrb[0].mxu0
  %v4093 = vadd.f32 %v3875, %v4092
  %4094 = vdwg.mxu0
  %v4095 = vadd.f32 %v3652, %v3949
  %v4096 = vadd.f32 %v3653, %v3951
  %v4097 = vadd.f32 %v3654, %v4020
  %v4098 = vadd.f32 %v3655, %v4022
  %v4099 = vxor.u32 %v4095, 2147483648
  %v4100 = vxor.u32 %v4096, 2147483648
  %v4101 = vxor.u32 %v4097, 2147483648
  %v4102 = vxor.u32 %v4098, 2147483648
  %v4103 = vmul.f32 %v4099, 1.442695
  %v4104 = vpow.pop %v4103
  %v4105 = vmul.f32 %v4100, 1.442695
  %v4106 = vpow.pop %v4105
  %v4107 = vmul.f32 %v4101, 1.442695
  %v4108 = vpow.pop %v4107
  %v4109 = vmul.f32 %v4102, 1.442695
  %v4110 = vpow.pop %v4109
  %v4111 = vadd.f32 %v4104, 1.0
  %v4112 = vadd.f32 %v4106, 1.0
  %v4113 = vadd.f32 %v4108, 1.0
  %v4114 = vadd.f32 %v4110, 1.0
  %v4115 = vrcp.pop %v4111
  %v4116 = vmul.f32 1.0, %v4115
  %v4117 = vrcp.pop %v4112
  %v4118 = vmul.f32 1.0, %v4117
  %v4119 = vrcp.pop %v4113
  %v4120 = vmul.f32 1.0, %v4119
  %v4121 = vrcp.pop %v4114
  %v4122 = vmul.f32 1.0, %v4121
  %v4123 = vmul.f32 %v4116, %v4091
  %v4124 = vmul.f32 %v4118, %v4093
  %v4125 = vadd.f32 %v3656, %v4123
  %v4126 = vadd.f32 %v3657, %v4124
  %v4127 = vtanh.pop %v4125
  %v4128 = vtanh.pop %v4126
  %v4129 = vsub.f32 1.0, %v4120
  %v4130 = vsub.f32 1.0, %v4122
  %v4131 = vmul.f32 %v4129, %v4127
  %v4132 = vmul.f32 %v4130, %v4128
  %v4133 = vmul.f32 %v4120, %v3118
  %v4134 = vmul.f32 %v4122, %v3119
  %v4135 = vadd.f32 %v4131, %v4133
  %v4136 = vadd.f32 %v4132, %v4134
  %s4137 = scalar_lea.vmem %s7, 12
  %4138 = vst [vmem:[%s4137] sm:$0xf] %v4135
  %s4139 = scalar_lea.vmem %s61, 16
  %4140 = vst [vmem:[%s4139] sm:$0xf] %v4136
  %s4141 = scalar_lea.vmem %s0, 16
  %v4142 = vld [vmem:[%s4141] sm:$0xf]
  %v4143 = vld [vmem:[%s2] sm:$0xff]
  %v4144 = vld [vmem:[%s2 + $0x8] sm:$0xff]
  %v4145 = vld [vmem:[%s2 + $0x10] sm:$0xff]
  %v4146 = vld [vmem:[%s2 + $0x18] sm:$0xff]
  %v4147 = vld [vmem:[%s2 + $0x20] sm:$0xff]
  %v4148 = vld [vmem:[%s2 + $0x28] sm:$0xff]
  %v4149 = vld [vmem:[%s2 + $0x30] sm:$0x3]
  %v4150 = vld [vmem:[%s2 + $0x38] sm:$0x3]
  %v4151 = vld [vmem:[%s2 + $0x40] sm:$0x3]
  %v4152 = vld [vmem:[%s2 + $0x48] sm:$0x3]
  %v4153 = vld [vmem:[%s2 + $0x50] sm:$0x3]
  %v4154 = vld [vmem:[%s2 + $0x58] sm:$0x3]
  %s4155 = scalar_lea.vmem %s53, 12
  %v4156 = vld [vmem:[%s4155] sm:$0xf]
  %v4157 = vld [vmem:[%s3] sm:$0xff]
  %v4158 = vld [vmem:[%s3 + $0x8] sm:$0xff]
  %v4159 = vld [vmem:[%s3 + $0x10] sm:$0xff]
  %v4160 = vld [vmem:[%s3 + $0x18] sm:$0xff]
  %v4161 = vld [vmem:[%s3 + $0x20] sm:$0xff]
  %v4162 = vld [vmem:[%s3 + $0x28] sm:$0xff]
  %v4163 = vld [vmem:[%s3 + $0x30] sm:$0x3]
  %v4164 = vld [vmem:[%s3 + $0x38] sm:$0x3]
  %v4165 = vld [vmem:[%s3 + $0x40] sm:$0x3]
  %v4166 = vld [vmem:[%s3 + $0x48] sm:$0x3]
  %v4167 = vld [vmem:[%s3 + $0x50] sm:$0x3]
  %v4168 = vld [vmem:[%s3 + $0x58] sm:$0x3]
  %v4170 = vsel %vm97, %v4156, 0
  %v4173 = vsel %vm101, %v4163, 0
  %v4176 = vsel %vm101, %v4164, 0
  %v4179 = vsel %vm101, %v4165, 0
  %v4182 = vsel %vm101, %v4166, 0
  %v4185 = vsel %vm101, %v4167, 0
  %v4188 = vsel %vm101, %v4168, 0
  %4190 = vmatprep.subr.mxu0 %v4158
  %4191 = vmatpush1.msra.mxu0 %v4157
  %4192 = vmatprep.subr.mxu0 %v4176
  %4193 = vmatpush1.msra.mxu0 %v4173
  %4194 = vmatprep.subr.mxu0 0.0
  %4195 = vmatpush1.msra.mxu0 0.0
  %4196 = vmatprep.subr.mxu0 0.0
  %4197 = vmatpush1.msra.mxu0 0.0
  %4198 = vmatprep.subr.mxu0 0.0
  %4199 = vmatpush1.msra.mxu0 0.0
  %4200 = vmatprep.subr.mxu0 0.0
  %4201 = vmatpush1.msra.mxu0 0.0
  %4202 = vmatprep.subr.mxu0 0.0
  %4203 = vmatpush1.msra.mxu0 0.0
  %4204 = vmatprep.subr.mxu0 0.0
  %4205 = vmatpush1.msra.mxu0 0.0
  %4206 = vmatprep.subr.mxu0 0.0
  %4207 = vmatpush1.msra.mxu0 0.0
  %4208 = vmatprep.subr.mxu0 0.0
  %4209 = vmatpush1.msra.mxu0 0.0
  %4210 = vmatprep.subr.mxu0 0.0
  %4211 = vmatpush1.msra.mxu0 0.0
  %4212 = vmatprep.subr.mxu0 0.0
  %4213 = vmatpush1.msra.mxu0 0.0
  %4214 = vmatprep.subr.mxu0 0.0
  %4215 = vmatpush1.msra.mxu0 0.0
  %4216 = vmatprep.subr.mxu0 0.0
  %4217 = vmatpush1.msra.mxu0 0.0
  %4218 = vmatprep.subr.mxu0 0.0
  %4219 = vmatpush1.msra.mxu0 0.0
  %4220 = vmatprep.subr.mxu0 0.0
  %4221 = vmatpush1.msra.mxu0 0.0
  %4222 = vmatprep.subr.mxu0 0.0
  %4223 = vmatpush1.msra.mxu0 0.0
  %4224 = vmatprep.subr.mxu0 0.0
  %4225 = vmatpush1.msra.mxu0 0.0
  %4226 = vmatprep.subr.mxu0 0.0
  %4227 = vmatpush1.msra.mxu0 0.0
  %4228 = vmatprep.subr.mxu0 0.0
  %4229 = vmatpush1.msra.mxu0 0.0
  %4230 = vmatprep.subr.mxu0 0.0
  %4231 = vmatpush1.msra.mxu0 0.0
  %4232 = vmatprep.subr.mxu0 0.0
  %4233 = vmatpush1.msra.mxu0 0.0
  %4234 = vmatprep.subr.mxu0 0.0
  %4235 = vmatpush1.msra.mxu0 0.0
  %4236 = vmatprep.subr.mxu0 0.0
  %4237 = vmatpush1.msra.mxu0 0.0
  %4238 = vmatprep.subr.mxu0 0.0
  %4239 = vmatpush1.msra.mxu0 0.0
  %4240 = vmatprep.subr.mxu0 0.0
  %4241 = vmatpush1.msra.mxu0 0.0
  %4242 = vmatprep.subr.mxu0 0.0
  %4243 = vmatpush1.msra.mxu0 0.0
  %4244 = vmatprep.subr.mxu0 0.0
  %4245 = vmatpush1.msra.mxu0 0.0
  %4246 = vmatprep.subr.mxu0 0.0
  %4247 = vmatpush1.msra.mxu0 0.0
  %4248 = vmatprep.subr.mxu0 0.0
  %4249 = vmatpush1.msra.mxu0 0.0
  %4250 = vmatprep.subr.mxu0 0.0
  %4251 = vmatpush1.msra.mxu0 0.0
  %4252 = vmatprep.subr.mxu0 0.0
  %4253 = vmatpush1.msra.mxu0 0.0
  %4254 = vmatprep.mubr.f32.mxu0 0.0
  %4255 = vmatmul.mubr.f32.gmra.mrb[0].mxu0 %v4170
  %v4256 = vpop.f32.mrb[0].mxu0
  %v4257 = vadd.f32 0.0, %v4256
  %v4258 = vpop.f32.mrb[0].mxu0
  %v4259 = vadd.f32 0.0, %v4258
  %4260 = vdwg.mxu0
  %4261 = vmatprep.subr.mxu0 %v4160
  %4262 = vmatpush1.msra.mxu0 %v4159
  %4263 = vmatprep.subr.mxu0 %v4182
  %4264 = vmatpush1.msra.mxu0 %v4179
  %4265 = vmatprep.subr.mxu0 0.0
  %4266 = vmatpush1.msra.mxu0 0.0
  %4267 = vmatprep.subr.mxu0 0.0
  %4268 = vmatpush1.msra.mxu0 0.0
  %4269 = vmatprep.subr.mxu0 0.0
  %4270 = vmatpush1.msra.mxu0 0.0
  %4271 = vmatprep.subr.mxu0 0.0
  %4272 = vmatpush1.msra.mxu0 0.0
  %4273 = vmatprep.subr.mxu0 0.0
  %4274 = vmatpush1.msra.mxu0 0.0
  %4275 = vmatprep.subr.mxu0 0.0
  %4276 = vmatpush1.msra.mxu0 0.0
  %4277 = vmatprep.subr.mxu0 0.0
  %4278 = vmatpush1.msra.mxu0 0.0
  %4279 = vmatprep.subr.mxu0 0.0
  %4280 = vmatpush1.msra.mxu0 0.0
  %4281 = vmatprep.subr.mxu0 0.0
  %4282 = vmatpush1.msra.mxu0 0.0
  %4283 = vmatprep.subr.mxu0 0.0
  %4284 = vmatpush1.msra.mxu0 0.0
  %4285 = vmatprep.subr.mxu0 0.0
  %4286 = vmatpush1.msra.mxu0 0.0
  %4287 = vmatprep.subr.mxu0 0.0
  %4288 = vmatpush1.msra.mxu0 0.0
  %4289 = vmatprep.subr.mxu0 0.0
  %4290 = vmatpush1.msra.mxu0 0.0
  %4291 = vmatprep.subr.mxu0 0.0
  %4292 = vmatpush1.msra.mxu0 0.0
  %4293 = vmatprep.subr.mxu0 0.0
  %4294 = vmatpush1.msra.mxu0 0.0
  %4295 = vmatprep.subr.mxu0 0.0
  %4296 = vmatpush1.msra.mxu0 0.0
  %4297 = vmatprep.subr.mxu0 0.0
  %4298 = vmatpush1.msra.mxu0 0.0
  %4299 = vmatprep.subr.mxu0 0.0
  %4300 = vmatpush1.msra.mxu0 0.0
  %4301 = vmatprep.subr.mxu0 0.0
  %4302 = vmatpush1.msra.mxu0 0.0
  %4303 = vmatprep.subr.mxu0 0.0
  %4304 = vmatpush1.msra.mxu0 0.0
  %4305 = vmatprep.subr.mxu0 0.0
  %4306 = vmatpush1.msra.mxu0 0.0
  %4307 = vmatprep.subr.mxu0 0.0
  %4308 = vmatpush1.msra.mxu0 0.0
  %4309 = vmatprep.subr.mxu0 0.0
  %4310 = vmatpush1.msra.mxu0 0.0
  %4311 = vmatprep.subr.mxu0 0.0
  %4312 = vmatpush1.msra.mxu0 0.0
  %4313 = vmatprep.subr.mxu0 0.0
  %4314 = vmatpush1.msra.mxu0 0.0
  %4315 = vmatprep.subr.mxu0 0.0
  %4316 = vmatpush1.msra.mxu0 0.0
  %4317 = vmatprep.subr.mxu0 0.0
  %4318 = vmatpush1.msra.mxu0 0.0
  %4319 = vmatprep.subr.mxu0 0.0
  %4320 = vmatpush1.msra.mxu0 0.0
  %4321 = vmatprep.subr.mxu0 0.0
  %4322 = vmatpush1.msra.mxu0 0.0
  %4323 = vmatprep.subr.mxu0 0.0
  %4324 = vmatpush1.msra.mxu0 0.0
  %4325 = vmatprep.mubr.f32.mxu0 0.0
  %4326 = vmatmul.mubr.f32.gmra.mrb[0].mxu0 %v4170
  %v4327 = vpop.f32.mrb[0].mxu0
  %v4328 = vadd.f32 0.0, %v4327
  %v4329 = vpop.f32.mrb[0].mxu0
  %v4330 = vadd.f32 0.0, %v4329
  %4331 = vdwg.mxu0
  %4332 = vmatprep.subr.mxu0 %v4162
  %4333 = vmatpush1.msra.mxu0 %v4161
  %4334 = vmatprep.subr.mxu0 %v4188
  %4335 = vmatpush1.msra.mxu0 %v4185
  %4336 = vmatprep.subr.mxu0 0.0
  %4337 = vmatpush1.msra.mxu0 0.0
  %4338 = vmatprep.subr.mxu0 0.0
  %4339 = vmatpush1.msra.mxu0 0.0
  %4340 = vmatprep.subr.mxu0 0.0
  %4341 = vmatpush1.msra.mxu0 0.0
  %4342 = vmatprep.subr.mxu0 0.0
  %4343 = vmatpush1.msra.mxu0 0.0
  %4344 = vmatprep.subr.mxu0 0.0
  %4345 = vmatpush1.msra.mxu0 0.0
  %4346 = vmatprep.subr.mxu0 0.0
  %4347 = vmatpush1.msra.mxu0 0.0
  %4348 = vmatprep.subr.mxu0 0.0
  %4349 = vmatpush1.msra.mxu0 0.0
  %4350 = vmatprep.subr.mxu0 0.0
  %4351 = vmatpush1.msra.mxu0 0.0
  %4352 = vmatprep.subr.mxu0 0.0
  %4353 = vmatpush1.msra.mxu0 0.0
  %4354 = vmatprep.subr.mxu0 0.0
  %4355 = vmatpush1.msra.mxu0 0.0
  %4356 = vmatprep.subr.mxu0 0.0
  %4357 = vmatpush1.msra.mxu0 0.0
  %4358 = vmatprep.subr.mxu0 0.0
  %4359 = vmatpush1.msra.mxu0 0.0
  %4360 = vmatprep.subr.mxu0 0.0
  %4361 = vmatpush1.msra.mxu0 0.0
  %4362 = vmatprep.subr.mxu0 0.0
  %4363 = vmatpush1.msra.mxu0 0.0
  %4364 = vmatprep.subr.mxu0 0.0
  %4365 = vmatpush1.msra.mxu0 0.0
  %4366 = vmatprep.subr.mxu0 0.0
  %4367 = vmatpush1.msra.mxu0 0.0
  %4368 = vmatprep.subr.mxu0 0.0
  %4369 = vmatpush1.msra.mxu0 0.0
  %4370 = vmatprep.subr.mxu0 0.0
  %4371 = vmatpush1.msra.mxu0 0.0
  %4372 = vmatprep.subr.mxu0 0.0
  %4373 = vmatpush1.msra.mxu0 0.0
  %4374 = vmatprep.subr.mxu0 0.0
  %4375 = vmatpush1.msra.mxu0 0.0
  %4376 = vmatprep.subr.mxu0 0.0
  %4377 = vmatpush1.msra.mxu0 0.0
  %4378 = vmatprep.subr.mxu0 0.0
  %4379 = vmatpush1.msra.mxu0 0.0
  %4380 = vmatprep.subr.mxu0 0.0
  %4381 = vmatpush1.msra.mxu0 0.0
  %4382 = vmatprep.subr.mxu0 0.0
  %4383 = vmatpush1.msra.mxu0 0.0
  %4384 = vmatprep.subr.mxu0 0.0
  %4385 = vmatpush1.msra.mxu0 0.0
  %4386 = vmatprep.subr.mxu0 0.0
  %4387 = vmatpush1.msra.mxu0 0.0
  %4388 = vmatprep.subr.mxu0 0.0
  %4389 = vmatpush1.msra.mxu0 0.0
  %4390 = vmatprep.subr.mxu0 0.0
  %4391 = vmatpush1.msra.mxu0 0.0
  %4392 = vmatprep.subr.mxu0 0.0
  %4393 = vmatpush1.msra.mxu0 0.0
  %4394 = vmatprep.subr.mxu0 0.0
  %4395 = vmatpush1.msra.mxu0 0.0
  %4396 = vmatprep.mubr.f32.mxu0 0.0
  %4397 = vmatmul.mubr.f32.gmra.mrb[0].mxu0 %v4170
  %v4398 = vpop.f32.mrb[0].mxu0
  %v4399 = vadd.f32 0.0, %v4398
  %v4400 = vpop.f32.mrb[0].mxu0
  %v4401 = vadd.f32 0.0, %v4400
  %4402 = vdwg.mxu0
  %v4404 = vsel %vm97, %v4142, 0
  %v4407 = vsel %vm101, %v4149, 0
  %v4410 = vsel %vm101, %v4150, 0
  %v4413 = vsel %vm101, %v4151, 0
  %v4416 = vsel %vm101, %v4152, 0
  %v4419 = vsel %vm101, %v4153, 0
  %v4422 = vsel %vm101, %v4154, 0
  %4424 = vmatprep.subr.mxu0 %v4144
  %4425 = vmatpush1.msra.mxu0 %v4143
  %4426 = vmatprep.subr.mxu0 %v4410
  %4427 = vmatpush1.msra.mxu0 %v4407
  %4428 = vmatprep.subr.mxu0 0.0
  %4429 = vmatpush1.msra.mxu0 0.0
  %4430 = vmatprep.subr.mxu0 0.0
  %4431 = vmatpush1.msra.mxu0 0.0
  %4432 = vmatprep.subr.mxu0 0.0
  %4433 = vmatpush1.msra.mxu0 0.0
  %4434 = vmatprep.subr.mxu0 0.0
  %4435 = vmatpush1.msra.mxu0 0.0
  %4436 = vmatprep.subr.mxu0 0.0
  %4437 = vmatpush1.msra.mxu0 0.0
  %4438 = vmatprep.subr.mxu0 0.0
  %4439 = vmatpush1.msra.mxu0 0.0
  %4440 = vmatprep.subr.mxu0 0.0
  %4441 = vmatpush1.msra.mxu0 0.0
  %4442 = vmatprep.subr.mxu0 0.0
  %4443 = vmatpush1.msra.mxu0 0.0
  %4444 = vmatprep.subr.mxu0 0.0
  %4445 = vmatpush1.msra.mxu0 0.0
  %4446 = vmatprep.subr.mxu0 0.0
  %4447 = vmatpush1.msra.mxu0 0.0
  %4448 = vmatprep.subr.mxu0 0.0
  %4449 = vmatpush1.msra.mxu0 0.0
  %4450 = vmatprep.subr.mxu0 0.0
  %4451 = vmatpush1.msra.mxu0 0.0
  %4452 = vmatprep.subr.mxu0 0.0
  %4453 = vmatpush1.msra.mxu0 0.0
  %4454 = vmatprep.subr.mxu0 0.0
  %4455 = vmatpush1.msra.mxu0 0.0
  %4456 = vmatprep.subr.mxu0 0.0
  %4457 = vmatpush1.msra.mxu0 0.0
  %4458 = vmatprep.subr.mxu0 0.0
  %4459 = vmatpush1.msra.mxu0 0.0
  %4460 = vmatprep.subr.mxu0 0.0
  %4461 = vmatpush1.msra.mxu0 0.0
  %4462 = vmatprep.subr.mxu0 0.0
  %4463 = vmatpush1.msra.mxu0 0.0
  %4464 = vmatprep.subr.mxu0 0.0
  %4465 = vmatpush1.msra.mxu0 0.0
  %4466 = vmatprep.subr.mxu0 0.0
  %4467 = vmatpush1.msra.mxu0 0.0
  %4468 = vmatprep.subr.mxu0 0.0
  %4469 = vmatpush1.msra.mxu0 0.0
  %4470 = vmatprep.subr.mxu0 0.0
  %4471 = vmatpush1.msra.mxu0 0.0
  %4472 = vmatprep.subr.mxu0 0.0
  %4473 = vmatpush1.msra.mxu0 0.0
  %4474 = vmatprep.subr.mxu0 0.0
  %4475 = vmatpush1.msra.mxu0 0.0
  %4476 = vmatprep.subr.mxu0 0.0
  %4477 = vmatpush1.msra.mxu0 0.0
  %4478 = vmatprep.subr.mxu0 0.0
  %4479 = vmatpush1.msra.mxu0 0.0
  %4480 = vmatprep.subr.mxu0 0.0
  %4481 = vmatpush1.msra.mxu0 0.0
  %4482 = vmatprep.subr.mxu0 0.0
  %4483 = vmatpush1.msra.mxu0 0.0
  %4484 = vmatprep.subr.mxu0 0.0
  %4485 = vmatpush1.msra.mxu0 0.0
  %4486 = vmatprep.subr.mxu0 0.0
  %4487 = vmatpush1.msra.mxu0 0.0
  %4488 = vmatprep.mubr.f32.mxu0 0.0
  %4489 = vmatmul.mubr.f32.gmra.mrb[0].mxu0 %v4404
  %v4490 = vpop.f32.mrb[0].mxu0
  %v4491 = vadd.f32 %v4257, %v4490
  %v4492 = vpop.f32.mrb[0].mxu0
  %v4493 = vadd.f32 %v4259, %v4492
  %4494 = vdwg.mxu0
  %4495 = vmatprep.subr.mxu0 %v4146
  %4496 = vmatpush1.msra.mxu0 %v4145
  %4497 = vmatprep.subr.mxu0 %v4416
  %4498 = vmatpush1.msra.mxu0 %v4413
  %4499 = vmatprep.subr.mxu0 0.0
  %4500 = vmatpush1.msra.mxu0 0.0
  %4501 = vmatprep.subr.mxu0 0.0
  %4502 = vmatpush1.msra.mxu0 0.0
  %4503 = vmatprep.subr.mxu0 0.0
  %4504 = vmatpush1.msra.mxu0 0.0
  %4505 = vmatprep.subr.mxu0 0.0
  %4506 = vmatpush1.msra.mxu0 0.0
  %4507 = vmatprep.subr.mxu0 0.0
  %4508 = vmatpush1.msra.mxu0 0.0
  %4509 = vmatprep.subr.mxu0 0.0
  %4510 = vmatpush1.msra.mxu0 0.0
  %4511 = vmatprep.subr.mxu0 0.0
  %4512 = vmatpush1.msra.mxu0 0.0
  %4513 = vmatprep.subr.mxu0 0.0
  %4514 = vmatpush1.msra.mxu0 0.0
  %4515 = vmatprep.subr.mxu0 0.0
  %4516 = vmatpush1.msra.mxu0 0.0
  %4517 = vmatprep.subr.mxu0 0.0
  %4518 = vmatpush1.msra.mxu0 0.0
  %4519 = vmatprep.subr.mxu0 0.0
  %4520 = vmatpush1.msra.mxu0 0.0
  %4521 = vmatprep.subr.mxu0 0.0
  %4522 = vmatpush1.msra.mxu0 0.0
  %4523 = vmatprep.subr.mxu0 0.0
  %4524 = vmatpush1.msra.mxu0 0.0
  %4525 = vmatprep.subr.mxu0 0.0
  %4526 = vmatpush1.msra.mxu0 0.0
  %4527 = vmatprep.subr.mxu0 0.0
  %4528 = vmatpush1.msra.mxu0 0.0
  %4529 = vmatprep.subr.mxu0 0.0
  %4530 = vmatpush1.msra.mxu0 0.0
  %4531 = vmatprep.subr.mxu0 0.0
  %4532 = vmatpush1.msra.mxu0 0.0
  %4533 = vmatprep.subr.mxu0 0.0
  %4534 = vmatpush1.msra.mxu0 0.0
  %4535 = vmatprep.subr.mxu0 0.0
  %4536 = vmatpush1.msra.mxu0 0.0
  %4537 = vmatprep.subr.mxu0 0.0
  %4538 = vmatpush1.msra.mxu0 0.0
  %4539 = vmatprep.subr.mxu0 0.0
  %4540 = vmatpush1.msra.mxu0 0.0
  %4541 = vmatprep.subr.mxu0 0.0
  %4542 = vmatpush1.msra.mxu0 0.0
  %4543 = vmatprep.subr.mxu0 0.0
  %4544 = vmatpush1.msra.mxu0 0.0
  %4545 = vmatprep.subr.mxu0 0.0
  %4546 = vmatpush1.msra.mxu0 0.0
  %4547 = vmatprep.subr.mxu0 0.0
  %4548 = vmatpush1.msra.mxu0 0.0
  %4549 = vmatprep.subr.mxu0 0.0
  %4550 = vmatpush1.msra.mxu0 0.0
  %4551 = vmatprep.subr.mxu0 0.0
  %4552 = vmatpush1.msra.mxu0 0.0
  %4553 = vmatprep.subr.mxu0 0.0
  %4554 = vmatpush1.msra.mxu0 0.0
  %4555 = vmatprep.subr.mxu0 0.0
  %4556 = vmatpush1.msra.mxu0 0.0
  %4557 = vmatprep.subr.mxu0 0.0
  %4558 = vmatpush1.msra.mxu0 0.0
  %4559 = vmatprep.mubr.f32.mxu0 0.0
  %4560 = vmatmul.mubr.f32.gmra.mrb[0].mxu0 %v4404
  %v4561 = vpop.f32.mrb[0].mxu0
  %v4562 = vadd.f32 %v4328, %v4561
  %v4563 = vpop.f32.mrb[0].mxu0
  %v4564 = vadd.f32 %v4330, %v4563
  %4565 = vdwg.mxu0
  %4566 = vmatprep.subr.mxu0 %v4148
  %4567 = vmatpush1.msra.mxu0 %v4147
  %4568 = vmatprep.subr.mxu0 %v4422
  %4569 = vmatpush1.msra.mxu0 %v4419
  %4570 = vmatprep.subr.mxu0 0.0
  %4571 = vmatpush1.msra.mxu0 0.0
  %4572 = vmatprep.subr.mxu0 0.0
  %4573 = vmatpush1.msra.mxu0 0.0
  %4574 = vmatprep.subr.mxu0 0.0
  %4575 = vmatpush1.msra.mxu0 0.0
  %4576 = vmatprep.subr.mxu0 0.0
  %4577 = vmatpush1.msra.mxu0 0.0
  %4578 = vmatprep.subr.mxu0 0.0
  %4579 = vmatpush1.msra.mxu0 0.0
  %4580 = vmatprep.subr.mxu0 0.0
  %4581 = vmatpush1.msra.mxu0 0.0
  %4582 = vmatprep.subr.mxu0 0.0
  %4583 = vmatpush1.msra.mxu0 0.0
  %4584 = vmatprep.subr.mxu0 0.0
  %4585 = vmatpush1.msra.mxu0 0.0
  %4586 = vmatprep.subr.mxu0 0.0
  %4587 = vmatpush1.msra.mxu0 0.0
  %4588 = vmatprep.subr.mxu0 0.0
  %4589 = vmatpush1.msra.mxu0 0.0
  %4590 = vmatprep.subr.mxu0 0.0
  %4591 = vmatpush1.msra.mxu0 0.0
  %4592 = vmatprep.subr.mxu0 0.0
  %4593 = vmatpush1.msra.mxu0 0.0
  %4594 = vmatprep.subr.mxu0 0.0
  %4595 = vmatpush1.msra.mxu0 0.0
  %4596 = vmatprep.subr.mxu0 0.0
  %4597 = vmatpush1.msra.mxu0 0.0
  %4598 = vmatprep.subr.mxu0 0.0
  %4599 = vmatpush1.msra.mxu0 0.0
  %4600 = vmatprep.subr.mxu0 0.0
  %4601 = vmatpush1.msra.mxu0 0.0
  %4602 = vmatprep.subr.mxu0 0.0
  %4603 = vmatpush1.msra.mxu0 0.0
  %4604 = vmatprep.subr.mxu0 0.0
  %4605 = vmatpush1.msra.mxu0 0.0
  %4606 = vmatprep.subr.mxu0 0.0
  %4607 = vmatpush1.msra.mxu0 0.0
  %4608 = vmatprep.subr.mxu0 0.0
  %4609 = vmatpush1.msra.mxu0 0.0
  %4610 = vmatprep.subr.mxu0 0.0
  %4611 = vmatpush1.msra.mxu0 0.0
  %4612 = vmatprep.subr.mxu0 0.0
  %4613 = vmatpush1.msra.mxu0 0.0
  %4614 = vmatprep.subr.mxu0 0.0
  %4615 = vmatpush1.msra.mxu0 0.0
  %4616 = vmatprep.subr.mxu0 0.0
  %4617 = vmatpush1.msra.mxu0 0.0
  %4618 = vmatprep.subr.mxu0 0.0
  %4619 = vmatpush1.msra.mxu0 0.0
  %4620 = vmatprep.subr.mxu0 0.0
  %4621 = vmatpush1.msra.mxu0 0.0
  %4622 = vmatprep.subr.mxu0 0.0
  %4623 = vmatpush1.msra.mxu0 0.0
  %4624 = vmatprep.subr.mxu0 0.0
  %4625 = vmatpush1.msra.mxu0 0.0
  %4626 = vmatprep.subr.mxu0 0.0
  %4627 = vmatpush1.msra.mxu0 0.0
  %4628 = vmatprep.subr.mxu0 0.0
  %4629 = vmatpush1.msra.mxu0 0.0
  %4630 = vmatprep.mubr.f32.mxu0 0.0
  %4631 = vmatmul.mubr.f32.gmra.mrb[0].mxu0 %v4404
  %v4632 = vpop.f32.mrb[0].mxu0
  %v4633 = vadd.f32 %v4399, %v4632
  %v4634 = vpop.f32.mrb[0].mxu0
  %v4635 = vadd.f32 %v4401, %v4634
  %4636 = vdwg.mxu0
  %v4637 = vld [vmem:[%s4] sm:$0x3f]
  %v4639 = vlaneseq
  %v4640 = vshrl.u32 %v4639, 7
  %v4641 = vsub.s32 0, %v4640
  %v4642 = vrot.slane %v4637, %v4641
  %v4643 = vlaneseq
  %v4644 = vshrl.u32 %v4643, 7
  %v4645 = vsub.s32 1, %v4644
  %v4646 = vrot.slane %v4637, %v4645
  %v4647 = vlaneseq
  %v4648 = vshrl.u32 %v4647, 7
  %v4649 = vsub.s32 2, %v4648
  %v4650 = vrot.slane %v4637, %v4649
  %v4651 = vlaneseq
  %v4652 = vshrl.u32 %v4651, 7
  %v4653 = vsub.s32 3, %v4652
  %v4654 = vrot.slane %v4637, %v4653
  %v4655 = vlaneseq
  %v4656 = vshrl.u32 %v4655, 7
  %v4657 = vsub.s32 4, %v4656
  %v4658 = vrot.slane %v4637, %v4657
  %v4659 = vlaneseq
  %v4660 = vshrl.u32 %v4659, 7
  %v4661 = vsub.s32 5, %v4660
  %v4662 = vrot.slane %v4637, %v4661
  %v4669 = vadd.f32 %v4491, %v4642
  %v4670 = vadd.f32 %v4493, %v4646
  %v4671 = vadd.f32 %v4562, %v4650
  %v4672 = vadd.f32 %v4564, %v4654
  %v4673 = vadd.f32 %v4633, %v4658
  %v4674 = vadd.f32 %v4635, %v4662
  %v4675 = vld [vmem:[%s5] sm:$0xff]
  %v4676 = vld [vmem:[%s5 + $0x8] sm:$0xff]
  %v4677 = vld [vmem:[%s5 + $0x10] sm:$0xff]
  %v4678 = vld [vmem:[%s5 + $0x18] sm:$0xff]
  %v4679 = vld [vmem:[%s5 + $0x20] sm:$0xff]
  %v4680 = vld [vmem:[%s5 + $0x28] sm:$0xff]
  %v4681 = vld [vmem:[%s5 + $0x30] sm:$0xff]
  %v4682 = vld [vmem:[%s5 + $0x38] sm:$0xff]
  %v4683 = vld [vmem:[%s5 + $0x40] sm:$0xff]
  %v4684 = vld [vmem:[%s5 + $0x48] sm:$0xff]
  %v4685 = vld [vmem:[%s5 + $0x50] sm:$0xff]
  %v4686 = vld [vmem:[%s5 + $0x58] sm:$0xff]
  %v4687 = vld [vmem:[%s5 + $0x60] sm:$0xff]
  %v4688 = vld [vmem:[%s5 + $0x68] sm:$0xff]
  %v4689 = vld [vmem:[%s5 + $0x70] sm:$0xff]
  %v4690 = vld [vmem:[%s5 + $0x78] sm:$0xff]
  %v4691 = vld [vmem:[%s5 + $0x80] sm:$0xff]
  %v4692 = vld [vmem:[%s5 + $0x88] sm:$0xff]
  %v4693 = vld [vmem:[%s5 + $0x90] sm:$0xff]
  %v4694 = vld [vmem:[%s5 + $0x98] sm:$0xff]
  %v4695 = vld [vmem:[%s5 + $0xa0] sm:$0xff]
  %v4696 = vld [vmem:[%s5 + $0xa8] sm:$0xff]
  %v4697 = vld [vmem:[%s5 + $0xb0] sm:$0xff]
  %v4698 = vld [vmem:[%s5 + $0xb8] sm:$0xff]
  %v4699 = vld [vmem:[%s5 + $0xc0] sm:$0xff]
  %v4700 = vld [vmem:[%s5 + $0xc8] sm:$0xff]
  %v4701 = vld [vmem:[%s5 + $0xd0] sm:$0xff]
  %v4702 = vld [vmem:[%s5 + $0xd8] sm:$0xff]
  %v4703 = vld [vmem:[%s5 + $0xe0] sm:$0xff]
  %v4704 = vld [vmem:[%s5 + $0xe8] sm:$0xff]
  %v4705 = vld [vmem:[%s5 + $0xf0] sm:$0xff]
  %v4706 = vld [vmem:[%s5 + $0xf8] sm:$0xff]
  %v4707 = vld [vmem:[%s5 + $0x100] sm:$0xff]
  %v4708 = vld [vmem:[%s5 + $0x108] sm:$0xff]
  %v4709 = vld [vmem:[%s5 + $0x110] sm:$0xff]
  %v4710 = vld [vmem:[%s5 + $0x118] sm:$0xff]
  %v4711 = vld [vmem:[%s5 + $0x120] sm:$0xff]
  %v4712 = vld [vmem:[%s5 + $0x128] sm:$0xff]
  %v4713 = vld [vmem:[%s5 + $0x130] sm:$0xff]
  %v4714 = vld [vmem:[%s5 + $0x138] sm:$0xff]
  %v4715 = vld [vmem:[%s5 + $0x140] sm:$0xff]
  %v4716 = vld [vmem:[%s5 + $0x148] sm:$0xff]
  %v4717 = vld [vmem:[%s5 + $0x150] sm:$0xff]
  %v4718 = vld [vmem:[%s5 + $0x158] sm:$0xff]
  %v4719 = vld [vmem:[%s5 + $0x160] sm:$0xff]
  %v4720 = vld [vmem:[%s5 + $0x168] sm:$0xff]
  %v4721 = vld [vmem:[%s5 + $0x170] sm:$0xff]
  %v4722 = vld [vmem:[%s5 + $0x178] sm:$0xff]
  %v4723 = vld [vmem:[%s5 + $0x180] sm:$0xff]
  %v4724 = vld [vmem:[%s5 + $0x188] sm:$0xff]
  %v4725 = vld [vmem:[%s5 + $0x190] sm:$0xff]
  %v4726 = vld [vmem:[%s5 + $0x198] sm:$0xff]
  %v4727 = vld [vmem:[%s5 + $0x1a0] sm:$0xff]
  %v4728 = vld [vmem:[%s5 + $0x1a8] sm:$0xff]
  %v4729 = vld [vmem:[%s5 + $0x1b0] sm:$0xff]
  %v4730 = vld [vmem:[%s5 + $0x1b8] sm:$0xff]
  %v4731 = vld [vmem:[%s5 + $0x1c0] sm:$0xff]
  %v4732 = vld [vmem:[%s5 + $0x1c8] sm:$0xff]
  %v4733 = vld [vmem:[%s5 + $0x1d0] sm:$0xff]
  %v4734 = vld [vmem:[%s5 + $0x1d8] sm:$0xff]
  %v4735 = vld [vmem:[%s5 + $0x1e0] sm:$0xff]
  %v4736 = vld [vmem:[%s5 + $0x1e8] sm:$0xff]
  %v4737 = vld [vmem:[%s5 + $0x1f0] sm:$0xff]
  %v4738 = vld [vmem:[%s5 + $0x1f8] sm:$0xff]
  %v4739 = vld [vmem:[%s5 + $0x200] sm:$0xff]
  %v4740 = vld [vmem:[%s5 + $0x208] sm:$0xff]
  %v4741 = vld [vmem:[%s5 + $0x210] sm:$0xff]
  %v4742 = vld [vmem:[%s5 + $0x218] sm:$0xff]
  %v4743 = vld [vmem:[%s5 + $0x220] sm:$0xff]
  %v4744 = vld [vmem:[%s5 + $0x228] sm:$0xff]
  %v4745 = vld [vmem:[%s5 + $0x230] sm:$0xff]
  %v4746 = vld [vmem:[%s5 + $0x238] sm:$0xff]
  %v4747 = vld [vmem:[%s5 + $0x240] sm:$0xff]
  %v4748 = vld [vmem:[%s5 + $0x248] sm:$0xff]
  %v4749 = vld [vmem:[%s5 + $0x250] sm:$0xff]
  %v4750 = vld [vmem:[%s5 + $0x258] sm:$0xff]
  %v4751 = vld [vmem:[%s5 + $0x260] sm:$0xff]
  %v4752 = vld [vmem:[%s5 + $0x268] sm:$0xff]
  %v4753 = vld [vmem:[%s5 + $0x270] sm:$0xff]
  %v4754 = vld [vmem:[%s5 + $0x278] sm:$0xff]
  %v4755 = vld [vmem:[%s5 + $0x280] sm:$0xff]
  %v4756 = vld [vmem:[%s5 + $0x288] sm:$0xff]
  %v4757 = vld [vmem:[%s5 + $0x290] sm:$0xff]
  %v4758 = vld [vmem:[%s5 + $0x298] sm:$0xff]
  %v4759 = vld [vmem:[%s5 + $0x2a0] sm:$0xff]
  %v4760 = vld [vmem:[%s5 + $0x2a8] sm:$0xff]
  %v4761 = vld [vmem:[%s5 + $0x2b0] sm:$0xff]
  %v4762 = vld [vmem:[%s5 + $0x2b8] sm:$0xff]
  %v4763 = vld [vmem:[%s5 + $0x2c0] sm:$0xff]
  %v4764 = vld [vmem:[%s5 + $0x2c8] sm:$0xff]
  %v4765 = vld [vmem:[%s5 + $0x2d0] sm:$0xff]
  %v4766 = vld [vmem:[%s5 + $0x2d8] sm:$0xff]
  %v4767 = vld [vmem:[%s5 + $0x2e0] sm:$0xff]
  %v4768 = vld [vmem:[%s5 + $0x2e8] sm:$0xff]
  %v4769 = vld [vmem:[%s5 + $0x2f0] sm:$0xff]
  %v4770 = vld [vmem:[%s5 + $0x2f8] sm:$0xff]
  %v4771 = vld [vmem:[%s5 + $0x300] sm:$0xff]
  %v4772 = vld [vmem:[%s5 + $0x308] sm:$0xff]
  %v4773 = vld [vmem:[%s5 + $0x310] sm:$0xff]
  %v4774 = vld [vmem:[%s5 + $0x318] sm:$0xff]
  %v4775 = vld [vmem:[%s5 + $0x320] sm:$0xff]
  %v4776 = vld [vmem:[%s5 + $0x328] sm:$0xff]
  %v4777 = vld [vmem:[%s5 + $0x330] sm:$0xff]
  %v4778 = vld [vmem:[%s5 + $0x338] sm:$0xff]
  %v4779 = vld [vmem:[%s5 + $0x340] sm:$0xff]
  %v4780 = vld [vmem:[%s5 + $0x348] sm:$0xff]
  %v4781 = vld [vmem:[%s5 + $0x350] sm:$0xff]
  %v4782 = vld [vmem:[%s5 + $0x358] sm:$0xff]
  %v4783 = vld [vmem:[%s5 + $0x360] sm:$0xff]
  %v4784 = vld [vmem:[%s5 + $0x368] sm:$0xff]
  %v4785 = vld [vmem:[%s5 + $0x370] sm:$0xff]
  %v4786 = vld [vmem:[%s5 + $0x378] sm:$0xff]
  %v4787 = vld [vmem:[%s5 + $0x380] sm:$0xff]
  %v4788 = vld [vmem:[%s5 + $0x388] sm:$0xff]
  %v4789 = vld [vmem:[%s5 + $0x390] sm:$0xff]
  %v4790 = vld [vmem:[%s5 + $0x398] sm:$0xff]
  %v4791 = vld [vmem:[%s5 + $0x3a0] sm:$0xff]
  %v4792 = vld [vmem:[%s5 + $0x3a8] sm:$0xff]
  %v4793 = vld [vmem:[%s5 + $0x3b0] sm:$0xff]
  %v4794 = vld [vmem:[%s5 + $0x3b8] sm:$0xff]
  %v4795 = vld [vmem:[%s5 + $0x3c0] sm:$0xff]
  %v4796 = vld [vmem:[%s5 + $0x3c8] sm:$0xff]
  %v4797 = vld [vmem:[%s5 + $0x3d0] sm:$0xff]
  %v4798 = vld [vmem:[%s5 + $0x3d8] sm:$0xff]
  %v4799 = vld [vmem:[%s5 + $0x3e0] sm:$0xff]
  %v4800 = vld [vmem:[%s5 + $0x3e8] sm:$0xff]
  %v4801 = vld [vmem:[%s5 + $0x3f0] sm:$0xff]
  %v4802 = vld [vmem:[%s5 + $0x3f8] sm:$0xff]
  %v4803 = vld [vmem:[%s5 + $0x400] sm:$0xff]
  %v4804 = vld [vmem:[%s5 + $0x408] sm:$0xff]
  %v4805 = vld [vmem:[%s5 + $0x410] sm:$0xff]
  %v4806 = vld [vmem:[%s5 + $0x418] sm:$0xff]
  %v4807 = vld [vmem:[%s5 + $0x420] sm:$0xff]
  %v4808 = vld [vmem:[%s5 + $0x428] sm:$0xff]
  %v4809 = vld [vmem:[%s5 + $0x430] sm:$0xff]
  %v4810 = vld [vmem:[%s5 + $0x438] sm:$0xff]
  %v4811 = vld [vmem:[%s5 + $0x440] sm:$0xff]
  %v4812 = vld [vmem:[%s5 + $0x448] sm:$0xff]
  %v4813 = vld [vmem:[%s5 + $0x450] sm:$0xff]
  %v4814 = vld [vmem:[%s5 + $0x458] sm:$0xff]
  %v4815 = vld [vmem:[%s5 + $0x460] sm:$0xff]
  %v4816 = vld [vmem:[%s5 + $0x468] sm:$0xff]
  %v4817 = vld [vmem:[%s5 + $0x470] sm:$0xff]
  %v4818 = vld [vmem:[%s5 + $0x478] sm:$0xff]
  %v4819 = vld [vmem:[%s5 + $0x480] sm:$0xff]
  %v4820 = vld [vmem:[%s5 + $0x488] sm:$0xff]
  %v4821 = vld [vmem:[%s5 + $0x490] sm:$0xff]
  %v4822 = vld [vmem:[%s5 + $0x498] sm:$0xff]
  %v4823 = vld [vmem:[%s5 + $0x4a0] sm:$0xff]
  %v4824 = vld [vmem:[%s5 + $0x4a8] sm:$0xff]
  %v4825 = vld [vmem:[%s5 + $0x4b0] sm:$0xff]
  %v4826 = vld [vmem:[%s5 + $0x4b8] sm:$0xff]
  %v4827 = vld [vmem:[%s5 + $0x4c0] sm:$0xff]
  %v4828 = vld [vmem:[%s5 + $0x4c8] sm:$0xff]
  %v4829 = vld [vmem:[%s5 + $0x4d0] sm:$0xff]
  %v4830 = vld [vmem:[%s5 + $0x4d8] sm:$0xff]
  %v4831 = vld [vmem:[%s5 + $0x4e0] sm:$0xff]
  %v4832 = vld [vmem:[%s5 + $0x4e8] sm:$0xff]
  %v4833 = vld [vmem:[%s5 + $0x4f0] sm:$0xff]
  %v4834 = vld [vmem:[%s5 + $0x4f8] sm:$0xff]
  %v4835 = vld [vmem:[%s5 + $0x500] sm:$0xff]
  %v4836 = vld [vmem:[%s5 + $0x508] sm:$0xff]
  %v4837 = vld [vmem:[%s5 + $0x510] sm:$0xff]
  %v4838 = vld [vmem:[%s5 + $0x518] sm:$0xff]
  %v4839 = vld [vmem:[%s5 + $0x520] sm:$0xff]
  %v4840 = vld [vmem:[%s5 + $0x528] sm:$0xff]
  %v4841 = vld [vmem:[%s5 + $0x530] sm:$0xff]
  %v4842 = vld [vmem:[%s5 + $0x538] sm:$0xff]
  %v4843 = vld [vmem:[%s5 + $0x540] sm:$0xff]
  %v4844 = vld [vmem:[%s5 + $0x548] sm:$0xff]
  %v4845 = vld [vmem:[%s5 + $0x550] sm:$0xff]
  %v4846 = vld [vmem:[%s5 + $0x558] sm:$0xff]
  %v4847 = vld [vmem:[%s5 + $0x560] sm:$0xff]
  %v4848 = vld [vmem:[%s5 + $0x568] sm:$0xff]
  %v4849 = vld [vmem:[%s5 + $0x570] sm:$0xff]
  %v4850 = vld [vmem:[%s5 + $0x578] sm:$0xff]
  %v4851 = vld [vmem:[%s5 + $0x580] sm:$0xff]
  %v4852 = vld [vmem:[%s5 + $0x588] sm:$0xff]
  %v4853 = vld [vmem:[%s5 + $0x590] sm:$0xff]
  %v4854 = vld [vmem:[%s5 + $0x598] sm:$0xff]
  %v4855 = vld [vmem:[%s5 + $0x5a0] sm:$0xff]
  %v4856 = vld [vmem:[%s5 + $0x5a8] sm:$0xff]
  %v4857 = vld [vmem:[%s5 + $0x5b0] sm:$0xff]
  %v4858 = vld [vmem:[%s5 + $0x5b8] sm:$0xff]
  %v4859 = vld [vmem:[%s5 + $0x5c0] sm:$0xff]
  %v4860 = vld [vmem:[%s5 + $0x5c8] sm:$0xff]
  %v4861 = vld [vmem:[%s5 + $0x5d0] sm:$0xff]
  %v4862 = vld [vmem:[%s5 + $0x5d8] sm:$0xff]
  %v4863 = vld [vmem:[%s5 + $0x5e0] sm:$0xff]
  %v4864 = vld [vmem:[%s5 + $0x5e8] sm:$0xff]
  %v4865 = vld [vmem:[%s5 + $0x5f0] sm:$0xff]
  %v4866 = vld [vmem:[%s5 + $0x5f8] sm:$0xff]
  %v4867 = vld [vmem:[%s6] sm:$0x3f]
  %v4869 = vlaneseq
  %v4870 = vshrl.u32 %v4869, 7
  %v4871 = vsub.s32 0, %v4870
  %v4872 = vrot.slane %v4867, %v4871
  %v4873 = vlaneseq
  %v4874 = vshrl.u32 %v4873, 7
  %v4875 = vsub.s32 1, %v4874
  %v4876 = vrot.slane %v4867, %v4875
  %v4877 = vlaneseq
  %v4878 = vshrl.u32 %v4877, 7
  %v4879 = vsub.s32 2, %v4878
  %v4880 = vrot.slane %v4867, %v4879
  %v4881 = vlaneseq
  %v4882 = vshrl.u32 %v4881, 7
  %v4883 = vsub.s32 3, %v4882
  %v4884 = vrot.slane %v4867, %v4883
  %v4885 = vlaneseq
  %v4886 = vshrl.u32 %v4885, 7
  %v4887 = vsub.s32 4, %v4886
  %v4888 = vrot.slane %v4867, %v4887
  %v4889 = vlaneseq
  %v4890 = vshrl.u32 %v4889, 7
  %v4891 = vsub.s32 5, %v4890
  %v4892 = vrot.slane %v4867, %v4891
  %4899 = vmatprep.subr.mxu0 %v4676
  %4900 = vmatpush1.msra.mxu0 %v4675
  %4901 = vmatprep.subr.mxu0 %v4682
  %4902 = vmatpush1.msra.mxu0 %v4681
  %4903 = vmatprep.subr.mxu0 %v4688
  %4904 = vmatpush1.msra.mxu0 %v4687
  %4905 = vmatprep.subr.mxu0 %v4694
  %4906 = vmatpush1.msra.mxu0 %v4693
  %4907 = vmatprep.subr.mxu0 %v4700
  %4908 = vmatpush1.msra.mxu0 %v4699
  %4909 = vmatprep.subr.mxu0 %v4706
  %4910 = vmatpush1.msra.mxu0 %v4705
  %4911 = vmatprep.subr.mxu0 %v4712
  %4912 = vmatpush1.msra.mxu0 %v4711
  %4913 = vmatprep.subr.mxu0 %v4718
  %4914 = vmatpush1.msra.mxu0 %v4717
  %4915 = vmatprep.subr.mxu0 %v4724
  %4916 = vmatpush1.msra.mxu0 %v4723
  %4917 = vmatprep.subr.mxu0 %v4730
  %4918 = vmatpush1.msra.mxu0 %v4729
  %4919 = vmatprep.subr.mxu0 %v4736
  %4920 = vmatpush1.msra.mxu0 %v4735
  %4921 = vmatprep.subr.mxu0 %v4742
  %4922 = vmatpush1.msra.mxu0 %v4741
  %4923 = vmatprep.subr.mxu0 %v4748
  %4924 = vmatpush1.msra.mxu0 %v4747
  %4925 = vmatprep.subr.mxu0 %v4754
  %4926 = vmatpush1.msra.mxu0 %v4753
  %4927 = vmatprep.subr.mxu0 %v4760
  %4928 = vmatpush1.msra.mxu0 %v4759
  %4929 = vmatprep.subr.mxu0 %v4766
  %4930 = vmatpush1.msra.mxu0 %v4765
  %4931 = vmatprep.subr.mxu0 %v4772
  %4932 = vmatpush1.msra.mxu0 %v4771
  %4933 = vmatprep.subr.mxu0 %v4778
  %4934 = vmatpush1.msra.mxu0 %v4777
  %4935 = vmatprep.subr.mxu0 %v4784
  %4936 = vmatpush1.msra.mxu0 %v4783
  %4937 = vmatprep.subr.mxu0 %v4790
  %4938 = vmatpush1.msra.mxu0 %v4789
  %4939 = vmatprep.subr.mxu0 %v4796
  %4940 = vmatpush1.msra.mxu0 %v4795
  %4941 = vmatprep.subr.mxu0 %v4802
  %4942 = vmatpush1.msra.mxu0 %v4801
  %4943 = vmatprep.subr.mxu0 %v4808
  %4944 = vmatpush1.msra.mxu0 %v4807
  %4945 = vmatprep.subr.mxu0 %v4814
  %4946 = vmatpush1.msra.mxu0 %v4813
  %4947 = vmatprep.subr.mxu0 %v4820
  %4948 = vmatpush1.msra.mxu0 %v4819
  %4949 = vmatprep.subr.mxu0 %v4826
  %4950 = vmatpush1.msra.mxu0 %v4825
  %4951 = vmatprep.subr.mxu0 %v4832
  %4952 = vmatpush1.msra.mxu0 %v4831
  %4953 = vmatprep.subr.mxu0 %v4838
  %4954 = vmatpush1.msra.mxu0 %v4837
  %4955 = vmatprep.subr.mxu0 %v4844
  %4956 = vmatpush1.msra.mxu0 %v4843
  %4957 = vmatprep.subr.mxu0 %v4850
  %4958 = vmatpush1.msra.mxu0 %v4849
  %4959 = vmatprep.subr.mxu0 %v4856
  %4960 = vmatpush1.msra.mxu0 %v4855
  %4961 = vmatprep.subr.mxu0 %v4862
  %4962 = vmatpush1.msra.mxu0 %v4861
  %4963 = vmatprep.mubr.f32.mxu0 %v4136
  %4964 = vmatmul.mubr.f32.gmra.mrb[0].mxu0 %v4135
  %v4965 = vpop.f32.mrb[0].mxu0
  %v4966 = vadd.f32 %v4872, %v4965
  %v4967 = vpop.f32.mrb[0].mxu0
  %v4968 = vadd.f32 %v4876, %v4967
  %4969 = vdwg.mxu0
  %4970 = vmatprep.subr.mxu0 %v4678
  %4971 = vmatpush1.msra.mxu0 %v4677
  %4972 = vmatprep.subr.mxu0 %v4684
  %4973 = vmatpush1.msra.mxu0 %v4683
  %4974 = vmatprep.subr.mxu0 %v4690
  %4975 = vmatpush1.msra.mxu0 %v4689
  %4976 = vmatprep.subr.mxu0 %v4696
  %4977 = vmatpush1.msra.mxu0 %v4695
  %4978 = vmatprep.subr.mxu0 %v4702
  %4979 = vmatpush1.msra.mxu0 %v4701
  %4980 = vmatprep.subr.mxu0 %v4708
  %4981 = vmatpush1.msra.mxu0 %v4707
  %4982 = vmatprep.subr.mxu0 %v4714
  %4983 = vmatpush1.msra.mxu0 %v4713
  %4984 = vmatprep.subr.mxu0 %v4720
  %4985 = vmatpush1.msra.mxu0 %v4719
  %4986 = vmatprep.subr.mxu0 %v4726
  %4987 = vmatpush1.msra.mxu0 %v4725
  %4988 = vmatprep.subr.mxu0 %v4732
  %4989 = vmatpush1.msra.mxu0 %v4731
  %4990 = vmatprep.subr.mxu0 %v4738
  %4991 = vmatpush1.msra.mxu0 %v4737
  %4992 = vmatprep.subr.mxu0 %v4744
  %4993 = vmatpush1.msra.mxu0 %v4743
  %4994 = vmatprep.subr.mxu0 %v4750
  %4995 = vmatpush1.msra.mxu0 %v4749
  %4996 = vmatprep.subr.mxu0 %v4756
  %4997 = vmatpush1.msra.mxu0 %v4755
  %4998 = vmatprep.subr.mxu0 %v4762
  %4999 = vmatpush1.msra.mxu0 %v4761
  %5000 = vmatprep.subr.mxu0 %v4768
  %5001 = vmatpush1.msra.mxu0 %v4767
  %5002 = vmatprep.subr.mxu0 %v4774
  %5003 = vmatpush1.msra.mxu0 %v4773
  %5004 = vmatprep.subr.mxu0 %v4780
  %5005 = vmatpush1.msra.mxu0 %v4779
  %5006 = vmatprep.subr.mxu0 %v4786
  %5007 = vmatpush1.msra.mxu0 %v4785
  %5008 = vmatprep.subr.mxu0 %v4792
  %5009 = vmatpush1.msra.mxu0 %v4791
  %5010 = vmatprep.subr.mxu0 %v4798
  %5011 = vmatpush1.msra.mxu0 %v4797
  %5012 = vmatprep.subr.mxu0 %v4804
  %5013 = vmatpush1.msra.mxu0 %v4803
  %5014 = vmatprep.subr.mxu0 %v4810
  %5015 = vmatpush1.msra.mxu0 %v4809
  %5016 = vmatprep.subr.mxu0 %v4816
  %5017 = vmatpush1.msra.mxu0 %v4815
  %5018 = vmatprep.subr.mxu0 %v4822
  %5019 = vmatpush1.msra.mxu0 %v4821
  %5020 = vmatprep.subr.mxu0 %v4828
  %5021 = vmatpush1.msra.mxu0 %v4827
  %5022 = vmatprep.subr.mxu0 %v4834
  %5023 = vmatpush1.msra.mxu0 %v4833
  %5024 = vmatprep.subr.mxu0 %v4840
  %5025 = vmatpush1.msra.mxu0 %v4839
  %5026 = vmatprep.subr.mxu0 %v4846
  %5027 = vmatpush1.msra.mxu0 %v4845
  %5028 = vmatprep.subr.mxu0 %v4852
  %5029 = vmatpush1.msra.mxu0 %v4851
  %5030 = vmatprep.subr.mxu0 %v4858
  %5031 = vmatpush1.msra.mxu0 %v4857
  %5032 = vmatprep.subr.mxu0 %v4864
  %5033 = vmatpush1.msra.mxu0 %v4863
  %5034 = vmatprep.mubr.f32.mxu0 %v4136
  %5035 = vmatmul.mubr.f32.gmra.mrb[0].mxu0 %v4135
  %v5036 = vpop.f32.mrb[0].mxu0
  %v5037 = vadd.f32 %v4880, %v5036
  %v5038 = vpop.f32.mrb[0].mxu0
  %v5039 = vadd.f32 %v4884, %v5038
  %5040 = vdwg.mxu0
  %5041 = vmatprep.subr.mxu0 %v4680
  %5042 = vmatpush1.msra.mxu0 %v4679
  %5043 = vmatprep.subr.mxu0 %v4686
  %5044 = vmatpush1.msra.mxu0 %v4685
  %5045 = vmatprep.subr.mxu0 %v4692
  %5046 = vmatpush1.msra.mxu0 %v4691
  %5047 = vmatprep.subr.mxu0 %v4698
  %5048 = vmatpush1.msra.mxu0 %v4697
  %5049 = vmatprep.subr.mxu0 %v4704
  %5050 = vmatpush1.msra.mxu0 %v4703
  %5051 = vmatprep.subr.mxu0 %v4710
  %5052 = vmatpush1.msra.mxu0 %v4709
  %5053 = vmatprep.subr.mxu0 %v4716
  %5054 = vmatpush1.msra.mxu0 %v4715
  %5055 = vmatprep.subr.mxu0 %v4722
  %5056 = vmatpush1.msra.mxu0 %v4721
  %5057 = vmatprep.subr.mxu0 %v4728
  %5058 = vmatpush1.msra.mxu0 %v4727
  %5059 = vmatprep.subr.mxu0 %v4734
  %5060 = vmatpush1.msra.mxu0 %v4733
  %5061 = vmatprep.subr.mxu0 %v4740
  %5062 = vmatpush1.msra.mxu0 %v4739
  %5063 = vmatprep.subr.mxu0 %v4746
  %5064 = vmatpush1.msra.mxu0 %v4745
  %5065 = vmatprep.subr.mxu0 %v4752
  %5066 = vmatpush1.msra.mxu0 %v4751
  %5067 = vmatprep.subr.mxu0 %v4758
  %5068 = vmatpush1.msra.mxu0 %v4757
  %5069 = vmatprep.subr.mxu0 %v4764
  %5070 = vmatpush1.msra.mxu0 %v4763
  %5071 = vmatprep.subr.mxu0 %v4770
  %5072 = vmatpush1.msra.mxu0 %v4769
  %5073 = vmatprep.subr.mxu0 %v4776
  %5074 = vmatpush1.msra.mxu0 %v4775
  %5075 = vmatprep.subr.mxu0 %v4782
  %5076 = vmatpush1.msra.mxu0 %v4781
  %5077 = vmatprep.subr.mxu0 %v4788
  %5078 = vmatpush1.msra.mxu0 %v4787
  %5079 = vmatprep.subr.mxu0 %v4794
  %5080 = vmatpush1.msra.mxu0 %v4793
  %5081 = vmatprep.subr.mxu0 %v4800
  %5082 = vmatpush1.msra.mxu0 %v4799
  %5083 = vmatprep.subr.mxu0 %v4806
  %5084 = vmatpush1.msra.mxu0 %v4805
  %5085 = vmatprep.subr.mxu0 %v4812
  %5086 = vmatpush1.msra.mxu0 %v4811
  %5087 = vmatprep.subr.mxu0 %v4818
  %5088 = vmatpush1.msra.mxu0 %v4817
  %5089 = vmatprep.subr.mxu0 %v4824
  %5090 = vmatpush1.msra.mxu0 %v4823
  %5091 = vmatprep.subr.mxu0 %v4830
  %5092 = vmatpush1.msra.mxu0 %v4829
  %5093 = vmatprep.subr.mxu0 %v4836
  %5094 = vmatpush1.msra.mxu0 %v4835
  %5095 = vmatprep.subr.mxu0 %v4842
  %5096 = vmatpush1.msra.mxu0 %v4841
  %5097 = vmatprep.subr.mxu0 %v4848
  %5098 = vmatpush1.msra.mxu0 %v4847
  %5099 = vmatprep.subr.mxu0 %v4854
  %5100 = vmatpush1.msra.mxu0 %v4853
  %5101 = vmatprep.subr.mxu0 %v4860
  %5102 = vmatpush1.msra.mxu0 %v4859
  %5103 = vmatprep.subr.mxu0 %v4866
  %5104 = vmatpush1.msra.mxu0 %v4865
  %5105 = vmatprep.mubr.f32.mxu0 %v4136
  %5106 = vmatmul.mubr.f32.gmra.mrb[0].mxu0 %v4135
  %v5107 = vpop.f32.mrb[0].mxu0
  %v5108 = vadd.f32 %v4888, %v5107
  %v5109 = vpop.f32.mrb[0].mxu0
  %v5110 = vadd.f32 %v4892, %v5109
  %5111 = vdwg.mxu0
  %v5112 = vadd.f32 %v4669, %v4966
  %v5113 = vadd.f32 %v4670, %v4968
  %v5114 = vadd.f32 %v4671, %v5037
  %v5115 = vadd.f32 %v4672, %v5039
  %v5116 = vxor.u32 %v5112, 2147483648
  %v5117 = vxor.u32 %v5113, 2147483648
  %v5118 = vxor.u32 %v5114, 2147483648
  %v5119 = vxor.u32 %v5115, 2147483648
  %v5120 = vmul.f32 %v5116, 1.442695
  %v5121 = vpow.pop %v5120
  %v5122 = vmul.f32 %v5117, 1.442695
  %v5123 = vpow.pop %v5122
  %v5124 = vmul.f32 %v5118, 1.442695
  %v5125 = vpow.pop %v5124
  %v5126 = vmul.f32 %v5119, 1.442695
  %v5127 = vpow.pop %v5126
  %v5128 = vadd.f32 %v5121, 1.0
  %v5129 = vadd.f32 %v5123, 1.0
  %v5130 = vadd.f32 %v5125, 1.0
  %v5131 = vadd.f32 %v5127, 1.0
  %v5132 = vrcp.pop %v5128
  %v5133 = vmul.f32 1.0, %v5132
  %v5134 = vrcp.pop %v5129
  %v5135 = vmul.f32 1.0, %v5134
  %v5136 = vrcp.pop %v5130
  %v5137 = vmul.f32 1.0, %v5136
  %v5138 = vrcp.pop %v5131
  %v5139 = vmul.f32 1.0, %v5138
  %v5140 = vmul.f32 %v5133, %v5108
  %v5141 = vmul.f32 %v5135, %v5110
  %v5142 = vadd.f32 %v4673, %v5140
  %v5143 = vadd.f32 %v4674, %v5141
  %v5144 = vtanh.pop %v5142
  %v5145 = vtanh.pop %v5143
  %v5146 = vsub.f32 1.0, %v5137
  %v5147 = vsub.f32 1.0, %v5139
  %v5148 = vmul.f32 %v5146, %v5144
  %v5149 = vmul.f32 %v5147, %v5145
  %v5150 = vmul.f32 %v5137, %v4135
  %v5151 = vmul.f32 %v5139, %v4136
  %v5152 = vadd.f32 %v5148, %v5150
  %v5153 = vadd.f32 %v5149, %v5151
  %s5154 = scalar_lea.vmem %s7, 16
  %5155 = vst [vmem:[%s5154] sm:$0xf] %v5152
  %s5156 = scalar_lea.vmem %s61, 12
  %5157 = vst [vmem:[%s5156] sm:$0xf] %v5153
  %s5158 = scalar_lea.vmem %s0, 20
  %v5159 = vld [vmem:[%s5158] sm:$0xf]
  %v5160 = vld [vmem:[%s2] sm:$0xff]
  %v5161 = vld [vmem:[%s2 + $0x8] sm:$0xff]
  %v5162 = vld [vmem:[%s2 + $0x10] sm:$0xff]
  %v5163 = vld [vmem:[%s2 + $0x18] sm:$0xff]
  %v5164 = vld [vmem:[%s2 + $0x20] sm:$0xff]
  %v5165 = vld [vmem:[%s2 + $0x28] sm:$0xff]
  %v5166 = vld [vmem:[%s2 + $0x30] sm:$0x3]
  %v5167 = vld [vmem:[%s2 + $0x38] sm:$0x3]
  %v5168 = vld [vmem:[%s2 + $0x40] sm:$0x3]
  %v5169 = vld [vmem:[%s2 + $0x48] sm:$0x3]
  %v5170 = vld [vmem:[%s2 + $0x50] sm:$0x3]
  %v5171 = vld [vmem:[%s2 + $0x58] sm:$0x3]
  %s5172 = scalar_lea.vmem %s53, 8
  %v5173 = vld [vmem:[%s5172] sm:$0xf]
  %v5174 = vld [vmem:[%s3] sm:$0xff]
  %v5175 = vld [vmem:[%s3 + $0x8] sm:$0xff]
  %v5176 = vld [vmem:[%s3 + $0x10] sm:$0xff]
  %v5177 = vld [vmem:[%s3 + $0x18] sm:$0xff]
  %v5178 = vld [vmem:[%s3 + $0x20] sm:$0xff]
  %v5179 = vld [vmem:[%s3 + $0x28] sm:$0xff]
  %v5180 = vld [vmem:[%s3 + $0x30] sm:$0x3]
  %v5181 = vld [vmem:[%s3 + $0x38] sm:$0x3]
  %v5182 = vld [vmem:[%s3 + $0x40] sm:$0x3]
  %v5183 = vld [vmem:[%s3 + $0x48] sm:$0x3]
  %v5184 = vld [vmem:[%s3 + $0x50] sm:$0x3]
  %v5185 = vld [vmem:[%s3 + $0x58] sm:$0x3]
  %v5187 = vsel %vm97, %v5173, 0
  %v5190 = vsel %vm101, %v5180, 0
  %v5193 = vsel %vm101, %v5181, 0
  %v5196 = vsel %vm101, %v5182, 0
  %v5199 = vsel %vm101, %v5183, 0
  %v5202 = vsel %vm101, %v5184, 0
  %v5205 = vsel %vm101, %v5185, 0
  %5207 = vmatprep.subr.mxu0 %v5175
  %5208 = vmatpush1.msra.mxu0 %v5174
  %5209 = vmatprep.subr.mxu0 %v5193
  %5210 = vmatpush1.msra.mxu0 %v5190
  %5211 = vmatprep.subr.mxu0 0.0
  %5212 = vmatpush1.msra.mxu0 0.0
  %5213 = vmatprep.subr.mxu0 0.0
  %5214 = vmatpush1.msra.mxu0 0.0
  %5215 = vmatprep.subr.mxu0 0.0
  %5216 = vmatpush1.msra.mxu0 0.0
  %5217 = vmatprep.subr.mxu0 0.0
  %5218 = vmatpush1.msra.mxu0 0.0
  %5219 = vmatprep.subr.mxu0 0.0
  %5220 = vmatpush1.msra.mxu0 0.0
  %5221 = vmatprep.subr.mxu0 0.0
  %5222 = vmatpush1.msra.mxu0 0.0
  %5223 = vmatprep.subr.mxu0 0.0
  %5224 = vmatpush1.msra.mxu0 0.0
  %5225 = vmatprep.subr.mxu0 0.0
  %5226 = vmatpush1.msra.mxu0 0.0
  %5227 = vmatprep.subr.mxu0 0.0
  %5228 = vmatpush1.msra.mxu0 0.0
  %5229 = vmatprep.subr.mxu0 0.0
  %5230 = vmatpush1.msra.mxu0 0.0
  %5231 = vmatprep.subr.mxu0 0.0
  %5232 = vmatpush1.msra.mxu0 0.0
  %5233 = vmatprep.subr.mxu0 0.0
  %5234 = vmatpush1.msra.mxu0 0.0
  %5235 = vmatprep.subr.mxu0 0.0
  %5236 = vmatpush1.msra.mxu0 0.0
  %5237 = vmatprep.subr.mxu0 0.0
  %5238 = vmatpush1.msra.mxu0 0.0
  %5239 = vmatprep.subr.mxu0 0.0
  %5240 = vmatpush1.msra.mxu0 0.0
  %5241 = vmatprep.subr.mxu0 0.0
  %5242 = vmatpush1.msra.mxu0 0.0
  %5243 = vmatprep.subr.mxu0 0.0
  %5244 = vmatpush1.msra.mxu0 0.0
  %5245 = vmatprep.subr.mxu0 0.0
  %5246 = vmatpush1.msra.mxu0 0.0
  %5247 = vmatprep.subr.mxu0 0.0
  %5248 = vmatpush1.msra.mxu0 0.0
  %5249 = vmatprep.subr.mxu0 0.0
  %5250 = vmatpush1.msra.mxu0 0.0
  %5251 = vmatprep.subr.mxu0 0.0
  %5252 = vmatpush1.msra.mxu0 0.0
  %5253 = vmatprep.subr.mxu0 0.0
  %5254 = vmatpush1.msra.mxu0 0.0
  %5255 = vmatprep.subr.mxu0 0.0
  %5256 = vmatpush1.msra.mxu0 0.0
  %5257 = vmatprep.subr.mxu0 0.0
  %5258 = vmatpush1.msra.mxu0 0.0
  %5259 = vmatprep.subr.mxu0 0.0
  %5260 = vmatpush1.msra.mxu0 0.0
  %5261 = vmatprep.subr.mxu0 0.0
  %5262 = vmatpush1.msra.mxu0 0.0
  %5263 = vmatprep.subr.mxu0 0.0
  %5264 = vmatpush1.msra.mxu0 0.0
  %5265 = vmatprep.subr.mxu0 0.0
  %5266 = vmatpush1.msra.mxu0 0.0
  %5267 = vmatprep.subr.mxu0 0.0
  %5268 = vmatpush1.msra.mxu0 0.0
  %5269 = vmatprep.subr.mxu0 0.0
  %5270 = vmatpush1.msra.mxu0 0.0
  %5271 = vmatprep.mubr.f32.mxu0 0.0
  %5272 = vmatmul.mubr.f32.gmra.mrb[0].mxu0 %v5187
  %v5273 = vpop.f32.mrb[0].mxu0
  %v5274 = vadd.f32 0.0, %v5273
  %v5275 = vpop.f32.mrb[0].mxu0
  %v5276 = vadd.f32 0.0, %v5275
  %5277 = vdwg.mxu0
  %5278 = vmatprep.subr.mxu0 %v5177
  %5279 = vmatpush1.msra.mxu0 %v5176
  %5280 = vmatprep.subr.mxu0 %v5199
  %5281 = vmatpush1.msra.mxu0 %v5196
  %5282 = vmatprep.subr.mxu0 0.0
  %5283 = vmatpush1.msra.mxu0 0.0
  %5284 = vmatprep.subr.mxu0 0.0
  %5285 = vmatpush1.msra.mxu0 0.0
  %5286 = vmatprep.subr.mxu0 0.0
  %5287 = vmatpush1.msra.mxu0 0.0
  %5288 = vmatprep.subr.mxu0 0.0
  %5289 = vmatpush1.msra.mxu0 0.0
  %5290 = vmatprep.subr.mxu0 0.0
  %5291 = vmatpush1.msra.mxu0 0.0
  %5292 = vmatprep.subr.mxu0 0.0
  %5293 = vmatpush1.msra.mxu0 0.0
  %5294 = vmatprep.subr.mxu0 0.0
  %5295 = vmatpush1.msra.mxu0 0.0
  %5296 = vmatprep.subr.mxu0 0.0
  %5297 = vmatpush1.msra.mxu0 0.0
  %5298 = vmatprep.subr.mxu0 0.0
  %5299 = vmatpush1.msra.mxu0 0.0
  %5300 = vmatprep.subr.mxu0 0.0
  %5301 = vmatpush1.msra.mxu0 0.0
  %5302 = vmatprep.subr.mxu0 0.0
  %5303 = vmatpush1.msra.mxu0 0.0
  %5304 = vmatprep.subr.mxu0 0.0
  %5305 = vmatpush1.msra.mxu0 0.0
  %5306 = vmatprep.subr.mxu0 0.0
  %5307 = vmatpush1.msra.mxu0 0.0
  %5308 = vmatprep.subr.mxu0 0.0
  %5309 = vmatpush1.msra.mxu0 0.0
  %5310 = vmatprep.subr.mxu0 0.0
  %5311 = vmatpush1.msra.mxu0 0.0
  %5312 = vmatprep.subr.mxu0 0.0
  %5313 = vmatpush1.msra.mxu0 0.0
  %5314 = vmatprep.subr.mxu0 0.0
  %5315 = vmatpush1.msra.mxu0 0.0
  %5316 = vmatprep.subr.mxu0 0.0
  %5317 = vmatpush1.msra.mxu0 0.0
  %5318 = vmatprep.subr.mxu0 0.0
  %5319 = vmatpush1.msra.mxu0 0.0
  %5320 = vmatprep.subr.mxu0 0.0
  %5321 = vmatpush1.msra.mxu0 0.0
  %5322 = vmatprep.subr.mxu0 0.0
  %5323 = vmatpush1.msra.mxu0 0.0
  %5324 = vmatprep.subr.mxu0 0.0
  %5325 = vmatpush1.msra.mxu0 0.0
  %5326 = vmatprep.subr.mxu0 0.0
  %5327 = vmatpush1.msra.mxu0 0.0
  %5328 = vmatprep.subr.mxu0 0.0
  %5329 = vmatpush1.msra.mxu0 0.0
  %5330 = vmatprep.subr.mxu0 0.0
  %5331 = vmatpush1.msra.mxu0 0.0
  %5332 = vmatprep.subr.mxu0 0.0
  %5333 = vmatpush1.msra.mxu0 0.0
  %5334 = vmatprep.subr.mxu0 0.0
  %5335 = vmatpush1.msra.mxu0 0.0
  %5336 = vmatprep.subr.mxu0 0.0
  %5337 = vmatpush1.msra.mxu0 0.0
  %5338 = vmatprep.subr.mxu0 0.0
  %5339 = vmatpush1.msra.mxu0 0.0
  %5340 = vmatprep.subr.mxu0 0.0
  %5341 = vmatpush1.msra.mxu0 0.0
  %5342 = vmatprep.mubr.f32.mxu0 0.0
  %5343 = vmatmul.mubr.f32.gmra.mrb[0].mxu0 %v5187
  %v5344 = vpop.f32.mrb[0].mxu0
  %v5345 = vadd.f32 0.0, %v5344
  %v5346 = vpop.f32.mrb[0].mxu0
  %v5347 = vadd.f32 0.0, %v5346
  %5348 = vdwg.mxu0
  %5349 = vmatprep.subr.mxu0 %v5179
  %5350 = vmatpush1.msra.mxu0 %v5178
  %5351 = vmatprep.subr.mxu0 %v5205
  %5352 = vmatpush1.msra.mxu0 %v5202
  %5353 = vmatprep.subr.mxu0 0.0
  %5354 = vmatpush1.msra.mxu0 0.0
  %5355 = vmatprep.subr.mxu0 0.0
  %5356 = vmatpush1.msra.mxu0 0.0
  %5357 = vmatprep.subr.mxu0 0.0
  %5358 = vmatpush1.msra.mxu0 0.0
  %5359 = vmatprep.subr.mxu0 0.0
  %5360 = vmatpush1.msra.mxu0 0.0
  %5361 = vmatprep.subr.mxu0 0.0
  %5362 = vmatpush1.msra.mxu0 0.0
  %5363 = vmatprep.subr.mxu0 0.0
  %5364 = vmatpush1.msra.mxu0 0.0
  %5365 = vmatprep.subr.mxu0 0.0
  %5366 = vmatpush1.msra.mxu0 0.0
  %5367 = vmatprep.subr.mxu0 0.0
  %5368 = vmatpush1.msra.mxu0 0.0
  %5369 = vmatprep.subr.mxu0 0.0
  %5370 = vmatpush1.msra.mxu0 0.0
  %5371 = vmatprep.subr.mxu0 0.0
  %5372 = vmatpush1.msra.mxu0 0.0
  %5373 = vmatprep.subr.mxu0 0.0
  %5374 = vmatpush1.msra.mxu0 0.0
  %5375 = vmatprep.subr.mxu0 0.0
  %5376 = vmatpush1.msra.mxu0 0.0
  %5377 = vmatprep.subr.mxu0 0.0
  %5378 = vmatpush1.msra.mxu0 0.0
  %5379 = vmatprep.subr.mxu0 0.0
  %5380 = vmatpush1.msra.mxu0 0.0
  %5381 = vmatprep.subr.mxu0 0.0
  %5382 = vmatpush1.msra.mxu0 0.0
  %5383 = vmatprep.subr.mxu0 0.0
  %5384 = vmatpush1.msra.mxu0 0.0
  %5385 = vmatprep.subr.mxu0 0.0
  %5386 = vmatpush1.msra.mxu0 0.0
  %5387 = vmatprep.subr.mxu0 0.0
  %5388 = vmatpush1.msra.mxu0 0.0
  %5389 = vmatprep.subr.mxu0 0.0
  %5390 = vmatpush1.msra.mxu0 0.0
  %5391 = vmatprep.subr.mxu0 0.0
  %5392 = vmatpush1.msra.mxu0 0.0
  %5393 = vmatprep.subr.mxu0 0.0
  %5394 = vmatpush1.msra.mxu0 0.0
  %5395 = vmatprep.subr.mxu0 0.0
  %5396 = vmatpush1.msra.mxu0 0.0
  %5397 = vmatprep.subr.mxu0 0.0
  %5398 = vmatpush1.msra.mxu0 0.0
  %5399 = vmatprep.subr.mxu0 0.0
  %5400 = vmatpush1.msra.mxu0 0.0
  %5401 = vmatprep.subr.mxu0 0.0
  %5402 = vmatpush1.msra.mxu0 0.0
  %5403 = vmatprep.subr.mxu0 0.0
  %5404 = vmatpush1.msra.mxu0 0.0
  %5405 = vmatprep.subr.mxu0 0.0
  %5406 = vmatpush1.msra.mxu0 0.0
  %5407 = vmatprep.subr.mxu0 0.0
  %5408 = vmatpush1.msra.mxu0 0.0
  %5409 = vmatprep.subr.mxu0 0.0
  %5410 = vmatpush1.msra.mxu0 0.0
  %5411 = vmatprep.subr.mxu0 0.0
  %5412 = vmatpush1.msra.mxu0 0.0
  %5413 = vmatprep.mubr.f32.mxu0 0.0
  %5414 = vmatmul.mubr.f32.gmra.mrb[0].mxu0 %v5187
  %v5415 = vpop.f32.mrb[0].mxu0
  %v5416 = vadd.f32 0.0, %v5415
  %v5417 = vpop.f32.mrb[0].mxu0
  %v5418 = vadd.f32 0.0, %v5417
  %5419 = vdwg.mxu0
  %v5421 = vsel %vm97, %v5159, 0
  %v5424 = vsel %vm101, %v5166, 0
  %v5427 = vsel %vm101, %v5167, 0
  %v5430 = vsel %vm101, %v5168, 0
  %v5433 = vsel %vm101, %v5169, 0
  %v5436 = vsel %vm101, %v5170, 0
  %v5439 = vsel %vm101, %v5171, 0
  %5441 = vmatprep.subr.mxu0 %v5161
  %5442 = vmatpush1.msra.mxu0 %v5160
  %5443 = vmatprep.subr.mxu0 %v5427
  %5444 = vmatpush1.msra.mxu0 %v5424
  %5445 = vmatprep.subr.mxu0 0.0
  %5446 = vmatpush1.msra.mxu0 0.0
  %5447 = vmatprep.subr.mxu0 0.0
  %5448 = vmatpush1.msra.mxu0 0.0
  %5449 = vmatprep.subr.mxu0 0.0
  %5450 = vmatpush1.msra.mxu0 0.0
  %5451 = vmatprep.subr.mxu0 0.0
  %5452 = vmatpush1.msra.mxu0 0.0
  %5453 = vmatprep.subr.mxu0 0.0
  %5454 = vmatpush1.msra.mxu0 0.0
  %5455 = vmatprep.subr.mxu0 0.0
  %5456 = vmatpush1.msra.mxu0 0.0
  %5457 = vmatprep.subr.mxu0 0.0
  %5458 = vmatpush1.msra.mxu0 0.0
  %5459 = vmatprep.subr.mxu0 0.0
  %5460 = vmatpush1.msra.mxu0 0.0
  %5461 = vmatprep.subr.mxu0 0.0
  %5462 = vmatpush1.msra.mxu0 0.0
  %5463 = vmatprep.subr.mxu0 0.0
  %5464 = vmatpush1.msra.mxu0 0.0
  %5465 = vmatprep.subr.mxu0 0.0
  %5466 = vmatpush1.msra.mxu0 0.0
  %5467 = vmatprep.subr.mxu0 0.0
  %5468 = vmatpush1.msra.mxu0 0.0
  %5469 = vmatprep.subr.mxu0 0.0
  %5470 = vmatpush1.msra.mxu0 0.0
  %5471 = vmatprep.subr.mxu0 0.0
  %5472 = vmatpush1.msra.mxu0 0.0
  %5473 = vmatprep.subr.mxu0 0.0
  %5474 = vmatpush1.msra.mxu0 0.0
  %5475 = vmatprep.subr.mxu0 0.0
  %5476 = vmatpush1.msra.mxu0 0.0
  %5477 = vmatprep.subr.mxu0 0.0
  %5478 = vmatpush1.msra.mxu0 0.0
  %5479 = vmatprep.subr.mxu0 0.0
  %5480 = vmatpush1.msra.mxu0 0.0
  %5481 = vmatprep.subr.mxu0 0.0
  %5482 = vmatpush1.msra.mxu0 0.0
  %5483 = vmatprep.subr.mxu0 0.0
  %5484 = vmatpush1.msra.mxu0 0.0
  %5485 = vmatprep.subr.mxu0 0.0
  %5486 = vmatpush1.msra.mxu0 0.0
  %5487 = vmatprep.subr.mxu0 0.0
  %5488 = vmatpush1.msra.mxu0 0.0
  %5489 = vmatprep.subr.mxu0 0.0
  %5490 = vmatpush1.msra.mxu0 0.0
  %5491 = vmatprep.subr.mxu0 0.0
  %5492 = vmatpush1.msra.mxu0 0.0
  %5493 = vmatprep.subr.mxu0 0.0
  %5494 = vmatpush1.msra.mxu0 0.0
  %5495 = vmatprep.subr.mxu0 0.0
  %5496 = vmatpush1.msra.mxu0 0.0
  %5497 = vmatprep.subr.mxu0 0.0
  %5498 = vmatpush1.msra.mxu0 0.0
  %5499 = vmatprep.subr.mxu0 0.0
  %5500 = vmatpush1.msra.mxu0 0.0
  %5501 = vmatprep.subr.mxu0 0.0
  %5502 = vmatpush1.msra.mxu0 0.0
  %5503 = vmatprep.subr.mxu0 0.0
  %5504 = vmatpush1.msra.mxu0 0.0
  %5505 = vmatprep.mubr.f32.mxu0 0.0
  %5506 = vmatmul.mubr.f32.gmra.mrb[0].mxu0 %v5421
  %v5507 = vpop.f32.mrb[0].mxu0
  %v5508 = vadd.f32 %v5274, %v5507
  %v5509 = vpop.f32.mrb[0].mxu0
  %v5510 = vadd.f32 %v5276, %v5509
  %5511 = vdwg.mxu0
  %5512 = vmatprep.subr.mxu0 %v5163
  %5513 = vmatpush1.msra.mxu0 %v5162
  %5514 = vmatprep.subr.mxu0 %v5433
  %5515 = vmatpush1.msra.mxu0 %v5430
  %5516 = vmatprep.subr.mxu0 0.0
  %5517 = vmatpush1.msra.mxu0 0.0
  %5518 = vmatprep.subr.mxu0 0.0
  %5519 = vmatpush1.msra.mxu0 0.0
  %5520 = vmatprep.subr.mxu0 0.0
  %5521 = vmatpush1.msra.mxu0 0.0
  %5522 = vmatprep.subr.mxu0 0.0
  %5523 = vmatpush1.msra.mxu0 0.0
  %5524 = vmatprep.subr.mxu0 0.0
  %5525 = vmatpush1.msra.mxu0 0.0
  %5526 = vmatprep.subr.mxu0 0.0
  %5527 = vmatpush1.msra.mxu0 0.0
  %5528 = vmatprep.subr.mxu0 0.0
  %5529 = vmatpush1.msra.mxu0 0.0
  %5530 = vmatprep.subr.mxu0 0.0
  %5531 = vmatpush1.msra.mxu0 0.0
  %5532 = vmatprep.subr.mxu0 0.0
  %5533 = vmatpush1.msra.mxu0 0.0
  %5534 = vmatprep.subr.mxu0 0.0
  %5535 = vmatpush1.msra.mxu0 0.0
  %5536 = vmatprep.subr.mxu0 0.0
  %5537 = vmatpush1.msra.mxu0 0.0
  %5538 = vmatprep.subr.mxu0 0.0
  %5539 = vmatpush1.msra.mxu0 0.0
  %5540 = vmatprep.subr.mxu0 0.0
  %5541 = vmatpush1.msra.mxu0 0.0
  %5542 = vmatprep.subr.mxu0 0.0
  %5543 = vmatpush1.msra.mxu0 0.0
  %5544 = vmatprep.subr.mxu0 0.0
  %5545 = vmatpush1.msra.mxu0 0.0
  %5546 = vmatprep.subr.mxu0 0.0
  %5547 = vmatpush1.msra.mxu0 0.0
  %5548 = vmatprep.subr.mxu0 0.0
  %5549 = vmatpush1.msra.mxu0 0.0
  %5550 = vmatprep.subr.mxu0 0.0
  %5551 = vmatpush1.msra.mxu0 0.0
  %5552 = vmatprep.subr.mxu0 0.0
  %5553 = vmatpush1.msra.mxu0 0.0
  %5554 = vmatprep.subr.mxu0 0.0
  %5555 = vmatpush1.msra.mxu0 0.0
  %5556 = vmatprep.subr.mxu0 0.0
  %5557 = vmatpush1.msra.mxu0 0.0
  %5558 = vmatprep.subr.mxu0 0.0
  %5559 = vmatpush1.msra.mxu0 0.0
  %5560 = vmatprep.subr.mxu0 0.0
  %5561 = vmatpush1.msra.mxu0 0.0
  %5562 = vmatprep.subr.mxu0 0.0
  %5563 = vmatpush1.msra.mxu0 0.0
  %5564 = vmatprep.subr.mxu0 0.0
  %5565 = vmatpush1.msra.mxu0 0.0
  %5566 = vmatprep.subr.mxu0 0.0
  %5567 = vmatpush1.msra.mxu0 0.0
  %5568 = vmatprep.subr.mxu0 0.0
  %5569 = vmatpush1.msra.mxu0 0.0
  %5570 = vmatprep.subr.mxu0 0.0
  %5571 = vmatpush1.msra.mxu0 0.0
  %5572 = vmatprep.subr.mxu0 0.0
  %5573 = vmatpush1.msra.mxu0 0.0
  %5574 = vmatprep.subr.mxu0 0.0
  %5575 = vmatpush1.msra.mxu0 0.0
  %5576 = vmatprep.mubr.f32.mxu0 0.0
  %5577 = vmatmul.mubr.f32.gmra.mrb[0].mxu0 %v5421
  %v5578 = vpop.f32.mrb[0].mxu0
  %v5579 = vadd.f32 %v5345, %v5578
  %v5580 = vpop.f32.mrb[0].mxu0
  %v5581 = vadd.f32 %v5347, %v5580
  %5582 = vdwg.mxu0
  %5583 = vmatprep.subr.mxu0 %v5165
  %5584 = vmatpush1.msra.mxu0 %v5164
  %5585 = vmatprep.subr.mxu0 %v5439
  %5586 = vmatpush1.msra.mxu0 %v5436
  %5587 = vmatprep.subr.mxu0 0.0
  %5588 = vmatpush1.msra.mxu0 0.0
  %5589 = vmatprep.subr.mxu0 0.0
  %5590 = vmatpush1.msra.mxu0 0.0
  %5591 = vmatprep.subr.mxu0 0.0
  %5592 = vmatpush1.msra.mxu0 0.0
  %5593 = vmatprep.subr.mxu0 0.0
  %5594 = vmatpush1.msra.mxu0 0.0
  %5595 = vmatprep.subr.mxu0 0.0
  %5596 = vmatpush1.msra.mxu0 0.0
  %5597 = vmatprep.subr.mxu0 0.0
  %5598 = vmatpush1.msra.mxu0 0.0
  %5599 = vmatprep.subr.mxu0 0.0
  %5600 = vmatpush1.msra.mxu0 0.0
  %5601 = vmatprep.subr.mxu0 0.0
  %5602 = vmatpush1.msra.mxu0 0.0
  %5603 = vmatprep.subr.mxu0 0.0
  %5604 = vmatpush1.msra.mxu0 0.0
  %5605 = vmatprep.subr.mxu0 0.0
  %5606 = vmatpush1.msra.mxu0 0.0
  %5607 = vmatprep.subr.mxu0 0.0
  %5608 = vmatpush1.msra.mxu0 0.0
  %5609 = vmatprep.subr.mxu0 0.0
  %5610 = vmatpush1.msra.mxu0 0.0
  %5611 = vmatprep.subr.mxu0 0.0
  %5612 = vmatpush1.msra.mxu0 0.0
  %5613 = vmatprep.subr.mxu0 0.0
  %5614 = vmatpush1.msra.mxu0 0.0
  %5615 = vmatprep.subr.mxu0 0.0
  %5616 = vmatpush1.msra.mxu0 0.0
  %5617 = vmatprep.subr.mxu0 0.0
  %5618 = vmatpush1.msra.mxu0 0.0
  %5619 = vmatprep.subr.mxu0 0.0
  %5620 = vmatpush1.msra.mxu0 0.0
  %5621 = vmatprep.subr.mxu0 0.0
  %5622 = vmatpush1.msra.mxu0 0.0
  %5623 = vmatprep.subr.mxu0 0.0
  %5624 = vmatpush1.msra.mxu0 0.0
  %5625 = vmatprep.subr.mxu0 0.0
  %5626 = vmatpush1.msra.mxu0 0.0
  %5627 = vmatprep.subr.mxu0 0.0
  %5628 = vmatpush1.msra.mxu0 0.0
  %5629 = vmatprep.subr.mxu0 0.0
  %5630 = vmatpush1.msra.mxu0 0.0
  %5631 = vmatprep.subr.mxu0 0.0
  %5632 = vmatpush1.msra.mxu0 0.0
  %5633 = vmatprep.subr.mxu0 0.0
  %5634 = vmatpush1.msra.mxu0 0.0
  %5635 = vmatprep.subr.mxu0 0.0
  %5636 = vmatpush1.msra.mxu0 0.0
  %5637 = vmatprep.subr.mxu0 0.0
  %5638 = vmatpush1.msra.mxu0 0.0
  %5639 = vmatprep.subr.mxu0 0.0
  %5640 = vmatpush1.msra.mxu0 0.0
  %5641 = vmatprep.subr.mxu0 0.0
  %5642 = vmatpush1.msra.mxu0 0.0
  %5643 = vmatprep.subr.mxu0 0.0
  %5644 = vmatpush1.msra.mxu0 0.0
  %5645 = vmatprep.subr.mxu0 0.0
  %5646 = vmatpush1.msra.mxu0 0.0
  %5647 = vmatprep.mubr.f32.mxu0 0.0
  %5648 = vmatmul.mubr.f32.gmra.mrb[0].mxu0 %v5421
  %v5649 = vpop.f32.mrb[0].mxu0
  %v5650 = vadd.f32 %v5416, %v5649
  %v5651 = vpop.f32.mrb[0].mxu0
  %v5652 = vadd.f32 %v5418, %v5651
  %5653 = vdwg.mxu0
  %v5654 = vld [vmem:[%s4] sm:$0x3f]
  %v5656 = vlaneseq
  %v5657 = vshrl.u32 %v5656, 7
  %v5658 = vsub.s32 0, %v5657
  %v5659 = vrot.slane %v5654, %v5658
  %v5660 = vlaneseq
  %v5661 = vshrl.u32 %v5660, 7
  %v5662 = vsub.s32 1, %v5661
  %v5663 = vrot.slane %v5654, %v5662
  %v5664 = vlaneseq
  %v5665 = vshrl.u32 %v5664, 7
  %v5666 = vsub.s32 2, %v5665
  %v5667 = vrot.slane %v5654, %v5666
  %v5668 = vlaneseq
  %v5669 = vshrl.u32 %v5668, 7
  %v5670 = vsub.s32 3, %v5669
  %v5671 = vrot.slane %v5654, %v5670
  %v5672 = vlaneseq
  %v5673 = vshrl.u32 %v5672, 7
  %v5674 = vsub.s32 4, %v5673
  %v5675 = vrot.slane %v5654, %v5674
  %v5676 = vlaneseq
  %v5677 = vshrl.u32 %v5676, 7
  %v5678 = vsub.s32 5, %v5677
  %v5679 = vrot.slane %v5654, %v5678
  %v5686 = vadd.f32 %v5508, %v5659
  %v5687 = vadd.f32 %v5510, %v5663
  %v5688 = vadd.f32 %v5579, %v5667
  %v5689 = vadd.f32 %v5581, %v5671
  %v5690 = vadd.f32 %v5650, %v5675
  %v5691 = vadd.f32 %v5652, %v5679
  %v5692 = vld [vmem:[%s5] sm:$0xff]
  %v5693 = vld [vmem:[%s5 + $0x8] sm:$0xff]
  %v5694 = vld [vmem:[%s5 + $0x10] sm:$0xff]
  %v5695 = vld [vmem:[%s5 + $0x18] sm:$0xff]
  %v5696 = vld [vmem:[%s5 + $0x20] sm:$0xff]
  %v5697 = vld [vmem:[%s5 + $0x28] sm:$0xff]
  %v5698 = vld [vmem:[%s5 + $0x30] sm:$0xff]
  %v5699 = vld [vmem:[%s5 + $0x38] sm:$0xff]
  %v5700 = vld [vmem:[%s5 + $0x40] sm:$0xff]
  %v5701 = vld [vmem:[%s5 + $0x48] sm:$0xff]
  %v5702 = vld [vmem:[%s5 + $0x50] sm:$0xff]
  %v5703 = vld [vmem:[%s5 + $0x58] sm:$0xff]
  %v5704 = vld [vmem:[%s5 + $0x60] sm:$0xff]
  %v5705 = vld [vmem:[%s5 + $0x68] sm:$0xff]
  %v5706 = vld [vmem:[%s5 + $0x70] sm:$0xff]
  %v5707 = vld [vmem:[%s5 + $0x78] sm:$0xff]
  %v5708 = vld [vmem:[%s5 + $0x80] sm:$0xff]
  %v5709 = vld [vmem:[%s5 + $0x88] sm:$0xff]
  %v5710 = vld [vmem:[%s5 + $0x90] sm:$0xff]
  %v5711 = vld [vmem:[%s5 + $0x98] sm:$0xff]
  %v5712 = vld [vmem:[%s5 + $0xa0] sm:$0xff]
  %v5713 = vld [vmem:[%s5 + $0xa8] sm:$0xff]
  %v5714 = vld [vmem:[%s5 + $0xb0] sm:$0xff]
  %v5715 = vld [vmem:[%s5 + $0xb8] sm:$0xff]
  %v5716 = vld [vmem:[%s5 + $0xc0] sm:$0xff]
  %v5717 = vld [vmem:[%s5 + $0xc8] sm:$0xff]
  %v5718 = vld [vmem:[%s5 + $0xd0] sm:$0xff]
  %v5719 = vld [vmem:[%s5 + $0xd8] sm:$0xff]
  %v5720 = vld [vmem:[%s5 + $0xe0] sm:$0xff]
  %v5721 = vld [vmem:[%s5 + $0xe8] sm:$0xff]
  %v5722 = vld [vmem:[%s5 + $0xf0] sm:$0xff]
  %v5723 = vld [vmem:[%s5 + $0xf8] sm:$0xff]
  %v5724 = vld [vmem:[%s5 + $0x100] sm:$0xff]
  %v5725 = vld [vmem:[%s5 + $0x108] sm:$0xff]
  %v5726 = vld [vmem:[%s5 + $0x110] sm:$0xff]
  %v5727 = vld [vmem:[%s5 + $0x118] sm:$0xff]
  %v5728 = vld [vmem:[%s5 + $0x120] sm:$0xff]
  %v5729 = vld [vmem:[%s5 + $0x128] sm:$0xff]
  %v5730 = vld [vmem:[%s5 + $0x130] sm:$0xff]
  %v5731 = vld [vmem:[%s5 + $0x138] sm:$0xff]
  %v5732 = vld [vmem:[%s5 + $0x140] sm:$0xff]
  %v5733 = vld [vmem:[%s5 + $0x148] sm:$0xff]
  %v5734 = vld [vmem:[%s5 + $0x150] sm:$0xff]
  %v5735 = vld [vmem:[%s5 + $0x158] sm:$0xff]
  %v5736 = vld [vmem:[%s5 + $0x160] sm:$0xff]
  %v5737 = vld [vmem:[%s5 + $0x168] sm:$0xff]
  %v5738 = vld [vmem:[%s5 + $0x170] sm:$0xff]
  %v5739 = vld [vmem:[%s5 + $0x178] sm:$0xff]
  %v5740 = vld [vmem:[%s5 + $0x180] sm:$0xff]
  %v5741 = vld [vmem:[%s5 + $0x188] sm:$0xff]
  %v5742 = vld [vmem:[%s5 + $0x190] sm:$0xff]
  %v5743 = vld [vmem:[%s5 + $0x198] sm:$0xff]
  %v5744 = vld [vmem:[%s5 + $0x1a0] sm:$0xff]
  %v5745 = vld [vmem:[%s5 + $0x1a8] sm:$0xff]
  %v5746 = vld [vmem:[%s5 + $0x1b0] sm:$0xff]
  %v5747 = vld [vmem:[%s5 + $0x1b8] sm:$0xff]
  %v5748 = vld [vmem:[%s5 + $0x1c0] sm:$0xff]
  %v5749 = vld [vmem:[%s5 + $0x1c8] sm:$0xff]
  %v5750 = vld [vmem:[%s5 + $0x1d0] sm:$0xff]
  %v5751 = vld [vmem:[%s5 + $0x1d8] sm:$0xff]
  %v5752 = vld [vmem:[%s5 + $0x1e0] sm:$0xff]
  %v5753 = vld [vmem:[%s5 + $0x1e8] sm:$0xff]
  %v5754 = vld [vmem:[%s5 + $0x1f0] sm:$0xff]
  %v5755 = vld [vmem:[%s5 + $0x1f8] sm:$0xff]
  %v5756 = vld [vmem:[%s5 + $0x200] sm:$0xff]
  %v5757 = vld [vmem:[%s5 + $0x208] sm:$0xff]
  %v5758 = vld [vmem:[%s5 + $0x210] sm:$0xff]
  %v5759 = vld [vmem:[%s5 + $0x218] sm:$0xff]
  %v5760 = vld [vmem:[%s5 + $0x220] sm:$0xff]
  %v5761 = vld [vmem:[%s5 + $0x228] sm:$0xff]
  %v5762 = vld [vmem:[%s5 + $0x230] sm:$0xff]
  %v5763 = vld [vmem:[%s5 + $0x238] sm:$0xff]
  %v5764 = vld [vmem:[%s5 + $0x240] sm:$0xff]
  %v5765 = vld [vmem:[%s5 + $0x248] sm:$0xff]
  %v5766 = vld [vmem:[%s5 + $0x250] sm:$0xff]
  %v5767 = vld [vmem:[%s5 + $0x258] sm:$0xff]
  %v5768 = vld [vmem:[%s5 + $0x260] sm:$0xff]
  %v5769 = vld [vmem:[%s5 + $0x268] sm:$0xff]
  %v5770 = vld [vmem:[%s5 + $0x270] sm:$0xff]
  %v5771 = vld [vmem:[%s5 + $0x278] sm:$0xff]
  %v5772 = vld [vmem:[%s5 + $0x280] sm:$0xff]
  %v5773 = vld [vmem:[%s5 + $0x288] sm:$0xff]
  %v5774 = vld [vmem:[%s5 + $0x290] sm:$0xff]
  %v5775 = vld [vmem:[%s5 + $0x298] sm:$0xff]
  %v5776 = vld [vmem:[%s5 + $0x2a0] sm:$0xff]
  %v5777 = vld [vmem:[%s5 + $0x2a8] sm:$0xff]
  %v5778 = vld [vmem:[%s5 + $0x2b0] sm:$0xff]
  %v5779 = vld [vmem:[%s5 + $0x2b8] sm:$0xff]
  %v5780 = vld [vmem:[%s5 + $0x2c0] sm:$0xff]
  %v5781 = vld [vmem:[%s5 + $0x2c8] sm:$0xff]
  %v5782 = vld [vmem:[%s5 + $0x2d0] sm:$0xff]
  %v5783 = vld [vmem:[%s5 + $0x2d8] sm:$0xff]
  %v5784 = vld [vmem:[%s5 + $0x2e0] sm:$0xff]
  %v5785 = vld [vmem:[%s5 + $0x2e8] sm:$0xff]
  %v5786 = vld [vmem:[%s5 + $0x2f0] sm:$0xff]
  %v5787 = vld [vmem:[%s5 + $0x2f8] sm:$0xff]
  %v5788 = vld [vmem:[%s5 + $0x300] sm:$0xff]
  %v5789 = vld [vmem:[%s5 + $0x308] sm:$0xff]
  %v5790 = vld [vmem:[%s5 + $0x310] sm:$0xff]
  %v5791 = vld [vmem:[%s5 + $0x318] sm:$0xff]
  %v5792 = vld [vmem:[%s5 + $0x320] sm:$0xff]
  %v5793 = vld [vmem:[%s5 + $0x328] sm:$0xff]
  %v5794 = vld [vmem:[%s5 + $0x330] sm:$0xff]
  %v5795 = vld [vmem:[%s5 + $0x338] sm:$0xff]
  %v5796 = vld [vmem:[%s5 + $0x340] sm:$0xff]
  %v5797 = vld [vmem:[%s5 + $0x348] sm:$0xff]
  %v5798 = vld [vmem:[%s5 + $0x350] sm:$0xff]
  %v5799 = vld [vmem:[%s5 + $0x358] sm:$0xff]
  %v5800 = vld [vmem:[%s5 + $0x360] sm:$0xff]
  %v5801 = vld [vmem:[%s5 + $0x368] sm:$0xff]
  %v5802 = vld [vmem:[%s5 + $0x370] sm:$0xff]
  %v5803 = vld [vmem:[%s5 + $0x378] sm:$0xff]
  %v5804 = vld [vmem:[%s5 + $0x380] sm:$0xff]
  %v5805 = vld [vmem:[%s5 + $0x388] sm:$0xff]
  %v5806 = vld [vmem:[%s5 + $0x390] sm:$0xff]
  %v5807 = vld [vmem:[%s5 + $0x398] sm:$0xff]
  %v5808 = vld [vmem:[%s5 + $0x3a0] sm:$0xff]
  %v5809 = vld [vmem:[%s5 + $0x3a8] sm:$0xff]
  %v5810 = vld [vmem:[%s5 + $0x3b0] sm:$0xff]
  %v5811 = vld [vmem:[%s5 + $0x3b8] sm:$0xff]
  %v5812 = vld [vmem:[%s5 + $0x3c0] sm:$0xff]
  %v5813 = vld [vmem:[%s5 + $0x3c8] sm:$0xff]
  %v5814 = vld [vmem:[%s5 + $0x3d0] sm:$0xff]
  %v5815 = vld [vmem:[%s5 + $0x3d8] sm:$0xff]
  %v5816 = vld [vmem:[%s5 + $0x3e0] sm:$0xff]
  %v5817 = vld [vmem:[%s5 + $0x3e8] sm:$0xff]
  %v5818 = vld [vmem:[%s5 + $0x3f0] sm:$0xff]
  %v5819 = vld [vmem:[%s5 + $0x3f8] sm:$0xff]
  %v5820 = vld [vmem:[%s5 + $0x400] sm:$0xff]
  %v5821 = vld [vmem:[%s5 + $0x408] sm:$0xff]
  %v5822 = vld [vmem:[%s5 + $0x410] sm:$0xff]
  %v5823 = vld [vmem:[%s5 + $0x418] sm:$0xff]
  %v5824 = vld [vmem:[%s5 + $0x420] sm:$0xff]
  %v5825 = vld [vmem:[%s5 + $0x428] sm:$0xff]
  %v5826 = vld [vmem:[%s5 + $0x430] sm:$0xff]
  %v5827 = vld [vmem:[%s5 + $0x438] sm:$0xff]
  %v5828 = vld [vmem:[%s5 + $0x440] sm:$0xff]
  %v5829 = vld [vmem:[%s5 + $0x448] sm:$0xff]
  %v5830 = vld [vmem:[%s5 + $0x450] sm:$0xff]
  %v5831 = vld [vmem:[%s5 + $0x458] sm:$0xff]
  %v5832 = vld [vmem:[%s5 + $0x460] sm:$0xff]
  %v5833 = vld [vmem:[%s5 + $0x468] sm:$0xff]
  %v5834 = vld [vmem:[%s5 + $0x470] sm:$0xff]
  %v5835 = vld [vmem:[%s5 + $0x478] sm:$0xff]
  %v5836 = vld [vmem:[%s5 + $0x480] sm:$0xff]
  %v5837 = vld [vmem:[%s5 + $0x488] sm:$0xff]
  %v5838 = vld [vmem:[%s5 + $0x490] sm:$0xff]
  %v5839 = vld [vmem:[%s5 + $0x498] sm:$0xff]
  %v5840 = vld [vmem:[%s5 + $0x4a0] sm:$0xff]
  %v5841 = vld [vmem:[%s5 + $0x4a8] sm:$0xff]
  %v5842 = vld [vmem:[%s5 + $0x4b0] sm:$0xff]
  %v5843 = vld [vmem:[%s5 + $0x4b8] sm:$0xff]
  %v5844 = vld [vmem:[%s5 + $0x4c0] sm:$0xff]
  %v5845 = vld [vmem:[%s5 + $0x4c8] sm:$0xff]
  %v5846 = vld [vmem:[%s5 + $0x4d0] sm:$0xff]
  %v5847 = vld [vmem:[%s5 + $0x4d8] sm:$0xff]
  %v5848 = vld [vmem:[%s5 + $0x4e0] sm:$0xff]
  %v5849 = vld [vmem:[%s5 + $0x4e8] sm:$0xff]
  %v5850 = vld [vmem:[%s5 + $0x4f0] sm:$0xff]
  %v5851 = vld [vmem:[%s5 + $0x4f8] sm:$0xff]
  %v5852 = vld [vmem:[%s5 + $0x500] sm:$0xff]
  %v5853 = vld [vmem:[%s5 + $0x508] sm:$0xff]
  %v5854 = vld [vmem:[%s5 + $0x510] sm:$0xff]
  %v5855 = vld [vmem:[%s5 + $0x518] sm:$0xff]
  %v5856 = vld [vmem:[%s5 + $0x520] sm:$0xff]
  %v5857 = vld [vmem:[%s5 + $0x528] sm:$0xff]
  %v5858 = vld [vmem:[%s5 + $0x530] sm:$0xff]
  %v5859 = vld [vmem:[%s5 + $0x538] sm:$0xff]
  %v5860 = vld [vmem:[%s5 + $0x540] sm:$0xff]
  %v5861 = vld [vmem:[%s5 + $0x548] sm:$0xff]
  %v5862 = vld [vmem:[%s5 + $0x550] sm:$0xff]
  %v5863 = vld [vmem:[%s5 + $0x558] sm:$0xff]
  %v5864 = vld [vmem:[%s5 + $0x560] sm:$0xff]
  %v5865 = vld [vmem:[%s5 + $0x568] sm:$0xff]
  %v5866 = vld [vmem:[%s5 + $0x570] sm:$0xff]
  %v5867 = vld [vmem:[%s5 + $0x578] sm:$0xff]
  %v5868 = vld [vmem:[%s5 + $0x580] sm:$0xff]
  %v5869 = vld [vmem:[%s5 + $0x588] sm:$0xff]
  %v5870 = vld [vmem:[%s5 + $0x590] sm:$0xff]
  %v5871 = vld [vmem:[%s5 + $0x598] sm:$0xff]
  %v5872 = vld [vmem:[%s5 + $0x5a0] sm:$0xff]
  %v5873 = vld [vmem:[%s5 + $0x5a8] sm:$0xff]
  %v5874 = vld [vmem:[%s5 + $0x5b0] sm:$0xff]
  %v5875 = vld [vmem:[%s5 + $0x5b8] sm:$0xff]
  %v5876 = vld [vmem:[%s5 + $0x5c0] sm:$0xff]
  %v5877 = vld [vmem:[%s5 + $0x5c8] sm:$0xff]
  %v5878 = vld [vmem:[%s5 + $0x5d0] sm:$0xff]
  %v5879 = vld [vmem:[%s5 + $0x5d8] sm:$0xff]
  %v5880 = vld [vmem:[%s5 + $0x5e0] sm:$0xff]
  %v5881 = vld [vmem:[%s5 + $0x5e8] sm:$0xff]
  %v5882 = vld [vmem:[%s5 + $0x5f0] sm:$0xff]
  %v5883 = vld [vmem:[%s5 + $0x5f8] sm:$0xff]
  %v5884 = vld [vmem:[%s6] sm:$0x3f]
  %v5886 = vlaneseq
  %v5887 = vshrl.u32 %v5886, 7
  %v5888 = vsub.s32 0, %v5887
  %v5889 = vrot.slane %v5884, %v5888
  %v5890 = vlaneseq
  %v5891 = vshrl.u32 %v5890, 7
  %v5892 = vsub.s32 1, %v5891
  %v5893 = vrot.slane %v5884, %v5892
  %v5894 = vlaneseq
  %v5895 = vshrl.u32 %v5894, 7
  %v5896 = vsub.s32 2, %v5895
  %v5897 = vrot.slane %v5884, %v5896
  %v5898 = vlaneseq
  %v5899 = vshrl.u32 %v5898, 7
  %v5900 = vsub.s32 3, %v5899
  %v5901 = vrot.slane %v5884, %v5900
  %v5902 = vlaneseq
  %v5903 = vshrl.u32 %v5902, 7
  %v5904 = vsub.s32 4, %v5903
  %v5905 = vrot.slane %v5884, %v5904
  %v5906 = vlaneseq
  %v5907 = vshrl.u32 %v5906, 7
  %v5908 = vsub.s32 5, %v5907
  %v5909 = vrot.slane %v5884, %v5908
  %5916 = vmatprep.subr.mxu0 %v5693
  %5917 = vmatpush1.msra.mxu0 %v5692
  %5918 = vmatprep.subr.mxu0 %v5699
  %5919 = vmatpush1.msra.mxu0 %v5698
  %5920 = vmatprep.subr.mxu0 %v5705
  %5921 = vmatpush1.msra.mxu0 %v5704
  %5922 = vmatprep.subr.mxu0 %v5711
  %5923 = vmatpush1.msra.mxu0 %v5710
  %5924 = vmatprep.subr.mxu0 %v5717
  %5925 = vmatpush1.msra.mxu0 %v5716
  %5926 = vmatprep.subr.mxu0 %v5723
  %5927 = vmatpush1.msra.mxu0 %v5722
  %5928 = vmatprep.subr.mxu0 %v5729
  %5929 = vmatpush1.msra.mxu0 %v5728
  %5930 = vmatprep.subr.mxu0 %v5735
  %5931 = vmatpush1.msra.mxu0 %v5734
  %5932 = vmatprep.subr.mxu0 %v5741
  %5933 = vmatpush1.msra.mxu0 %v5740
  %5934 = vmatprep.subr.mxu0 %v5747
  %5935 = vmatpush1.msra.mxu0 %v5746
  %5936 = vmatprep.subr.mxu0 %v5753
  %5937 = vmatpush1.msra.mxu0 %v5752
  %5938 = vmatprep.subr.mxu0 %v5759
  %5939 = vmatpush1.msra.mxu0 %v5758
  %5940 = vmatprep.subr.mxu0 %v5765
  %5941 = vmatpush1.msra.mxu0 %v5764
  %5942 = vmatprep.subr.mxu0 %v5771
  %5943 = vmatpush1.msra.mxu0 %v5770
  %5944 = vmatprep.subr.mxu0 %v5777
  %5945 = vmatpush1.msra.mxu0 %v5776
  %5946 = vmatprep.subr.mxu0 %v5783
  %5947 = vmatpush1.msra.mxu0 %v5782
  %5948 = vmatprep.subr.mxu0 %v5789
  %5949 = vmatpush1.msra.mxu0 %v5788
  %5950 = vmatprep.subr.mxu0 %v5795
  %5951 = vmatpush1.msra.mxu0 %v5794
  %5952 = vmatprep.subr.mxu0 %v5801
  %5953 = vmatpush1.msra.mxu0 %v5800
  %5954 = vmatprep.subr.mxu0 %v5807
  %5955 = vmatpush1.msra.mxu0 %v5806
  %5956 = vmatprep.subr.mxu0 %v5813
  %5957 = vmatpush1.msra.mxu0 %v5812
  %5958 = vmatprep.subr.mxu0 %v5819
  %5959 = vmatpush1.msra.mxu0 %v5818
  %5960 = vmatprep.subr.mxu0 %v5825
  %5961 = vmatpush1.msra.mxu0 %v5824
  %5962 = vmatprep.subr.mxu0 %v5831
  %5963 = vmatpush1.msra.mxu0 %v5830
  %5964 = vmatprep.subr.mxu0 %v5837
  %5965 = vmatpush1.msra.mxu0 %v5836
  %5966 = vmatprep.subr.mxu0 %v5843
  %5967 = vmatpush1.msra.mxu0 %v5842
  %5968 = vmatprep.subr.mxu0 %v5849
  %5969 = vmatpush1.msra.mxu0 %v5848
  %5970 = vmatprep.subr.mxu0 %v5855
  %5971 = vmatpush1.msra.mxu0 %v5854
  %5972 = vmatprep.subr.mxu0 %v5861
  %5973 = vmatpush1.msra.mxu0 %v5860
  %5974 = vmatprep.subr.mxu0 %v5867
  %5975 = vmatpush1.msra.mxu0 %v5866
  %5976 = vmatprep.subr.mxu0 %v5873
  %5977 = vmatpush1.msra.mxu0 %v5872
  %5978 = vmatprep.subr.mxu0 %v5879
  %5979 = vmatpush1.msra.mxu0 %v5878
  %5980 = vmatprep.mubr.f32.mxu0 %v5153
  %5981 = vmatmul.mubr.f32.gmra.mrb[0].mxu0 %v5152
  %v5982 = vpop.f32.mrb[0].mxu0
  %v5983 = vadd.f32 %v5889, %v5982
  %v5984 = vpop.f32.mrb[0].mxu0
  %v5985 = vadd.f32 %v5893, %v5984
  %5986 = vdwg.mxu0
  %5987 = vmatprep.subr.mxu0 %v5695
  %5988 = vmatpush1.msra.mxu0 %v5694
  %5989 = vmatprep.subr.mxu0 %v5701
  %5990 = vmatpush1.msra.mxu0 %v5700
  %5991 = vmatprep.subr.mxu0 %v5707
  %5992 = vmatpush1.msra.mxu0 %v5706
  %5993 = vmatprep.subr.mxu0 %v5713
  %5994 = vmatpush1.msra.mxu0 %v5712
  %5995 = vmatprep.subr.mxu0 %v5719
  %5996 = vmatpush1.msra.mxu0 %v5718
  %5997 = vmatprep.subr.mxu0 %v5725
  %5998 = vmatpush1.msra.mxu0 %v5724
  %5999 = vmatprep.subr.mxu0 %v5731
  %6000 = vmatpush1.msra.mxu0 %v5730
  %6001 = vmatprep.subr.mxu0 %v5737
  %6002 = vmatpush1.msra.mxu0 %v5736
  %6003 = vmatprep.subr.mxu0 %v5743
  %6004 = vmatpush1.msra.mxu0 %v5742
  %6005 = vmatprep.subr.mxu0 %v5749
  %6006 = vmatpush1.msra.mxu0 %v5748
  %6007 = vmatprep.subr.mxu0 %v5755
  %6008 = vmatpush1.msra.mxu0 %v5754
  %6009 = vmatprep.subr.mxu0 %v5761
  %6010 = vmatpush1.msra.mxu0 %v5760
  %6011 = vmatprep.subr.mxu0 %v5767
  %6012 = vmatpush1.msra.mxu0 %v5766
  %6013 = vmatprep.subr.mxu0 %v5773
  %6014 = vmatpush1.msra.mxu0 %v5772
  %6015 = vmatprep.subr.mxu0 %v5779
  %6016 = vmatpush1.msra.mxu0 %v5778
  %6017 = vmatprep.subr.mxu0 %v5785
  %6018 = vmatpush1.msra.mxu0 %v5784
  %6019 = vmatprep.subr.mxu0 %v5791
  %6020 = vmatpush1.msra.mxu0 %v5790
  %6021 = vmatprep.subr.mxu0 %v5797
  %6022 = vmatpush1.msra.mxu0 %v5796
  %6023 = vmatprep.subr.mxu0 %v5803
  %6024 = vmatpush1.msra.mxu0 %v5802
  %6025 = vmatprep.subr.mxu0 %v5809
  %6026 = vmatpush1.msra.mxu0 %v5808
  %6027 = vmatprep.subr.mxu0 %v5815
  %6028 = vmatpush1.msra.mxu0 %v5814
  %6029 = vmatprep.subr.mxu0 %v5821
  %6030 = vmatpush1.msra.mxu0 %v5820
  %6031 = vmatprep.subr.mxu0 %v5827
  %6032 = vmatpush1.msra.mxu0 %v5826
  %6033 = vmatprep.subr.mxu0 %v5833
  %6034 = vmatpush1.msra.mxu0 %v5832
  %6035 = vmatprep.subr.mxu0 %v5839
  %6036 = vmatpush1.msra.mxu0 %v5838
  %6037 = vmatprep.subr.mxu0 %v5845
  %6038 = vmatpush1.msra.mxu0 %v5844
  %6039 = vmatprep.subr.mxu0 %v5851
  %6040 = vmatpush1.msra.mxu0 %v5850
  %6041 = vmatprep.subr.mxu0 %v5857
  %6042 = vmatpush1.msra.mxu0 %v5856
  %6043 = vmatprep.subr.mxu0 %v5863
  %6044 = vmatpush1.msra.mxu0 %v5862
  %6045 = vmatprep.subr.mxu0 %v5869
  %6046 = vmatpush1.msra.mxu0 %v5868
  %6047 = vmatprep.subr.mxu0 %v5875
  %6048 = vmatpush1.msra.mxu0 %v5874
  %6049 = vmatprep.subr.mxu0 %v5881
  %6050 = vmatpush1.msra.mxu0 %v5880
  %6051 = vmatprep.mubr.f32.mxu0 %v5153
  %6052 = vmatmul.mubr.f32.gmra.mrb[0].mxu0 %v5152
  %v6053 = vpop.f32.mrb[0].mxu0
  %v6054 = vadd.f32 %v5897, %v6053
  %v6055 = vpop.f32.mrb[0].mxu0
  %v6056 = vadd.f32 %v5901, %v6055
  %6057 = vdwg.mxu0
  %6058 = vmatprep.subr.mxu0 %v5697
  %6059 = vmatpush1.msra.mxu0 %v5696
  %6060 = vmatprep.subr.mxu0 %v5703
  %6061 = vmatpush1.msra.mxu0 %v5702
  %6062 = vmatprep.subr.mxu0 %v5709
  %6063 = vmatpush1.msra.mxu0 %v5708
  %6064 = vmatprep.subr.mxu0 %v5715
  %6065 = vmatpush1.msra.mxu0 %v5714
  %6066 = vmatprep.subr.mxu0 %v5721
  %6067 = vmatpush1.msra.mxu0 %v5720
  %6068 = vmatprep.subr.mxu0 %v5727
  %6069 = vmatpush1.msra.mxu0 %v5726
  %6070 = vmatprep.subr.mxu0 %v5733
  %6071 = vmatpush1.msra.mxu0 %v5732
  %6072 = vmatprep.subr.mxu0 %v5739
  %6073 = vmatpush1.msra.mxu0 %v5738
  %6074 = vmatprep.subr.mxu0 %v5745
  %6075 = vmatpush1.msra.mxu0 %v5744
  %6076 = vmatprep.subr.mxu0 %v5751
  %6077 = vmatpush1.msra.mxu0 %v5750
  %6078 = vmatprep.subr.mxu0 %v5757
  %6079 = vmatpush1.msra.mxu0 %v5756
  %6080 = vmatprep.subr.mxu0 %v5763
  %6081 = vmatpush1.msra.mxu0 %v5762
  %6082 = vmatprep.subr.mxu0 %v5769
  %6083 = vmatpush1.msra.mxu0 %v5768
  %6084 = vmatprep.subr.mxu0 %v5775
  %6085 = vmatpush1.msra.mxu0 %v5774
  %6086 = vmatprep.subr.mxu0 %v5781
  %6087 = vmatpush1.msra.mxu0 %v5780
  %6088 = vmatprep.subr.mxu0 %v5787
  %6089 = vmatpush1.msra.mxu0 %v5786
  %6090 = vmatprep.subr.mxu0 %v5793
  %6091 = vmatpush1.msra.mxu0 %v5792
  %6092 = vmatprep.subr.mxu0 %v5799
  %6093 = vmatpush1.msra.mxu0 %v5798
  %6094 = vmatprep.subr.mxu0 %v5805
  %6095 = vmatpush1.msra.mxu0 %v5804
  %6096 = vmatprep.subr.mxu0 %v5811
  %6097 = vmatpush1.msra.mxu0 %v5810
  %6098 = vmatprep.subr.mxu0 %v5817
  %6099 = vmatpush1.msra.mxu0 %v5816
  %6100 = vmatprep.subr.mxu0 %v5823
  %6101 = vmatpush1.msra.mxu0 %v5822
  %6102 = vmatprep.subr.mxu0 %v5829
  %6103 = vmatpush1.msra.mxu0 %v5828
  %6104 = vmatprep.subr.mxu0 %v5835
  %6105 = vmatpush1.msra.mxu0 %v5834
  %6106 = vmatprep.subr.mxu0 %v5841
  %6107 = vmatpush1.msra.mxu0 %v5840
  %6108 = vmatprep.subr.mxu0 %v5847
  %6109 = vmatpush1.msra.mxu0 %v5846
  %6110 = vmatprep.subr.mxu0 %v5853
  %6111 = vmatpush1.msra.mxu0 %v5852
  %6112 = vmatprep.subr.mxu0 %v5859
  %6113 = vmatpush1.msra.mxu0 %v5858
  %6114 = vmatprep.subr.mxu0 %v5865
  %6115 = vmatpush1.msra.mxu0 %v5864
  %6116 = vmatprep.subr.mxu0 %v5871
  %6117 = vmatpush1.msra.mxu0 %v5870
  %6118 = vmatprep.subr.mxu0 %v5877
  %6119 = vmatpush1.msra.mxu0 %v5876
  %6120 = vmatprep.subr.mxu0 %v5883
  %6121 = vmatpush1.msra.mxu0 %v5882
  %6122 = vmatprep.mubr.f32.mxu0 %v5153
  %6123 = vmatmul.mubr.f32.gmra.mrb[0].mxu0 %v5152
  %v6124 = vpop.f32.mrb[0].mxu0
  %v6125 = vadd.f32 %v5905, %v6124
  %v6126 = vpop.f32.mrb[0].mxu0
  %v6127 = vadd.f32 %v5909, %v6126
  %6128 = vdwg.mxu0
  %v6129 = vadd.f32 %v5686, %v5983
  %v6130 = vadd.f32 %v5687, %v5985
  %v6131 = vadd.f32 %v5688, %v6054
  %v6132 = vadd.f32 %v5689, %v6056
  %v6133 = vxor.u32 %v6129, 2147483648
  %v6134 = vxor.u32 %v6130, 2147483648
  %v6135 = vxor.u32 %v6131, 2147483648
  %v6136 = vxor.u32 %v6132, 2147483648
  %v6137 = vmul.f32 %v6133, 1.442695
  %v6138 = vpow.pop %v6137
  %v6139 = vmul.f32 %v6134, 1.442695
  %v6140 = vpow.pop %v6139
  %v6141 = vmul.f32 %v6135, 1.442695
  %v6142 = vpow.pop %v6141
  %v6143 = vmul.f32 %v6136, 1.442695
  %v6144 = vpow.pop %v6143
  %v6145 = vadd.f32 %v6138, 1.0
  %v6146 = vadd.f32 %v6140, 1.0
  %v6147 = vadd.f32 %v6142, 1.0
  %v6148 = vadd.f32 %v6144, 1.0
  %v6149 = vrcp.pop %v6145
  %v6150 = vmul.f32 1.0, %v6149
  %v6151 = vrcp.pop %v6146
  %v6152 = vmul.f32 1.0, %v6151
  %v6153 = vrcp.pop %v6147
  %v6154 = vmul.f32 1.0, %v6153
  %v6155 = vrcp.pop %v6148
  %v6156 = vmul.f32 1.0, %v6155
  %v6157 = vmul.f32 %v6150, %v6125
  %v6158 = vmul.f32 %v6152, %v6127
  %v6159 = vadd.f32 %v5690, %v6157
  %v6160 = vadd.f32 %v5691, %v6158
  %v6161 = vtanh.pop %v6159
  %v6162 = vtanh.pop %v6160
  %v6163 = vsub.f32 1.0, %v6154
  %v6164 = vsub.f32 1.0, %v6156
  %v6165 = vmul.f32 %v6163, %v6161
  %v6166 = vmul.f32 %v6164, %v6162
  %v6167 = vmul.f32 %v6154, %v5152
  %v6168 = vmul.f32 %v6156, %v5153
  %v6169 = vadd.f32 %v6165, %v6167
  %v6170 = vadd.f32 %v6166, %v6168
  %s6171 = scalar_lea.vmem %s7, 20
  %6172 = vst [vmem:[%s6171] sm:$0xf] %v6169
  %s6173 = scalar_lea.vmem %s61, 8
  %6174 = vst [vmem:[%s6173] sm:$0xf] %v6170
  %s6175 = scalar_lea.vmem %s0, 24
  %v6176 = vld [vmem:[%s6175] sm:$0xf]
  %v6177 = vld [vmem:[%s2] sm:$0xff]
  %v6178 = vld [vmem:[%s2 + $0x8] sm:$0xff]
  %v6179 = vld [vmem:[%s2 + $0x10] sm:$0xff]
  %v6180 = vld [vmem:[%s2 + $0x18] sm:$0xff]
  %v6181 = vld [vmem:[%s2 + $0x20] sm:$0xff]
  %v6182 = vld [vmem:[%s2 + $0x28] sm:$0xff]
  %v6183 = vld [vmem:[%s2 + $0x30] sm:$0x3]
  %v6184 = vld [vmem:[%s2 + $0x38] sm:$0x3]
  %v6185 = vld [vmem:[%s2 + $0x40] sm:$0x3]
  %v6186 = vld [vmem:[%s2 + $0x48] sm:$0x3]
  %v6187 = vld [vmem:[%s2 + $0x50] sm:$0x3]
  %v6188 = vld [vmem:[%s2 + $0x58] sm:$0x3]
  %s6189 = scalar_lea.vmem %s53, 4
  %v6190 = vld [vmem:[%s6189] sm:$0xf]
  %v6191 = vld [vmem:[%s3] sm:$0xff]
  %v6192 = vld [vmem:[%s3 + $0x8] sm:$0xff]
  %v6193 = vld [vmem:[%s3 + $0x10] sm:$0xff]
  %v6194 = vld [vmem:[%s3 + $0x18] sm:$0xff]
  %v6195 = vld [vmem:[%s3 + $0x20] sm:$0xff]
  %v6196 = vld [vmem:[%s3 + $0x28] sm:$0xff]
  %v6197 = vld [vmem:[%s3 + $0x30] sm:$0x3]
  %v6198 = vld [vmem:[%s3 + $0x38] sm:$0x3]
  %v6199 = vld [vmem:[%s3 + $0x40] sm:$0x3]
  %v6200 = vld [vmem:[%s3 + $0x48] sm:$0x3]
  %v6201 = vld [vmem:[%s3 + $0x50] sm:$0x3]
  %v6202 = vld [vmem:[%s3 + $0x58] sm:$0x3]
  %v6204 = vsel %vm97, %v6190, 0
  %v6207 = vsel %vm101, %v6197, 0
  %v6210 = vsel %vm101, %v6198, 0
  %v6213 = vsel %vm101, %v6199, 0
  %v6216 = vsel %vm101, %v6200, 0
  %v6219 = vsel %vm101, %v6201, 0
  %v6222 = vsel %vm101, %v6202, 0
  %6224 = vmatprep.subr.mxu0 %v6192
  %6225 = vmatpush1.msra.mxu0 %v6191
  %6226 = vmatprep.subr.mxu0 %v6210
  %6227 = vmatpush1.msra.mxu0 %v6207
  %6228 = vmatprep.subr.mxu0 0.0
  %6229 = vmatpush1.msra.mxu0 0.0
  %6230 = vmatprep.subr.mxu0 0.0
  %6231 = vmatpush1.msra.mxu0 0.0
  %6232 = vmatprep.subr.mxu0 0.0
  %6233 = vmatpush1.msra.mxu0 0.0
  %6234 = vmatprep.subr.mxu0 0.0
  %6235 = vmatpush1.msra.mxu0 0.0
  %6236 = vmatprep.subr.mxu0 0.0
  %6237 = vmatpush1.msra.mxu0 0.0
  %6238 = vmatprep.subr.mxu0 0.0
  %6239 = vmatpush1.msra.mxu0 0.0
  %6240 = vmatprep.subr.mxu0 0.0
  %6241 = vmatpush1.msra.mxu0 0.0
  %6242 = vmatprep.subr.mxu0 0.0
  %6243 = vmatpush1.msra.mxu0 0.0
  %6244 = vmatprep.subr.mxu0 0.0
  %6245 = vmatpush1.msra.mxu0 0.0
  %6246 = vmatprep.subr.mxu0 0.0
  %6247 = vmatpush1.msra.mxu0 0.0
  %6248 = vmatprep.subr.mxu0 0.0
  %6249 = vmatpush1.msra.mxu0 0.0
  %6250 = vmatprep.subr.mxu0 0.0
  %6251 = vmatpush1.msra.mxu0 0.0
  %6252 = vmatprep.subr.mxu0 0.0
  %6253 = vmatpush1.msra.mxu0 0.0
  %6254 = vmatprep.subr.mxu0 0.0
  %6255 = vmatpush1.msra.mxu0 0.0
  %6256 = vmatprep.subr.mxu0 0.0
  %6257 = vmatpush1.msra.mxu0 0.0
  %6258 = vmatprep.subr.mxu0 0.0
  %6259 = vmatpush1.msra.mxu0 0.0
  %6260 = vmatprep.subr.mxu0 0.0
  %6261 = vmatpush1.msra.mxu0 0.0
  %6262 = vmatprep.subr.mxu0 0.0
  %6263 = vmatpush1.msra.mxu0 0.0
  %6264 = vmatprep.subr.mxu0 0.0
  %6265 = vmatpush1.msra.mxu0 0.0
  %6266 = vmatprep.subr.mxu0 0.0
  %6267 = vmatpush1.msra.mxu0 0.0
  %6268 = vmatprep.subr.mxu0 0.0
  %6269 = vmatpush1.msra.mxu0 0.0
  %6270 = vmatprep.subr.mxu0 0.0
  %6271 = vmatpush1.msra.mxu0 0.0
  %6272 = vmatprep.subr.mxu0 0.0
  %6273 = vmatpush1.msra.mxu0 0.0
  %6274 = vmatprep.subr.mxu0 0.0
  %6275 = vmatpush1.msra.mxu0 0.0
  %6276 = vmatprep.subr.mxu0 0.0
  %6277 = vmatpush1.msra.mxu0 0.0
  %6278 = vmatprep.subr.mxu0 0.0
  %6279 = vmatpush1.msra.mxu0 0.0
  %6280 = vmatprep.subr.mxu0 0.0
  %6281 = vmatpush1.msra.mxu0 0.0
  %6282 = vmatprep.subr.mxu0 0.0
  %6283 = vmatpush1.msra.mxu0 0.0
  %6284 = vmatprep.subr.mxu0 0.0
  %6285 = vmatpush1.msra.mxu0 0.0
  %6286 = vmatprep.subr.mxu0 0.0
  %6287 = vmatpush1.msra.mxu0 0.0
  %6288 = vmatprep.mubr.f32.mxu0 0.0
  %6289 = vmatmul.mubr.f32.gmra.mrb[0].mxu0 %v6204
  %v6290 = vpop.f32.mrb[0].mxu0
  %v6291 = vadd.f32 0.0, %v6290
  %v6292 = vpop.f32.mrb[0].mxu0
  %v6293 = vadd.f32 0.0, %v6292
  %6294 = vdwg.mxu0
  %6295 = vmatprep.subr.mxu0 %v6194
  %6296 = vmatpush1.msra.mxu0 %v6193
  %6297 = vmatprep.subr.mxu0 %v6216
  %6298 = vmatpush1.msra.mxu0 %v6213
  %6299 = vmatprep.subr.mxu0 0.0
  %6300 = vmatpush1.msra.mxu0 0.0
  %6301 = vmatprep.subr.mxu0 0.0
  %6302 = vmatpush1.msra.mxu0 0.0
  %6303 = vmatprep.subr.mxu0 0.0
  %6304 = vmatpush1.msra.mxu0 0.0
  %6305 = vmatprep.subr.mxu0 0.0
  %6306 = vmatpush1.msra.mxu0 0.0
  %6307 = vmatprep.subr.mxu0 0.0
  %6308 = vmatpush1.msra.mxu0 0.0
  %6309 = vmatprep.subr.mxu0 0.0
  %6310 = vmatpush1.msra.mxu0 0.0
  %6311 = vmatprep.subr.mxu0 0.0
  %6312 = vmatpush1.msra.mxu0 0.0
  %6313 = vmatprep.subr.mxu0 0.0
  %6314 = vmatpush1.msra.mxu0 0.0
  %6315 = vmatprep.subr.mxu0 0.0
  %6316 = vmatpush1.msra.mxu0 0.0
  %6317 = vmatprep.subr.mxu0 0.0
  %6318 = vmatpush1.msra.mxu0 0.0
  %6319 = vmatprep.subr.mxu0 0.0
  %6320 = vmatpush1.msra.mxu0 0.0
  %6321 = vmatprep.subr.mxu0 0.0
  %6322 = vmatpush1.msra.mxu0 0.0
  %6323 = vmatprep.subr.mxu0 0.0
  %6324 = vmatpush1.msra.mxu0 0.0
  %6325 = vmatprep.subr.mxu0 0.0
  %6326 = vmatpush1.msra.mxu0 0.0
  %6327 = vmatprep.subr.mxu0 0.0
  %6328 = vmatpush1.msra.mxu0 0.0
  %6329 = vmatprep.subr.mxu0 0.0
  %6330 = vmatpush1.msra.mxu0 0.0
  %6331 = vmatprep.subr.mxu0 0.0
  %6332 = vmatpush1.msra.mxu0 0.0
  %6333 = vmatprep.subr.mxu0 0.0
  %6334 = vmatpush1.msra.mxu0 0.0
  %6335 = vmatprep.subr.mxu0 0.0
  %6336 = vmatpush1.msra.mxu0 0.0
  %6337 = vmatprep.subr.mxu0 0.0
  %6338 = vmatpush1.msra.mxu0 0.0
  %6339 = vmatprep.subr.mxu0 0.0
  %6340 = vmatpush1.msra.mxu0 0.0
  %6341 = vmatprep.subr.mxu0 0.0
  %6342 = vmatpush1.msra.mxu0 0.0
  %6343 = vmatprep.subr.mxu0 0.0
  %6344 = vmatpush1.msra.mxu0 0.0
  %6345 = vmatprep.subr.mxu0 0.0
  %6346 = vmatpush1.msra.mxu0 0.0
  %6347 = vmatprep.subr.mxu0 0.0
  %6348 = vmatpush1.msra.mxu0 0.0
  %6349 = vmatprep.subr.mxu0 0.0
  %6350 = vmatpush1.msra.mxu0 0.0
  %6351 = vmatprep.subr.mxu0 0.0
  %6352 = vmatpush1.msra.mxu0 0.0
  %6353 = vmatprep.subr.mxu0 0.0
  %6354 = vmatpush1.msra.mxu0 0.0
  %6355 = vmatprep.subr.mxu0 0.0
  %6356 = vmatpush1.msra.mxu0 0.0
  %6357 = vmatprep.subr.mxu0 0.0
  %6358 = vmatpush1.msra.mxu0 0.0
  %6359 = vmatprep.mubr.f32.mxu0 0.0
  %6360 = vmatmul.mubr.f32.gmra.mrb[0].mxu0 %v6204
  %v6361 = vpop.f32.mrb[0].mxu0
  %v6362 = vadd.f32 0.0, %v6361
  %v6363 = vpop.f32.mrb[0].mxu0
  %v6364 = vadd.f32 0.0, %v6363
  %6365 = vdwg.mxu0
  %6366 = vmatprep.subr.mxu0 %v6196
  %6367 = vmatpush1.msra.mxu0 %v6195
  %6368 = vmatprep.subr.mxu0 %v6222
  %6369 = vmatpush1.msra.mxu0 %v6219
  %6370 = vmatprep.subr.mxu0 0.0
  %6371 = vmatpush1.msra.mxu0 0.0
  %6372 = vmatprep.subr.mxu0 0.0
  %6373 = vmatpush1.msra.mxu0 0.0
  %6374 = vmatprep.subr.mxu0 0.0
  %6375 = vmatpush1.msra.mxu0 0.0
  %6376 = vmatprep.subr.mxu0 0.0
  %6377 = vmatpush1.msra.mxu0 0.0
  %6378 = vmatprep.subr.mxu0 0.0
  %6379 = vmatpush1.msra.mxu0 0.0
  %6380 = vmatprep.subr.mxu0 0.0
  %6381 = vmatpush1.msra.mxu0 0.0
  %6382 = vmatprep.subr.mxu0 0.0
  %6383 = vmatpush1.msra.mxu0 0.0
  %6384 = vmatprep.subr.mxu0 0.0
  %6385 = vmatpush1.msra.mxu0 0.0
  %6386 = vmatprep.subr.mxu0 0.0
  %6387 = vmatpush1.msra.mxu0 0.0
  %6388 = vmatprep.subr.mxu0 0.0
  %6389 = vmatpush1.msra.mxu0 0.0
  %6390 = vmatprep.subr.mxu0 0.0
  %6391 = vmatpush1.msra.mxu0 0.0
  %6392 = vmatprep.subr.mxu0 0.0
  %6393 = vmatpush1.msra.mxu0 0.0
  %6394 = vmatprep.subr.mxu0 0.0
  %6395 = vmatpush1.msra.mxu0 0.0
  %6396 = vmatprep.subr.mxu0 0.0
  %6397 = vmatpush1.msra.mxu0 0.0
  %6398 = vmatprep.subr.mxu0 0.0
  %6399 = vmatpush1.msra.mxu0 0.0
  %6400 = vmatprep.subr.mxu0 0.0
  %6401 = vmatpush1.msra.mxu0 0.0
  %6402 = vmatprep.subr.mxu0 0.0
  %6403 = vmatpush1.msra.mxu0 0.0
  %6404 = vmatprep.subr.mxu0 0.0
  %6405 = vmatpush1.msra.mxu0 0.0
  %6406 = vmatprep.subr.mxu0 0.0
  %6407 = vmatpush1.msra.mxu0 0.0
  %6408 = vmatprep.subr.mxu0 0.0
  %6409 = vmatpush1.msra.mxu0 0.0
  %6410 = vmatprep.subr.mxu0 0.0
  %6411 = vmatpush1.msra.mxu0 0.0
  %6412 = vmatprep.subr.mxu0 0.0
  %6413 = vmatpush1.msra.mxu0 0.0
  %6414 = vmatprep.subr.mxu0 0.0
  %6415 = vmatpush1.msra.mxu0 0.0
  %6416 = vmatprep.subr.mxu0 0.0
  %6417 = vmatpush1.msra.mxu0 0.0
  %6418 = vmatprep.subr.mxu0 0.0
  %6419 = vmatpush1.msra.mxu0 0.0
  %6420 = vmatprep.subr.mxu0 0.0
  %6421 = vmatpush1.msra.mxu0 0.0
  %6422 = vmatprep.subr.mxu0 0.0
  %6423 = vmatpush1.msra.mxu0 0.0
  %6424 = vmatprep.subr.mxu0 0.0
  %6425 = vmatpush1.msra.mxu0 0.0
  %6426 = vmatprep.subr.mxu0 0.0
  %6427 = vmatpush1.msra.mxu0 0.0
  %6428 = vmatprep.subr.mxu0 0.0
  %6429 = vmatpush1.msra.mxu0 0.0
  %6430 = vmatprep.mubr.f32.mxu0 0.0
  %6431 = vmatmul.mubr.f32.gmra.mrb[0].mxu0 %v6204
  %v6432 = vpop.f32.mrb[0].mxu0
  %v6433 = vadd.f32 0.0, %v6432
  %v6434 = vpop.f32.mrb[0].mxu0
  %v6435 = vadd.f32 0.0, %v6434
  %6436 = vdwg.mxu0
  %v6438 = vsel %vm97, %v6176, 0
  %v6441 = vsel %vm101, %v6183, 0
  %v6444 = vsel %vm101, %v6184, 0
  %v6447 = vsel %vm101, %v6185, 0
  %v6450 = vsel %vm101, %v6186, 0
  %v6453 = vsel %vm101, %v6187, 0
  %v6456 = vsel %vm101, %v6188, 0
  %6458 = vmatprep.subr.mxu0 %v6178
  %6459 = vmatpush1.msra.mxu0 %v6177
  %6460 = vmatprep.subr.mxu0 %v6444
  %6461 = vmatpush1.msra.mxu0 %v6441
  %6462 = vmatprep.subr.mxu0 0.0
  %6463 = vmatpush1.msra.mxu0 0.0
  %6464 = vmatprep.subr.mxu0 0.0
  %6465 = vmatpush1.msra.mxu0 0.0
  %6466 = vmatprep.subr.mxu0 0.0
  %6467 = vmatpush1.msra.mxu0 0.0
  %6468 = vmatprep.subr.mxu0 0.0
  %6469 = vmatpush1.msra.mxu0 0.0
  %6470 = vmatprep.subr.mxu0 0.0
  %6471 = vmatpush1.msra.mxu0 0.0
  %6472 = vmatprep.subr.mxu0 0.0
  %6473 = vmatpush1.msra.mxu0 0.0
  %6474 = vmatprep.subr.mxu0 0.0
  %6475 = vmatpush1.msra.mxu0 0.0
  %6476 = vmatprep.subr.mxu0 0.0
  %6477 = vmatpush1.msra.mxu0 0.0
  %6478 = vmatprep.subr.mxu0 0.0
  %6479 = vmatpush1.msra.mxu0 0.0
  %6480 = vmatprep.subr.mxu0 0.0
  %6481 = vmatpush1.msra.mxu0 0.0
  %6482 = vmatprep.subr.mxu0 0.0
  %6483 = vmatpush1.msra.mxu0 0.0
  %6484 = vmatprep.subr.mxu0 0.0
  %6485 = vmatpush1.msra.mxu0 0.0
  %6486 = vmatprep.subr.mxu0 0.0
  %6487 = vmatpush1.msra.mxu0 0.0
  %6488 = vmatprep.subr.mxu0 0.0
  %6489 = vmatpush1.msra.mxu0 0.0
  %6490 = vmatprep.subr.mxu0 0.0
  %6491 = vmatpush1.msra.mxu0 0.0
  %6492 = vmatprep.subr.mxu0 0.0
  %6493 = vmatpush1.msra.mxu0 0.0
  %6494 = vmatprep.subr.mxu0 0.0
  %6495 = vmatpush1.msra.mxu0 0.0
  %6496 = vmatprep.subr.mxu0 0.0
  %6497 = vmatpush1.msra.mxu0 0.0
  %6498 = vmatprep.subr.mxu0 0.0
  %6499 = vmatpush1.msra.mxu0 0.0
  %6500 = vmatprep.subr.mxu0 0.0
  %6501 = vmatpush1.msra.mxu0 0.0
  %6502 = vmatprep.subr.mxu0 0.0
  %6503 = vmatpush1.msra.mxu0 0.0
  %6504 = vmatprep.subr.mxu0 0.0
  %6505 = vmatpush1.msra.mxu0 0.0
  %6506 = vmatprep.subr.mxu0 0.0
  %6507 = vmatpush1.msra.mxu0 0.0
  %6508 = vmatprep.subr.mxu0 0.0
  %6509 = vmatpush1.msra.mxu0 0.0
  %6510 = vmatprep.subr.mxu0 0.0
  %6511 = vmatpush1.msra.mxu0 0.0
  %6512 = vmatprep.subr.mxu0 0.0
  %6513 = vmatpush1.msra.mxu0 0.0
  %6514 = vmatprep.subr.mxu0 0.0
  %6515 = vmatpush1.msra.mxu0 0.0
  %6516 = vmatprep.subr.mxu0 0.0
  %6517 = vmatpush1.msra.mxu0 0.0
  %6518 = vmatprep.subr.mxu0 0.0
  %6519 = vmatpush1.msra.mxu0 0.0
  %6520 = vmatprep.subr.mxu0 0.0
  %6521 = vmatpush1.msra.mxu0 0.0
  %6522 = vmatprep.mubr.f32.mxu0 0.0
  %6523 = vmatmul.mubr.f32.gmra.mrb[0].mxu0 %v6438
  %v6524 = vpop.f32.mrb[0].mxu0
  %v6525 = vadd.f32 %v6291, %v6524
  %v6526 = vpop.f32.mrb[0].mxu0
  %v6527 = vadd.f32 %v6293, %v6526
  %6528 = vdwg.mxu0
  %6529 = vmatprep.subr.mxu0 %v6180
  %6530 = vmatpush1.msra.mxu0 %v6179
  %6531 = vmatprep.subr.mxu0 %v6450
  %6532 = vmatpush1.msra.mxu0 %v6447
  %6533 = vmatprep.subr.mxu0 0.0
  %6534 = vmatpush1.msra.mxu0 0.0
  %6535 = vmatprep.subr.mxu0 0.0
  %6536 = vmatpush1.msra.mxu0 0.0
  %6537 = vmatprep.subr.mxu0 0.0
  %6538 = vmatpush1.msra.mxu0 0.0
  %6539 = vmatprep.subr.mxu0 0.0
  %6540 = vmatpush1.msra.mxu0 0.0
  %6541 = vmatprep.subr.mxu0 0.0
  %6542 = vmatpush1.msra.mxu0 0.0
  %6543 = vmatprep.subr.mxu0 0.0
  %6544 = vmatpush1.msra.mxu0 0.0
  %6545 = vmatprep.subr.mxu0 0.0
  %6546 = vmatpush1.msra.mxu0 0.0
  %6547 = vmatprep.subr.mxu0 0.0
  %6548 = vmatpush1.msra.mxu0 0.0
  %6549 = vmatprep.subr.mxu0 0.0
  %6550 = vmatpush1.msra.mxu0 0.0
  %6551 = vmatprep.subr.mxu0 0.0
  %6552 = vmatpush1.msra.mxu0 0.0
  %6553 = vmatprep.subr.mxu0 0.0
  %6554 = vmatpush1.msra.mxu0 0.0
  %6555 = vmatprep.subr.mxu0 0.0
  %6556 = vmatpush1.msra.mxu0 0.0
  %6557 = vmatprep.subr.mxu0 0.0
  %6558 = vmatpush1.msra.mxu0 0.0
  %6559 = vmatprep.subr.mxu0 0.0
  %6560 = vmatpush1.msra.mxu0 0.0
  %6561 = vmatprep.subr.mxu0 0.0
  %6562 = vmatpush1.msra.mxu0 0.0
  %6563 = vmatprep.subr.mxu0 0.0
  %6564 = vmatpush1.msra.mxu0 0.0
  %6565 = vmatprep.subr.mxu0 0.0
  %6566 = vmatpush1.msra.mxu0 0.0
  %6567 = vmatprep.subr.mxu0 0.0
  %6568 = vmatpush1.msra.mxu0 0.0
  %6569 = vmatprep.subr.mxu0 0.0
  %6570 = vmatpush1.msra.mxu0 0.0
  %6571 = vmatprep.subr.mxu0 0.0
  %6572 = vmatpush1.msra.mxu0 0.0
  %6573 = vmatprep.subr.mxu0 0.0
  %6574 = vmatpush1.msra.mxu0 0.0
  %6575 = vmatprep.subr.mxu0 0.0
  %6576 = vmatpush1.msra.mxu0 0.0
  %6577 = vmatprep.subr.mxu0 0.0
  %6578 = vmatpush1.msra.mxu0 0.0
  %6579 = vmatprep.subr.mxu0 0.0
  %6580 = vmatpush1.msra.mxu0 0.0
  %6581 = vmatprep.subr.mxu0 0.0
  %6582 = vmatpush1.msra.mxu0 0.0
  %6583 = vmatprep.subr.mxu0 0.0
  %6584 = vmatpush1.msra.mxu0 0.0
  %6585 = vmatprep.subr.mxu0 0.0
  %6586 = vmatpush1.msra.mxu0 0.0
  %6587 = vmatprep.subr.mxu0 0.0
  %6588 = vmatpush1.msra.mxu0 0.0
  %6589 = vmatprep.subr.mxu0 0.0
  %6590 = vmatpush1.msra.mxu0 0.0
  %6591 = vmatprep.subr.mxu0 0.0
  %6592 = vmatpush1.msra.mxu0 0.0
  %6593 = vmatprep.mubr.f32.mxu0 0.0
  %6594 = vmatmul.mubr.f32.gmra.mrb[0].mxu0 %v6438
  %v6595 = vpop.f32.mrb[0].mxu0
  %v6596 = vadd.f32 %v6362, %v6595
  %v6597 = vpop.f32.mrb[0].mxu0
  %v6598 = vadd.f32 %v6364, %v6597
  %6599 = vdwg.mxu0
  %6600 = vmatprep.subr.mxu0 %v6182
  %6601 = vmatpush1.msra.mxu0 %v6181
  %6602 = vmatprep.subr.mxu0 %v6456
  %6603 = vmatpush1.msra.mxu0 %v6453
  %6604 = vmatprep.subr.mxu0 0.0
  %6605 = vmatpush1.msra.mxu0 0.0
  %6606 = vmatprep.subr.mxu0 0.0
  %6607 = vmatpush1.msra.mxu0 0.0
  %6608 = vmatprep.subr.mxu0 0.0
  %6609 = vmatpush1.msra.mxu0 0.0
  %6610 = vmatprep.subr.mxu0 0.0
  %6611 = vmatpush1.msra.mxu0 0.0
  %6612 = vmatprep.subr.mxu0 0.0
  %6613 = vmatpush1.msra.mxu0 0.0
  %6614 = vmatprep.subr.mxu0 0.0
  %6615 = vmatpush1.msra.mxu0 0.0
  %6616 = vmatprep.subr.mxu0 0.0
  %6617 = vmatpush1.msra.mxu0 0.0
  %6618 = vmatprep.subr.mxu0 0.0
  %6619 = vmatpush1.msra.mxu0 0.0
  %6620 = vmatprep.subr.mxu0 0.0
  %6621 = vmatpush1.msra.mxu0 0.0
  %6622 = vmatprep.subr.mxu0 0.0
  %6623 = vmatpush1.msra.mxu0 0.0
  %6624 = vmatprep.subr.mxu0 0.0
  %6625 = vmatpush1.msra.mxu0 0.0
  %6626 = vmatprep.subr.mxu0 0.0
  %6627 = vmatpush1.msra.mxu0 0.0
  %6628 = vmatprep.subr.mxu0 0.0
  %6629 = vmatpush1.msra.mxu0 0.0
  %6630 = vmatprep.subr.mxu0 0.0
  %6631 = vmatpush1.msra.mxu0 0.0
  %6632 = vmatprep.subr.mxu0 0.0
  %6633 = vmatpush1.msra.mxu0 0.0
  %6634 = vmatprep.subr.mxu0 0.0
  %6635 = vmatpush1.msra.mxu0 0.0
  %6636 = vmatprep.subr.mxu0 0.0
  %6637 = vmatpush1.msra.mxu0 0.0
  %6638 = vmatprep.subr.mxu0 0.0
  %6639 = vmatpush1.msra.mxu0 0.0
  %6640 = vmatprep.subr.mxu0 0.0
  %6641 = vmatpush1.msra.mxu0 0.0
  %6642 = vmatprep.subr.mxu0 0.0
  %6643 = vmatpush1.msra.mxu0 0.0
  %6644 = vmatprep.subr.mxu0 0.0
  %6645 = vmatpush1.msra.mxu0 0.0
  %6646 = vmatprep.subr.mxu0 0.0
  %6647 = vmatpush1.msra.mxu0 0.0
  %6648 = vmatprep.subr.mxu0 0.0
  %6649 = vmatpush1.msra.mxu0 0.0
  %6650 = vmatprep.subr.mxu0 0.0
  %6651 = vmatpush1.msra.mxu0 0.0
  %6652 = vmatprep.subr.mxu0 0.0
  %6653 = vmatpush1.msra.mxu0 0.0
  %6654 = vmatprep.subr.mxu0 0.0
  %6655 = vmatpush1.msra.mxu0 0.0
  %6656 = vmatprep.subr.mxu0 0.0
  %6657 = vmatpush1.msra.mxu0 0.0
  %6658 = vmatprep.subr.mxu0 0.0
  %6659 = vmatpush1.msra.mxu0 0.0
  %6660 = vmatprep.subr.mxu0 0.0
  %6661 = vmatpush1.msra.mxu0 0.0
  %6662 = vmatprep.subr.mxu0 0.0
  %6663 = vmatpush1.msra.mxu0 0.0
  %6664 = vmatprep.mubr.f32.mxu0 0.0
  %6665 = vmatmul.mubr.f32.gmra.mrb[0].mxu0 %v6438
  %v6666 = vpop.f32.mrb[0].mxu0
  %v6667 = vadd.f32 %v6433, %v6666
  %v6668 = vpop.f32.mrb[0].mxu0
  %v6669 = vadd.f32 %v6435, %v6668
  %6670 = vdwg.mxu0
  %v6671 = vld [vmem:[%s4] sm:$0x3f]
  %v6673 = vlaneseq
  %v6674 = vshrl.u32 %v6673, 7
  %v6675 = vsub.s32 0, %v6674
  %v6676 = vrot.slane %v6671, %v6675
  %v6677 = vlaneseq
  %v6678 = vshrl.u32 %v6677, 7
  %v6679 = vsub.s32 1, %v6678
  %v6680 = vrot.slane %v6671, %v6679
  %v6681 = vlaneseq
  %v6682 = vshrl.u32 %v6681, 7
  %v6683 = vsub.s32 2, %v6682
  %v6684 = vrot.slane %v6671, %v6683
  %v6685 = vlaneseq
  %v6686 = vshrl.u32 %v6685, 7
  %v6687 = vsub.s32 3, %v6686
  %v6688 = vrot.slane %v6671, %v6687
  %v6689 = vlaneseq
  %v6690 = vshrl.u32 %v6689, 7
  %v6691 = vsub.s32 4, %v6690
  %v6692 = vrot.slane %v6671, %v6691
  %v6693 = vlaneseq
  %v6694 = vshrl.u32 %v6693, 7
  %v6695 = vsub.s32 5, %v6694
  %v6696 = vrot.slane %v6671, %v6695
  %v6703 = vadd.f32 %v6525, %v6676
  %v6704 = vadd.f32 %v6527, %v6680
  %v6705 = vadd.f32 %v6596, %v6684
  %v6706 = vadd.f32 %v6598, %v6688
  %v6707 = vadd.f32 %v6667, %v6692
  %v6708 = vadd.f32 %v6669, %v6696
  %v6709 = vld [vmem:[%s5] sm:$0xff]
  %v6710 = vld [vmem:[%s5 + $0x8] sm:$0xff]
  %v6711 = vld [vmem:[%s5 + $0x10] sm:$0xff]
  %v6712 = vld [vmem:[%s5 + $0x18] sm:$0xff]
  %v6713 = vld [vmem:[%s5 + $0x20] sm:$0xff]
  %v6714 = vld [vmem:[%s5 + $0x28] sm:$0xff]
  %v6715 = vld [vmem:[%s5 + $0x30] sm:$0xff]
  %v6716 = vld [vmem:[%s5 + $0x38] sm:$0xff]
  %v6717 = vld [vmem:[%s5 + $0x40] sm:$0xff]
  %v6718 = vld [vmem:[%s5 + $0x48] sm:$0xff]
  %v6719 = vld [vmem:[%s5 + $0x50] sm:$0xff]
  %v6720 = vld [vmem:[%s5 + $0x58] sm:$0xff]
  %v6721 = vld [vmem:[%s5 + $0x60] sm:$0xff]
  %v6722 = vld [vmem:[%s5 + $0x68] sm:$0xff]
  %v6723 = vld [vmem:[%s5 + $0x70] sm:$0xff]
  %v6724 = vld [vmem:[%s5 + $0x78] sm:$0xff]
  %v6725 = vld [vmem:[%s5 + $0x80] sm:$0xff]
  %v6726 = vld [vmem:[%s5 + $0x88] sm:$0xff]
  %v6727 = vld [vmem:[%s5 + $0x90] sm:$0xff]
  %v6728 = vld [vmem:[%s5 + $0x98] sm:$0xff]
  %v6729 = vld [vmem:[%s5 + $0xa0] sm:$0xff]
  %v6730 = vld [vmem:[%s5 + $0xa8] sm:$0xff]
  %v6731 = vld [vmem:[%s5 + $0xb0] sm:$0xff]
  %v6732 = vld [vmem:[%s5 + $0xb8] sm:$0xff]
  %v6733 = vld [vmem:[%s5 + $0xc0] sm:$0xff]
  %v6734 = vld [vmem:[%s5 + $0xc8] sm:$0xff]
  %v6735 = vld [vmem:[%s5 + $0xd0] sm:$0xff]
  %v6736 = vld [vmem:[%s5 + $0xd8] sm:$0xff]
  %v6737 = vld [vmem:[%s5 + $0xe0] sm:$0xff]
  %v6738 = vld [vmem:[%s5 + $0xe8] sm:$0xff]
  %v6739 = vld [vmem:[%s5 + $0xf0] sm:$0xff]
  %v6740 = vld [vmem:[%s5 + $0xf8] sm:$0xff]
  %v6741 = vld [vmem:[%s5 + $0x100] sm:$0xff]
  %v6742 = vld [vmem:[%s5 + $0x108] sm:$0xff]
  %v6743 = vld [vmem:[%s5 + $0x110] sm:$0xff]
  %v6744 = vld [vmem:[%s5 + $0x118] sm:$0xff]
  %v6745 = vld [vmem:[%s5 + $0x120] sm:$0xff]
  %v6746 = vld [vmem:[%s5 + $0x128] sm:$0xff]
  %v6747 = vld [vmem:[%s5 + $0x130] sm:$0xff]
  %v6748 = vld [vmem:[%s5 + $0x138] sm:$0xff]
  %v6749 = vld [vmem:[%s5 + $0x140] sm:$0xff]
  %v6750 = vld [vmem:[%s5 + $0x148] sm:$0xff]
  %v6751 = vld [vmem:[%s5 + $0x150] sm:$0xff]
  %v6752 = vld [vmem:[%s5 + $0x158] sm:$0xff]
  %v6753 = vld [vmem:[%s5 + $0x160] sm:$0xff]
  %v6754 = vld [vmem:[%s5 + $0x168] sm:$0xff]
  %v6755 = vld [vmem:[%s5 + $0x170] sm:$0xff]
  %v6756 = vld [vmem:[%s5 + $0x178] sm:$0xff]
  %v6757 = vld [vmem:[%s5 + $0x180] sm:$0xff]
  %v6758 = vld [vmem:[%s5 + $0x188] sm:$0xff]
  %v6759 = vld [vmem:[%s5 + $0x190] sm:$0xff]
  %v6760 = vld [vmem:[%s5 + $0x198] sm:$0xff]
  %v6761 = vld [vmem:[%s5 + $0x1a0] sm:$0xff]
  %v6762 = vld [vmem:[%s5 + $0x1a8] sm:$0xff]
  %v6763 = vld [vmem:[%s5 + $0x1b0] sm:$0xff]
  %v6764 = vld [vmem:[%s5 + $0x1b8] sm:$0xff]
  %v6765 = vld [vmem:[%s5 + $0x1c0] sm:$0xff]
  %v6766 = vld [vmem:[%s5 + $0x1c8] sm:$0xff]
  %v6767 = vld [vmem:[%s5 + $0x1d0] sm:$0xff]
  %v6768 = vld [vmem:[%s5 + $0x1d8] sm:$0xff]
  %v6769 = vld [vmem:[%s5 + $0x1e0] sm:$0xff]
  %v6770 = vld [vmem:[%s5 + $0x1e8] sm:$0xff]
  %v6771 = vld [vmem:[%s5 + $0x1f0] sm:$0xff]
  %v6772 = vld [vmem:[%s5 + $0x1f8] sm:$0xff]
  %v6773 = vld [vmem:[%s5 + $0x200] sm:$0xff]
  %v6774 = vld [vmem:[%s5 + $0x208] sm:$0xff]
  %v6775 = vld [vmem:[%s5 + $0x210] sm:$0xff]
  %v6776 = vld [vmem:[%s5 + $0x218] sm:$0xff]
  %v6777 = vld [vmem:[%s5 + $0x220] sm:$0xff]
  %v6778 = vld [vmem:[%s5 + $0x228] sm:$0xff]
  %v6779 = vld [vmem:[%s5 + $0x230] sm:$0xff]
  %v6780 = vld [vmem:[%s5 + $0x238] sm:$0xff]
  %v6781 = vld [vmem:[%s5 + $0x240] sm:$0xff]
  %v6782 = vld [vmem:[%s5 + $0x248] sm:$0xff]
  %v6783 = vld [vmem:[%s5 + $0x250] sm:$0xff]
  %v6784 = vld [vmem:[%s5 + $0x258] sm:$0xff]
  %v6785 = vld [vmem:[%s5 + $0x260] sm:$0xff]
  %v6786 = vld [vmem:[%s5 + $0x268] sm:$0xff]
  %v6787 = vld [vmem:[%s5 + $0x270] sm:$0xff]
  %v6788 = vld [vmem:[%s5 + $0x278] sm:$0xff]
  %v6789 = vld [vmem:[%s5 + $0x280] sm:$0xff]
  %v6790 = vld [vmem:[%s5 + $0x288] sm:$0xff]
  %v6791 = vld [vmem:[%s5 + $0x290] sm:$0xff]
  %v6792 = vld [vmem:[%s5 + $0x298] sm:$0xff]
  %v6793 = vld [vmem:[%s5 + $0x2a0] sm:$0xff]
  %v6794 = vld [vmem:[%s5 + $0x2a8] sm:$0xff]
  %v6795 = vld [vmem:[%s5 + $0x2b0] sm:$0xff]
  %v6796 = vld [vmem:[%s5 + $0x2b8] sm:$0xff]
  %v6797 = vld [vmem:[%s5 + $0x2c0] sm:$0xff]
  %v6798 = vld [vmem:[%s5 + $0x2c8] sm:$0xff]
  %v6799 = vld [vmem:[%s5 + $0x2d0] sm:$0xff]
  %v6800 = vld [vmem:[%s5 + $0x2d8] sm:$0xff]
  %v6801 = vld [vmem:[%s5 + $0x2e0] sm:$0xff]
  %v6802 = vld [vmem:[%s5 + $0x2e8] sm:$0xff]
  %v6803 = vld [vmem:[%s5 + $0x2f0] sm:$0xff]
  %v6804 = vld [vmem:[%s5 + $0x2f8] sm:$0xff]
  %v6805 = vld [vmem:[%s5 + $0x300] sm:$0xff]
  %v6806 = vld [vmem:[%s5 + $0x308] sm:$0xff]
  %v6807 = vld [vmem:[%s5 + $0x310] sm:$0xff]
  %v6808 = vld [vmem:[%s5 + $0x318] sm:$0xff]
  %v6809 = vld [vmem:[%s5 + $0x320] sm:$0xff]
  %v6810 = vld [vmem:[%s5 + $0x328] sm:$0xff]
  %v6811 = vld [vmem:[%s5 + $0x330] sm:$0xff]
  %v6812 = vld [vmem:[%s5 + $0x338] sm:$0xff]
  %v6813 = vld [vmem:[%s5 + $0x340] sm:$0xff]
  %v6814 = vld [vmem:[%s5 + $0x348] sm:$0xff]
  %v6815 = vld [vmem:[%s5 + $0x350] sm:$0xff]
  %v6816 = vld [vmem:[%s5 + $0x358] sm:$0xff]
  %v6817 = vld [vmem:[%s5 + $0x360] sm:$0xff]
  %v6818 = vld [vmem:[%s5 + $0x368] sm:$0xff]
  %v6819 = vld [vmem:[%s5 + $0x370] sm:$0xff]
  %v6820 = vld [vmem:[%s5 + $0x378] sm:$0xff]
  %v6821 = vld [vmem:[%s5 + $0x380] sm:$0xff]
  %v6822 = vld [vmem:[%s5 + $0x388] sm:$0xff]
  %v6823 = vld [vmem:[%s5 + $0x390] sm:$0xff]
  %v6824 = vld [vmem:[%s5 + $0x398] sm:$0xff]
  %v6825 = vld [vmem:[%s5 + $0x3a0] sm:$0xff]
  %v6826 = vld [vmem:[%s5 + $0x3a8] sm:$0xff]
  %v6827 = vld [vmem:[%s5 + $0x3b0] sm:$0xff]
  %v6828 = vld [vmem:[%s5 + $0x3b8] sm:$0xff]
  %v6829 = vld [vmem:[%s5 + $0x3c0] sm:$0xff]
  %v6830 = vld [vmem:[%s5 + $0x3c8] sm:$0xff]
  %v6831 = vld [vmem:[%s5 + $0x3d0] sm:$0xff]
  %v6832 = vld [vmem:[%s5 + $0x3d8] sm:$0xff]
  %v6833 = vld [vmem:[%s5 + $0x3e0] sm:$0xff]
  %v6834 = vld [vmem:[%s5 + $0x3e8] sm:$0xff]
  %v6835 = vld [vmem:[%s5 + $0x3f0] sm:$0xff]
  %v6836 = vld [vmem:[%s5 + $0x3f8] sm:$0xff]
  %v6837 = vld [vmem:[%s5 + $0x400] sm:$0xff]
  %v6838 = vld [vmem:[%s5 + $0x408] sm:$0xff]
  %v6839 = vld [vmem:[%s5 + $0x410] sm:$0xff]
  %v6840 = vld [vmem:[%s5 + $0x418] sm:$0xff]
  %v6841 = vld [vmem:[%s5 + $0x420] sm:$0xff]
  %v6842 = vld [vmem:[%s5 + $0x428] sm:$0xff]
  %v6843 = vld [vmem:[%s5 + $0x430] sm:$0xff]
  %v6844 = vld [vmem:[%s5 + $0x438] sm:$0xff]
  %v6845 = vld [vmem:[%s5 + $0x440] sm:$0xff]
  %v6846 = vld [vmem:[%s5 + $0x448] sm:$0xff]
  %v6847 = vld [vmem:[%s5 + $0x450] sm:$0xff]
  %v6848 = vld [vmem:[%s5 + $0x458] sm:$0xff]
  %v6849 = vld [vmem:[%s5 + $0x460] sm:$0xff]
  %v6850 = vld [vmem:[%s5 + $0x468] sm:$0xff]
  %v6851 = vld [vmem:[%s5 + $0x470] sm:$0xff]
  %v6852 = vld [vmem:[%s5 + $0x478] sm:$0xff]
  %v6853 = vld [vmem:[%s5 + $0x480] sm:$0xff]
  %v6854 = vld [vmem:[%s5 + $0x488] sm:$0xff]
  %v6855 = vld [vmem:[%s5 + $0x490] sm:$0xff]
  %v6856 = vld [vmem:[%s5 + $0x498] sm:$0xff]
  %v6857 = vld [vmem:[%s5 + $0x4a0] sm:$0xff]
  %v6858 = vld [vmem:[%s5 + $0x4a8] sm:$0xff]
  %v6859 = vld [vmem:[%s5 + $0x4b0] sm:$0xff]
  %v6860 = vld [vmem:[%s5 + $0x4b8] sm:$0xff]
  %v6861 = vld [vmem:[%s5 + $0x4c0] sm:$0xff]
  %v6862 = vld [vmem:[%s5 + $0x4c8] sm:$0xff]
  %v6863 = vld [vmem:[%s5 + $0x4d0] sm:$0xff]
  %v6864 = vld [vmem:[%s5 + $0x4d8] sm:$0xff]
  %v6865 = vld [vmem:[%s5 + $0x4e0] sm:$0xff]
  %v6866 = vld [vmem:[%s5 + $0x4e8] sm:$0xff]
  %v6867 = vld [vmem:[%s5 + $0x4f0] sm:$0xff]
  %v6868 = vld [vmem:[%s5 + $0x4f8] sm:$0xff]
  %v6869 = vld [vmem:[%s5 + $0x500] sm:$0xff]
  %v6870 = vld [vmem:[%s5 + $0x508] sm:$0xff]
  %v6871 = vld [vmem:[%s5 + $0x510] sm:$0xff]
  %v6872 = vld [vmem:[%s5 + $0x518] sm:$0xff]
  %v6873 = vld [vmem:[%s5 + $0x520] sm:$0xff]
  %v6874 = vld [vmem:[%s5 + $0x528] sm:$0xff]
  %v6875 = vld [vmem:[%s5 + $0x530] sm:$0xff]
  %v6876 = vld [vmem:[%s5 + $0x538] sm:$0xff]
  %v6877 = vld [vmem:[%s5 + $0x540] sm:$0xff]
  %v6878 = vld [vmem:[%s5 + $0x548] sm:$0xff]
  %v6879 = vld [vmem:[%s5 + $0x550] sm:$0xff]
  %v6880 = vld [vmem:[%s5 + $0x558] sm:$0xff]
  %v6881 = vld [vmem:[%s5 + $0x560] sm:$0xff]
  %v6882 = vld [vmem:[%s5 + $0x568] sm:$0xff]
  %v6883 = vld [vmem:[%s5 + $0x570] sm:$0xff]
  %v6884 = vld [vmem:[%s5 + $0x578] sm:$0xff]
  %v6885 = vld [vmem:[%s5 + $0x580] sm:$0xff]
  %v6886 = vld [vmem:[%s5 + $0x588] sm:$0xff]
  %v6887 = vld [vmem:[%s5 + $0x590] sm:$0xff]
  %v6888 = vld [vmem:[%s5 + $0x598] sm:$0xff]
  %v6889 = vld [vmem:[%s5 + $0x5a0] sm:$0xff]
  %v6890 = vld [vmem:[%s5 + $0x5a8] sm:$0xff]
  %v6891 = vld [vmem:[%s5 + $0x5b0] sm:$0xff]
  %v6892 = vld [vmem:[%s5 + $0x5b8] sm:$0xff]
  %v6893 = vld [vmem:[%s5 + $0x5c0] sm:$0xff]
  %v6894 = vld [vmem:[%s5 + $0x5c8] sm:$0xff]
  %v6895 = vld [vmem:[%s5 + $0x5d0] sm:$0xff]
  %v6896 = vld [vmem:[%s5 + $0x5d8] sm:$0xff]
  %v6897 = vld [vmem:[%s5 + $0x5e0] sm:$0xff]
  %v6898 = vld [vmem:[%s5 + $0x5e8] sm:$0xff]
  %v6899 = vld [vmem:[%s5 + $0x5f0] sm:$0xff]
  %v6900 = vld [vmem:[%s5 + $0x5f8] sm:$0xff]
  %v6901 = vld [vmem:[%s6] sm:$0x3f]
  %v6903 = vlaneseq
  %v6904 = vshrl.u32 %v6903, 7
  %v6905 = vsub.s32 0, %v6904
  %v6906 = vrot.slane %v6901, %v6905
  %v6907 = vlaneseq
  %v6908 = vshrl.u32 %v6907, 7
  %v6909 = vsub.s32 1, %v6908
  %v6910 = vrot.slane %v6901, %v6909
  %v6911 = vlaneseq
  %v6912 = vshrl.u32 %v6911, 7
  %v6913 = vsub.s32 2, %v6912
  %v6914 = vrot.slane %v6901, %v6913
  %v6915 = vlaneseq
  %v6916 = vshrl.u32 %v6915, 7
  %v6917 = vsub.s32 3, %v6916
  %v6918 = vrot.slane %v6901, %v6917
  %v6919 = vlaneseq
  %v6920 = vshrl.u32 %v6919, 7
  %v6921 = vsub.s32 4, %v6920
  %v6922 = vrot.slane %v6901, %v6921
  %v6923 = vlaneseq
  %v6924 = vshrl.u32 %v6923, 7
  %v6925 = vsub.s32 5, %v6924
  %v6926 = vrot.slane %v6901, %v6925
  %6933 = vmatprep.subr.mxu0 %v6710
  %6934 = vmatpush1.msra.mxu0 %v6709
  %6935 = vmatprep.subr.mxu0 %v6716
  %6936 = vmatpush1.msra.mxu0 %v6715
  %6937 = vmatprep.subr.mxu0 %v6722
  %6938 = vmatpush1.msra.mxu0 %v6721
  %6939 = vmatprep.subr.mxu0 %v6728
  %6940 = vmatpush1.msra.mxu0 %v6727
  %6941 = vmatprep.subr.mxu0 %v6734
  %6942 = vmatpush1.msra.mxu0 %v6733
  %6943 = vmatprep.subr.mxu0 %v6740
  %6944 = vmatpush1.msra.mxu0 %v6739
  %6945 = vmatprep.subr.mxu0 %v6746
  %6946 = vmatpush1.msra.mxu0 %v6745
  %6947 = vmatprep.subr.mxu0 %v6752
  %6948 = vmatpush1.msra.mxu0 %v6751
  %6949 = vmatprep.subr.mxu0 %v6758
  %6950 = vmatpush1.msra.mxu0 %v6757
  %6951 = vmatprep.subr.mxu0 %v6764
  %6952 = vmatpush1.msra.mxu0 %v6763
  %6953 = vmatprep.subr.mxu0 %v6770
  %6954 = vmatpush1.msra.mxu0 %v6769
  %6955 = vmatprep.subr.mxu0 %v6776
  %6956 = vmatpush1.msra.mxu0 %v6775
  %6957 = vmatprep.subr.mxu0 %v6782
  %6958 = vmatpush1.msra.mxu0 %v6781
  %6959 = vmatprep.subr.mxu0 %v6788
  %6960 = vmatpush1.msra.mxu0 %v6787
  %6961 = vmatprep.subr.mxu0 %v6794
  %6962 = vmatpush1.msra.mxu0 %v6793
  %6963 = vmatprep.subr.mxu0 %v6800
  %6964 = vmatpush1.msra.mxu0 %v6799
  %6965 = vmatprep.subr.mxu0 %v6806
  %6966 = vmatpush1.msra.mxu0 %v6805
  %6967 = vmatprep.subr.mxu0 %v6812
  %6968 = vmatpush1.msra.mxu0 %v6811
  %6969 = vmatprep.subr.mxu0 %v6818
  %6970 = vmatpush1.msra.mxu0 %v6817
  %6971 = vmatprep.subr.mxu0 %v6824
  %6972 = vmatpush1.msra.mxu0 %v6823
  %6973 = vmatprep.subr.mxu0 %v6830
  %6974 = vmatpush1.msra.mxu0 %v6829
  %6975 = vmatprep.subr.mxu0 %v6836
  %6976 = vmatpush1.msra.mxu0 %v6835
  %6977 = vmatprep.subr.mxu0 %v6842
  %6978 = vmatpush1.msra.mxu0 %v6841
  %6979 = vmatprep.subr.mxu0 %v6848
  %6980 = vmatpush1.msra.mxu0 %v6847
  %6981 = vmatprep.subr.mxu0 %v6854
  %6982 = vmatpush1.msra.mxu0 %v6853
  %6983 = vmatprep.subr.mxu0 %v6860
  %6984 = vmatpush1.msra.mxu0 %v6859
  %6985 = vmatprep.subr.mxu0 %v6866
  %6986 = vmatpush1.msra.mxu0 %v6865
  %6987 = vmatprep.subr.mxu0 %v6872
  %6988 = vmatpush1.msra.mxu0 %v6871
  %6989 = vmatprep.subr.mxu0 %v6878
  %6990 = vmatpush1.msra.mxu0 %v6877
  %6991 = vmatprep.subr.mxu0 %v6884
  %6992 = vmatpush1.msra.mxu0 %v6883
  %6993 = vmatprep.subr.mxu0 %v6890
  %6994 = vmatpush1.msra.mxu0 %v6889
  %6995 = vmatprep.subr.mxu0 %v6896
  %6996 = vmatpush1.msra.mxu0 %v6895
  %6997 = vmatprep.mubr.f32.mxu0 %v6170
  %6998 = vmatmul.mubr.f32.gmra.mrb[0].mxu0 %v6169
  %v6999 = vpop.f32.mrb[0].mxu0
  %v7000 = vadd.f32 %v6906, %v6999
  %v7001 = vpop.f32.mrb[0].mxu0
  %v7002 = vadd.f32 %v6910, %v7001
  %7003 = vdwg.mxu0
  %7004 = vmatprep.subr.mxu0 %v6712
  %7005 = vmatpush1.msra.mxu0 %v6711
  %7006 = vmatprep.subr.mxu0 %v6718
  %7007 = vmatpush1.msra.mxu0 %v6717
  %7008 = vmatprep.subr.mxu0 %v6724
  %7009 = vmatpush1.msra.mxu0 %v6723
  %7010 = vmatprep.subr.mxu0 %v6730
  %7011 = vmatpush1.msra.mxu0 %v6729
  %7012 = vmatprep.subr.mxu0 %v6736
  %7013 = vmatpush1.msra.mxu0 %v6735
  %7014 = vmatprep.subr.mxu0 %v6742
  %7015 = vmatpush1.msra.mxu0 %v6741
  %7016 = vmatprep.subr.mxu0 %v6748
  %7017 = vmatpush1.msra.mxu0 %v6747
  %7018 = vmatprep.subr.mxu0 %v6754
  %7019 = vmatpush1.msra.mxu0 %v6753
  %7020 = vmatprep.subr.mxu0 %v6760
  %7021 = vmatpush1.msra.mxu0 %v6759
  %7022 = vmatprep.subr.mxu0 %v6766
  %7023 = vmatpush1.msra.mxu0 %v6765
  %7024 = vmatprep.subr.mxu0 %v6772
  %7025 = vmatpush1.msra.mxu0 %v6771
  %7026 = vmatprep.subr.mxu0 %v6778
  %7027 = vmatpush1.msra.mxu0 %v6777
  %7028 = vmatprep.subr.mxu0 %v6784
  %7029 = vmatpush1.msra.mxu0 %v6783
  %7030 = vmatprep.subr.mxu0 %v6790
  %7031 = vmatpush1.msra.mxu0 %v6789
  %7032 = vmatprep.subr.mxu0 %v6796
  %7033 = vmatpush1.msra.mxu0 %v6795
  %7034 = vmatprep.subr.mxu0 %v6802
  %7035 = vmatpush1.msra.mxu0 %v6801
  %7036 = vmatprep.subr.mxu0 %v6808
  %7037 = vmatpush1.msra.mxu0 %v6807
  %7038 = vmatprep.subr.mxu0 %v6814
  %7039 = vmatpush1.msra.mxu0 %v6813
  %7040 = vmatprep.subr.mxu0 %v6820
  %7041 = vmatpush1.msra.mxu0 %v6819
  %7042 = vmatprep.subr.mxu0 %v6826
  %7043 = vmatpush1.msra.mxu0 %v6825
  %7044 = vmatprep.subr.mxu0 %v6832
  %7045 = vmatpush1.msra.mxu0 %v6831
  %7046 = vmatprep.subr.mxu0 %v6838
  %7047 = vmatpush1.msra.mxu0 %v6837
  %7048 = vmatprep.subr.mxu0 %v6844
  %7049 = vmatpush1.msra.mxu0 %v6843
  %7050 = vmatprep.subr.mxu0 %v6850
  %7051 = vmatpush1.msra.mxu0 %v6849
  %7052 = vmatprep.subr.mxu0 %v6856
  %7053 = vmatpush1.msra.mxu0 %v6855
  %7054 = vmatprep.subr.mxu0 %v6862
  %7055 = vmatpush1.msra.mxu0 %v6861
  %7056 = vmatprep.subr.mxu0 %v6868
  %7057 = vmatpush1.msra.mxu0 %v6867
  %7058 = vmatprep.subr.mxu0 %v6874
  %7059 = vmatpush1.msra.mxu0 %v6873
  %7060 = vmatprep.subr.mxu0 %v6880
  %7061 = vmatpush1.msra.mxu0 %v6879
  %7062 = vmatprep.subr.mxu0 %v6886
  %7063 = vmatpush1.msra.mxu0 %v6885
  %7064 = vmatprep.subr.mxu0 %v6892
  %7065 = vmatpush1.msra.mxu0 %v6891
  %7066 = vmatprep.subr.mxu0 %v6898
  %7067 = vmatpush1.msra.mxu0 %v6897
  %7068 = vmatprep.mubr.f32.mxu0 %v6170
  %7069 = vmatmul.mubr.f32.gmra.mrb[0].mxu0 %v6169
  %v7070 = vpop.f32.mrb[0].mxu0
  %v7071 = vadd.f32 %v6914, %v7070
  %v7072 = vpop.f32.mrb[0].mxu0
  %v7073 = vadd.f32 %v6918, %v7072
  %7074 = vdwg.mxu0
  %7075 = vmatprep.subr.mxu0 %v6714
  %7076 = vmatpush1.msra.mxu0 %v6713
  %7077 = vmatprep.subr.mxu0 %v6720
  %7078 = vmatpush1.msra.mxu0 %v6719
  %7079 = vmatprep.subr.mxu0 %v6726
  %7080 = vmatpush1.msra.mxu0 %v6725
  %7081 = vmatprep.subr.mxu0 %v6732
  %7082 = vmatpush1.msra.mxu0 %v6731
  %7083 = vmatprep.subr.mxu0 %v6738
  %7084 = vmatpush1.msra.mxu0 %v6737
  %7085 = vmatprep.subr.mxu0 %v6744
  %7086 = vmatpush1.msra.mxu0 %v6743
  %7087 = vmatprep.subr.mxu0 %v6750
  %7088 = vmatpush1.msra.mxu0 %v6749
  %7089 = vmatprep.subr.mxu0 %v6756
  %7090 = vmatpush1.msra.mxu0 %v6755
  %7091 = vmatprep.subr.mxu0 %v6762
  %7092 = vmatpush1.msra.mxu0 %v6761
  %7093 = vmatprep.subr.mxu0 %v6768
  %7094 = vmatpush1.msra.mxu0 %v6767
  %7095 = vmatprep.subr.mxu0 %v6774
  %7096 = vmatpush1.msra.mxu0 %v6773
  %7097 = vmatprep.subr.mxu0 %v6780
  %7098 = vmatpush1.msra.mxu0 %v6779
  %7099 = vmatprep.subr.mxu0 %v6786
  %7100 = vmatpush1.msra.mxu0 %v6785
  %7101 = vmatprep.subr.mxu0 %v6792
  %7102 = vmatpush1.msra.mxu0 %v6791
  %7103 = vmatprep.subr.mxu0 %v6798
  %7104 = vmatpush1.msra.mxu0 %v6797
  %7105 = vmatprep.subr.mxu0 %v6804
  %7106 = vmatpush1.msra.mxu0 %v6803
  %7107 = vmatprep.subr.mxu0 %v6810
  %7108 = vmatpush1.msra.mxu0 %v6809
  %7109 = vmatprep.subr.mxu0 %v6816
  %7110 = vmatpush1.msra.mxu0 %v6815
  %7111 = vmatprep.subr.mxu0 %v6822
  %7112 = vmatpush1.msra.mxu0 %v6821
  %7113 = vmatprep.subr.mxu0 %v6828
  %7114 = vmatpush1.msra.mxu0 %v6827
  %7115 = vmatprep.subr.mxu0 %v6834
  %7116 = vmatpush1.msra.mxu0 %v6833
  %7117 = vmatprep.subr.mxu0 %v6840
  %7118 = vmatpush1.msra.mxu0 %v6839
  %7119 = vmatprep.subr.mxu0 %v6846
  %7120 = vmatpush1.msra.mxu0 %v6845
  %7121 = vmatprep.subr.mxu0 %v6852
  %7122 = vmatpush1.msra.mxu0 %v6851
  %7123 = vmatprep.subr.mxu0 %v6858
  %7124 = vmatpush1.msra.mxu0 %v6857
  %7125 = vmatprep.subr.mxu0 %v6864
  %7126 = vmatpush1.msra.mxu0 %v6863
  %7127 = vmatprep.subr.mxu0 %v6870
  %7128 = vmatpush1.msra.mxu0 %v6869
  %7129 = vmatprep.subr.mxu0 %v6876
  %7130 = vmatpush1.msra.mxu0 %v6875
  %7131 = vmatprep.subr.mxu0 %v6882
  %7132 = vmatpush1.msra.mxu0 %v6881
  %7133 = vmatprep.subr.mxu0 %v6888
  %7134 = vmatpush1.msra.mxu0 %v6887
  %7135 = vmatprep.subr.mxu0 %v6894
  %7136 = vmatpush1.msra.mxu0 %v6893
  %7137 = vmatprep.subr.mxu0 %v6900
  %7138 = vmatpush1.msra.mxu0 %v6899
  %7139 = vmatprep.mubr.f32.mxu0 %v6170
  %7140 = vmatmul.mubr.f32.gmra.mrb[0].mxu0 %v6169
  %v7141 = vpop.f32.mrb[0].mxu0
  %v7142 = vadd.f32 %v6922, %v7141
  %v7143 = vpop.f32.mrb[0].mxu0
  %v7144 = vadd.f32 %v6926, %v7143
  %7145 = vdwg.mxu0
  %v7146 = vadd.f32 %v6703, %v7000
  %v7147 = vadd.f32 %v6704, %v7002
  %v7148 = vadd.f32 %v6705, %v7071
  %v7149 = vadd.f32 %v6706, %v7073
  %v7150 = vxor.u32 %v7146, 2147483648
  %v7151 = vxor.u32 %v7147, 2147483648
  %v7152 = vxor.u32 %v7148, 2147483648
  %v7153 = vxor.u32 %v7149, 2147483648
  %v7154 = vmul.f32 %v7150, 1.442695
  %v7155 = vpow.pop %v7154
  %v7156 = vmul.f32 %v7151, 1.442695
  %v7157 = vpow.pop %v7156
  %v7158 = vmul.f32 %v7152, 1.442695
  %v7159 = vpow.pop %v7158
  %v7160 = vmul.f32 %v7153, 1.442695
  %v7161 = vpow.pop %v7160
  %v7162 = vadd.f32 %v7155, 1.0
  %v7163 = vadd.f32 %v7157, 1.0
  %v7164 = vadd.f32 %v7159, 1.0
  %v7165 = vadd.f32 %v7161, 1.0
  %v7166 = vrcp.pop %v7162
  %v7167 = vmul.f32 1.0, %v7166
  %v7168 = vrcp.pop %v7163
  %v7169 = vmul.f32 1.0, %v7168
  %v7170 = vrcp.pop %v7164
  %v7171 = vmul.f32 1.0, %v7170
  %v7172 = vrcp.pop %v7165
  %v7173 = vmul.f32 1.0, %v7172
  %v7174 = vmul.f32 %v7167, %v7142
  %v7175 = vmul.f32 %v7169, %v7144
  %v7176 = vadd.f32 %v6707, %v7174
  %v7177 = vadd.f32 %v6708, %v7175
  %v7178 = vtanh.pop %v7176
  %v7179 = vtanh.pop %v7177
  %v7180 = vsub.f32 1.0, %v7171
  %v7181 = vsub.f32 1.0, %v7173
  %v7182 = vmul.f32 %v7180, %v7178
  %v7183 = vmul.f32 %v7181, %v7179
  %v7184 = vmul.f32 %v7171, %v6169
  %v7185 = vmul.f32 %v7173, %v6170
  %v7186 = vadd.f32 %v7182, %v7184
  %v7187 = vadd.f32 %v7183, %v7185
  %s7188 = scalar_lea.vmem %s7, 24
  %7189 = vst [vmem:[%s7188] sm:$0xf] %v7186
  %s7190 = scalar_lea.vmem %s61, 4
  %7191 = vst [vmem:[%s7190] sm:$0xf] %v7187
  %s7192 = scalar_lea.vmem %s0, 28
  %v7193 = vld [vmem:[%s7192] sm:$0xf]
  %v7194 = vld [vmem:[%s2] sm:$0xff]
  %v7195 = vld [vmem:[%s2 + $0x8] sm:$0xff]
  %v7196 = vld [vmem:[%s2 + $0x10] sm:$0xff]
  %v7197 = vld [vmem:[%s2 + $0x18] sm:$0xff]
  %v7198 = vld [vmem:[%s2 + $0x20] sm:$0xff]
  %v7199 = vld [vmem:[%s2 + $0x28] sm:$0xff]
  %v7200 = vld [vmem:[%s2 + $0x30] sm:$0x3]
  %v7201 = vld [vmem:[%s2 + $0x38] sm:$0x3]
  %v7202 = vld [vmem:[%s2 + $0x40] sm:$0x3]
  %v7203 = vld [vmem:[%s2 + $0x48] sm:$0x3]
  %v7204 = vld [vmem:[%s2 + $0x50] sm:$0x3]
  %v7205 = vld [vmem:[%s2 + $0x58] sm:$0x3]
  %v7206 = vld [vmem:[%s53] sm:$0xf]
  %v7207 = vld [vmem:[%s3] sm:$0xff]
  %v7208 = vld [vmem:[%s3 + $0x8] sm:$0xff]
  %v7209 = vld [vmem:[%s3 + $0x10] sm:$0xff]
  %v7210 = vld [vmem:[%s3 + $0x18] sm:$0xff]
  %v7211 = vld [vmem:[%s3 + $0x20] sm:$0xff]
  %v7212 = vld [vmem:[%s3 + $0x28] sm:$0xff]
  %v7213 = vld [vmem:[%s3 + $0x30] sm:$0x3]
  %v7214 = vld [vmem:[%s3 + $0x38] sm:$0x3]
  %v7215 = vld [vmem:[%s3 + $0x40] sm:$0x3]
  %v7216 = vld [vmem:[%s3 + $0x48] sm:$0x3]
  %v7217 = vld [vmem:[%s3 + $0x50] sm:$0x3]
  %v7218 = vld [vmem:[%s3 + $0x58] sm:$0x3]
  %v7220 = vsel %vm97, %v7206, 0
  %v7223 = vsel %vm101, %v7213, 0
  %v7226 = vsel %vm101, %v7214, 0
  %v7229 = vsel %vm101, %v7215, 0
  %v7232 = vsel %vm101, %v7216, 0
  %v7235 = vsel %vm101, %v7217, 0
  %v7238 = vsel %vm101, %v7218, 0
  %7240 = vmatprep.subr.mxu0 %v7208
  %7241 = vmatpush1.msra.mxu0 %v7207
  %7242 = vmatprep.subr.mxu0 %v7226
  %7243 = vmatpush1.msra.mxu0 %v7223
  %7244 = vmatprep.subr.mxu0 0.0
  %7245 = vmatpush1.msra.mxu0 0.0
  %7246 = vmatprep.subr.mxu0 0.0
  %7247 = vmatpush1.msra.mxu0 0.0
  %7248 = vmatprep.subr.mxu0 0.0
  %7249 = vmatpush1.msra.mxu0 0.0
  %7250 = vmatprep.subr.mxu0 0.0
  %7251 = vmatpush1.msra.mxu0 0.0
  %7252 = vmatprep.subr.mxu0 0.0
  %7253 = vmatpush1.msra.mxu0 0.0
  %7254 = vmatprep.subr.mxu0 0.0
  %7255 = vmatpush1.msra.mxu0 0.0
  %7256 = vmatprep.subr.mxu0 0.0
  %7257 = vmatpush1.msra.mxu0 0.0
  %7258 = vmatprep.subr.mxu0 0.0
  %7259 = vmatpush1.msra.mxu0 0.0
  %7260 = vmatprep.subr.mxu0 0.0
  %7261 = vmatpush1.msra.mxu0 0.0
  %7262 = vmatprep.subr.mxu0 0.0
  %7263 = vmatpush1.msra.mxu0 0.0
  %7264 = vmatprep.subr.mxu0 0.0
  %7265 = vmatpush1.msra.mxu0 0.0
  %7266 = vmatprep.subr.mxu0 0.0
  %7267 = vmatpush1.msra.mxu0 0.0
  %7268 = vmatprep.subr.mxu0 0.0
  %7269 = vmatpush1.msra.mxu0 0.0
  %7270 = vmatprep.subr.mxu0 0.0
  %7271 = vmatpush1.msra.mxu0 0.0
  %7272 = vmatprep.subr.mxu0 0.0
  %7273 = vmatpush1.msra.mxu0 0.0
  %7274 = vmatprep.subr.mxu0 0.0
  %7275 = vmatpush1.msra.mxu0 0.0
  %7276 = vmatprep.subr.mxu0 0.0
  %7277 = vmatpush1.msra.mxu0 0.0
  %7278 = vmatprep.subr.mxu0 0.0
  %7279 = vmatpush1.msra.mxu0 0.0
  %7280 = vmatprep.subr.mxu0 0.0
  %7281 = vmatpush1.msra.mxu0 0.0
  %7282 = vmatprep.subr.mxu0 0.0
  %7283 = vmatpush1.msra.mxu0 0.0
  %7284 = vmatprep.subr.mxu0 0.0
  %7285 = vmatpush1.msra.mxu0 0.0
  %7286 = vmatprep.subr.mxu0 0.0
  %7287 = vmatpush1.msra.mxu0 0.0
  %7288 = vmatprep.subr.mxu0 0.0
  %7289 = vmatpush1.msra.mxu0 0.0
  %7290 = vmatprep.subr.mxu0 0.0
  %7291 = vmatpush1.msra.mxu0 0.0
  %7292 = vmatprep.subr.mxu0 0.0
  %7293 = vmatpush1.msra.mxu0 0.0
  %7294 = vmatprep.subr.mxu0 0.0
  %7295 = vmatpush1.msra.mxu0 0.0
  %7296 = vmatprep.subr.mxu0 0.0
  %7297 = vmatpush1.msra.mxu0 0.0
  %7298 = vmatprep.subr.mxu0 0.0
  %7299 = vmatpush1.msra.mxu0 0.0
  %7300 = vmatprep.subr.mxu0 0.0
  %7301 = vmatpush1.msra.mxu0 0.0
  %7302 = vmatprep.subr.mxu0 0.0
  %7303 = vmatpush1.msra.mxu0 0.0
  %7304 = vmatprep.mubr.f32.mxu0 0.0
  %7305 = vmatmul.mubr.f32.gmra.mrb[0].mxu0 %v7220
  %v7306 = vpop.f32.mrb[0].mxu0
  %v7307 = vadd.f32 0.0, %v7306
  %v7308 = vpop.f32.mrb[0].mxu0
  %v7309 = vadd.f32 0.0, %v7308
  %7310 = vdwg.mxu0
  %7311 = vmatprep.subr.mxu0 %v7210
  %7312 = vmatpush1.msra.mxu0 %v7209
  %7313 = vmatprep.subr.mxu0 %v7232
  %7314 = vmatpush1.msra.mxu0 %v7229
  %7315 = vmatprep.subr.mxu0 0.0
  %7316 = vmatpush1.msra.mxu0 0.0
  %7317 = vmatprep.subr.mxu0 0.0
  %7318 = vmatpush1.msra.mxu0 0.0
  %7319 = vmatprep.subr.mxu0 0.0
  %7320 = vmatpush1.msra.mxu0 0.0
  %7321 = vmatprep.subr.mxu0 0.0
  %7322 = vmatpush1.msra.mxu0 0.0
  %7323 = vmatprep.subr.mxu0 0.0
  %7324 = vmatpush1.msra.mxu0 0.0
  %7325 = vmatprep.subr.mxu0 0.0
  %7326 = vmatpush1.msra.mxu0 0.0
  %7327 = vmatprep.subr.mxu0 0.0
  %7328 = vmatpush1.msra.mxu0 0.0
  %7329 = vmatprep.subr.mxu0 0.0
  %7330 = vmatpush1.msra.mxu0 0.0
  %7331 = vmatprep.subr.mxu0 0.0
  %7332 = vmatpush1.msra.mxu0 0.0
  %7333 = vmatprep.subr.mxu0 0.0
  %7334 = vmatpush1.msra.mxu0 0.0
  %7335 = vmatprep.subr.mxu0 0.0
  %7336 = vmatpush1.msra.mxu0 0.0
  %7337 = vmatprep.subr.mxu0 0.0
  %7338 = vmatpush1.msra.mxu0 0.0
  %7339 = vmatprep.subr.mxu0 0.0
  %7340 = vmatpush1.msra.mxu0 0.0
  %7341 = vmatprep.subr.mxu0 0.0
  %7342 = vmatpush1.msra.mxu0 0.0
  %7343 = vmatprep.subr.mxu0 0.0
  %7344 = vmatpush1.msra.mxu0 0.0
  %7345 = vmatprep.subr.mxu0 0.0
  %7346 = vmatpush1.msra.mxu0 0.0
  %7347 = vmatprep.subr.mxu0 0.0
  %7348 = vmatpush1.msra.mxu0 0.0
  %7349 = vmatprep.subr.mxu0 0.0
  %7350 = vmatpush1.msra.mxu0 0.0
  %7351 = vmatprep.subr.mxu0 0.0
  %7352 = vmatpush1.msra.mxu0 0.0
  %7353 = vmatprep.subr.mxu0 0.0
  %7354 = vmatpush1.msra.mxu0 0.0
  %7355 = vmatprep.subr.mxu0 0.0
  %7356 = vmatpush1.msra.mxu0 0.0
  %7357 = vmatprep.subr.mxu0 0.0
  %7358 = vmatpush1.msra.mxu0 0.0
  %7359 = vmatprep.subr.mxu0 0.0
  %7360 = vmatpush1.msra.mxu0 0.0
  %7361 = vmatprep.subr.mxu0 0.0
  %7362 = vmatpush1.msra.mxu0 0.0
  %7363 = vmatprep.subr.mxu0 0.0
  %7364 = vmatpush1.msra.mxu0 0.0
  %7365 = vmatprep.subr.mxu0 0.0
  %7366 = vmatpush1.msra.mxu0 0.0
  %7367 = vmatprep.subr.mxu0 0.0
  %7368 = vmatpush1.msra.mxu0 0.0
  %7369 = vmatprep.subr.mxu0 0.0
  %7370 = vmatpush1.msra.mxu0 0.0
  %7371 = vmatprep.subr.mxu0 0.0
  %7372 = vmatpush1.msra.mxu0 0.0
  %7373 = vmatprep.subr.mxu0 0.0
  %7374 = vmatpush1.msra.mxu0 0.0
  %7375 = vmatprep.mubr.f32.mxu0 0.0
  %7376 = vmatmul.mubr.f32.gmra.mrb[0].mxu0 %v7220
  %v7377 = vpop.f32.mrb[0].mxu0
  %v7378 = vadd.f32 0.0, %v7377
  %v7379 = vpop.f32.mrb[0].mxu0
  %v7380 = vadd.f32 0.0, %v7379
  %7381 = vdwg.mxu0
  %7382 = vmatprep.subr.mxu0 %v7212
  %7383 = vmatpush1.msra.mxu0 %v7211
  %7384 = vmatprep.subr.mxu0 %v7238
  %7385 = vmatpush1.msra.mxu0 %v7235
  %7386 = vmatprep.subr.mxu0 0.0
  %7387 = vmatpush1.msra.mxu0 0.0
  %7388 = vmatprep.subr.mxu0 0.0
  %7389 = vmatpush1.msra.mxu0 0.0
  %7390 = vmatprep.subr.mxu0 0.0
  %7391 = vmatpush1.msra.mxu0 0.0
  %7392 = vmatprep.subr.mxu0 0.0
  %7393 = vmatpush1.msra.mxu0 0.0
  %7394 = vmatprep.subr.mxu0 0.0
  %7395 = vmatpush1.msra.mxu0 0.0
  %7396 = vmatprep.subr.mxu0 0.0
  %7397 = vmatpush1.msra.mxu0 0.0
  %7398 = vmatprep.subr.mxu0 0.0
  %7399 = vmatpush1.msra.mxu0 0.0
  %7400 = vmatprep.subr.mxu0 0.0
  %7401 = vmatpush1.msra.mxu0 0.0
  %7402 = vmatprep.subr.mxu0 0.0
  %7403 = vmatpush1.msra.mxu0 0.0
  %7404 = vmatprep.subr.mxu0 0.0
  %7405 = vmatpush1.msra.mxu0 0.0
  %7406 = vmatprep.subr.mxu0 0.0
  %7407 = vmatpush1.msra.mxu0 0.0
  %7408 = vmatprep.subr.mxu0 0.0
  %7409 = vmatpush1.msra.mxu0 0.0
  %7410 = vmatprep.subr.mxu0 0.0
  %7411 = vmatpush1.msra.mxu0 0.0
  %7412 = vmatprep.subr.mxu0 0.0
  %7413 = vmatpush1.msra.mxu0 0.0
  %7414 = vmatprep.subr.mxu0 0.0
  %7415 = vmatpush1.msra.mxu0 0.0
  %7416 = vmatprep.subr.mxu0 0.0
  %7417 = vmatpush1.msra.mxu0 0.0
  %7418 = vmatprep.subr.mxu0 0.0
  %7419 = vmatpush1.msra.mxu0 0.0
  %7420 = vmatprep.subr.mxu0 0.0
  %7421 = vmatpush1.msra.mxu0 0.0
  %7422 = vmatprep.subr.mxu0 0.0
  %7423 = vmatpush1.msra.mxu0 0.0
  %7424 = vmatprep.subr.mxu0 0.0
  %7425 = vmatpush1.msra.mxu0 0.0
  %7426 = vmatprep.subr.mxu0 0.0
  %7427 = vmatpush1.msra.mxu0 0.0
  %7428 = vmatprep.subr.mxu0 0.0
  %7429 = vmatpush1.msra.mxu0 0.0
  %7430 = vmatprep.subr.mxu0 0.0
  %7431 = vmatpush1.msra.mxu0 0.0
  %7432 = vmatprep.subr.mxu0 0.0
  %7433 = vmatpush1.msra.mxu0 0.0
  %7434 = vmatprep.subr.mxu0 0.0
  %7435 = vmatpush1.msra.mxu0 0.0
  %7436 = vmatprep.subr.mxu0 0.0
  %7437 = vmatpush1.msra.mxu0 0.0
  %7438 = vmatprep.subr.mxu0 0.0
  %7439 = vmatpush1.msra.mxu0 0.0
  %7440 = vmatprep.subr.mxu0 0.0
  %7441 = vmatpush1.msra.mxu0 0.0
  %7442 = vmatprep.subr.mxu0 0.0
  %7443 = vmatpush1.msra.mxu0 0.0
  %7444 = vmatprep.subr.mxu0 0.0
  %7445 = vmatpush1.msra.mxu0 0.0
  %7446 = vmatprep.mubr.f32.mxu0 0.0
  %7447 = vmatmul.mubr.f32.gmra.mrb[0].mxu0 %v7220
  %v7448 = vpop.f32.mrb[0].mxu0
  %v7449 = vadd.f32 0.0, %v7448
  %v7450 = vpop.f32.mrb[0].mxu0
  %v7451 = vadd.f32 0.0, %v7450
  %7452 = vdwg.mxu0
  %v7454 = vsel %vm97, %v7193, 0
  %v7457 = vsel %vm101, %v7200, 0
  %v7460 = vsel %vm101, %v7201, 0
  %v7463 = vsel %vm101, %v7202, 0
  %v7466 = vsel %vm101, %v7203, 0
  %v7469 = vsel %vm101, %v7204, 0
  %v7472 = vsel %vm101, %v7205, 0
  %7474 = vmatprep.subr.mxu0 %v7195
  %7475 = vmatpush1.msra.mxu0 %v7194
  %7476 = vmatprep.subr.mxu0 %v7460
  %7477 = vmatpush1.msra.mxu0 %v7457
  %7478 = vmatprep.subr.mxu0 0.0
  %7479 = vmatpush1.msra.mxu0 0.0
  %7480 = vmatprep.subr.mxu0 0.0
  %7481 = vmatpush1.msra.mxu0 0.0
  %7482 = vmatprep.subr.mxu0 0.0
  %7483 = vmatpush1.msra.mxu0 0.0
  %7484 = vmatprep.subr.mxu0 0.0
  %7485 = vmatpush1.msra.mxu0 0.0
  %7486 = vmatprep.subr.mxu0 0.0
  %7487 = vmatpush1.msra.mxu0 0.0
  %7488 = vmatprep.subr.mxu0 0.0
  %7489 = vmatpush1.msra.mxu0 0.0
  %7490 = vmatprep.subr.mxu0 0.0
  %7491 = vmatpush1.msra.mxu0 0.0
  %7492 = vmatprep.subr.mxu0 0.0
  %7493 = vmatpush1.msra.mxu0 0.0
  %7494 = vmatprep.subr.mxu0 0.0
  %7495 = vmatpush1.msra.mxu0 0.0
  %7496 = vmatprep.subr.mxu0 0.0
  %7497 = vmatpush1.msra.mxu0 0.0
  %7498 = vmatprep.subr.mxu0 0.0
  %7499 = vmatpush1.msra.mxu0 0.0
  %7500 = vmatprep.subr.mxu0 0.0
  %7501 = vmatpush1.msra.mxu0 0.0
  %7502 = vmatprep.subr.mxu0 0.0
  %7503 = vmatpush1.msra.mxu0 0.0
  %7504 = vmatprep.subr.mxu0 0.0
  %7505 = vmatpush1.msra.mxu0 0.0
  %7506 = vmatprep.subr.mxu0 0.0
  %7507 = vmatpush1.msra.mxu0 0.0
  %7508 = vmatprep.subr.mxu0 0.0
  %7509 = vmatpush1.msra.mxu0 0.0
  %7510 = vmatprep.subr.mxu0 0.0
  %7511 = vmatpush1.msra.mxu0 0.0
  %7512 = vmatprep.subr.mxu0 0.0
  %7513 = vmatpush1.msra.mxu0 0.0
  %7514 = vmatprep.subr.mxu0 0.0
  %7515 = vmatpush1.msra.mxu0 0.0
  %7516 = vmatprep.subr.mxu0 0.0
  %7517 = vmatpush1.msra.mxu0 0.0
  %7518 = vmatprep.subr.mxu0 0.0
  %7519 = vmatpush1.msra.mxu0 0.0
  %7520 = vmatprep.subr.mxu0 0.0
  %7521 = vmatpush1.msra.mxu0 0.0
  %7522 = vmatprep.subr.mxu0 0.0
  %7523 = vmatpush1.msra.mxu0 0.0
  %7524 = vmatprep.subr.mxu0 0.0
  %7525 = vmatpush1.msra.mxu0 0.0
  %7526 = vmatprep.subr.mxu0 0.0
  %7527 = vmatpush1.msra.mxu0 0.0
  %7528 = vmatprep.subr.mxu0 0.0
  %7529 = vmatpush1.msra.mxu0 0.0
  %7530 = vmatprep.subr.mxu0 0.0
  %7531 = vmatpush1.msra.mxu0 0.0
  %7532 = vmatprep.subr.mxu0 0.0
  %7533 = vmatpush1.msra.mxu0 0.0
  %7534 = vmatprep.subr.mxu0 0.0
  %7535 = vmatpush1.msra.mxu0 0.0
  %7536 = vmatprep.subr.mxu0 0.0
  %7537 = vmatpush1.msra.mxu0 0.0
  %7538 = vmatprep.mubr.f32.mxu0 0.0
  %7539 = vmatmul.mubr.f32.gmra.mrb[0].mxu0 %v7454
  %v7540 = vpop.f32.mrb[0].mxu0
  %v7541 = vadd.f32 %v7307, %v7540
  %v7542 = vpop.f32.mrb[0].mxu0
  %v7543 = vadd.f32 %v7309, %v7542
  %7544 = vdwg.mxu0
  %7545 = vmatprep.subr.mxu0 %v7197
  %7546 = vmatpush1.msra.mxu0 %v7196
  %7547 = vmatprep.subr.mxu0 %v7466
  %7548 = vmatpush1.msra.mxu0 %v7463
  %7549 = vmatprep.subr.mxu0 0.0
  %7550 = vmatpush1.msra.mxu0 0.0
  %7551 = vmatprep.subr.mxu0 0.0
  %7552 = vmatpush1.msra.mxu0 0.0
  %7553 = vmatprep.subr.mxu0 0.0
  %7554 = vmatpush1.msra.mxu0 0.0
  %7555 = vmatprep.subr.mxu0 0.0
  %7556 = vmatpush1.msra.mxu0 0.0
  %7557 = vmatprep.subr.mxu0 0.0
  %7558 = vmatpush1.msra.mxu0 0.0
  %7559 = vmatprep.subr.mxu0 0.0
  %7560 = vmatpush1.msra.mxu0 0.0
  %7561 = vmatprep.subr.mxu0 0.0
  %7562 = vmatpush1.msra.mxu0 0.0
  %7563 = vmatprep.subr.mxu0 0.0
  %7564 = vmatpush1.msra.mxu0 0.0
  %7565 = vmatprep.subr.mxu0 0.0
  %7566 = vmatpush1.msra.mxu0 0.0
  %7567 = vmatprep.subr.mxu0 0.0
  %7568 = vmatpush1.msra.mxu0 0.0
  %7569 = vmatprep.subr.mxu0 0.0
  %7570 = vmatpush1.msra.mxu0 0.0
  %7571 = vmatprep.subr.mxu0 0.0
  %7572 = vmatpush1.msra.mxu0 0.0
  %7573 = vmatprep.subr.mxu0 0.0
  %7574 = vmatpush1.msra.mxu0 0.0
  %7575 = vmatprep.subr.mxu0 0.0
  %7576 = vmatpush1.msra.mxu0 0.0
  %7577 = vmatprep.subr.mxu0 0.0
  %7578 = vmatpush1.msra.mxu0 0.0
  %7579 = vmatprep.subr.mxu0 0.0
  %7580 = vmatpush1.msra.mxu0 0.0
  %7581 = vmatprep.subr.mxu0 0.0
  %7582 = vmatpush1.msra.mxu0 0.0
  %7583 = vmatprep.subr.mxu0 0.0
  %7584 = vmatpush1.msra.mxu0 0.0
  %7585 = vmatprep.subr.mxu0 0.0
  %7586 = vmatpush1.msra.mxu0 0.0
  %7587 = vmatprep.subr.mxu0 0.0
  %7588 = vmatpush1.msra.mxu0 0.0
  %7589 = vmatprep.subr.mxu0 0.0
  %7590 = vmatpush1.msra.mxu0 0.0
  %7591 = vmatprep.subr.mxu0 0.0
  %7592 = vmatpush1.msra.mxu0 0.0
  %7593 = vmatprep.subr.mxu0 0.0
  %7594 = vmatpush1.msra.mxu0 0.0
  %7595 = vmatprep.subr.mxu0 0.0
  %7596 = vmatpush1.msra.mxu0 0.0
  %7597 = vmatprep.subr.mxu0 0.0
  %7598 = vmatpush1.msra.mxu0 0.0
  %7599 = vmatprep.subr.mxu0 0.0
  %7600 = vmatpush1.msra.mxu0 0.0
  %7601 = vmatprep.subr.mxu0 0.0
  %7602 = vmatpush1.msra.mxu0 0.0
  %7603 = vmatprep.subr.mxu0 0.0
  %7604 = vmatpush1.msra.mxu0 0.0
  %7605 = vmatprep.subr.mxu0 0.0
  %7606 = vmatpush1.msra.mxu0 0.0
  %7607 = vmatprep.subr.mxu0 0.0
  %7608 = vmatpush1.msra.mxu0 0.0
  %7609 = vmatprep.mubr.f32.mxu0 0.0
  %7610 = vmatmul.mubr.f32.gmra.mrb[0].mxu0 %v7454
  %v7611 = vpop.f32.mrb[0].mxu0
  %v7612 = vadd.f32 %v7378, %v7611
  %v7613 = vpop.f32.mrb[0].mxu0
  %v7614 = vadd.f32 %v7380, %v7613
  %7615 = vdwg.mxu0
  %7616 = vmatprep.subr.mxu0 %v7199
  %7617 = vmatpush1.msra.mxu0 %v7198
  %7618 = vmatprep.subr.mxu0 %v7472
  %7619 = vmatpush1.msra.mxu0 %v7469
  %7620 = vmatprep.subr.mxu0 0.0
  %7621 = vmatpush1.msra.mxu0 0.0
  %7622 = vmatprep.subr.mxu0 0.0
  %7623 = vmatpush1.msra.mxu0 0.0
  %7624 = vmatprep.subr.mxu0 0.0
  %7625 = vmatpush1.msra.mxu0 0.0
  %7626 = vmatprep.subr.mxu0 0.0
  %7627 = vmatpush1.msra.mxu0 0.0
  %7628 = vmatprep.subr.mxu0 0.0
  %7629 = vmatpush1.msra.mxu0 0.0
  %7630 = vmatprep.subr.mxu0 0.0
  %7631 = vmatpush1.msra.mxu0 0.0
  %7632 = vmatprep.subr.mxu0 0.0
  %7633 = vmatpush1.msra.mxu0 0.0
  %7634 = vmatprep.subr.mxu0 0.0
  %7635 = vmatpush1.msra.mxu0 0.0
  %7636 = vmatprep.subr.mxu0 0.0
  %7637 = vmatpush1.msra.mxu0 0.0
  %7638 = vmatprep.subr.mxu0 0.0
  %7639 = vmatpush1.msra.mxu0 0.0
  %7640 = vmatprep.subr.mxu0 0.0
  %7641 = vmatpush1.msra.mxu0 0.0
  %7642 = vmatprep.subr.mxu0 0.0
  %7643 = vmatpush1.msra.mxu0 0.0
  %7644 = vmatprep.subr.mxu0 0.0
  %7645 = vmatpush1.msra.mxu0 0.0
  %7646 = vmatprep.subr.mxu0 0.0
  %7647 = vmatpush1.msra.mxu0 0.0
  %7648 = vmatprep.subr.mxu0 0.0
  %7649 = vmatpush1.msra.mxu0 0.0
  %7650 = vmatprep.subr.mxu0 0.0
  %7651 = vmatpush1.msra.mxu0 0.0
  %7652 = vmatprep.subr.mxu0 0.0
  %7653 = vmatpush1.msra.mxu0 0.0
  %7654 = vmatprep.subr.mxu0 0.0
  %7655 = vmatpush1.msra.mxu0 0.0
  %7656 = vmatprep.subr.mxu0 0.0
  %7657 = vmatpush1.msra.mxu0 0.0
  %7658 = vmatprep.subr.mxu0 0.0
  %7659 = vmatpush1.msra.mxu0 0.0
  %7660 = vmatprep.subr.mxu0 0.0
  %7661 = vmatpush1.msra.mxu0 0.0
  %7662 = vmatprep.subr.mxu0 0.0
  %7663 = vmatpush1.msra.mxu0 0.0
  %7664 = vmatprep.subr.mxu0 0.0
  %7665 = vmatpush1.msra.mxu0 0.0
  %7666 = vmatprep.subr.mxu0 0.0
  %7667 = vmatpush1.msra.mxu0 0.0
  %7668 = vmatprep.subr.mxu0 0.0
  %7669 = vmatpush1.msra.mxu0 0.0
  %7670 = vmatprep.subr.mxu0 0.0
  %7671 = vmatpush1.msra.mxu0 0.0
  %7672 = vmatprep.subr.mxu0 0.0
  %7673 = vmatpush1.msra.mxu0 0.0
  %7674 = vmatprep.subr.mxu0 0.0
  %7675 = vmatpush1.msra.mxu0 0.0
  %7676 = vmatprep.subr.mxu0 0.0
  %7677 = vmatpush1.msra.mxu0 0.0
  %7678 = vmatprep.subr.mxu0 0.0
  %7679 = vmatpush1.msra.mxu0 0.0
  %7680 = vmatprep.mubr.f32.mxu0 0.0
  %7681 = vmatmul.mubr.f32.gmra.mrb[0].mxu0 %v7454
  %v7682 = vpop.f32.mrb[0].mxu0
  %v7683 = vadd.f32 %v7449, %v7682
  %v7684 = vpop.f32.mrb[0].mxu0
  %v7685 = vadd.f32 %v7451, %v7684
  %7686 = vdwg.mxu0
  %v7687 = vld [vmem:[%s4] sm:$0x3f]
  %v7689 = vlaneseq
  %v7690 = vshrl.u32 %v7689, 7
  %v7691 = vsub.s32 0, %v7690
  %v7692 = vrot.slane %v7687, %v7691
  %v7693 = vlaneseq
  %v7694 = vshrl.u32 %v7693, 7
  %v7695 = vsub.s32 1, %v7694
  %v7696 = vrot.slane %v7687, %v7695
  %v7697 = vlaneseq
  %v7698 = vshrl.u32 %v7697, 7
  %v7699 = vsub.s32 2, %v7698
  %v7700 = vrot.slane %v7687, %v7699
  %v7701 = vlaneseq
  %v7702 = vshrl.u32 %v7701, 7
  %v7703 = vsub.s32 3, %v7702
  %v7704 = vrot.slane %v7687, %v7703
  %v7705 = vlaneseq
  %v7706 = vshrl.u32 %v7705, 7
  %v7707 = vsub.s32 4, %v7706
  %v7708 = vrot.slane %v7687, %v7707
  %v7709 = vlaneseq
  %v7710 = vshrl.u32 %v7709, 7
  %v7711 = vsub.s32 5, %v7710
  %v7712 = vrot.slane %v7687, %v7711
  %v7719 = vadd.f32 %v7541, %v7692
  %v7720 = vadd.f32 %v7543, %v7696
  %v7721 = vadd.f32 %v7612, %v7700
  %v7722 = vadd.f32 %v7614, %v7704
  %v7723 = vadd.f32 %v7683, %v7708
  %v7724 = vadd.f32 %v7685, %v7712
  %v7725 = vld [vmem:[%s5] sm:$0xff]
  %v7726 = vld [vmem:[%s5 + $0x8] sm:$0xff]
  %v7727 = vld [vmem:[%s5 + $0x10] sm:$0xff]
  %v7728 = vld [vmem:[%s5 + $0x18] sm:$0xff]
  %v7729 = vld [vmem:[%s5 + $0x20] sm:$0xff]
  %v7730 = vld [vmem:[%s5 + $0x28] sm:$0xff]
  %v7731 = vld [vmem:[%s5 + $0x30] sm:$0xff]
  %v7732 = vld [vmem:[%s5 + $0x38] sm:$0xff]
  %v7733 = vld [vmem:[%s5 + $0x40] sm:$0xff]
  %v7734 = vld [vmem:[%s5 + $0x48] sm:$0xff]
  %v7735 = vld [vmem:[%s5 + $0x50] sm:$0xff]
  %v7736 = vld [vmem:[%s5 + $0x58] sm:$0xff]
  %v7737 = vld [vmem:[%s5 + $0x60] sm:$0xff]
  %v7738 = vld [vmem:[%s5 + $0x68] sm:$0xff]
  %v7739 = vld [vmem:[%s5 + $0x70] sm:$0xff]
  %v7740 = vld [vmem:[%s5 + $0x78] sm:$0xff]
  %v7741 = vld [vmem:[%s5 + $0x80] sm:$0xff]
  %v7742 = vld [vmem:[%s5 + $0x88] sm:$0xff]
  %v7743 = vld [vmem:[%s5 + $0x90] sm:$0xff]
  %v7744 = vld [vmem:[%s5 + $0x98] sm:$0xff]
  %v7745 = vld [vmem:[%s5 + $0xa0] sm:$0xff]
  %v7746 = vld [vmem:[%s5 + $0xa8] sm:$0xff]
  %v7747 = vld [vmem:[%s5 + $0xb0] sm:$0xff]
  %v7748 = vld [vmem:[%s5 + $0xb8] sm:$0xff]
  %v7749 = vld [vmem:[%s5 + $0xc0] sm:$0xff]
  %v7750 = vld [vmem:[%s5 + $0xc8] sm:$0xff]
  %v7751 = vld [vmem:[%s5 + $0xd0] sm:$0xff]
  %v7752 = vld [vmem:[%s5 + $0xd8] sm:$0xff]
  %v7753 = vld [vmem:[%s5 + $0xe0] sm:$0xff]
  %v7754 = vld [vmem:[%s5 + $0xe8] sm:$0xff]
  %v7755 = vld [vmem:[%s5 + $0xf0] sm:$0xff]
  %v7756 = vld [vmem:[%s5 + $0xf8] sm:$0xff]
  %v7757 = vld [vmem:[%s5 + $0x100] sm:$0xff]
  %v7758 = vld [vmem:[%s5 + $0x108] sm:$0xff]
  %v7759 = vld [vmem:[%s5 + $0x110] sm:$0xff]
  %v7760 = vld [vmem:[%s5 + $0x118] sm:$0xff]
  %v7761 = vld [vmem:[%s5 + $0x120] sm:$0xff]
  %v7762 = vld [vmem:[%s5 + $0x128] sm:$0xff]
  %v7763 = vld [vmem:[%s5 + $0x130] sm:$0xff]
  %v7764 = vld [vmem:[%s5 + $0x138] sm:$0xff]
  %v7765 = vld [vmem:[%s5 + $0x140] sm:$0xff]
  %v7766 = vld [vmem:[%s5 + $0x148] sm:$0xff]
  %v7767 = vld [vmem:[%s5 + $0x150] sm:$0xff]
  %v7768 = vld [vmem:[%s5 + $0x158] sm:$0xff]
  %v7769 = vld [vmem:[%s5 + $0x160] sm:$0xff]
  %v7770 = vld [vmem:[%s5 + $0x168] sm:$0xff]
  %v7771 = vld [vmem:[%s5 + $0x170] sm:$0xff]
  %v7772 = vld [vmem:[%s5 + $0x178] sm:$0xff]
  %v7773 = vld [vmem:[%s5 + $0x180] sm:$0xff]
  %v7774 = vld [vmem:[%s5 + $0x188] sm:$0xff]
  %v7775 = vld [vmem:[%s5 + $0x190] sm:$0xff]
  %v7776 = vld [vmem:[%s5 + $0x198] sm:$0xff]
  %v7777 = vld [vmem:[%s5 + $0x1a0] sm:$0xff]
  %v7778 = vld [vmem:[%s5 + $0x1a8] sm:$0xff]
  %v7779 = vld [vmem:[%s5 + $0x1b0] sm:$0xff]
  %v7780 = vld [vmem:[%s5 + $0x1b8] sm:$0xff]
  %v7781 = vld [vmem:[%s5 + $0x1c0] sm:$0xff]
  %v7782 = vld [vmem:[%s5 + $0x1c8] sm:$0xff]
  %v7783 = vld [vmem:[%s5 + $0x1d0] sm:$0xff]
  %v7784 = vld [vmem:[%s5 + $0x1d8] sm:$0xff]
  %v7785 = vld [vmem:[%s5 + $0x1e0] sm:$0xff]
  %v7786 = vld [vmem:[%s5 + $0x1e8] sm:$0xff]
  %v7787 = vld [vmem:[%s5 + $0x1f0] sm:$0xff]
  %v7788 = vld [vmem:[%s5 + $0x1f8] sm:$0xff]
  %v7789 = vld [vmem:[%s5 + $0x200] sm:$0xff]
  %v7790 = vld [vmem:[%s5 + $0x208] sm:$0xff]
  %v7791 = vld [vmem:[%s5 + $0x210] sm:$0xff]
  %v7792 = vld [vmem:[%s5 + $0x218] sm:$0xff]
  %v7793 = vld [vmem:[%s5 + $0x220] sm:$0xff]
  %v7794 = vld [vmem:[%s5 + $0x228] sm:$0xff]
  %v7795 = vld [vmem:[%s5 + $0x230] sm:$0xff]
  %v7796 = vld [vmem:[%s5 + $0x238] sm:$0xff]
  %v7797 = vld [vmem:[%s5 + $0x240] sm:$0xff]
  %v7798 = vld [vmem:[%s5 + $0x248] sm:$0xff]
  %v7799 = vld [vmem:[%s5 + $0x250] sm:$0xff]
  %v7800 = vld [vmem:[%s5 + $0x258] sm:$0xff]
  %v7801 = vld [vmem:[%s5 + $0x260] sm:$0xff]
  %v7802 = vld [vmem:[%s5 + $0x268] sm:$0xff]
  %v7803 = vld [vmem:[%s5 + $0x270] sm:$0xff]
  %v7804 = vld [vmem:[%s5 + $0x278] sm:$0xff]
  %v7805 = vld [vmem:[%s5 + $0x280] sm:$0xff]
  %v7806 = vld [vmem:[%s5 + $0x288] sm:$0xff]
  %v7807 = vld [vmem:[%s5 + $0x290] sm:$0xff]
  %v7808 = vld [vmem:[%s5 + $0x298] sm:$0xff]
  %v7809 = vld [vmem:[%s5 + $0x2a0] sm:$0xff]
  %v7810 = vld [vmem:[%s5 + $0x2a8] sm:$0xff]
  %v7811 = vld [vmem:[%s5 + $0x2b0] sm:$0xff]
  %v7812 = vld [vmem:[%s5 + $0x2b8] sm:$0xff]
  %v7813 = vld [vmem:[%s5 + $0x2c0] sm:$0xff]
  %v7814 = vld [vmem:[%s5 + $0x2c8] sm:$0xff]
  %v7815 = vld [vmem:[%s5 + $0x2d0] sm:$0xff]
  %v7816 = vld [vmem:[%s5 + $0x2d8] sm:$0xff]
  %v7817 = vld [vmem:[%s5 + $0x2e0] sm:$0xff]
  %v7818 = vld [vmem:[%s5 + $0x2e8] sm:$0xff]
  %v7819 = vld [vmem:[%s5 + $0x2f0] sm:$0xff]
  %v7820 = vld [vmem:[%s5 + $0x2f8] sm:$0xff]
  %v7821 = vld [vmem:[%s5 + $0x300] sm:$0xff]
  %v7822 = vld [vmem:[%s5 + $0x308] sm:$0xff]
  %v7823 = vld [vmem:[%s5 + $0x310] sm:$0xff]
  %v7824 = vld [vmem:[%s5 + $0x318] sm:$0xff]
  %v7825 = vld [vmem:[%s5 + $0x320] sm:$0xff]
  %v7826 = vld [vmem:[%s5 + $0x328] sm:$0xff]
  %v7827 = vld [vmem:[%s5 + $0x330] sm:$0xff]
  %v7828 = vld [vmem:[%s5 + $0x338] sm:$0xff]
  %v7829 = vld [vmem:[%s5 + $0x340] sm:$0xff]
  %v7830 = vld [vmem:[%s5 + $0x348] sm:$0xff]
  %v7831 = vld [vmem:[%s5 + $0x350] sm:$0xff]
  %v7832 = vld [vmem:[%s5 + $0x358] sm:$0xff]
  %v7833 = vld [vmem:[%s5 + $0x360] sm:$0xff]
  %v7834 = vld [vmem:[%s5 + $0x368] sm:$0xff]
  %v7835 = vld [vmem:[%s5 + $0x370] sm:$0xff]
  %v7836 = vld [vmem:[%s5 + $0x378] sm:$0xff]
  %v7837 = vld [vmem:[%s5 + $0x380] sm:$0xff]
  %v7838 = vld [vmem:[%s5 + $0x388] sm:$0xff]
  %v7839 = vld [vmem:[%s5 + $0x390] sm:$0xff]
  %v7840 = vld [vmem:[%s5 + $0x398] sm:$0xff]
  %v7841 = vld [vmem:[%s5 + $0x3a0] sm:$0xff]
  %v7842 = vld [vmem:[%s5 + $0x3a8] sm:$0xff]
  %v7843 = vld [vmem:[%s5 + $0x3b0] sm:$0xff]
  %v7844 = vld [vmem:[%s5 + $0x3b8] sm:$0xff]
  %v7845 = vld [vmem:[%s5 + $0x3c0] sm:$0xff]
  %v7846 = vld [vmem:[%s5 + $0x3c8] sm:$0xff]
  %v7847 = vld [vmem:[%s5 + $0x3d0] sm:$0xff]
  %v7848 = vld [vmem:[%s5 + $0x3d8] sm:$0xff]
  %v7849 = vld [vmem:[%s5 + $0x3e0] sm:$0xff]
  %v7850 = vld [vmem:[%s5 + $0x3e8] sm:$0xff]
  %v7851 = vld [vmem:[%s5 + $0x3f0] sm:$0xff]
  %v7852 = vld [vmem:[%s5 + $0x3f8] sm:$0xff]
  %v7853 = vld [vmem:[%s5 + $0x400] sm:$0xff]
  %v7854 = vld [vmem:[%s5 + $0x408] sm:$0xff]
  %v7855 = vld [vmem:[%s5 + $0x410] sm:$0xff]
  %v7856 = vld [vmem:[%s5 + $0x418] sm:$0xff]
  %v7857 = vld [vmem:[%s5 + $0x420] sm:$0xff]
  %v7858 = vld [vmem:[%s5 + $0x428] sm:$0xff]
  %v7859 = vld [vmem:[%s5 + $0x430] sm:$0xff]
  %v7860 = vld [vmem:[%s5 + $0x438] sm:$0xff]
  %v7861 = vld [vmem:[%s5 + $0x440] sm:$0xff]
  %v7862 = vld [vmem:[%s5 + $0x448] sm:$0xff]
  %v7863 = vld [vmem:[%s5 + $0x450] sm:$0xff]
  %v7864 = vld [vmem:[%s5 + $0x458] sm:$0xff]
  %v7865 = vld [vmem:[%s5 + $0x460] sm:$0xff]
  %v7866 = vld [vmem:[%s5 + $0x468] sm:$0xff]
  %v7867 = vld [vmem:[%s5 + $0x470] sm:$0xff]
  %v7868 = vld [vmem:[%s5 + $0x478] sm:$0xff]
  %v7869 = vld [vmem:[%s5 + $0x480] sm:$0xff]
  %v7870 = vld [vmem:[%s5 + $0x488] sm:$0xff]
  %v7871 = vld [vmem:[%s5 + $0x490] sm:$0xff]
  %v7872 = vld [vmem:[%s5 + $0x498] sm:$0xff]
  %v7873 = vld [vmem:[%s5 + $0x4a0] sm:$0xff]
  %v7874 = vld [vmem:[%s5 + $0x4a8] sm:$0xff]
  %v7875 = vld [vmem:[%s5 + $0x4b0] sm:$0xff]
  %v7876 = vld [vmem:[%s5 + $0x4b8] sm:$0xff]
  %v7877 = vld [vmem:[%s5 + $0x4c0] sm:$0xff]
  %v7878 = vld [vmem:[%s5 + $0x4c8] sm:$0xff]
  %v7879 = vld [vmem:[%s5 + $0x4d0] sm:$0xff]
  %v7880 = vld [vmem:[%s5 + $0x4d8] sm:$0xff]
  %v7881 = vld [vmem:[%s5 + $0x4e0] sm:$0xff]
  %v7882 = vld [vmem:[%s5 + $0x4e8] sm:$0xff]
  %v7883 = vld [vmem:[%s5 + $0x4f0] sm:$0xff]
  %v7884 = vld [vmem:[%s5 + $0x4f8] sm:$0xff]
  %v7885 = vld [vmem:[%s5 + $0x500] sm:$0xff]
  %v7886 = vld [vmem:[%s5 + $0x508] sm:$0xff]
  %v7887 = vld [vmem:[%s5 + $0x510] sm:$0xff]
  %v7888 = vld [vmem:[%s5 + $0x518] sm:$0xff]
  %v7889 = vld [vmem:[%s5 + $0x520] sm:$0xff]
  %v7890 = vld [vmem:[%s5 + $0x528] sm:$0xff]
  %v7891 = vld [vmem:[%s5 + $0x530] sm:$0xff]
  %v7892 = vld [vmem:[%s5 + $0x538] sm:$0xff]
  %v7893 = vld [vmem:[%s5 + $0x540] sm:$0xff]
  %v7894 = vld [vmem:[%s5 + $0x548] sm:$0xff]
  %v7895 = vld [vmem:[%s5 + $0x550] sm:$0xff]
  %v7896 = vld [vmem:[%s5 + $0x558] sm:$0xff]
  %v7897 = vld [vmem:[%s5 + $0x560] sm:$0xff]
  %v7898 = vld [vmem:[%s5 + $0x568] sm:$0xff]
  %v7899 = vld [vmem:[%s5 + $0x570] sm:$0xff]
  %v7900 = vld [vmem:[%s5 + $0x578] sm:$0xff]
  %v7901 = vld [vmem:[%s5 + $0x580] sm:$0xff]
  %v7902 = vld [vmem:[%s5 + $0x588] sm:$0xff]
  %v7903 = vld [vmem:[%s5 + $0x590] sm:$0xff]
  %v7904 = vld [vmem:[%s5 + $0x598] sm:$0xff]
  %v7905 = vld [vmem:[%s5 + $0x5a0] sm:$0xff]
  %v7906 = vld [vmem:[%s5 + $0x5a8] sm:$0xff]
  %v7907 = vld [vmem:[%s5 + $0x5b0] sm:$0xff]
  %v7908 = vld [vmem:[%s5 + $0x5b8] sm:$0xff]
  %v7909 = vld [vmem:[%s5 + $0x5c0] sm:$0xff]
  %v7910 = vld [vmem:[%s5 + $0x5c8] sm:$0xff]
  %v7911 = vld [vmem:[%s5 + $0x5d0] sm:$0xff]
  %v7912 = vld [vmem:[%s5 + $0x5d8] sm:$0xff]
  %v7913 = vld [vmem:[%s5 + $0x5e0] sm:$0xff]
  %v7914 = vld [vmem:[%s5 + $0x5e8] sm:$0xff]
  %v7915 = vld [vmem:[%s5 + $0x5f0] sm:$0xff]
  %v7916 = vld [vmem:[%s5 + $0x5f8] sm:$0xff]
  %v7917 = vld [vmem:[%s6] sm:$0x3f]
  %v7919 = vlaneseq
  %v7920 = vshrl.u32 %v7919, 7
  %v7921 = vsub.s32 0, %v7920
  %v7922 = vrot.slane %v7917, %v7921
  %v7923 = vlaneseq
  %v7924 = vshrl.u32 %v7923, 7
  %v7925 = vsub.s32 1, %v7924
  %v7926 = vrot.slane %v7917, %v7925
  %v7927 = vlaneseq
  %v7928 = vshrl.u32 %v7927, 7
  %v7929 = vsub.s32 2, %v7928
  %v7930 = vrot.slane %v7917, %v7929
  %v7931 = vlaneseq
  %v7932 = vshrl.u32 %v7931, 7
  %v7933 = vsub.s32 3, %v7932
  %v7934 = vrot.slane %v7917, %v7933
  %v7935 = vlaneseq
  %v7936 = vshrl.u32 %v7935, 7
  %v7937 = vsub.s32 4, %v7936
  %v7938 = vrot.slane %v7917, %v7937
  %v7939 = vlaneseq
  %v7940 = vshrl.u32 %v7939, 7
  %v7941 = vsub.s32 5, %v7940
  %v7942 = vrot.slane %v7917, %v7941
  %7949 = vmatprep.subr.mxu0 %v7726
  %7950 = vmatpush1.msra.mxu0 %v7725
  %7951 = vmatprep.subr.mxu0 %v7732
  %7952 = vmatpush1.msra.mxu0 %v7731
  %7953 = vmatprep.subr.mxu0 %v7738
  %7954 = vmatpush1.msra.mxu0 %v7737
  %7955 = vmatprep.subr.mxu0 %v7744
  %7956 = vmatpush1.msra.mxu0 %v7743
  %7957 = vmatprep.subr.mxu0 %v7750
  %7958 = vmatpush1.msra.mxu0 %v7749
  %7959 = vmatprep.subr.mxu0 %v7756
  %7960 = vmatpush1.msra.mxu0 %v7755
  %7961 = vmatprep.subr.mxu0 %v7762
  %7962 = vmatpush1.msra.mxu0 %v7761
  %7963 = vmatprep.subr.mxu0 %v7768
  %7964 = vmatpush1.msra.mxu0 %v7767
  %7965 = vmatprep.subr.mxu0 %v7774
  %7966 = vmatpush1.msra.mxu0 %v7773
  %7967 = vmatprep.subr.mxu0 %v7780
  %7968 = vmatpush1.msra.mxu0 %v7779
  %7969 = vmatprep.subr.mxu0 %v7786
  %7970 = vmatpush1.msra.mxu0 %v7785
  %7971 = vmatprep.subr.mxu0 %v7792
  %7972 = vmatpush1.msra.mxu0 %v7791
  %7973 = vmatprep.subr.mxu0 %v7798
  %7974 = vmatpush1.msra.mxu0 %v7797
  %7975 = vmatprep.subr.mxu0 %v7804
  %7976 = vmatpush1.msra.mxu0 %v7803
  %7977 = vmatprep.subr.mxu0 %v7810
  %7978 = vmatpush1.msra.mxu0 %v7809
  %7979 = vmatprep.subr.mxu0 %v7816
  %7980 = vmatpush1.msra.mxu0 %v7815
  %7981 = vmatprep.subr.mxu0 %v7822
  %7982 = vmatpush1.msra.mxu0 %v7821
  %7983 = vmatprep.subr.mxu0 %v7828
  %7984 = vmatpush1.msra.mxu0 %v7827
  %7985 = vmatprep.subr.mxu0 %v7834
  %7986 = vmatpush1.msra.mxu0 %v7833
  %7987 = vmatprep.subr.mxu0 %v7840
  %7988 = vmatpush1.msra.mxu0 %v7839
  %7989 = vmatprep.subr.mxu0 %v7846
  %7990 = vmatpush1.msra.mxu0 %v7845
  %7991 = vmatprep.subr.mxu0 %v7852
  %7992 = vmatpush1.msra.mxu0 %v7851
  %7993 = vmatprep.subr.mxu0 %v7858
  %7994 = vmatpush1.msra.mxu0 %v7857
  %7995 = vmatprep.subr.mxu0 %v7864
  %7996 = vmatpush1.msra.mxu0 %v7863
  %7997 = vmatprep.subr.mxu0 %v7870
  %7998 = vmatpush1.msra.mxu0 %v7869
  %7999 = vmatprep.subr.mxu0 %v7876
  %8000 = vmatpush1.msra.mxu0 %v7875
  %8001 = vmatprep.subr.mxu0 %v7882
  %8002 = vmatpush1.msra.mxu0 %v7881
  %8003 = vmatprep.subr.mxu0 %v7888
  %8004 = vmatpush1.msra.mxu0 %v7887
  %8005 = vmatprep.subr.mxu0 %v7894
  %8006 = vmatpush1.msra.mxu0 %v7893
  %8007 = vmatprep.subr.mxu0 %v7900
  %8008 = vmatpush1.msra.mxu0 %v7899
  %8009 = vmatprep.subr.mxu0 %v7906
  %8010 = vmatpush1.msra.mxu0 %v7905
  %8011 = vmatprep.subr.mxu0 %v7912
  %8012 = vmatpush1.msra.mxu0 %v7911
  %8013 = vmatprep.mubr.f32.mxu0 %v7187
  %8014 = vmatmul.mubr.f32.gmra.mrb[0].mxu0 %v7186
  %v8015 = vpop.f32.mrb[0].mxu0
  %v8016 = vadd.f32 %v7922, %v8015
  %v8017 = vpop.f32.mrb[0].mxu0
  %v8018 = vadd.f32 %v7926, %v8017
  %8019 = vdwg.mxu0
  %8020 = vmatprep.subr.mxu0 %v7728
  %8021 = vmatpush1.msra.mxu0 %v7727
  %8022 = vmatprep.subr.mxu0 %v7734
  %8023 = vmatpush1.msra.mxu0 %v7733
  %8024 = vmatprep.subr.mxu0 %v7740
  %8025 = vmatpush1.msra.mxu0 %v7739
  %8026 = vmatprep.subr.mxu0 %v7746
  %8027 = vmatpush1.msra.mxu0 %v7745
  %8028 = vmatprep.subr.mxu0 %v7752
  %8029 = vmatpush1.msra.mxu0 %v7751
  %8030 = vmatprep.subr.mxu0 %v7758
  %8031 = vmatpush1.msra.mxu0 %v7757
  %8032 = vmatprep.subr.mxu0 %v7764
  %8033 = vmatpush1.msra.mxu0 %v7763
  %8034 = vmatprep.subr.mxu0 %v7770
  %8035 = vmatpush1.msra.mxu0 %v7769
  %8036 = vmatprep.subr.mxu0 %v7776
  %8037 = vmatpush1.msra.mxu0 %v7775
  %8038 = vmatprep.subr.mxu0 %v7782
  %8039 = vmatpush1.msra.mxu0 %v7781
  %8040 = vmatprep.subr.mxu0 %v7788
  %8041 = vmatpush1.msra.mxu0 %v7787
  %8042 = vmatprep.subr.mxu0 %v7794
  %8043 = vmatpush1.msra.mxu0 %v7793
  %8044 = vmatprep.subr.mxu0 %v7800
  %8045 = vmatpush1.msra.mxu0 %v7799
  %8046 = vmatprep.subr.mxu0 %v7806
  %8047 = vmatpush1.msra.mxu0 %v7805
  %8048 = vmatprep.subr.mxu0 %v7812
  %8049 = vmatpush1.msra.mxu0 %v7811
  %8050 = vmatprep.subr.mxu0 %v7818
  %8051 = vmatpush1.msra.mxu0 %v7817
  %8052 = vmatprep.subr.mxu0 %v7824
  %8053 = vmatpush1.msra.mxu0 %v7823
  %8054 = vmatprep.subr.mxu0 %v7830
  %8055 = vmatpush1.msra.mxu0 %v7829
  %8056 = vmatprep.subr.mxu0 %v7836
  %8057 = vmatpush1.msra.mxu0 %v7835
  %8058 = vmatprep.subr.mxu0 %v7842
  %8059 = vmatpush1.msra.mxu0 %v7841
  %8060 = vmatprep.subr.mxu0 %v7848
  %8061 = vmatpush1.msra.mxu0 %v7847
  %8062 = vmatprep.subr.mxu0 %v7854
  %8063 = vmatpush1.msra.mxu0 %v7853
  %8064 = vmatprep.subr.mxu0 %v7860
  %8065 = vmatpush1.msra.mxu0 %v7859
  %8066 = vmatprep.subr.mxu0 %v7866
  %8067 = vmatpush1.msra.mxu0 %v7865
  %8068 = vmatprep.subr.mxu0 %v7872
  %8069 = vmatpush1.msra.mxu0 %v7871
  %8070 = vmatprep.subr.mxu0 %v7878
  %8071 = vmatpush1.msra.mxu0 %v7877
  %8072 = vmatprep.subr.mxu0 %v7884
  %8073 = vmatpush1.msra.mxu0 %v7883
  %8074 = vmatprep.subr.mxu0 %v7890
  %8075 = vmatpush1.msra.mxu0 %v7889
  %8076 = vmatprep.subr.mxu0 %v7896
  %8077 = vmatpush1.msra.mxu0 %v7895
  %8078 = vmatprep.subr.mxu0 %v7902
  %8079 = vmatpush1.msra.mxu0 %v7901
  %8080 = vmatprep.subr.mxu0 %v7908
  %8081 = vmatpush1.msra.mxu0 %v7907
  %8082 = vmatprep.subr.mxu0 %v7914
  %8083 = vmatpush1.msra.mxu0 %v7913
  %8084 = vmatprep.mubr.f32.mxu0 %v7187
  %8085 = vmatmul.mubr.f32.gmra.mrb[0].mxu0 %v7186
  %v8086 = vpop.f32.mrb[0].mxu0
  %v8087 = vadd.f32 %v7930, %v8086
  %v8088 = vpop.f32.mrb[0].mxu0
  %v8089 = vadd.f32 %v7934, %v8088
  %8090 = vdwg.mxu0
  %8091 = vmatprep.subr.mxu0 %v7730
  %8092 = vmatpush1.msra.mxu0 %v7729
  %8093 = vmatprep.subr.mxu0 %v7736
  %8094 = vmatpush1.msra.mxu0 %v7735
  %8095 = vmatprep.subr.mxu0 %v7742
  %8096 = vmatpush1.msra.mxu0 %v7741
  %8097 = vmatprep.subr.mxu0 %v7748
  %8098 = vmatpush1.msra.mxu0 %v7747
  %8099 = vmatprep.subr.mxu0 %v7754
  %8100 = vmatpush1.msra.mxu0 %v7753
  %8101 = vmatprep.subr.mxu0 %v7760
  %8102 = vmatpush1.msra.mxu0 %v7759
  %8103 = vmatprep.subr.mxu0 %v7766
  %8104 = vmatpush1.msra.mxu0 %v7765
  %8105 = vmatprep.subr.mxu0 %v7772
  %8106 = vmatpush1.msra.mxu0 %v7771
  %8107 = vmatprep.subr.mxu0 %v7778
  %8108 = vmatpush1.msra.mxu0 %v7777
  %8109 = vmatprep.subr.mxu0 %v7784
  %8110 = vmatpush1.msra.mxu0 %v7783
  %8111 = vmatprep.subr.mxu0 %v7790
  %8112 = vmatpush1.msra.mxu0 %v7789
  %8113 = vmatprep.subr.mxu0 %v7796
  %8114 = vmatpush1.msra.mxu0 %v7795
  %8115 = vmatprep.subr.mxu0 %v7802
  %8116 = vmatpush1.msra.mxu0 %v7801
  %8117 = vmatprep.subr.mxu0 %v7808
  %8118 = vmatpush1.msra.mxu0 %v7807
  %8119 = vmatprep.subr.mxu0 %v7814
  %8120 = vmatpush1.msra.mxu0 %v7813
  %8121 = vmatprep.subr.mxu0 %v7820
  %8122 = vmatpush1.msra.mxu0 %v7819
  %8123 = vmatprep.subr.mxu0 %v7826
  %8124 = vmatpush1.msra.mxu0 %v7825
  %8125 = vmatprep.subr.mxu0 %v7832
  %8126 = vmatpush1.msra.mxu0 %v7831
  %8127 = vmatprep.subr.mxu0 %v7838
  %8128 = vmatpush1.msra.mxu0 %v7837
  %8129 = vmatprep.subr.mxu0 %v7844
  %8130 = vmatpush1.msra.mxu0 %v7843
  %8131 = vmatprep.subr.mxu0 %v7850
  %8132 = vmatpush1.msra.mxu0 %v7849
  %8133 = vmatprep.subr.mxu0 %v7856
  %8134 = vmatpush1.msra.mxu0 %v7855
  %8135 = vmatprep.subr.mxu0 %v7862
  %8136 = vmatpush1.msra.mxu0 %v7861
  %8137 = vmatprep.subr.mxu0 %v7868
  %8138 = vmatpush1.msra.mxu0 %v7867
  %8139 = vmatprep.subr.mxu0 %v7874
  %8140 = vmatpush1.msra.mxu0 %v7873
  %8141 = vmatprep.subr.mxu0 %v7880
  %8142 = vmatpush1.msra.mxu0 %v7879
  %8143 = vmatprep.subr.mxu0 %v7886
  %8144 = vmatpush1.msra.mxu0 %v7885
  %8145 = vmatprep.subr.mxu0 %v7892
  %8146 = vmatpush1.msra.mxu0 %v7891
  %8147 = vmatprep.subr.mxu0 %v7898
  %8148 = vmatpush1.msra.mxu0 %v7897
  %8149 = vmatprep.subr.mxu0 %v7904
  %8150 = vmatpush1.msra.mxu0 %v7903
  %8151 = vmatprep.subr.mxu0 %v7910
  %8152 = vmatpush1.msra.mxu0 %v7909
  %8153 = vmatprep.subr.mxu0 %v7916
  %8154 = vmatpush1.msra.mxu0 %v7915
  %8155 = vmatprep.mubr.f32.mxu0 %v7187
  %8156 = vmatmul.mubr.f32.gmra.mrb[0].mxu0 %v7186
  %v8157 = vpop.f32.mrb[0].mxu0
  %v8158 = vadd.f32 %v7938, %v8157
  %v8159 = vpop.f32.mrb[0].mxu0
  %v8160 = vadd.f32 %v7942, %v8159
  %8161 = vdwg.mxu0
  %v8162 = vadd.f32 %v7719, %v8016
  %v8163 = vadd.f32 %v7720, %v8018
  %v8164 = vadd.f32 %v7721, %v8087
  %v8165 = vadd.f32 %v7722, %v8089
  %v8166 = vxor.u32 %v8162, 2147483648
  %v8167 = vxor.u32 %v8163, 2147483648
  %v8168 = vxor.u32 %v8164, 2147483648
  %v8169 = vxor.u32 %v8165, 2147483648
  %v8170 = vmul.f32 %v8166, 1.442695
  %v8171 = vpow.pop %v8170
  %v8172 = vmul.f32 %v8167, 1.442695
  %v8173 = vpow.pop %v8172
  %v8174 = vmul.f32 %v8168, 1.442695
  %v8175 = vpow.pop %v8174
  %v8176 = vmul.f32 %v8169, 1.442695
  %v8177 = vpow.pop %v8176
  %v8178 = vadd.f32 %v8171, 1.0
  %v8179 = vadd.f32 %v8173, 1.0
  %v8180 = vadd.f32 %v8175, 1.0
  %v8181 = vadd.f32 %v8177, 1.0
  %v8182 = vrcp.pop %v8178
  %v8183 = vmul.f32 1.0, %v8182
  %v8184 = vrcp.pop %v8179
  %v8185 = vmul.f32 1.0, %v8184
  %v8186 = vrcp.pop %v8180
  %v8187 = vmul.f32 1.0, %v8186
  %v8188 = vrcp.pop %v8181
  %v8189 = vmul.f32 1.0, %v8188
  %v8190 = vmul.f32 %v8183, %v8158
  %v8191 = vmul.f32 %v8185, %v8160
  %v8192 = vadd.f32 %v7723, %v8190
  %v8193 = vadd.f32 %v7724, %v8191
  %v8194 = vtanh.pop %v8192
  %v8195 = vtanh.pop %v8193
  %v8196 = vsub.f32 1.0, %v8187
  %v8197 = vsub.f32 1.0, %v8189
  %v8198 = vmul.f32 %v8196, %v8194
  %v8199 = vmul.f32 %v8197, %v8195
  %v8200 = vmul.f32 %v8187, %v7186
  %v8201 = vmul.f32 %v8189, %v7187
  %v8202 = vadd.f32 %v8198, %v8200
  %v8203 = vadd.f32 %v8199, %v8201
  %s8204 = scalar_lea.vmem %s7, 28
  %8205 = vst [vmem:[%s8204] sm:$0xf] %v8202
  %8206 = vst [vmem:[%s61] sm:$0xf] %v8203
  %v8209 = vcombine.low %v8202, %v8203
  %8211 = vst [vmem:[#allocation2] sm:$0xff] %v8209
  %s8212 = ssub.s32 0, 0
  %s8213 = smul.u32 8, %s8212
  %p8214 = scmp.lt.s32.totalorder %s8213, 7
  %s8215 = scalar_select %p8214, %s8213, 7
  %s8216 = smul.addr %s8215, 4
  %s8217 = scalar_lea.vmem %s8, %s8216
  // Predicated region
  $region34: #{arrival_rate_estimator_forward.2} parent=0 // pred_check
    _
  $region35: #{arrival_rate_estimator_forward.2} parent=0 // pred_check_branch
    %8219 = sbr.rel (0) target = $region37
  $region36: #{arrival_rate_estimator_forward.2} parent=0 // pred_region
    _
  $region37: #{arrival_rate_estimator_forward.2} parent=0 // pred_fallthru
    _
  // Predicated region
  $region38: #{arrival_rate_estimator_forward.2} parent=0 // pred_check
    _
  $region39: #{arrival_rate_estimator_forward.2} parent=0 // pred_check_branch
    %8221 = sbr.rel (0) target = $region41
  $region40: #{arrival_rate_estimator_forward.2} parent=0 // pred_region
    %s8222 = ssub.s32 0, 0
    %s8223 = smul.u32 8, %s8222
  $region41: #{arrival_rate_estimator_forward.2} parent=0 // pred_fallthru
    _
  // Predicated region
  $region42: #{arrival_rate_estimator_forward.2} parent=0 // pred_check
    _
  $region43: #{arrival_rate_estimator_forward.2} parent=0 // pred_check_branch
    %8225 = sbr.rel (0) target = $region45
  $region44: #{arrival_rate_estimator_forward.2} parent=0 // pred_region
    _
  $region45: #{arrival_rate_estimator_forward.2} parent=0 // pred_fallthru
    _
  // Predicated region
  $region46: #{arrival_rate_estimator_forward.2} parent=0 // pred_check
    _
  $region47: #{arrival_rate_estimator_forward.2} parent=0 // pred_check_branch
    %8227 = sbr.rel (0) target = $region49
  $region48: #{arrival_rate_estimator_forward.2} parent=0 // pred_region
    %s8228 = ssub.s32 0, 0
    %s8229 = smul.u32 8, %s8228
    %p8230 = scmp.lt.s32.totalorder %s8229, 7
    %s8231 = scalar_select %p8230, %s8229, 7
    %s8232 = smul.addr %s8231, 4
    %s8233 = scalar_lea.vmem %s8, %s8232
  $region49: #{arrival_rate_estimator_forward.2} parent=0 // pred_fallthru
    _

</llo_original>
